<compile_context>
chip_gen: v5e
topology: v5e:2x2
jax: 0.10.0
libtpu: 0.0.40
codegen_flags: <defaults>
</compile_context>

<pallas_src>
import functools

import jax
import jax.numpy as jnp
from jax.experimental import pallas as pl
from jax.experimental.pallas import tpu as pltpu


# ------------------------ fused BiLSTM + FC kernel ------------------------

def _birnn_fused_kernel(emb_ref, wih_ref, whh_ref, b_ref, wfc_ref, bfc_ref,
                        o_ref, gx_sc, h_sc, c_sc):
    """Single grid step. Both directions interleaved; FC fused.

    emb_ref: (T*B, D)  bf16 time-major embeddings, rows ordered t*B + b
    wih_ref: (D, 8H)   bf16 [fw W_ih | bw W_ih] along lanes (gate order i,f,g,o)
    whh_ref: (2H, 8H)  bf16 block-diagonal [fw W_hh | 0 ; 0 | bw W_hh]
    b_ref:   (1, 8H)   f32  [fw (b_ih+b_hh) | bw (b_ih+b_hh)]
    wfc_ref: (2H, P)   bf16 FC weight, rows 0:H = fw half, H:2H = bw half, P lane-padded
    bfc_ref: (1, P)    f32  FC bias (lane-padded)
    o_ref:   (T*B, P)  f32  logits, time-major rows
    gx_sc:   (T*B, 8H) f32  hoisted input projections (both directions, all steps)
    h_sc:    (B, 2H)   f32  hidden state  [:, :H]=fw, [:, H:]=bw
    c_sc:    (B, 2H)   f32  cell state
    """
    TB, G2 = gx_sc.shape
    B, H2 = h_sc.shape
    H = H2 // 2
    G = 4 * H
    T = TB // B

    # (1) Hoisted input projection: ONE MXU matmul for both directions, all steps.
    gx_sc[...] = (
        jnp.dot(emb_ref[...], wih_ref[...], preferred_element_type=jnp.float32)
        + b_ref[...]
    )

    # (2) Init state; output block starts at the FC bias — every row then gets
    #     exactly one fw and one bw partial-logit accumulation.
    h_sc[...] = jnp.zeros_like(h_sc)
    c_sc[...] = jnp.zeros_like(c_sc)
    o_ref[...] = jnp.zeros_like(o_ref) + bfc_ref[...]

    def both(a, b):  # (B,H),(B,H) -> (B,2H): fw/bw share the VPU/EUP work
        return jnp.concatenate([a, b], axis=1)

    # (3) Interleaved fw/bw recurrence, statically unrolled (T is small here).
    for s in range(T):
        r_fw = s * B              # fw reads/writes original time index s
        r_bw = (T - 1 - s) * B    # bw walks backwards, writes back at T-1-s

        # Block-diagonal recurrent matmul: [h_fw@Wfw | h_bw@Wbw] in one dot.
        hh = jnp.dot(h_sc[...].astype(jnp.bfloat16), whh_ref[...],
                     preferred_element_type=jnp.float32)          # (B, 8H)

        g_fw = gx_sc[r_fw:r_fw + B, 0:G] + hh[:, 0:G]
        g_bw = gx_sc[r_bw:r_bw + B, G:2 * G] + hh[:, G:2 * G]

        i = jax.nn.sigmoid(both(g_fw[:, 0 * H:1 * H], g_bw[:, 0 * H:1 * H]))
        f = jax.nn.sigmoid(both(g_fw[:, 1 * H:2 * H], g_bw[:, 1 * H:2 * H]))
        g = jnp.tanh(both(g_fw[:, 2 * H:3 * H], g_bw[:, 2 * H:3 * H]))
        o = jax.nn.sigmoid(both(g_fw[:, 3 * H:4 * H], g_bw[:, 3 * H:4 * H]))

        c_new = f * c_sc[...] + i * g
        h_new = o * jnp.tanh(c_new)
        c_sc[...] = c_new
        h_sc[...] = h_new

        # (4) Fused FC: accumulate this step's partial logits into the output
        #     block (concat + Linear fused; hidden states never hit HBM).
        h_bf = h_new.astype(jnp.bfloat16)
        o_ref[r_fw:r_fw + B, :] = o_ref[r_fw:r_fw + B, :] + jnp.dot(
            h_bf[:, 0:H], wfc_ref[0:H, :], preferred_element_type=jnp.float32)
        o_ref[r_bw:r_bw + B, :] = o_ref[r_bw:r_bw + B, :] + jnp.dot(
            h_bf[:, H:2 * H], wfc_ref[H:2 * H, :],
            preferred_element_type=jnp.float32)


def birnn_pallas(emb2d, w_ih, w_hh, bias, w_fc, b_fc, *, batch):
    TB, D = emb2d.shape
    H2, G2 = w_hh.shape          # (2H, 8H)
    P = w_fc.shape[1]

    return pl.pallas_call(
        _birnn_fused_kernel,
        out_shape=jax.ShapeDtypeStruct((TB, P), jnp.float32),
        grid_spec=pltpu.PrefetchScalarGridSpec(
            num_scalar_prefetch=0,
            grid=(1,),
            in_specs=[
                pl.BlockSpec((TB, D), lambda i: (0, 0)),    # embeddings
                pl.BlockSpec((D, G2), lambda i: (0, 0)),    # W_ih (both dirs)
                pl.BlockSpec((H2, G2), lambda i: (0, 0)),   # W_hh block-diag
                pl.BlockSpec((1, G2), lambda i: (0, 0)),    # LSTM biases
                pl.BlockSpec((H2, P), lambda i: (0, 0)),    # FC weight
                pl.BlockSpec((1, P), lambda i: (0, 0)),     # FC bias
            ],
            out_specs=pl.BlockSpec((TB, P), lambda i: (0, 0)),
            scratch_shapes=[
                pltpu.VMEM((TB, G2), jnp.float32),   # hoisted input projections
                pltpu.VMEM((batch, H2), jnp.float32),  # h state (fw|bw)
                pltpu.VMEM((batch, H2), jnp.float32),  # c state (fw|bw)
            ],
        ),
        compiler_params=pltpu.CompilerParams(
            dimension_semantics=("arbitrary",),
        ),
    )(emb2d, w_ih, w_hh, bias, w_fc, b_fc)


# ------------------------ parameter preprocessing (once) ------------------------

def prepare_kernel_params(params):
    """Build kernel-layout weights ONCE (concat / block-diag / lane-pad / bf16)."""
    D, G = params["fw_w_ih"].shape          # (D, 4H)
    H = params["fw_w_hh"].shape[0]
    n_out = params["fc_w"].shape[1]
    P = max(128, ((n_out + 127) // 128) * 128)   # lane-dense FC output width

    w_ih = jnp.concatenate([params["fw_w_ih"], params["bw_w_ih"]],
                           axis=1).astype(jnp.bfloat16)                # (D, 8H)
    w_hh = (jnp.zeros((2 * H, 2 * G), jnp.float32)
            .at[:H, :G].set(params["fw_w_hh"])
            .at[H:, G:].set(params["bw_w_hh"])).astype(jnp.bfloat16)   # (2H, 8H)
    bias = jnp.concatenate([params["fw_b"], params["bw_b"]]).reshape(1, 2 * G)
    w_fc = (jnp.zeros((2 * H, P), jnp.float32)
            .at[:, :n_out].set(params["fc_w"])).astype(jnp.bfloat16)   # (2H, P)
    b_fc = jnp.zeros((1, P), jnp.float32).at[:, :n_out].set(params["fc_b"])

    return {
        "embedding": params["embedding"].astype(jnp.bfloat16),
        "w_ih": w_ih, "w_hh": w_hh, "bias": bias.astype(jnp.float32),
        "w_fc": w_fc, "b_fc": b_fc,
    }


# --------------------------------- BiRNN forward --------------------------------

def birnn_forward(kparams, X, *, n_out):
    """X: (B, T) int32 token ids. Returns logits (B*T, n_out), rows ordered b*T + t."""
    B, T = X.shape
    D = kparams["w_ih"].shape[0]
    H = kparams["w_hh"].shape[0] // 2
    # Layout assumptions the kernel relies on (lane-aligned gate slices, full
    # sublane rows for unmasked gx/output accesses).
    assert D % 128 == 0 and H % 128 == 0, "D and H must be multiples of 128"
    assert B % 8 == 0, "B must be a multiple of 8 (f32 sublane tile)"

    # Embedding lookup directly in time-major order (no HBM transpose of activations).
    emb2d = jnp.take(kparams["embedding"], X.T, axis=0).reshape(T * B, D)  # bf16

    logits_tm = birnn_pallas(emb2d, kparams["w_ih"], kparams["w_hh"],
                             kparams["bias"], kparams["w_fc"], kparams["b_fc"],
                             batch=B)                                    # (T*B, P)
    # rows are (t, b)-ordered; reorder the tiny logits tensor to the module's (b, t) order.
    logits = (logits_tm[:, :n_out].reshape(T, B, n_out)
              .transpose(1, 0, 2).reshape(B * T, n_out))
    return logits


# ----------------------------- pure-JAX references --------------------------------

_HI = jax.lax.Precision.HIGHEST


def _maybe_bf16(x, emulate):
    return x.astype(jnp.bfloat16).astype(jnp.float32) if emulate else x


def _lstm_ref(x_tbd, w_ih, w_hh, bias, emulate_bf16):
    T, B, D = x_tbd.shape
    H = w_hh.shape[0]
    w_ih_c = _maybe_bf16(w_ih, emulate_bf16)
    w_hh_c = _maybe_bf16(w_hh, emulate_bf16)

    def step(carry, x_t):
        h, c = carry
        gates = (jnp.dot(_maybe_bf16(x_t, emulate_bf16), w_ih_c, precision=_HI)
                 + jnp.dot(_maybe_bf16(h, emulate_bf16), w_hh_c, precision=_HI)
                 + bias)
        i = jax.nn.sigmoid(gates[:, 0 * H:1 * H])
        f = jax.nn.sigmoid(gates[:, 1 * H:2 * H])
        g = jnp.tanh(gates[:, 2 * H:3 * H])
        o = jax.nn.sigmoid(gates[:, 3 * H:4 * H])
        c = f * c + i * g
        h = o * jnp.tanh(c)
        return (h, c), h

    init = (jnp.zeros((B, H), jnp.float32), jnp.zeros((B, H), jnp.float32))
    _, hs = jax.lax.scan(step, init, x_tbd)
    return hs


def birnn_forward_ref(params, X, emulate_bf16=False):
    B, T = X.shape
    emb = jnp.take(params["embedding"], X, axis=0)
    emb_rev = emb[:, ::-1, :]
    fw_h = _lstm_ref(jnp.transpose(emb, (1, 0, 2)),
                     params["fw_w_ih"], params["fw_w_hh"], params["fw_b"],
                     emulate_bf16)
    bw_h = _lstm_ref(jnp.transpose(emb_rev, (1, 0, 2)),
                     params["bw_w_ih"], params["bw_w_hh"], params["bw_b"],
                     emulate_bf16)
    fw_out = jnp.transpose(fw_h, (1, 0, 2))
    bw_out = jnp.transpose(bw_h, (1, 0, 2))[:, ::-1, :]
    bi = jnp.concatenate([fw_out, bw_out], axis=2).reshape(B * T, -1)
    return (jnp.dot(_maybe_bf16(bi, emulate_bf16),
                    _maybe_bf16(params["fc_w"], emulate_bf16), precision=_HI)
            + params["fc_b"])


# ------------------------------------- main --------------------------------------

if __name__ == "__main__":
    VOCAB = 50
    N_OUT = 5
    D = 128      # embedding_dim (module default; lane-aligned gate slices)
    H = 128      # cell_size     (module default; 4H = 512 lanes)
    B, T = 8, 8  # B=8 fills the f32 sublane tile

    key = jax.random.PRNGKey(0)
    ks = jax.random.split(key, 12)
    s = 1.0 / jnp.sqrt(jnp.float32(H))

    params = {
        "embedding": jax.random.normal(ks[0], (VOCAB, D), jnp.float32),
        # PyTorch LSTM stores weight_ih (4H, D) / weight_hh (4H, H); we keep the
        # transposed (D, 4H)/(H, 4H) layout for in-kernel matmuls. Gate order i,f,g,o.
        "fw_w_ih": jax.random.uniform(ks[1], (D, 4 * H), jnp.float32, -s, s),
        "fw_w_hh": jax.random.uniform(ks[2], (H, 4 * H), jnp.float32, -s, s),
        "fw_b":    jax.random.uniform(ks[3], (4 * H,), jnp.float32, -s, s)
                 + jax.random.uniform(ks[4], (4 * H,), jnp.float32, -s, s),   # b_ih + b_hh
        "bw_w_ih": jax.random.uniform(ks[5], (D, 4 * H), jnp.float32, -s, s),
        "bw_w_hh": jax.random.uniform(ks[6], (H, 4 * H), jnp.float32, -s, s),
        "bw_b":    jax.random.uniform(ks[7], (4 * H,), jnp.float32, -s, s)
                 + jax.random.uniform(ks[8], (4 * H,), jnp.float32, -s, s),
        "fc_w":    jax.random.uniform(ks[9], (2 * H, N_OUT), jnp.float32, -s, s),
        "fc_b":    jax.random.uniform(ks[10], (N_OUT,), jnp.float32, -s, s),
    }

    X = jax.random.randint(ks[11], (B, T), 0, VOCAB, dtype=jnp.int32)

    # One-time weight preprocessing (out of the per-call path).
    kparams = jax.tree_util.tree_map(jax.block_until_ready,
                                     prepare_kernel_params(params))

    fwd = jax.jit(functools.partial(birnn_forward, n_out=N_OUT))
    logits = jax.block_until_ready(fwd(kparams, X))
    assert logits.shape == (B * T, N_OUT), logits.shape

    # Structural check: reference with the SAME bf16 rounding at every dot input
    # (kernel and reference then differ only by accumulation order / EUP impl).
    ref_bf16 = jax.block_until_ready(birnn_forward_ref(params, X, emulate_bf16=True))
    assert jnp.allclose(logits, ref_bf16, atol=5e-3, rtol=5e-3), \
        "mismatch vs bf16-emulating reference"

    # Semantic check vs the pure-f32 module reference; tolerance reflects bf16
    # MXU inputs (f32 accumulation) vs Precision.HIGHEST f32 dots.
    ref_f32 = jax.block_until_ready(birnn_forward_ref(params, X, emulate_bf16=False))
    assert jnp.allclose(logits, ref_f32, atol=3e-2, rtol=3e-2), \
        "mismatch vs f32 reference"

    print("KERNEL_OK")
</pallas_src>

<mosaic_0001>
module attributes {stable_mosaic.version = 11 : i64} {
  func.func @_birnn_fused_kernel(%arg0: i32, %arg1: memref<64x128xbf16, #tpu.memory_space<vmem>>, %arg2: memref<128x1024xbf16, #tpu.memory_space<vmem>>, %arg3: memref<256x1024xbf16, #tpu.memory_space<vmem>>, %arg4: memref<1x1024xf32, #tpu.memory_space<vmem>>, %arg5: memref<256x128xbf16, #tpu.memory_space<vmem>>, %arg6: memref<1x128xf32, #tpu.memory_space<vmem>>, %arg7: memref<64x128xf32, #tpu.memory_space<vmem>>, %arg8: memref<64x1024xf32, #tpu.memory_space<vmem>>, %arg9: memref<8x256xf32, #tpu.memory_space<vmem>>, %arg10: memref<8x256xf32, #tpu.memory_space<vmem>>) attributes {dimension_semantics = [#tpu.dimension_semantics<arbitrary>], iteration_bounds = array<i64: 1>, scalar_prefetch = 0 : i64, scratch_operands = 3 : i64, tpu.core_type = #tpu.core_type<tc>, window_params = [{pipeline_mode = #tpu.pipeline_mode<synchronous>, transform_indices = @transform_0, window_bounds = array<i64: 64, 128>}, {pipeline_mode = #tpu.pipeline_mode<synchronous>, transform_indices = @transform_1, window_bounds = array<i64: 128, 1024>}, {pipeline_mode = #tpu.pipeline_mode<synchronous>, transform_indices = @transform_2, window_bounds = array<i64: 256, 1024>}, {pipeline_mode = #tpu.pipeline_mode<synchronous>, transform_indices = @transform_3, window_bounds = array<i64: 1, 1024>}, {pipeline_mode = #tpu.pipeline_mode<synchronous>, transform_indices = @transform_4, window_bounds = array<i64: 256, 128>}, {pipeline_mode = #tpu.pipeline_mode<synchronous>, transform_indices = @transform_5, window_bounds = array<i64: 1, 128>}, {pipeline_mode = #tpu.pipeline_mode<synchronous>, transform_indices = @transform_6, window_bounds = array<i64: 64, 128>}]} {
    %c0 = arith.constant 0 : index
    %c0_0 = arith.constant 0 : index
    %0 = vector.load %arg1[%c0, %c0_0] : memref<64x128xbf16, #tpu.memory_space<vmem>>, vector<64x128xbf16>
    %c0_1 = arith.constant 0 : index
    %c0_2 = arith.constant 0 : index
    %1 = vector.load %arg2[%c0_1, %c0_2] : memref<128x1024xbf16, #tpu.memory_space<vmem>>, vector<128x1024xbf16>
    %cst = arith.constant dense<0.000000e+00> : vector<64x1024xf32>
    %2 = tpu.matmul %0, %1, %cst {dimension_numbers = #tpu.dot_dimension_numbers<[1], [0], [0], [1], [0, 0, 1, 1], [], []>} : vector<64x128xbf16>, vector<128x1024xbf16>, vector<64x1024xf32> -> vector<64x1024xf32>
    %c0_3 = arith.constant 0 : index
    %c0_4 = arith.constant 0 : index
    %3 = vector.load %arg4[%c0_3, %c0_4] : memref<1x1024xf32, #tpu.memory_space<vmem>>, vector<1x1024xf32>
    %4 = vector.broadcast %3 : vector<1x1024xf32> to vector<64x1024xf32>
    %5 = arith.addf %2, %4 : vector<64x1024xf32>
    %c0_5 = arith.constant 0 : index
    %c0_6 = arith.constant 0 : index
    %6 = vector.load %arg8[%c0_5, %c0_6] : memref<64x1024xf32, #tpu.memory_space<vmem>>, vector<64x1024xf32>
    tpu.vector_store %arg8[%c0_5, %c0_6], %5 {strides = array<i32>} : memref<64x1024xf32, #tpu.memory_space<vmem>>, vector<64x1024xf32>,
    %cst_7 = arith.constant 0.000000e+00 : f32
    %7 = vector.broadcast %cst_7 : f32 to vector<8x256xf32>
    %c0_8 = arith.constant 0 : index
    %c0_9 = arith.constant 0 : index
    %8 = vector.load %arg9[%c0_8, %c0_9] : memref<8x256xf32, #tpu.memory_space<vmem>>, vector<8x256xf32>
    tpu.vector_store %arg9[%c0_8, %c0_9], %7 {strides = array<i32>} : memref<8x256xf32, #tpu.memory_space<vmem>>, vector<8x256xf32>,
    %cst_10 = arith.constant 0.000000e+00 : f32
    %9 = vector.broadcast %cst_10 : f32 to vector<8x256xf32>
    %c0_11 = arith.constant 0 : index
    %c0_12 = arith.constant 0 : index
    %10 = vector.load %arg10[%c0_11, %c0_12] : memref<8x256xf32, #tpu.memory_space<vmem>>, vector<8x256xf32>
    tpu.vector_store %arg10[%c0_11, %c0_12], %9 {strides = array<i32>} : memref<8x256xf32, #tpu.memory_space<vmem>>, vector<8x256xf32>,
    %cst_13 = arith.constant 0.000000e+00 : f32
    %11 = vector.broadcast %cst_13 : f32 to vector<64x128xf32>
    %c0_14 = arith.constant 0 : index
    %c0_15 = arith.constant 0 : index
    %12 = vector.load %arg6[%c0_14, %c0_15] : memref<1x128xf32, #tpu.memory_space<vmem>>, vector<1x128xf32>
    %13 = vector.broadcast %12 : vector<1x128xf32> to vector<64x128xf32>
    %14 = arith.addf %11, %13 : vector<64x128xf32>
    %c0_16 = arith.constant 0 : index
    %c0_17 = arith.constant 0 : index
    %15 = vector.load %arg7[%c0_16, %c0_17] : memref<64x128xf32, #tpu.memory_space<vmem>>, vector<64x128xf32>
    tpu.vector_store %arg7[%c0_16, %c0_17], %14 {strides = array<i32>} : memref<64x128xf32, #tpu.memory_space<vmem>>, vector<64x128xf32>,
    %c0_18 = arith.constant 0 : index
    %c0_19 = arith.constant 0 : index
    %16 = vector.load %arg9[%c0_18, %c0_19] : memref<8x256xf32, #tpu.memory_space<vmem>>, vector<8x256xf32>
    %17 = arith.truncf %16 : vector<8x256xf32> to vector<8x256xbf16>
    %c0_20 = arith.constant 0 : index
    %c0_21 = arith.constant 0 : index
    %18 = vector.load %arg3[%c0_20, %c0_21] : memref<256x1024xbf16, #tpu.memory_space<vmem>>, vector<256x1024xbf16>
    %cst_22 = arith.constant dense<0.000000e+00> : vector<8x1024xf32>
    %19 = tpu.matmul %17, %18, %cst_22 {dimension_numbers = #tpu.dot_dimension_numbers<[1], [0], [0], [1], [0, 0, 1, 1], [], []>} : vector<8x256xbf16>, vector<256x1024xbf16>, vector<8x1024xf32> -> vector<8x1024xf32>
    %c0_23 = arith.constant 0 : index
    %c0_24 = arith.constant 0 : index
    %20 = vector.load %arg8[%c0_23, %c0_24] : memref<64x1024xf32, #tpu.memory_space<vmem>>, vector<8x512xf32>
    %21 = vector.extract_strided_slice %19 {offsets = [0, 0], sizes = [8, 512], strides = [1, 1]} : vector<8x1024xf32> to vector<8x512xf32>
    %22 = arith.addf %20, %21 : vector<8x512xf32>
    %c56 = arith.constant 56 : index
    %c512 = arith.constant 512 : index
    %23 = vector.load %arg8[%c56, %c512] : memref<64x1024xf32, #tpu.memory_space<vmem>>, vector<8x512xf32>
    %24 = vector.extract_strided_slice %19 {offsets = [0, 512], sizes = [8, 512], strides = [1, 1]} : vector<8x1024xf32> to vector<8x512xf32>
    %25 = arith.addf %23, %24 : vector<8x512xf32>
    %26 = vector.extract_strided_slice %22 {offsets = [0, 0], sizes = [8, 128], strides = [1, 1]} : vector<8x512xf32> to vector<8x128xf32>
    %27 = vector.extract_strided_slice %25 {offsets = [0, 0], sizes = [8, 128], strides = [1, 1]} : vector<8x512xf32> to vector<8x128xf32>
    %28 = tpu.concatenate %26, %27 in 1 : vector<8x128xf32>, vector<8x128xf32> -> vector<8x256xf32>
    %29 = arith.negf %28 : vector<8x256xf32>
    %30 = math.exp %29 : vector<8x256xf32>
    %cst_25 = arith.constant 1.000000e+00 : f32
    %31 = vector.broadcast %cst_25 : f32 to vector<8x256xf32>
    %32 = arith.addf %31, %30 : vector<8x256xf32>
    %33 = arith.divf %31, %32 : vector<8x256xf32>
    %34 = vector.extract_strided_slice %22 {offsets = [0, 128], sizes = [8, 128], strides = [1, 1]} : vector<8x512xf32> to vector<8x128xf32>
    %35 = vector.extract_strided_slice %25 {offsets = [0, 128], sizes = [8, 128], strides = [1, 1]} : vector<8x512xf32> to vector<8x128xf32>
    %36 = tpu.concatenate %34, %35 in 1 : vector<8x128xf32>, vector<8x128xf32> -> vector<8x256xf32>
    %37 = arith.negf %36 : vector<8x256xf32>
    %38 = math.exp %37 : vector<8x256xf32>
    %cst_26 = arith.constant 1.000000e+00 : f32
    %39 = vector.broadcast %cst_26 : f32 to vector<8x256xf32>
    %40 = arith.addf %39, %38 : vector<8x256xf32>
    %41 = arith.divf %39, %40 : vector<8x256xf32>
    %42 = vector.extract_strided_slice %22 {offsets = [0, 256], sizes = [8, 128], strides = [1, 1]} : vector<8x512xf32> to vector<8x128xf32>
    %43 = vector.extract_strided_slice %25 {offsets = [0, 256], sizes = [8, 128], strides = [1, 1]} : vector<8x512xf32> to vector<8x128xf32>
    %44 = tpu.concatenate %42, %43 in 1 : vector<8x128xf32>, vector<8x128xf32> -> vector<8x256xf32>
    %45 = math.tanh %44 : vector<8x256xf32>
    %46 = vector.extract_strided_slice %22 {offsets = [0, 384], sizes = [8, 128], strides = [1, 1]} : vector<8x512xf32> to vector<8x128xf32>
    %47 = vector.extract_strided_slice %25 {offsets = [0, 384], sizes = [8, 128], strides = [1, 1]} : vector<8x512xf32> to vector<8x128xf32>
    %48 = tpu.concatenate %46, %47 in 1 : vector<8x128xf32>, vector<8x128xf32> -> vector<8x256xf32>
    %49 = arith.negf %48 : vector<8x256xf32>
    %50 = math.exp %49 : vector<8x256xf32>
    %cst_27 = arith.constant 1.000000e+00 : f32
    %51 = vector.broadcast %cst_27 : f32 to vector<8x256xf32>
    %52 = arith.addf %51, %50 : vector<8x256xf32>
    %53 = arith.divf %51, %52 : vector<8x256xf32>
    %c0_28 = arith.constant 0 : index
    %c0_29 = arith.constant 0 : index
    %54 = vector.load %arg10[%c0_28, %c0_29] : memref<8x256xf32, #tpu.memory_space<vmem>>, vector<8x256xf32>
    %55 = arith.mulf %41, %54 : vector<8x256xf32>
    %56 = arith.mulf %33, %45 : vector<8x256xf32>
    %57 = arith.addf %55, %56 : vector<8x256xf32>
    %58 = math.tanh %57 : vector<8x256xf32>
    %59 = arith.mulf %53, %58 : vector<8x256xf32>
    %c0_30 = arith.constant 0 : index
    %c0_31 = arith.constant 0 : index
    %60 = vector.load %arg10[%c0_30, %c0_31] : memref<8x256xf32, #tpu.memory_space<vmem>>, vector<8x256xf32>
    tpu.vector_store %arg10[%c0_30, %c0_31], %57 {strides = array<i32>} : memref<8x256xf32, #tpu.memory_space<vmem>>, vector<8x256xf32>,
    %c0_32 = arith.constant 0 : index
    %c0_33 = arith.constant 0 : index
    %61 = vector.load %arg9[%c0_32, %c0_33] : memref<8x256xf32, #tpu.memory_space<vmem>>, vector<8x256xf32>
    tpu.vector_store %arg9[%c0_32, %c0_33], %59 {strides = array<i32>} : memref<8x256xf32, #tpu.memory_space<vmem>>, vector<8x256xf32>,
    %62 = arith.truncf %59 : vector<8x256xf32> to vector<8x256xbf16>
    %c0_34 = arith.constant 0 : index
    %c0_35 = arith.constant 0 : index
    %63 = vector.load %arg7[%c0_34, %c0_35] : memref<64x128xf32, #tpu.memory_space<vmem>>, vector<8x128xf32>
    %64 = vector.extract_strided_slice %62 {offsets = [0, 0], sizes = [8, 128], strides = [1, 1]} : vector<8x256xbf16> to vector<8x128xbf16>
    %c0_36 = arith.constant 0 : index
    %c0_37 = arith.constant 0 : index
    %65 = vector.load %arg5[%c0_36, %c0_37] : memref<256x128xbf16, #tpu.memory_space<vmem>>, vector<128x128xbf16>
    %cst_38 = arith.constant dense<0.000000e+00> : vector<8x128xf32>
    %66 = tpu.matmul %64, %65, %cst_38 {dimension_numbers = #tpu.dot_dimension_numbers<[1], [0], [0], [1], [0, 0, 1, 1], [], []>} : vector<8x128xbf16>, vector<128x128xbf16>, vector<8x128xf32> -> vector<8x128xf32>
    %67 = arith.addf %63, %66 : vector<8x128xf32>
    %c0_39 = arith.constant 0 : index
    %c0_40 = arith.constant 0 : index
    %68 = vector.load %arg7[%c0_39, %c0_40] : memref<64x128xf32, #tpu.memory_space<vmem>>, vector<8x128xf32>
    tpu.vector_store %arg7[%c0_39, %c0_40], %67 {strides = array<i32>} : memref<64x128xf32, #tpu.memory_space<vmem>>, vector<8x128xf32>,
    %c56_41 = arith.constant 56 : index
    %c0_42 = arith.constant 0 : index
    %69 = vector.load %arg7[%c56_41, %c0_42] : memref<64x128xf32, #tpu.memory_space<vmem>>, vector<8x128xf32>
    %70 = vector.extract_strided_slice %62 {offsets = [0, 128], sizes = [8, 128], strides = [1, 1]} : vector<8x256xbf16> to vector<8x128xbf16>
    %c128 = arith.constant 128 : index
    %c0_43 = arith.constant 0 : index
    %71 = vector.load %arg5[%c128, %c0_43] : memref<256x128xbf16, #tpu.memory_space<vmem>>, vector<128x128xbf16>
    %cst_44 = arith.constant dense<0.000000e+00> : vector<8x128xf32>
    %72 = tpu.matmul %70, %71, %cst_44 {dimension_numbers = #tpu.dot_dimension_numbers<[1], [0], [0], [1], [0, 0, 1, 1], [], []>} : vector<8x128xbf16>, vector<128x128xbf16>, vector<8x128xf32> -> vector<8x128xf32>
    %73 = arith.addf %69, %72 : vector<8x128xf32>
    %c56_45 = arith.constant 56 : index
    %c0_46 = arith.constant 0 : index
    %74 = vector.load %arg7[%c56_45, %c0_46] : memref<64x128xf32, #tpu.memory_space<vmem>>, vector<8x128xf32>
    tpu.vector_store %arg7[%c56_45, %c0_46], %73 {strides = array<i32>} : memref<64x128xf32, #tpu.memory_space<vmem>>, vector<8x128xf32>,
    %c0_47 = arith.constant 0 : index
    %c0_48 = arith.constant 0 : index
    %75 = vector.load %arg9[%c0_47, %c0_48] : memref<8x256xf32, #tpu.memory_space<vmem>>, vector<8x256xf32>
    %76 = arith.truncf %75 : vector<8x256xf32> to vector<8x256xbf16>
    %c0_49 = arith.constant 0 : index
    %c0_50 = arith.constant 0 : index
    %77 = vector.load %arg3[%c0_49, %c0_50] : memref<256x1024xbf16, #tpu.memory_space<vmem>>, vector<256x1024xbf16>
    %cst_51 = arith.constant dense<0.000000e+00> : vector<8x1024xf32>
    %78 = tpu.matmul %76, %77, %cst_51 {dimension_numbers = #tpu.dot_dimension_numbers<[1], [0], [0], [1], [0, 0, 1, 1], [], []>} : vector<8x256xbf16>, vector<256x1024xbf16>, vector<8x1024xf32> -> vector<8x1024xf32>
    %c8 = arith.constant 8 : index
    %c0_52 = arith.constant 0 : index
    %79 = vector.load %arg8[%c8, %c0_52] : memref<64x1024xf32, #tpu.memory_space<vmem>>, vector<8x512xf32>
    %80 = vector.extract_strided_slice %78 {offsets = [0, 0], sizes = [8, 512], strides = [1, 1]} : vector<8x1024xf32> to vector<8x512xf32>
    %81 = arith.addf %79, %80 : vector<8x512xf32>
    %c48 = arith.constant 48 : index
    %c512_53 = arith.constant 512 : index
    %82 = vector.load %arg8[%c48, %c512_53] : memref<64x1024xf32, #tpu.memory_space<vmem>>, vector<8x512xf32>
    %83 = vector.extract_strided_slice %78 {offsets = [0, 512], sizes = [8, 512], strides = [1, 1]} : vector<8x1024xf32> to vector<8x512xf32>
    %84 = arith.addf %82, %83 : vector<8x512xf32>
    %85 = vector.extract_strided_slice %81 {offsets = [0, 0], sizes = [8, 128], strides = [1, 1]} : vector<8x512xf32> to vector<8x128xf32>
    %86 = vector.extract_strided_slice %84 {offsets = [0, 0], sizes = [8, 128], strides = [1, 1]} : vector<8x512xf32> to vector<8x128xf32>
    %87 = tpu.concatenate %85, %86 in 1 : vector<8x128xf32>, vector<8x128xf32> -> vector<8x256xf32>
    %88 = arith.negf %87 : vector<8x256xf32>
    %89 = math.exp %88 : vector<8x256xf32>
    %cst_54 = arith.constant 1.000000e+00 : f32
    %90 = vector.broadcast %cst_54 : f32 to vector<8x256xf32>
    %91 = arith.addf %90, %89 : vector<8x256xf32>
    %92 = arith.divf %90, %91 : vector<8x256xf32>
    %93 = vector.extract_strided_slice %81 {offsets = [0, 128], sizes = [8, 128], strides = [1, 1]} : vector<8x512xf32> to vector<8x128xf32>
    %94 = vector.extract_strided_slice %84 {offsets = [0, 128], sizes = [8, 128], strides = [1, 1]} : vector<8x512xf32> to vector<8x128xf32>
    %95 = tpu.concatenate %93, %94 in 1 : vector<8x128xf32>, vector<8x128xf32> -> vector<8x256xf32>
    %96 = arith.negf %95 : vector<8x256xf32>
    %97 = math.exp %96 : vector<8x256xf32>
    %cst_55 = arith.constant 1.000000e+00 : f32
    %98 = vector.broadcast %cst_55 : f32 to vector<8x256xf32>
    %99 = arith.addf %98, %97 : vector<8x256xf32>
    %100 = arith.divf %98, %99 : vector<8x256xf32>
    %101 = vector.extract_strided_slice %81 {offsets = [0, 256], sizes = [8, 128], strides = [1, 1]} : vector<8x512xf32> to vector<8x128xf32>
    %102 = vector.extract_strided_slice %84 {offsets = [0, 256], sizes = [8, 128], strides = [1, 1]} : vector<8x512xf32> to vector<8x128xf32>
    %103 = tpu.concatenate %101, %102 in 1 : vector<8x128xf32>, vector<8x128xf32> -> vector<8x256xf32>
    %104 = math.tanh %103 : vector<8x256xf32>
    %105 = vector.extract_strided_slice %81 {offsets = [0, 384], sizes = [8, 128], strides = [1, 1]} : vector<8x512xf32> to vector<8x128xf32>
    %106 = vector.extract_strided_slice %84 {offsets = [0, 384], sizes = [8, 128], strides = [1, 1]} : vector<8x512xf32> to vector<8x128xf32>
    %107 = tpu.concatenate %105, %106 in 1 : vector<8x128xf32>, vector<8x128xf32> -> vector<8x256xf32>
    %108 = arith.negf %107 : vector<8x256xf32>
    %109 = math.exp %108 : vector<8x256xf32>
    %cst_56 = arith.constant 1.000000e+00 : f32
    %110 = vector.broadcast %cst_56 : f32 to vector<8x256xf32>
    %111 = arith.addf %110, %109 : vector<8x256xf32>
    %112 = arith.divf %110, %111 : vector<8x256xf32>
    %c0_57 = arith.constant 0 : index
    %c0_58 = arith.constant 0 : index
    %113 = vector.load %arg10[%c0_57, %c0_58] : memref<8x256xf32, #tpu.memory_space<vmem>>, vector<8x256xf32>
    %114 = arith.mulf %100, %113 : vector<8x256xf32>
    %115 = arith.mulf %92, %104 : vector<8x256xf32>
    %116 = arith.addf %114, %115 : vector<8x256xf32>
    %117 = math.tanh %116 : vector<8x256xf32>
    %118 = arith.mulf %112, %117 : vector<8x256xf32>
    %c0_59 = arith.constant 0 : index
    %c0_60 = arith.constant 0 : index
    %119 = vector.load %arg10[%c0_59, %c0_60] : memref<8x256xf32, #tpu.memory_space<vmem>>, vector<8x256xf32>
    tpu.vector_store %arg10[%c0_59, %c0_60], %116 {strides = array<i32>} : memref<8x256xf32, #tpu.memory_space<vmem>>, vector<8x256xf32>,
    %c0_61 = arith.constant 0 : index
    %c0_62 = arith.constant 0 : index
    %120 = vector.load %arg9[%c0_61, %c0_62] : memref<8x256xf32, #tpu.memory_space<vmem>>, vector<8x256xf32>
    tpu.vector_store %arg9[%c0_61, %c0_62], %118 {strides = array<i32>} : memref<8x256xf32, #tpu.memory_space<vmem>>, vector<8x256xf32>,
    %121 = arith.truncf %118 : vector<8x256xf32> to vector<8x256xbf16>
    %c8_63 = arith.constant 8 : index
    %c0_64 = arith.constant 0 : index
    %122 = vector.load %arg7[%c8_63, %c0_64] : memref<64x128xf32, #tpu.memory_space<vmem>>, vector<8x128xf32>
    %123 = vector.extract_strided_slice %121 {offsets = [0, 0], sizes = [8, 128], strides = [1, 1]} : vector<8x256xbf16> to vector<8x128xbf16>
    %c0_65 = arith.constant 0 : index
    %c0_66 = arith.constant 0 : index
    %124 = vector.load %arg5[%c0_65, %c0_66] : memref<256x128xbf16, #tpu.memory_space<vmem>>, vector<128x128xbf16>
    %cst_67 = arith.constant dense<0.000000e+00> : vector<8x128xf32>
    %125 = tpu.matmul %123, %124, %cst_67 {dimension_numbers = #tpu.dot_dimension_numbers<[1], [0], [0], [1], [0, 0, 1, 1], [], []>} : vector<8x128xbf16>, vector<128x128xbf16>, vector<8x128xf32> -> vector<8x128xf32>
    %126 = arith.addf %122, %125 : vector<8x128xf32>
    %c8_68 = arith.constant 8 : index
    %c0_69 = arith.constant 0 : index
    %127 = vector.load %arg7[%c8_68, %c0_69] : memref<64x128xf32, #tpu.memory_space<vmem>>, vector<8x128xf32>
    tpu.vector_store %arg7[%c8_68, %c0_69], %126 {strides = array<i32>} : memref<64x128xf32, #tpu.memory_space<vmem>>, vector<8x128xf32>,
    %c48_70 = arith.constant 48 : index
    %c0_71 = arith.constant 0 : index
    %128 = vector.load %arg7[%c48_70, %c0_71] : memref<64x128xf32, #tpu.memory_space<vmem>>, vector<8x128xf32>
    %129 = vector.extract_strided_slice %121 {offsets = [0, 128], sizes = [8, 128], strides = [1, 1]} : vector<8x256xbf16> to vector<8x128xbf16>
    %c128_72 = arith.constant 128 : index
    %c0_73 = arith.constant 0 : index
    %130 = vector.load %arg5[%c128_72, %c0_73] : memref<256x128xbf16, #tpu.memory_space<vmem>>, vector<128x128xbf16>
    %cst_74 = arith.constant dense<0.000000e+00> : vector<8x128xf32>
    %131 = tpu.matmul %129, %130, %cst_74 {dimension_numbers = #tpu.dot_dimension_numbers<[1], [0], [0], [1], [0, 0, 1, 1], [], []>} : vector<8x128xbf16>, vector<128x128xbf16>, vector<8x128xf32> -> vector<8x128xf32>
    %132 = arith.addf %128, %131 : vector<8x128xf32>
    %c48_75 = arith.constant 48 : index
    %c0_76 = arith.constant 0 : index
    %133 = vector.load %arg7[%c48_75, %c0_76] : memref<64x128xf32, #tpu.memory_space<vmem>>, vector<8x128xf32>
    tpu.vector_store %arg7[%c48_75, %c0_76], %132 {strides = array<i32>} : memref<64x128xf32, #tpu.memory_space<vmem>>, vector<8x128xf32>,
    %c0_77 = arith.constant 0 : index
    %c0_78 = arith.constant 0 : index
    %134 = vector.load %arg9[%c0_77, %c0_78] : memref<8x256xf32, #tpu.memory_space<vmem>>, vector<8x256xf32>
    %135 = arith.truncf %134 : vector<8x256xf32> to vector<8x256xbf16>
    %c0_79 = arith.constant 0 : index
    %c0_80 = arith.constant 0 : index
    %136 = vector.load %arg3[%c0_79, %c0_80] : memref<256x1024xbf16, #tpu.memory_space<vmem>>, vector<256x1024xbf16>
    %cst_81 = arith.constant dense<0.000000e+00> : vector<8x1024xf32>
    %137 = tpu.matmul %135, %136, %cst_81 {dimension_numbers = #tpu.dot_dimension_numbers<[1], [0], [0], [1], [0, 0, 1, 1], [], []>} : vector<8x256xbf16>, vector<256x1024xbf16>, vector<8x1024xf32> -> vector<8x1024xf32>
    %c16 = arith.constant 16 : index
    %c0_82 = arith.constant 0 : index
    %138 = vector.load %arg8[%c16, %c0_82] : memref<64x1024xf32, #tpu.memory_space<vmem>>, vector<8x512xf32>
    %139 = vector.extract_strided_slice %137 {offsets = [0, 0], sizes = [8, 512], strides = [1, 1]} : vector<8x1024xf32> to vector<8x512xf32>
    %140 = arith.addf %138, %139 : vector<8x512xf32>
    %c40 = arith.constant 40 : index
    %c512_83 = arith.constant 512 : index
    %141 = vector.load %arg8[%c40, %c512_83] : memref<64x1024xf32, #tpu.memory_space<vmem>>, vector<8x512xf32>
    %142 = vector.extract_strided_slice %137 {offsets = [0, 512], sizes = [8, 512], strides = [1, 1]} : vector<8x1024xf32> to vector<8x512xf32>
    %143 = arith.addf %141, %142 : vector<8x512xf32>
    %144 = vector.extract_strided_slice %140 {offsets = [0, 0], sizes = [8, 128], strides = [1, 1]} : vector<8x512xf32> to vector<8x128xf32>
    %145 = vector.extract_strided_slice %143 {offsets = [0, 0], sizes = [8, 128], strides = [1, 1]} : vector<8x512xf32> to vector<8x128xf32>
    %146 = tpu.concatenate %144, %145 in 1 : vector<8x128xf32>, vector<8x128xf32> -> vector<8x256xf32>
    %147 = arith.negf %146 : vector<8x256xf32>
    %148 = math.exp %147 : vector<8x256xf32>
    %cst_84 = arith.constant 1.000000e+00 : f32
    %149 = vector.broadcast %cst_84 : f32 to vector<8x256xf32>
    %150 = arith.addf %149, %148 : vector<8x256xf32>
    %151 = arith.divf %149, %150 : vector<8x256xf32>
    %152 = vector.extract_strided_slice %140 {offsets = [0, 128], sizes = [8, 128], strides = [1, 1]} : vector<8x512xf32> to vector<8x128xf32>
    %153 = vector.extract_strided_slice %143 {offsets = [0, 128], sizes = [8, 128], strides = [1, 1]} : vector<8x512xf32> to vector<8x128xf32>
    %154 = tpu.concatenate %152, %153 in 1 : vector<8x128xf32>, vector<8x128xf32> -> vector<8x256xf32>
    %155 = arith.negf %154 : vector<8x256xf32>
    %156 = math.exp %155 : vector<8x256xf32>
    %cst_85 = arith.constant 1.000000e+00 : f32
    %157 = vector.broadcast %cst_85 : f32 to vector<8x256xf32>
    %158 = arith.addf %157, %156 : vector<8x256xf32>
    %159 = arith.divf %157, %158 : vector<8x256xf32>
    %160 = vector.extract_strided_slice %140 {offsets = [0, 256], sizes = [8, 128], strides = [1, 1]} : vector<8x512xf32> to vector<8x128xf32>
    %161 = vector.extract_strided_slice %143 {offsets = [0, 256], sizes = [8, 128], strides = [1, 1]} : vector<8x512xf32> to vector<8x128xf32>
    %162 = tpu.concatenate %160, %161 in 1 : vector<8x128xf32>, vector<8x128xf32> -> vector<8x256xf32>
    %163 = math.tanh %162 : vector<8x256xf32>
    %164 = vector.extract_strided_slice %140 {offsets = [0, 384], sizes = [8, 128], strides = [1, 1]} : vector<8x512xf32> to vector<8x128xf32>
    %165 = vector.extract_strided_slice %143 {offsets = [0, 384], sizes = [8, 128], strides = [1, 1]} : vector<8x512xf32> to vector<8x128xf32>
    %166 = tpu.concatenate %164, %165 in 1 : vector<8x128xf32>, vector<8x128xf32> -> vector<8x256xf32>
    %167 = arith.negf %166 : vector<8x256xf32>
    %168 = math.exp %167 : vector<8x256xf32>
    %cst_86 = arith.constant 1.000000e+00 : f32
    %169 = vector.broadcast %cst_86 : f32 to vector<8x256xf32>
    %170 = arith.addf %169, %168 : vector<8x256xf32>
    %171 = arith.divf %169, %170 : vector<8x256xf32>
    %c0_87 = arith.constant 0 : index
    %c0_88 = arith.constant 0 : index
    %172 = vector.load %arg10[%c0_87, %c0_88] : memref<8x256xf32, #tpu.memory_space<vmem>>, vector<8x256xf32>
    %173 = arith.mulf %159, %172 : vector<8x256xf32>
    %174 = arith.mulf %151, %163 : vector<8x256xf32>
    %175 = arith.addf %173, %174 : vector<8x256xf32>
    %176 = math.tanh %175 : vector<8x256xf32>
    %177 = arith.mulf %171, %176 : vector<8x256xf32>
    %c0_89 = arith.constant 0 : index
    %c0_90 = arith.constant 0 : index
    %178 = vector.load %arg10[%c0_89, %c0_90] : memref<8x256xf32, #tpu.memory_space<vmem>>, vector<8x256xf32>
    tpu.vector_store %arg10[%c0_89, %c0_90], %175 {strides = array<i32>} : memref<8x256xf32, #tpu.memory_space<vmem>>, vector<8x256xf32>,
    %c0_91 = arith.constant 0 : index
    %c0_92 = arith.constant 0 : index
    %179 = vector.load %arg9[%c0_91, %c0_92] : memref<8x256xf32, #tpu.memory_space<vmem>>, vector<8x256xf32>
    tpu.vector_store %arg9[%c0_91, %c0_92], %177 {strides = array<i32>} : memref<8x256xf32, #tpu.memory_space<vmem>>, vector<8x256xf32>,
    %180 = arith.truncf %177 : vector<8x256xf32> to vector<8x256xbf16>
    %c16_93 = arith.constant 16 : index
    %c0_94 = arith.constant 0 : index
    %181 = vector.load %arg7[%c16_93, %c0_94] : memref<64x128xf32, #tpu.memory_space<vmem>>, vector<8x128xf32>
    %182 = vector.extract_strided_slice %180 {offsets = [0, 0], sizes = [8, 128], strides = [1, 1]} : vector<8x256xbf16> to vector<8x128xbf16>
    %c0_95 = arith.constant 0 : index
    %c0_96 = arith.constant 0 : index
    %183 = vector.load %arg5[%c0_95, %c0_96] : memref<256x128xbf16, #tpu.memory_space<vmem>>, vector<128x128xbf16>
    %cst_97 = arith.constant dense<0.000000e+00> : vector<8x128xf32>
    %184 = tpu.matmul %182, %183, %cst_97 {dimension_numbers = #tpu.dot_dimension_numbers<[1], [0], [0], [1], [0, 0, 1, 1], [], []>} : vector<8x128xbf16>, vector<128x128xbf16>, vector<8x128xf32> -> vector<8x128xf32>
    %185 = arith.addf %181, %184 : vector<8x128xf32>
    %c16_98 = arith.constant 16 : index
    %c0_99 = arith.constant 0 : index
    %186 = vector.load %arg7[%c16_98, %c0_99] : memref<64x128xf32, #tpu.memory_space<vmem>>, vector<8x128xf32>
    tpu.vector_store %arg7[%c16_98, %c0_99], %185 {strides = array<i32>} : memref<64x128xf32, #tpu.memory_space<vmem>>, vector<8x128xf32>,
    %c40_100 = arith.constant 40 : index
    %c0_101 = arith.constant 0 : index
    %187 = vector.load %arg7[%c40_100, %c0_101] : memref<64x128xf32, #tpu.memory_space<vmem>>, vector<8x128xf32>
    %188 = vector.extract_strided_slice %180 {offsets = [0, 128], sizes = [8, 128], strides = [1, 1]} : vector<8x256xbf16> to vector<8x128xbf16>
    %c128_102 = arith.constant 128 : index
    %c0_103 = arith.constant 0 : index
    %189 = vector.load %arg5[%c128_102, %c0_103] : memref<256x128xbf16, #tpu.memory_space<vmem>>, vector<128x128xbf16>
    %cst_104 = arith.constant dense<0.000000e+00> : vector<8x128xf32>
    %190 = tpu.matmul %188, %189, %cst_104 {dimension_numbers = #tpu.dot_dimension_numbers<[1], [0], [0], [1], [0, 0, 1, 1], [], []>} : vector<8x128xbf16>, vector<128x128xbf16>, vector<8x128xf32> -> vector<8x128xf32>
    %191 = arith.addf %187, %190 : vector<8x128xf32>
    %c40_105 = arith.constant 40 : index
    %c0_106 = arith.constant 0 : index
    %192 = vector.load %arg7[%c40_105, %c0_106] : memref<64x128xf32, #tpu.memory_space<vmem>>, vector<8x128xf32>
    tpu.vector_store %arg7[%c40_105, %c0_106], %191 {strides = array<i32>} : memref<64x128xf32, #tpu.memory_space<vmem>>, vector<8x128xf32>,
    %c0_107 = arith.constant 0 : index
    %c0_108 = arith.constant 0 : index
    %193 = vector.load %arg9[%c0_107, %c0_108] : memref<8x256xf32, #tpu.memory_space<vmem>>, vector<8x256xf32>
    %194 = arith.truncf %193 : vector<8x256xf32> to vector<8x256xbf16>
    %c0_109 = arith.constant 0 : index
    %c0_110 = arith.constant 0 : index
    %195 = vector.load %arg3[%c0_109, %c0_110] : memref<256x1024xbf16, #tpu.memory_space<vmem>>, vector<256x1024xbf16>
    %cst_111 = arith.constant dense<0.000000e+00> : vector<8x1024xf32>
    %196 = tpu.matmul %194, %195, %cst_111 {dimension_numbers = #tpu.dot_dimension_numbers<[1], [0], [0], [1], [0, 0, 1, 1], [], []>} : vector<8x256xbf16>, vector<256x1024xbf16>, vector<8x1024xf32> -> vector<8x1024xf32>
    %c24 = arith.constant 24 : index
    %c0_112 = arith.constant 0 : index
    %197 = vector.load %arg8[%c24, %c0_112] : memref<64x1024xf32, #tpu.memory_space<vmem>>, vector<8x512xf32>
    %198 = vector.extract_strided_slice %196 {offsets = [0, 0], sizes = [8, 512], strides = [1, 1]} : vector<8x1024xf32> to vector<8x512xf32>
    %199 = arith.addf %197, %198 : vector<8x512xf32>
    %c32 = arith.constant 32 : index
    %c512_113 = arith.constant 512 : index
    %200 = vector.load %arg8[%c32, %c512_113] : memref<64x1024xf32, #tpu.memory_space<vmem>>, vector<8x512xf32>
    %201 = vector.extract_strided_slice %196 {offsets = [0, 512], sizes = [8, 512], strides = [1, 1]} : vector<8x1024xf32> to vector<8x512xf32>
    %202 = arith.addf %200, %201 : vector<8x512xf32>
    %203 = vector.extract_strided_slice %199 {offsets = [0, 0], sizes = [8, 128], strides = [1, 1]} : vector<8x512xf32> to vector<8x128xf32>
    %204 = vector.extract_strided_slice %202 {offsets = [0, 0], sizes = [8, 128], strides = [1, 1]} : vector<8x512xf32> to vector<8x128xf32>
    %205 = tpu.concatenate %203, %204 in 1 : vector<8x128xf32>, vector<8x128xf32> -> vector<8x256xf32>
    %206 = arith.negf %205 : vector<8x256xf32>
    %207 = math.exp %206 : vector<8x256xf32>
    %cst_114 = arith.constant 1.000000e+00 : f32
    %208 = vector.broadcast %cst_114 : f32 to vector<8x256xf32>
    %209 = arith.addf %208, %207 : vector<8x256xf32>
    %210 = arith.divf %208, %209 : vector<8x256xf32>
    %211 = vector.extract_strided_slice %199 {offsets = [0, 128], sizes = [8, 128], strides = [1, 1]} : vector<8x512xf32> to vector<8x128xf32>
    %212 = vector.extract_strided_slice %202 {offsets = [0, 128], sizes = [8, 128], strides = [1, 1]} : vector<8x512xf32> to vector<8x128xf32>
    %213 = tpu.concatenate %211, %212 in 1 : vector<8x128xf32>, vector<8x128xf32> -> vector<8x256xf32>
    %214 = arith.negf %213 : vector<8x256xf32>
    %215 = math.exp %214 : vector<8x256xf32>
    %cst_115 = arith.constant 1.000000e+00 : f32
    %216 = vector.broadcast %cst_115 : f32 to vector<8x256xf32>
    %217 = arith.addf %216, %215 : vector<8x256xf32>
    %218 = arith.divf %216, %217 : vector<8x256xf32>
    %219 = vector.extract_strided_slice %199 {offsets = [0, 256], sizes = [8, 128], strides = [1, 1]} : vector<8x512xf32> to vector<8x128xf32>
    %220 = vector.extract_strided_slice %202 {offsets = [0, 256], sizes = [8, 128], strides = [1, 1]} : vector<8x512xf32> to vector<8x128xf32>
    %221 = tpu.concatenate %219, %220 in 1 : vector<8x128xf32>, vector<8x128xf32> -> vector<8x256xf32>
    %222 = math.tanh %221 : vector<8x256xf32>
    %223 = vector.extract_strided_slice %199 {offsets = [0, 384], sizes = [8, 128], strides = [1, 1]} : vector<8x512xf32> to vector<8x128xf32>
    %224 = vector.extract_strided_slice %202 {offsets = [0, 384], sizes = [8, 128], strides = [1, 1]} : vector<8x512xf32> to vector<8x128xf32>
    %225 = tpu.concatenate %223, %224 in 1 : vector<8x128xf32>, vector<8x128xf32> -> vector<8x256xf32>
    %226 = arith.negf %225 : vector<8x256xf32>
    %227 = math.exp %226 : vector<8x256xf32>
    %cst_116 = arith.constant 1.000000e+00 : f32
    %228 = vector.broadcast %cst_116 : f32 to vector<8x256xf32>
    %229 = arith.addf %228, %227 : vector<8x256xf32>
    %230 = arith.divf %228, %229 : vector<8x256xf32>
    %c0_117 = arith.constant 0 : index
    %c0_118 = arith.constant 0 : index
    %231 = vector.load %arg10[%c0_117, %c0_118] : memref<8x256xf32, #tpu.memory_space<vmem>>, vector<8x256xf32>
    %232 = arith.mulf %218, %231 : vector<8x256xf32>
    %233 = arith.mulf %210, %222 : vector<8x256xf32>
    %234 = arith.addf %232, %233 : vector<8x256xf32>
    %235 = math.tanh %234 : vector<8x256xf32>
    %236 = arith.mulf %230, %235 : vector<8x256xf32>
    %c0_119 = arith.constant 0 : index
    %c0_120 = arith.constant 0 : index
    %237 = vector.load %arg10[%c0_119, %c0_120] : memref<8x256xf32, #tpu.memory_space<vmem>>, vector<8x256xf32>
    tpu.vector_store %arg10[%c0_119, %c0_120], %234 {strides = array<i32>} : memref<8x256xf32, #tpu.memory_space<vmem>>, vector<8x256xf32>,
    %c0_121 = arith.constant 0 : index
    %c0_122 = arith.constant 0 : index
    %238 = vector.load %arg9[%c0_121, %c0_122] : memref<8x256xf32, #tpu.memory_space<vmem>>, vector<8x256xf32>
    tpu.vector_store %arg9[%c0_121, %c0_122], %236 {strides = array<i32>} : memref<8x256xf32, #tpu.memory_space<vmem>>, vector<8x256xf32>,
    %239 = arith.truncf %236 : vector<8x256xf32> to vector<8x256xbf16>
    %c24_123 = arith.constant 24 : index
    %c0_124 = arith.constant 0 : index
    %240 = vector.load %arg7[%c24_123, %c0_124] : memref<64x128xf32, #tpu.memory_space<vmem>>, vector<8x128xf32>
    %241 = vector.extract_strided_slice %239 {offsets = [0, 0], sizes = [8, 128], strides = [1, 1]} : vector<8x256xbf16> to vector<8x128xbf16>
    %c0_125 = arith.constant 0 : index
    %c0_126 = arith.constant 0 : index
    %242 = vector.load %arg5[%c0_125, %c0_126] : memref<256x128xbf16, #tpu.memory_space<vmem>>, vector<128x128xbf16>
    %cst_127 = arith.constant dense<0.000000e+00> : vector<8x128xf32>
    %243 = tpu.matmul %241, %242, %cst_127 {dimension_numbers = #tpu.dot_dimension_numbers<[1], [0], [0], [1], [0, 0, 1, 1], [], []>} : vector<8x128xbf16>, vector<128x128xbf16>, vector<8x128xf32> -> vector<8x128xf32>
    %244 = arith.addf %240, %243 : vector<8x128xf32>
    %c24_128 = arith.constant 24 : index
    %c0_129 = arith.constant 0 : index
    %245 = vector.load %arg7[%c24_128, %c0_129] : memref<64x128xf32, #tpu.memory_space<vmem>>, vector<8x128xf32>
    tpu.vector_store %arg7[%c24_128, %c0_129], %244 {strides = array<i32>} : memref<64x128xf32, #tpu.memory_space<vmem>>, vector<8x128xf32>,
    %c32_130 = arith.constant 32 : index
    %c0_131 = arith.constant 0 : index
    %246 = vector.load %arg7[%c32_130, %c0_131] : memref<64x128xf32, #tpu.memory_space<vmem>>, vector<8x128xf32>
    %247 = vector.extract_strided_slice %239 {offsets = [0, 128], sizes = [8, 128], strides = [1, 1]} : vector<8x256xbf16> to vector<8x128xbf16>
    %c128_132 = arith.constant 128 : index
    %c0_133 = arith.constant 0 : index
    %248 = vector.load %arg5[%c128_132, %c0_133] : memref<256x128xbf16, #tpu.memory_space<vmem>>, vector<128x128xbf16>
    %cst_134 = arith.constant dense<0.000000e+00> : vector<8x128xf32>
    %249 = tpu.matmul %247, %248, %cst_134 {dimension_numbers = #tpu.dot_dimension_numbers<[1], [0], [0], [1], [0, 0, 1, 1], [], []>} : vector<8x128xbf16>, vector<128x128xbf16>, vector<8x128xf32> -> vector<8x128xf32>
    %250 = arith.addf %246, %249 : vector<8x128xf32>
    %c32_135 = arith.constant 32 : index
    %c0_136 = arith.constant 0 : index
    %251 = vector.load %arg7[%c32_135, %c0_136] : memref<64x128xf32, #tpu.memory_space<vmem>>, vector<8x128xf32>
    tpu.vector_store %arg7[%c32_135, %c0_136], %250 {strides = array<i32>} : memref<64x128xf32, #tpu.memory_space<vmem>>, vector<8x128xf32>,
    %c0_137 = arith.constant 0 : index
    %c0_138 = arith.constant 0 : index
    %252 = vector.load %arg9[%c0_137, %c0_138] : memref<8x256xf32, #tpu.memory_space<vmem>>, vector<8x256xf32>
    %253 = arith.truncf %252 : vector<8x256xf32> to vector<8x256xbf16>
    %c0_139 = arith.constant 0 : index
    %c0_140 = arith.constant 0 : index
    %254 = vector.load %arg3[%c0_139, %c0_140] : memref<256x1024xbf16, #tpu.memory_space<vmem>>, vector<256x1024xbf16>
    %cst_141 = arith.constant dense<0.000000e+00> : vector<8x1024xf32>
    %255 = tpu.matmul %253, %254, %cst_141 {dimension_numbers = #tpu.dot_dimension_numbers<[1], [0], [0], [1], [0, 0, 1, 1], [], []>} : vector<8x256xbf16>, vector<256x1024xbf16>, vector<8x1024xf32> -> vector<8x1024xf32>
    %c32_142 = arith.constant 32 : index
    %c0_143 = arith.constant 0 : index
    %256 = vector.load %arg8[%c32_142, %c0_143] : memref<64x1024xf32, #tpu.memory_space<vmem>>, vector<8x512xf32>
    %257 = vector.extract_strided_slice %255 {offsets = [0, 0], sizes = [8, 512], strides = [1, 1]} : vector<8x1024xf32> to vector<8x512xf32>
    %258 = arith.addf %256, %257 : vector<8x512xf32>
    %c24_144 = arith.constant 24 : index
    %c512_145 = arith.constant 512 : index
    %259 = vector.load %arg8[%c24_144, %c512_145] : memref<64x1024xf32, #tpu.memory_space<vmem>>, vector<8x512xf32>
    %260 = vector.extract_strided_slice %255 {offsets = [0, 512], sizes = [8, 512], strides = [1, 1]} : vector<8x1024xf32> to vector<8x512xf32>
    %261 = arith.addf %259, %260 : vector<8x512xf32>
    %262 = vector.extract_strided_slice %258 {offsets = [0, 0], sizes = [8, 128], strides = [1, 1]} : vector<8x512xf32> to vector<8x128xf32>
    %263 = vector.extract_strided_slice %261 {offsets = [0, 0], sizes = [8, 128], strides = [1, 1]} : vector<8x512xf32> to vector<8x128xf32>
    %264 = tpu.concatenate %262, %263 in 1 : vector<8x128xf32>, vector<8x128xf32> -> vector<8x256xf32>
    %265 = arith.negf %264 : vector<8x256xf32>
    %266 = math.exp %265 : vector<8x256xf32>
    %cst_146 = arith.constant 1.000000e+00 : f32
    %267 = vector.broadcast %cst_146 : f32 to vector<8x256xf32>
    %268 = arith.addf %267, %266 : vector<8x256xf32>
    %269 = arith.divf %267, %268 : vector<8x256xf32>
    %270 = vector.extract_strided_slice %258 {offsets = [0, 128], sizes = [8, 128], strides = [1, 1]} : vector<8x512xf32> to vector<8x128xf32>
    %271 = vector.extract_strided_slice %261 {offsets = [0, 128], sizes = [8, 128], strides = [1, 1]} : vector<8x512xf32> to vector<8x128xf32>
    %272 = tpu.concatenate %270, %271 in 1 : vector<8x128xf32>, vector<8x128xf32> -> vector<8x256xf32>
    %273 = arith.negf %272 : vector<8x256xf32>
    %274 = math.exp %273 : vector<8x256xf32>
    %cst_147 = arith.constant 1.000000e+00 : f32
    %275 = vector.broadcast %cst_147 : f32 to vector<8x256xf32>
    %276 = arith.addf %275, %274 : vector<8x256xf32>
    %277 = arith.divf %275, %276 : vector<8x256xf32>
    %278 = vector.extract_strided_slice %258 {offsets = [0, 256], sizes = [8, 128], strides = [1, 1]} : vector<8x512xf32> to vector<8x128xf32>
    %279 = vector.extract_strided_slice %261 {offsets = [0, 256], sizes = [8, 128], strides = [1, 1]} : vector<8x512xf32> to vector<8x128xf32>
    %280 = tpu.concatenate %278, %279 in 1 : vector<8x128xf32>, vector<8x128xf32> -> vector<8x256xf32>
    %281 = math.tanh %280 : vector<8x256xf32>
    %282 = vector.extract_strided_slice %258 {offsets = [0, 384], sizes = [8, 128], strides = [1, 1]} : vector<8x512xf32> to vector<8x128xf32>
    %283 = vector.extract_strided_slice %261 {offsets = [0, 384], sizes = [8, 128], strides = [1, 1]} : vector<8x512xf32> to vector<8x128xf32>
    %284 = tpu.concatenate %282, %283 in 1 : vector<8x128xf32>, vector<8x128xf32> -> vector<8x256xf32>
    %285 = arith.negf %284 : vector<8x256xf32>
    %286 = math.exp %285 : vector<8x256xf32>
    %cst_148 = arith.constant 1.000000e+00 : f32
    %287 = vector.broadcast %cst_148 : f32 to vector<8x256xf32>
    %288 = arith.addf %287, %286 : vector<8x256xf32>
    %289 = arith.divf %287, %288 : vector<8x256xf32>
    %c0_149 = arith.constant 0 : index
    %c0_150 = arith.constant 0 : index
    %290 = vector.load %arg10[%c0_149, %c0_150] : memref<8x256xf32, #tpu.memory_space<vmem>>, vector<8x256xf32>
    %291 = arith.mulf %277, %290 : vector<8x256xf32>
    %292 = arith.mulf %269, %281 : vector<8x256xf32>
    %293 = arith.addf %291, %292 : vector<8x256xf32>
    %294 = math.tanh %293 : vector<8x256xf32>
    %295 = arith.mulf %289, %294 : vector<8x256xf32>
    %c0_151 = arith.constant 0 : index
    %c0_152 = arith.constant 0 : index
    %296 = vector.load %arg10[%c0_151, %c0_152] : memref<8x256xf32, #tpu.memory_space<vmem>>, vector<8x256xf32>
    tpu.vector_store %arg10[%c0_151, %c0_152], %293 {strides = array<i32>} : memref<8x256xf32, #tpu.memory_space<vmem>>, vector<8x256xf32>,
    %c0_153 = arith.constant 0 : index
    %c0_154 = arith.constant 0 : index
    %297 = vector.load %arg9[%c0_153, %c0_154] : memref<8x256xf32, #tpu.memory_space<vmem>>, vector<8x256xf32>
    tpu.vector_store %arg9[%c0_153, %c0_154], %295 {strides = array<i32>} : memref<8x256xf32, #tpu.memory_space<vmem>>, vector<8x256xf32>,
    %298 = arith.truncf %295 : vector<8x256xf32> to vector<8x256xbf16>
    %c32_155 = arith.constant 32 : index
    %c0_156 = arith.constant 0 : index
    %299 = vector.load %arg7[%c32_155, %c0_156] : memref<64x128xf32, #tpu.memory_space<vmem>>, vector<8x128xf32>
    %300 = vector.extract_strided_slice %298 {offsets = [0, 0], sizes = [8, 128], strides = [1, 1]} : vector<8x256xbf16> to vector<8x128xbf16>
    %c0_157 = arith.constant 0 : index
    %c0_158 = arith.constant 0 : index
    %301 = vector.load %arg5[%c0_157, %c0_158] : memref<256x128xbf16, #tpu.memory_space<vmem>>, vector<128x128xbf16>
    %cst_159 = arith.constant dense<0.000000e+00> : vector<8x128xf32>
    %302 = tpu.matmul %300, %301, %cst_159 {dimension_numbers = #tpu.dot_dimension_numbers<[1], [0], [0], [1], [0, 0, 1, 1], [], []>} : vector<8x128xbf16>, vector<128x128xbf16>, vector<8x128xf32> -> vector<8x128xf32>
    %303 = arith.addf %299, %302 : vector<8x128xf32>
    %c32_160 = arith.constant 32 : index
    %c0_161 = arith.constant 0 : index
    %304 = vector.load %arg7[%c32_160, %c0_161] : memref<64x128xf32, #tpu.memory_space<vmem>>, vector<8x128xf32>
    tpu.vector_store %arg7[%c32_160, %c0_161], %303 {strides = array<i32>} : memref<64x128xf32, #tpu.memory_space<vmem>>, vector<8x128xf32>,
    %c24_162 = arith.constant 24 : index
    %c0_163 = arith.constant 0 : index
    %305 = vector.load %arg7[%c24_162, %c0_163] : memref<64x128xf32, #tpu.memory_space<vmem>>, vector<8x128xf32>
    %306 = vector.extract_strided_slice %298 {offsets = [0, 128], sizes = [8, 128], strides = [1, 1]} : vector<8x256xbf16> to vector<8x128xbf16>
    %c128_164 = arith.constant 128 : index
    %c0_165 = arith.constant 0 : index
    %307 = vector.load %arg5[%c128_164, %c0_165] : memref<256x128xbf16, #tpu.memory_space<vmem>>, vector<128x128xbf16>
    %cst_166 = arith.constant dense<0.000000e+00> : vector<8x128xf32>
    %308 = tpu.matmul %306, %307, %cst_166 {dimension_numbers = #tpu.dot_dimension_numbers<[1], [0], [0], [1], [0, 0, 1, 1], [], []>} : vector<8x128xbf16>, vector<128x128xbf16>, vector<8x128xf32> -> vector<8x128xf32>
    %309 = arith.addf %305, %308 : vector<8x128xf32>
    %c24_167 = arith.constant 24 : index
    %c0_168 = arith.constant 0 : index
    %310 = vector.load %arg7[%c24_167, %c0_168] : memref<64x128xf32, #tpu.memory_space<vmem>>, vector<8x128xf32>
    tpu.vector_store %arg7[%c24_167, %c0_168], %309 {strides = array<i32>} : memref<64x128xf32, #tpu.memory_space<vmem>>, vector<8x128xf32>,
    %c0_169 = arith.constant 0 : index
    %c0_170 = arith.constant 0 : index
    %311 = vector.load %arg9[%c0_169, %c0_170] : memref<8x256xf32, #tpu.memory_space<vmem>>, vector<8x256xf32>
    %312 = arith.truncf %311 : vector<8x256xf32> to vector<8x256xbf16>
    %c0_171 = arith.constant 0 : index
    %c0_172 = arith.constant 0 : index
    %313 = vector.load %arg3[%c0_171, %c0_172] : memref<256x1024xbf16, #tpu.memory_space<vmem>>, vector<256x1024xbf16>
    %cst_173 = arith.constant dense<0.000000e+00> : vector<8x1024xf32>
    %314 = tpu.matmul %312, %313, %cst_173 {dimension_numbers = #tpu.dot_dimension_numbers<[1], [0], [0], [1], [0, 0, 1, 1], [], []>} : vector<8x256xbf16>, vector<256x1024xbf16>, vector<8x1024xf32> -> vector<8x1024xf32>
    %c40_174 = arith.constant 40 : index
    %c0_175 = arith.constant 0 : index
    %315 = vector.load %arg8[%c40_174, %c0_175] : memref<64x1024xf32, #tpu.memory_space<vmem>>, vector<8x512xf32>
    %316 = vector.extract_strided_slice %314 {offsets = [0, 0], sizes = [8, 512], strides = [1, 1]} : vector<8x1024xf32> to vector<8x512xf32>
    %317 = arith.addf %315, %316 : vector<8x512xf32>
    %c16_176 = arith.constant 16 : index
    %c512_177 = arith.constant 512 : index
    %318 = vector.load %arg8[%c16_176, %c512_177] : memref<64x1024xf32, #tpu.memory_space<vmem>>, vector<8x512xf32>
    %319 = vector.extract_strided_slice %314 {offsets = [0, 512], sizes = [8, 512], strides = [1, 1]} : vector<8x1024xf32> to vector<8x512xf32>
    %320 = arith.addf %318, %319 : vector<8x512xf32>
    %321 = vector.extract_strided_slice %317 {offsets = [0, 0], sizes = [8, 128], strides = [1, 1]} : vector<8x512xf32> to vector<8x128xf32>
    %322 = vector.extract_strided_slice %320 {offsets = [0, 0], sizes = [8, 128], strides = [1, 1]} : vector<8x512xf32> to vector<8x128xf32>
    %323 = tpu.concatenate %321, %322 in 1 : vector<8x128xf32>, vector<8x128xf32> -> vector<8x256xf32>
    %324 = arith.negf %323 : vector<8x256xf32>
    %325 = math.exp %324 : vector<8x256xf32>
    %cst_178 = arith.constant 1.000000e+00 : f32
    %326 = vector.broadcast %cst_178 : f32 to vector<8x256xf32>
    %327 = arith.addf %326, %325 : vector<8x256xf32>
    %328 = arith.divf %326, %327 : vector<8x256xf32>
    %329 = vector.extract_strided_slice %317 {offsets = [0, 128], sizes = [8, 128], strides = [1, 1]} : vector<8x512xf32> to vector<8x128xf32>
    %330 = vector.extract_strided_slice %320 {offsets = [0, 128], sizes = [8, 128], strides = [1, 1]} : vector<8x512xf32> to vector<8x128xf32>
    %331 = tpu.concatenate %329, %330 in 1 : vector<8x128xf32>, vector<8x128xf32> -> vector<8x256xf32>
    %332 = arith.negf %331 : vector<8x256xf32>
    %333 = math.exp %332 : vector<8x256xf32>
    %cst_179 = arith.constant 1.000000e+00 : f32
    %334 = vector.broadcast %cst_179 : f32 to vector<8x256xf32>
    %335 = arith.addf %334, %333 : vector<8x256xf32>
    %336 = arith.divf %334, %335 : vector<8x256xf32>
    %337 = vector.extract_strided_slice %317 {offsets = [0, 256], sizes = [8, 128], strides = [1, 1]} : vector<8x512xf32> to vector<8x128xf32>
    %338 = vector.extract_strided_slice %320 {offsets = [0, 256], sizes = [8, 128], strides = [1, 1]} : vector<8x512xf32> to vector<8x128xf32>
    %339 = tpu.concatenate %337, %338 in 1 : vector<8x128xf32>, vector<8x128xf32> -> vector<8x256xf32>
    %340 = math.tanh %339 : vector<8x256xf32>
    %341 = vector.extract_strided_slice %317 {offsets = [0, 384], sizes = [8, 128], strides = [1, 1]} : vector<8x512xf32> to vector<8x128xf32>
    %342 = vector.extract_strided_slice %320 {offsets = [0, 384], sizes = [8, 128], strides = [1, 1]} : vector<8x512xf32> to vector<8x128xf32>
    %343 = tpu.concatenate %341, %342 in 1 : vector<8x128xf32>, vector<8x128xf32> -> vector<8x256xf32>
    %344 = arith.negf %343 : vector<8x256xf32>
    %345 = math.exp %344 : vector<8x256xf32>
    %cst_180 = arith.constant 1.000000e+00 : f32
    %346 = vector.broadcast %cst_180 : f32 to vector<8x256xf32>
    %347 = arith.addf %346, %345 : vector<8x256xf32>
    %348 = arith.divf %346, %347 : vector<8x256xf32>
    %c0_181 = arith.constant 0 : index
    %c0_182 = arith.constant 0 : index
    %349 = vector.load %arg10[%c0_181, %c0_182] : memref<8x256xf32, #tpu.memory_space<vmem>>, vector<8x256xf32>
    %350 = arith.mulf %336, %349 : vector<8x256xf32>
    %351 = arith.mulf %328, %340 : vector<8x256xf32>
    %352 = arith.addf %350, %351 : vector<8x256xf32>
    %353 = math.tanh %352 : vector<8x256xf32>
    %354 = arith.mulf %348, %353 : vector<8x256xf32>
    %c0_183 = arith.constant 0 : index
    %c0_184 = arith.constant 0 : index
    %355 = vector.load %arg10[%c0_183, %c0_184] : memref<8x256xf32, #tpu.memory_space<vmem>>, vector<8x256xf32>
    tpu.vector_store %arg10[%c0_183, %c0_184], %352 {strides = array<i32>} : memref<8x256xf32, #tpu.memory_space<vmem>>, vector<8x256xf32>,
    %c0_185 = arith.constant 0 : index
    %c0_186 = arith.constant 0 : index
    %356 = vector.load %arg9[%c0_185, %c0_186] : memref<8x256xf32, #tpu.memory_space<vmem>>, vector<8x256xf32>
    tpu.vector_store %arg9[%c0_185, %c0_186], %354 {strides = array<i32>} : memref<8x256xf32, #tpu.memory_space<vmem>>, vector<8x256xf32>,
    %357 = arith.truncf %354 : vector<8x256xf32> to vector<8x256xbf16>
    %c40_187 = arith.constant 40 : index
    %c0_188 = arith.constant 0 : index
    %358 = vector.load %arg7[%c40_187, %c0_188] : memref<64x128xf32, #tpu.memory_space<vmem>>, vector<8x128xf32>
    %359 = vector.extract_strided_slice %357 {offsets = [0, 0], sizes = [8, 128], strides = [1, 1]} : vector<8x256xbf16> to vector<8x128xbf16>
    %c0_189 = arith.constant 0 : index
    %c0_190 = arith.constant 0 : index
    %360 = vector.load %arg5[%c0_189, %c0_190] : memref<256x128xbf16, #tpu.memory_space<vmem>>, vector<128x128xbf16>
    %cst_191 = arith.constant dense<0.000000e+00> : vector<8x128xf32>
    %361 = tpu.matmul %359, %360, %cst_191 {dimension_numbers = #tpu.dot_dimension_numbers<[1], [0], [0], [1], [0, 0, 1, 1], [], []>} : vector<8x128xbf16>, vector<128x128xbf16>, vector<8x128xf32> -> vector<8x128xf32>
    %362 = arith.addf %358, %361 : vector<8x128xf32>
    %c40_192 = arith.constant 40 : index
    %c0_193 = arith.constant 0 : index
    %363 = vector.load %arg7[%c40_192, %c0_193] : memref<64x128xf32, #tpu.memory_space<vmem>>, vector<8x128xf32>
    tpu.vector_store %arg7[%c40_192, %c0_193], %362 {strides = array<i32>} : memref<64x128xf32, #tpu.memory_space<vmem>>, vector<8x128xf32>,
    %c16_194 = arith.constant 16 : index
    %c0_195 = arith.constant 0 : index
    %364 = vector.load %arg7[%c16_194, %c0_195] : memref<64x128xf32, #tpu.memory_space<vmem>>, vector<8x128xf32>
    %365 = vector.extract_strided_slice %357 {offsets = [0, 128], sizes = [8, 128], strides = [1, 1]} : vector<8x256xbf16> to vector<8x128xbf16>
    %c128_196 = arith.constant 128 : index
    %c0_197 = arith.constant 0 : index
    %366 = vector.load %arg5[%c128_196, %c0_197] : memref<256x128xbf16, #tpu.memory_space<vmem>>, vector<128x128xbf16>
    %cst_198 = arith.constant dense<0.000000e+00> : vector<8x128xf32>
    %367 = tpu.matmul %365, %366, %cst_198 {dimension_numbers = #tpu.dot_dimension_numbers<[1], [0], [0], [1], [0, 0, 1, 1], [], []>} : vector<8x128xbf16>, vector<128x128xbf16>, vector<8x128xf32> -> vector<8x128xf32>
    %368 = arith.addf %364, %367 : vector<8x128xf32>
    %c16_199 = arith.constant 16 : index
    %c0_200 = arith.constant 0 : index
    %369 = vector.load %arg7[%c16_199, %c0_200] : memref<64x128xf32, #tpu.memory_space<vmem>>, vector<8x128xf32>
    tpu.vector_store %arg7[%c16_199, %c0_200], %368 {strides = array<i32>} : memref<64x128xf32, #tpu.memory_space<vmem>>, vector<8x128xf32>,
    %c0_201 = arith.constant 0 : index
    %c0_202 = arith.constant 0 : index
    %370 = vector.load %arg9[%c0_201, %c0_202] : memref<8x256xf32, #tpu.memory_space<vmem>>, vector<8x256xf32>
    %371 = arith.truncf %370 : vector<8x256xf32> to vector<8x256xbf16>
    %c0_203 = arith.constant 0 : index
    %c0_204 = arith.constant 0 : index
    %372 = vector.load %arg3[%c0_203, %c0_204] : memref<256x1024xbf16, #tpu.memory_space<vmem>>, vector<256x1024xbf16>
    %cst_205 = arith.constant dense<0.000000e+00> : vector<8x1024xf32>
    %373 = tpu.matmul %371, %372, %cst_205 {dimension_numbers = #tpu.dot_dimension_numbers<[1], [0], [0], [1], [0, 0, 1, 1], [], []>} : vector<8x256xbf16>, vector<256x1024xbf16>, vector<8x1024xf32> -> vector<8x1024xf32>
    %c48_206 = arith.constant 48 : index
    %c0_207 = arith.constant 0 : index
    %374 = vector.load %arg8[%c48_206, %c0_207] : memref<64x1024xf32, #tpu.memory_space<vmem>>, vector<8x512xf32>
    %375 = vector.extract_strided_slice %373 {offsets = [0, 0], sizes = [8, 512], strides = [1, 1]} : vector<8x1024xf32> to vector<8x512xf32>
    %376 = arith.addf %374, %375 : vector<8x512xf32>
    %c8_208 = arith.constant 8 : index
    %c512_209 = arith.constant 512 : index
    %377 = vector.load %arg8[%c8_208, %c512_209] : memref<64x1024xf32, #tpu.memory_space<vmem>>, vector<8x512xf32>
    %378 = vector.extract_strided_slice %373 {offsets = [0, 512], sizes = [8, 512], strides = [1, 1]} : vector<8x1024xf32> to vector<8x512xf32>
    %379 = arith.addf %377, %378 : vector<8x512xf32>
    %380 = vector.extract_strided_slice %376 {offsets = [0, 0], sizes = [8, 128], strides = [1, 1]} : vector<8x512xf32> to vector<8x128xf32>
    %381 = vector.extract_strided_slice %379 {offsets = [0, 0], sizes = [8, 128], strides = [1, 1]} : vector<8x512xf32> to vector<8x128xf32>
    %382 = tpu.concatenate %380, %381 in 1 : vector<8x128xf32>, vector<8x128xf32> -> vector<8x256xf32>
    %383 = arith.negf %382 : vector<8x256xf32>
    %384 = math.exp %383 : vector<8x256xf32>
    %cst_210 = arith.constant 1.000000e+00 : f32
    %385 = vector.broadcast %cst_210 : f32 to vector<8x256xf32>
    %386 = arith.addf %385, %384 : vector<8x256xf32>
    %387 = arith.divf %385, %386 : vector<8x256xf32>
    %388 = vector.extract_strided_slice %376 {offsets = [0, 128], sizes = [8, 128], strides = [1, 1]} : vector<8x512xf32> to vector<8x128xf32>
    %389 = vector.extract_strided_slice %379 {offsets = [0, 128], sizes = [8, 128], strides = [1, 1]} : vector<8x512xf32> to vector<8x128xf32>
    %390 = tpu.concatenate %388, %389 in 1 : vector<8x128xf32>, vector<8x128xf32> -> vector<8x256xf32>
    %391 = arith.negf %390 : vector<8x256xf32>
    %392 = math.exp %391 : vector<8x256xf32>
    %cst_211 = arith.constant 1.000000e+00 : f32
    %393 = vector.broadcast %cst_211 : f32 to vector<8x256xf32>
    %394 = arith.addf %393, %392 : vector<8x256xf32>
    %395 = arith.divf %393, %394 : vector<8x256xf32>
    %396 = vector.extract_strided_slice %376 {offsets = [0, 256], sizes = [8, 128], strides = [1, 1]} : vector<8x512xf32> to vector<8x128xf32>
    %397 = vector.extract_strided_slice %379 {offsets = [0, 256], sizes = [8, 128], strides = [1, 1]} : vector<8x512xf32> to vector<8x128xf32>
    %398 = tpu.concatenate %396, %397 in 1 : vector<8x128xf32>, vector<8x128xf32> -> vector<8x256xf32>
    %399 = math.tanh %398 : vector<8x256xf32>
    %400 = vector.extract_strided_slice %376 {offsets = [0, 384], sizes = [8, 128], strides = [1, 1]} : vector<8x512xf32> to vector<8x128xf32>
    %401 = vector.extract_strided_slice %379 {offsets = [0, 384], sizes = [8, 128], strides = [1, 1]} : vector<8x512xf32> to vector<8x128xf32>
    %402 = tpu.concatenate %400, %401 in 1 : vector<8x128xf32>, vector<8x128xf32> -> vector<8x256xf32>
    %403 = arith.negf %402 : vector<8x256xf32>
    %404 = math.exp %403 : vector<8x256xf32>
    %cst_212 = arith.constant 1.000000e+00 : f32
    %405 = vector.broadcast %cst_212 : f32 to vector<8x256xf32>
    %406 = arith.addf %405, %404 : vector<8x256xf32>
    %407 = arith.divf %405, %406 : vector<8x256xf32>
    %c0_213 = arith.constant 0 : index
    %c0_214 = arith.constant 0 : index
    %408 = vector.load %arg10[%c0_213, %c0_214] : memref<8x256xf32, #tpu.memory_space<vmem>>, vector<8x256xf32>
    %409 = arith.mulf %395, %408 : vector<8x256xf32>
    %410 = arith.mulf %387, %399 : vector<8x256xf32>
    %411 = arith.addf %409, %410 : vector<8x256xf32>
    %412 = math.tanh %411 : vector<8x256xf32>
    %413 = arith.mulf %407, %412 : vector<8x256xf32>
    %c0_215 = arith.constant 0 : index
    %c0_216 = arith.constant 0 : index
    %414 = vector.load %arg10[%c0_215, %c0_216] : memref<8x256xf32, #tpu.memory_space<vmem>>, vector<8x256xf32>
    tpu.vector_store %arg10[%c0_215, %c0_216], %411 {strides = array<i32>} : memref<8x256xf32, #tpu.memory_space<vmem>>, vector<8x256xf32>,
    %c0_217 = arith.constant 0 : index
    %c0_218 = arith.constant 0 : index
    %415 = vector.load %arg9[%c0_217, %c0_218] : memref<8x256xf32, #tpu.memory_space<vmem>>, vector<8x256xf32>
    tpu.vector_store %arg9[%c0_217, %c0_218], %413 {strides = array<i32>} : memref<8x256xf32, #tpu.memory_space<vmem>>, vector<8x256xf32>,
    %416 = arith.truncf %413 : vector<8x256xf32> to vector<8x256xbf16>
    %c48_219 = arith.constant 48 : index
    %c0_220 = arith.constant 0 : index
    %417 = vector.load %arg7[%c48_219, %c0_220] : memref<64x128xf32, #tpu.memory_space<vmem>>, vector<8x128xf32>
    %418 = vector.extract_strided_slice %416 {offsets = [0, 0], sizes = [8, 128], strides = [1, 1]} : vector<8x256xbf16> to vector<8x128xbf16>
    %c0_221 = arith.constant 0 : index
    %c0_222 = arith.constant 0 : index
    %419 = vector.load %arg5[%c0_221, %c0_222] : memref<256x128xbf16, #tpu.memory_space<vmem>>, vector<128x128xbf16>
    %cst_223 = arith.constant dense<0.000000e+00> : vector<8x128xf32>
    %420 = tpu.matmul %418, %419, %cst_223 {dimension_numbers = #tpu.dot_dimension_numbers<[1], [0], [0], [1], [0, 0, 1, 1], [], []>} : vector<8x128xbf16>, vector<128x128xbf16>, vector<8x128xf32> -> vector<8x128xf32>
    %421 = arith.addf %417, %420 : vector<8x128xf32>
    %c48_224 = arith.constant 48 : index
    %c0_225 = arith.constant 0 : index
    %422 = vector.load %arg7[%c48_224, %c0_225] : memref<64x128xf32, #tpu.memory_space<vmem>>, vector<8x128xf32>
    tpu.vector_store %arg7[%c48_224, %c0_225], %421 {strides = array<i32>} : memref<64x128xf32, #tpu.memory_space<vmem>>, vector<8x128xf32>,
    %c8_226 = arith.constant 8 : index
    %c0_227 = arith.constant 0 : index
    %423 = vector.load %arg7[%c8_226, %c0_227] : memref<64x128xf32, #tpu.memory_space<vmem>>, vector<8x128xf32>
    %424 = vector.extract_strided_slice %416 {offsets = [0, 128], sizes = [8, 128], strides = [1, 1]} : vector<8x256xbf16> to vector<8x128xbf16>
    %c128_228 = arith.constant 128 : index
    %c0_229 = arith.constant 0 : index
    %425 = vector.load %arg5[%c128_228, %c0_229] : memref<256x128xbf16, #tpu.memory_space<vmem>>, vector<128x128xbf16>
    %cst_230 = arith.constant dense<0.000000e+00> : vector<8x128xf32>
    %426 = tpu.matmul %424, %425, %cst_230 {dimension_numbers = #tpu.dot_dimension_numbers<[1], [0], [0], [1], [0, 0, 1, 1], [], []>} : vector<8x128xbf16>, vector<128x128xbf16>, vector<8x128xf32> -> vector<8x128xf32>
    %427 = arith.addf %423, %426 : vector<8x128xf32>
    %c8_231 = arith.constant 8 : index
    %c0_232 = arith.constant 0 : index
    %428 = vector.load %arg7[%c8_231, %c0_232] : memref<64x128xf32, #tpu.memory_space<vmem>>, vector<8x128xf32>
    tpu.vector_store %arg7[%c8_231, %c0_232], %427 {strides = array<i32>} : memref<64x128xf32, #tpu.memory_space<vmem>>, vector<8x128xf32>,
    %c0_233 = arith.constant 0 : index
    %c0_234 = arith.constant 0 : index
    %429 = vector.load %arg9[%c0_233, %c0_234] : memref<8x256xf32, #tpu.memory_space<vmem>>, vector<8x256xf32>
    %430 = arith.truncf %429 : vector<8x256xf32> to vector<8x256xbf16>
    %c0_235 = arith.constant 0 : index
    %c0_236 = arith.constant 0 : index
    %431 = vector.load %arg3[%c0_235, %c0_236] : memref<256x1024xbf16, #tpu.memory_space<vmem>>, vector<256x1024xbf16>
    %cst_237 = arith.constant dense<0.000000e+00> : vector<8x1024xf32>
    %432 = tpu.matmul %430, %431, %cst_237 {dimension_numbers = #tpu.dot_dimension_numbers<[1], [0], [0], [1], [0, 0, 1, 1], [], []>} : vector<8x256xbf16>, vector<256x1024xbf16>, vector<8x1024xf32> -> vector<8x1024xf32>
    %c56_238 = arith.constant 56 : index
    %c0_239 = arith.constant 0 : index
    %433 = vector.load %arg8[%c56_238, %c0_239] : memref<64x1024xf32, #tpu.memory_space<vmem>>, vector<8x512xf32>
    %434 = vector.extract_strided_slice %432 {offsets = [0, 0], sizes = [8, 512], strides = [1, 1]} : vector<8x1024xf32> to vector<8x512xf32>
    %435 = arith.addf %433, %434 : vector<8x512xf32>
    %c0_240 = arith.constant 0 : index
    %c512_241 = arith.constant 512 : index
    %436 = vector.load %arg8[%c0_240, %c512_241] : memref<64x1024xf32, #tpu.memory_space<vmem>>, vector<8x512xf32>
    %437 = vector.extract_strided_slice %432 {offsets = [0, 512], sizes = [8, 512], strides = [1, 1]} : vector<8x1024xf32> to vector<8x512xf32>
    %438 = arith.addf %436, %437 : vector<8x512xf32>
    %439 = vector.extract_strided_slice %435 {offsets = [0, 0], sizes = [8, 128], strides = [1, 1]} : vector<8x512xf32> to vector<8x128xf32>
    %440 = vector.extract_strided_slice %438 {offsets = [0, 0], sizes = [8, 128], strides = [1, 1]} : vector<8x512xf32> to vector<8x128xf32>
    %441 = tpu.concatenate %439, %440 in 1 : vector<8x128xf32>, vector<8x128xf32> -> vector<8x256xf32>
    %442 = arith.negf %441 : vector<8x256xf32>
    %443 = math.exp %442 : vector<8x256xf32>
    %cst_242 = arith.constant 1.000000e+00 : f32
    %444 = vector.broadcast %cst_242 : f32 to vector<8x256xf32>
    %445 = arith.addf %444, %443 : vector<8x256xf32>
    %446 = arith.divf %444, %445 : vector<8x256xf32>
    %447 = vector.extract_strided_slice %435 {offsets = [0, 128], sizes = [8, 128], strides = [1, 1]} : vector<8x512xf32> to vector<8x128xf32>
    %448 = vector.extract_strided_slice %438 {offsets = [0, 128], sizes = [8, 128], strides = [1, 1]} : vector<8x512xf32> to vector<8x128xf32>
    %449 = tpu.concatenate %447, %448 in 1 : vector<8x128xf32>, vector<8x128xf32> -> vector<8x256xf32>
    %450 = arith.negf %449 : vector<8x256xf32>
    %451 = math.exp %450 : vector<8x256xf32>
    %cst_243 = arith.constant 1.000000e+00 : f32
    %452 = vector.broadcast %cst_243 : f32 to vector<8x256xf32>
    %453 = arith.addf %452, %451 : vector<8x256xf32>
    %454 = arith.divf %452, %453 : vector<8x256xf32>
    %455 = vector.extract_strided_slice %435 {offsets = [0, 256], sizes = [8, 128], strides = [1, 1]} : vector<8x512xf32> to vector<8x128xf32>
    %456 = vector.extract_strided_slice %438 {offsets = [0, 256], sizes = [8, 128], strides = [1, 1]} : vector<8x512xf32> to vector<8x128xf32>
    %457 = tpu.concatenate %455, %456 in 1 : vector<8x128xf32>, vector<8x128xf32> -> vector<8x256xf32>
    %458 = math.tanh %457 : vector<8x256xf32>
    %459 = vector.extract_strided_slice %435 {offsets = [0, 384], sizes = [8, 128], strides = [1, 1]} : vector<8x512xf32> to vector<8x128xf32>
    %460 = vector.extract_strided_slice %438 {offsets = [0, 384], sizes = [8, 128], strides = [1, 1]} : vector<8x512xf32> to vector<8x128xf32>
    %461 = tpu.concatenate %459, %460 in 1 : vector<8x128xf32>, vector<8x128xf32> -> vector<8x256xf32>
    %462 = arith.negf %461 : vector<8x256xf32>
    %463 = math.exp %462 : vector<8x256xf32>
    %cst_244 = arith.constant 1.000000e+00 : f32
    %464 = vector.broadcast %cst_244 : f32 to vector<8x256xf32>
    %465 = arith.addf %464, %463 : vector<8x256xf32>
    %466 = arith.divf %464, %465 : vector<8x256xf32>
    %c0_245 = arith.constant 0 : index
    %c0_246 = arith.constant 0 : index
    %467 = vector.load %arg10[%c0_245, %c0_246] : memref<8x256xf32, #tpu.memory_space<vmem>>, vector<8x256xf32>
    %468 = arith.mulf %454, %467 : vector<8x256xf32>
    %469 = arith.mulf %446, %458 : vector<8x256xf32>
    %470 = arith.addf %468, %469 : vector<8x256xf32>
    %471 = math.tanh %470 : vector<8x256xf32>
    %472 = arith.mulf %466, %471 : vector<8x256xf32>
    %c0_247 = arith.constant 0 : index
    %c0_248 = arith.constant 0 : index
    %473 = vector.load %arg10[%c0_247, %c0_248] : memref<8x256xf32, #tpu.memory_space<vmem>>, vector<8x256xf32>
    tpu.vector_store %arg10[%c0_247, %c0_248], %470 {strides = array<i32>} : memref<8x256xf32, #tpu.memory_space<vmem>>, vector<8x256xf32>,
    %c0_249 = arith.constant 0 : index
    %c0_250 = arith.constant 0 : index
    %474 = vector.load %arg9[%c0_249, %c0_250] : memref<8x256xf32, #tpu.memory_space<vmem>>, vector<8x256xf32>
    tpu.vector_store %arg9[%c0_249, %c0_250], %472 {strides = array<i32>} : memref<8x256xf32, #tpu.memory_space<vmem>>, vector<8x256xf32>,
    %475 = arith.truncf %472 : vector<8x256xf32> to vector<8x256xbf16>
    %c56_251 = arith.constant 56 : index
    %c0_252 = arith.constant 0 : index
    %476 = vector.load %arg7[%c56_251, %c0_252] : memref<64x128xf32, #tpu.memory_space<vmem>>, vector<8x128xf32>
    %477 = vector.extract_strided_slice %475 {offsets = [0, 0], sizes = [8, 128], strides = [1, 1]} : vector<8x256xbf16> to vector<8x128xbf16>
    %c0_253 = arith.constant 0 : index
    %c0_254 = arith.constant 0 : index
    %478 = vector.load %arg5[%c0_253, %c0_254] : memref<256x128xbf16, #tpu.memory_space<vmem>>, vector<128x128xbf16>
    %cst_255 = arith.constant dense<0.000000e+00> : vector<8x128xf32>
    %479 = tpu.matmul %477, %478, %cst_255 {dimension_numbers = #tpu.dot_dimension_numbers<[1], [0], [0], [1], [0, 0, 1, 1], [], []>} : vector<8x128xbf16>, vector<128x128xbf16>, vector<8x128xf32> -> vector<8x128xf32>
    %480 = arith.addf %476, %479 : vector<8x128xf32>
    %c56_256 = arith.constant 56 : index
    %c0_257 = arith.constant 0 : index
    %481 = vector.load %arg7[%c56_256, %c0_257] : memref<64x128xf32, #tpu.memory_space<vmem>>, vector<8x128xf32>
    tpu.vector_store %arg7[%c56_256, %c0_257], %480 {strides = array<i32>} : memref<64x128xf32, #tpu.memory_space<vmem>>, vector<8x128xf32>,
    %c0_258 = arith.constant 0 : index
    %c0_259 = arith.constant 0 : index
    %482 = vector.load %arg7[%c0_258, %c0_259] : memref<64x128xf32, #tpu.memory_space<vmem>>, vector<8x128xf32>
    %483 = vector.extract_strided_slice %475 {offsets = [0, 128], sizes = [8, 128], strides = [1, 1]} : vector<8x256xbf16> to vector<8x128xbf16>
    %c128_260 = arith.constant 128 : index
    %c0_261 = arith.constant 0 : index
    %484 = vector.load %arg5[%c128_260, %c0_261] : memref<256x128xbf16, #tpu.memory_space<vmem>>, vector<128x128xbf16>
    %cst_262 = arith.constant dense<0.000000e+00> : vector<8x128xf32>
    %485 = tpu.matmul %483, %484, %cst_262 {dimension_numbers = #tpu.dot_dimension_numbers<[1], [0], [0], [1], [0, 0, 1, 1], [], []>} : vector<8x128xbf16>, vector<128x128xbf16>, vector<8x128xf32> -> vector<8x128xf32>
    %486 = arith.addf %482, %485 : vector<8x128xf32>
    %c0_263 = arith.constant 0 : index
    %c0_264 = arith.constant 0 : index
    %487 = vector.load %arg7[%c0_263, %c0_264] : memref<64x128xf32, #tpu.memory_space<vmem>>, vector<8x128xf32>
    tpu.vector_store %arg7[%c0_263, %c0_264], %486 {strides = array<i32>} : memref<64x128xf32, #tpu.memory_space<vmem>>, vector<8x128xf32>,
    return
  }
  func.func @transform_0(%arg0: i32) -> (i32, i32) {
    %c0_i32 = arith.constant 0 : i32
    %c0_i32_0 = arith.constant 0 : i32
    %c0_i32_1 = arith.constant 0 : i32
    return %c0_i32, %c0_i32_0 : i32, i32
  }
  func.func @transform_1(%arg0: i32) -> (i32, i32) {
    %c0_i32 = arith.constant 0 : i32
    %c0_i32_0 = arith.constant 0 : i32
    %c0_i32_1 = arith.constant 0 : i32
    return %c0_i32, %c0_i32_0 : i32, i32
  }
  func.func @transform_2(%arg0: i32) -> (i32, i32) {
    %c0_i32 = arith.constant 0 : i32
    %c0_i32_0 = arith.constant 0 : i32
    %c0_i32_1 = arith.constant 0 : i32
    return %c0_i32, %c0_i32_0 : i32, i32
  }
  func.func @transform_3(%arg0: i32) -> (i32, i32) {
    %c0_i32 = arith.constant 0 : i32
    %c0_i32_0 = arith.constant 0 : i32
    %c0_i32_1 = arith.constant 0 : i32
    return %c0_i32, %c0_i32_0 : i32, i32
  }
  func.func @transform_4(%arg0: i32) -> (i32, i32) {
    %c0_i32 = arith.constant 0 : i32
    %c0_i32_0 = arith.constant 0 : i32
    %c0_i32_1 = arith.constant 0 : i32
    return %c0_i32, %c0_i32_0 : i32, i32
  }
  func.func @transform_5(%arg0: i32) -> (i32, i32) {
    %c0_i32 = arith.constant 0 : i32
    %c0_i32_0 = arith.constant 0 : i32
    %c0_i32_1 = arith.constant 0 : i32
    return %c0_i32, %c0_i32_0 : i32, i32
  }
  func.func @transform_6(%arg0: i32) -> (i32, i32) {
    %c0_i32 = arith.constant 0 : i32
    %c0_i32_0 = arith.constant 0 : i32
    %c0_i32_1 = arith.constant 0 : i32
    return %c0_i32, %c0_i32_0 : i32, i32
  }
}

</mosaic_0001>

<llo_original>
// kernel: birnn_forward.1
$region0: #{birnn_forward.1}
  #allocation0 [shape = 'u32[]', space=smem, size = 0x4, offset = 0x4, fixed_abs, tag = 'smem constant byte address 0x4 - core index']
  #allocation1 [shape = 'u32[72,128]{1,0:T(1,128)}', space=vmem, size = 0x9000, scoped, tag = 'internal scratch']
  #allocation2 [shape = 'f32[64,1024]{1,0:T(8,128)}', space=vmem, size = 0x40000, scoped, tag = 'scratch operand']
  #allocation3 [shape = 'f32[8,256]{1,0:T(8,128)}', space=vmem, size = 0x2000, scoped, tag = 'scratch operand']
  #allocation4 [shape = 'f32[8,256]{1,0:T(8,128)}', space=vmem, size = 0x2000, scoped, tag = 'scratch operand']
  %s0 = inlined_call_operand.vmem [shape: bf16[64,128], index: 0, kind: input, shape index: {}]
  %s1 = inlined_call_operand.hbm [shape: bf16[128,1024], index: 1, kind: input, shape index: {}]
  %s2 = inlined_call_operand.hbm [shape: bf16[256,1024], index: 2, kind: input, shape index: {}]
  %s3 = inlined_call_operand.vmem [shape: f32[1,1024], index: 3, kind: input, shape index: {}]
  %s4 = inlined_call_operand.vmem [shape: bf16[256,128], index: 4, kind: input, shape index: {}]
  %s5 = inlined_call_operand.vmem [shape: f32[1,128], index: 5, kind: input, shape index: {}]
  %s6 = inlined_call_operand.vmem [shape: f32[64,128], index: 6, kind: output, shape index: {}]
  %s7 = sld [smem:[#allocation0]]
  $region42: #{birnn_forward.1} parent=0
    _
  %s9 = ssub.s32 1, %s7
  %s10 = scalar_select 0, %s9, %s7
  $region1: #{birnn_forward.1} parent=0
    #allocation5 [shape = 'u8[262144]{0}', space=vmem, size = 0x40000, scoped, tag = 'input window, operand 1, single buffered']
    #allocation6 [shape = 's32[1]{0}', space=sflag, size = 0x4, scoped, tag = 'scoped memory for birnn_forward.1']
    #allocation7 [shape = 'u8[524288]{0}', space=vmem, size = 0x80000, scoped, tag = 'input window, operand 2, single buffered']
    #allocation8 [shape = 's32[1]{0}', space=sflag, size = 0x4, scoped, tag = 'scoped memory for birnn_forward.1']
    %11 = vsyncpa [#allocation6], 0
    %12 = vsyncpa [#allocation8], 0
    // Predicated region
    $region2: #{birnn_forward.1} parent=1 // pred_check
      _
    $region3: #{birnn_forward.1} parent=1 // pred_check_branch
      %14 = sbr.rel (0) target = $region5
    $region4: #{birnn_forward.1} parent=1 // pred_region
      _
    $region5: #{birnn_forward.1} parent=1 // pred_fallthru
      _
    // Predicated region
    $region6: #{birnn_forward.1} parent=1 // pred_check
      _
    $region7: #{birnn_forward.1} parent=1 // pred_check_branch
      %16 = sbr.rel (0) target = $region9
    $region8: #{birnn_forward.1} parent=1 // pred_region
      %18 = vsyncadd [#allocation6], 0
      %s19 = sshll.u32 %s1, 4
      %s20 = int_to_ptr.hbm [resolvable:$true] %s19
      %s21 = sshll.u32 [#allocation5], 4
      %s22 = int_to_ptr.vmem [resolvable:$true] %s21
      %27 = dma.hbm_to_vmem [thread:$0]  %s20, 8192, %s22, [#allocation6], 512, 512, 32
    $region9: #{birnn_forward.1} parent=1 // pred_fallthru
      _
    // Predicated region
    $region10: #{birnn_forward.1} parent=1 // pred_check
      _
    $region11: #{birnn_forward.1} parent=1 // pred_check_branch
      %29 = sbr.rel (0) target = $region13
    $region12: #{birnn_forward.1} parent=1 // pred_region
      %31 = vsyncadd [#allocation8], 0
      %s32 = sshll.u32 %s2, 4
      %s33 = int_to_ptr.hbm [resolvable:$true] %s32
      %s34 = sshll.u32 [#allocation7], 4
      %s35 = int_to_ptr.vmem [resolvable:$true] %s34
      %40 = dma.hbm_to_vmem [thread:$0]  %s33, 16384, %s35, [#allocation8], 512, 512, 32
    $region13: #{birnn_forward.1} parent=1 // pred_fallthru
      _
    // Predicated region
    $region14: #{birnn_forward.1} parent=1 // pred_check
      _
    $region15: #{birnn_forward.1} parent=1 // pred_check_branch
      %42 = sbr.rel (0) target = $region17
    $region16: #{birnn_forward.1} parent=1 // pred_region
      _
    $region17: #{birnn_forward.1} parent=1 // pred_fallthru
      _
    // Predicated region
    $region18: #{birnn_forward.1} parent=1 // pred_check
      _
    $region19: #{birnn_forward.1} parent=1 // pred_check_branch
      %44 = sbr.rel (0) target = $region21
    $region20: #{birnn_forward.1} parent=1 // pred_region
      _
    $region21: #{birnn_forward.1} parent=1 // pred_fallthru
      _
    // Predicated region
    $region22: #{birnn_forward.1} parent=1 // pred_check
      _
    $region23: #{birnn_forward.1} parent=1 // pred_check_branch
      %46 = sbr.rel (0) target = $region25
    $region24: #{birnn_forward.1} parent=1 // pred_region
      _
    $region25: #{birnn_forward.1} parent=1 // pred_fallthru
      _
    // Predicated region
    $region26: #{birnn_forward.1} parent=1 // pred_check
      _
    $region27: #{birnn_forward.1} parent=1 // pred_check_branch
      %48 = sbr.rel (0) target = $region29
    $region28: #{birnn_forward.1} parent=1 // pred_region
      %50 = dma.done [#allocation6], 8192
    $region29: #{birnn_forward.1} parent=1 // pred_fallthru
      _
    // Predicated region
    $region30: #{birnn_forward.1} parent=1 // pred_check
      _
    $region31: #{birnn_forward.1} parent=1 // pred_check_branch
      %52 = sbr.rel (0) target = $region33
    $region32: #{birnn_forward.1} parent=1 // pred_region
      %54 = dma.done [#allocation8], 16384
    $region33: #{birnn_forward.1} parent=1 // pred_fallthru
      _
    %v55 = vld [vmem:[%s0] sm:$0xf]
    %v56 = vld [vmem:[%s0 + $0x4] sm:$0xf]
    %v57 = vld [vmem:[%s0 + $0x8] sm:$0xf]
    %v58 = vld [vmem:[%s0 + $0xc] sm:$0xf]
    %v59 = vld [vmem:[%s0 + $0x10] sm:$0xf]
    %v60 = vld [vmem:[%s0 + $0x14] sm:$0xf]
    %v61 = vld [vmem:[%s0 + $0x18] sm:$0xf]
    %v62 = vld [vmem:[%s0 + $0x1c] sm:$0xf]
    %v63 = vld [vmem:[#allocation5] sm:$0xff]
    %v64 = vld [vmem:[#allocation5 + $0x8] sm:$0xff]
    %v65 = vld [vmem:[#allocation5 + $0x10] sm:$0xff]
    %v66 = vld [vmem:[#allocation5 + $0x18] sm:$0xff]
    %v67 = vld [vmem:[#allocation5 + $0x20] sm:$0xff]
    %v68 = vld [vmem:[#allocation5 + $0x28] sm:$0xff]
    %v69 = vld [vmem:[#allocation5 + $0x30] sm:$0xff]
    %v70 = vld [vmem:[#allocation5 + $0x38] sm:$0xff]
    %v71 = vld [vmem:[#allocation5 + $0x40] sm:$0xff]
    %v72 = vld [vmem:[#allocation5 + $0x48] sm:$0xff]
    %v73 = vld [vmem:[#allocation5 + $0x50] sm:$0xff]
    %v74 = vld [vmem:[#allocation5 + $0x58] sm:$0xff]
    %v75 = vld [vmem:[#allocation5 + $0x60] sm:$0xff]
    %v76 = vld [vmem:[#allocation5 + $0x68] sm:$0xff]
    %v77 = vld [vmem:[#allocation5 + $0x70] sm:$0xff]
    %v78 = vld [vmem:[#allocation5 + $0x78] sm:$0xff]
    %v79 = vld [vmem:[#allocation5 + $0x80] sm:$0xff]
    %v80 = vld [vmem:[#allocation5 + $0x88] sm:$0xff]
    %v81 = vld [vmem:[#allocation5 + $0x90] sm:$0xff]
    %v82 = vld [vmem:[#allocation5 + $0x98] sm:$0xff]
    %v83 = vld [vmem:[#allocation5 + $0xa0] sm:$0xff]
    %v84 = vld [vmem:[#allocation5 + $0xa8] sm:$0xff]
    %v85 = vld [vmem:[#allocation5 + $0xb0] sm:$0xff]
    %v86 = vld [vmem:[#allocation5 + $0xb8] sm:$0xff]
    %v87 = vld [vmem:[#allocation5 + $0xc0] sm:$0xff]
    %v88 = vld [vmem:[#allocation5 + $0xc8] sm:$0xff]
    %v89 = vld [vmem:[#allocation5 + $0xd0] sm:$0xff]
    %v90 = vld [vmem:[#allocation5 + $0xd8] sm:$0xff]
    %v91 = vld [vmem:[#allocation5 + $0xe0] sm:$0xff]
    %v92 = vld [vmem:[#allocation5 + $0xe8] sm:$0xff]
    %v93 = vld [vmem:[#allocation5 + $0xf0] sm:$0xff]
    %v94 = vld [vmem:[#allocation5 + $0xf8] sm:$0xff]
    %v95 = vld [vmem:[#allocation5 + $0x100] sm:$0xff]
    %v96 = vld [vmem:[#allocation5 + $0x108] sm:$0xff]
    %v97 = vld [vmem:[#allocation5 + $0x110] sm:$0xff]
    %v98 = vld [vmem:[#allocation5 + $0x118] sm:$0xff]
    %v99 = vld [vmem:[#allocation5 + $0x120] sm:$0xff]
    %v100 = vld [vmem:[#allocation5 + $0x128] sm:$0xff]
    %v101 = vld [vmem:[#allocation5 + $0x130] sm:$0xff]
    %v102 = vld [vmem:[#allocation5 + $0x138] sm:$0xff]
    %v103 = vld [vmem:[#allocation5 + $0x140] sm:$0xff]
    %v104 = vld [vmem:[#allocation5 + $0x148] sm:$0xff]
    %v105 = vld [vmem:[#allocation5 + $0x150] sm:$0xff]
    %v106 = vld [vmem:[#allocation5 + $0x158] sm:$0xff]
    %v107 = vld [vmem:[#allocation5 + $0x160] sm:$0xff]
    %v108 = vld [vmem:[#allocation5 + $0x168] sm:$0xff]
    %v109 = vld [vmem:[#allocation5 + $0x170] sm:$0xff]
    %v110 = vld [vmem:[#allocation5 + $0x178] sm:$0xff]
    %v111 = vld [vmem:[#allocation5 + $0x180] sm:$0xff]
    %v112 = vld [vmem:[#allocation5 + $0x188] sm:$0xff]
    %v113 = vld [vmem:[#allocation5 + $0x190] sm:$0xff]
    %v114 = vld [vmem:[#allocation5 + $0x198] sm:$0xff]
    %v115 = vld [vmem:[#allocation5 + $0x1a0] sm:$0xff]
    %v116 = vld [vmem:[#allocation5 + $0x1a8] sm:$0xff]
    %v117 = vld [vmem:[#allocation5 + $0x1b0] sm:$0xff]
    %v118 = vld [vmem:[#allocation5 + $0x1b8] sm:$0xff]
    %v119 = vld [vmem:[#allocation5 + $0x1c0] sm:$0xff]
    %v120 = vld [vmem:[#allocation5 + $0x1c8] sm:$0xff]
    %v121 = vld [vmem:[#allocation5 + $0x1d0] sm:$0xff]
    %v122 = vld [vmem:[#allocation5 + $0x1d8] sm:$0xff]
    %v123 = vld [vmem:[#allocation5 + $0x1e0] sm:$0xff]
    %v124 = vld [vmem:[#allocation5 + $0x1e8] sm:$0xff]
    %v125 = vld [vmem:[#allocation5 + $0x1f0] sm:$0xff]
    %v126 = vld [vmem:[#allocation5 + $0x1f8] sm:$0xff]
    %v127 = vld [vmem:[%s3] sm:$0xff]
    %v129 = vperm.slane %v127, 0
    %v130 = vperm.slane %v127, 1
    %v131 = vperm.slane %v127, 2
    %v132 = vperm.slane %v127, 3
    %v133 = vperm.slane %v127, 4
    %v134 = vperm.slane %v127, 5
    %v135 = vperm.slane %v127, 6
    %v136 = vperm.slane %v127, 7
    %v153 = vunpack.c.l.b16 %v55
    %v154 = vunpack.c.l.b16 %v56
    %v155 = vunpack.c.l.b16 %v57
    %v156 = vunpack.c.l.b16 %v58
    %v157 = vunpack.c.l.b16 %v59
    %v158 = vunpack.c.l.b16 %v60
    %v159 = vunpack.c.l.b16 %v61
    %v160 = vunpack.c.l.b16 %v62
    %v161 = vpack.c.b16 %v154, %v153
    %v162 = vpack.c.b16 %v156, %v155
    %v163 = vpack.c.b16 %v158, %v157
    %v164 = vpack.c.b16 %v160, %v159
    %v233 = vunpack.c.l.b16 %v63
    %v234 = vunpack.c.h.b16 %v63
    %v235 = vunpack.c.l.b16 %v64
    %v236 = vunpack.c.h.b16 %v64
    %v237 = vunpack.c.l.b16 %v65
    %v238 = vunpack.c.h.b16 %v65
    %v239 = vunpack.c.l.b16 %v66
    %v240 = vunpack.c.h.b16 %v66
    %v241 = vunpack.c.l.b16 %v67
    %v242 = vunpack.c.h.b16 %v67
    %v243 = vunpack.c.l.b16 %v68
    %v244 = vunpack.c.h.b16 %v68
    %v245 = vunpack.c.l.b16 %v69
    %v246 = vunpack.c.h.b16 %v69
    %v247 = vunpack.c.l.b16 %v70
    %v248 = vunpack.c.h.b16 %v70
    %v249 = vunpack.c.l.b16 %v71
    %v250 = vunpack.c.h.b16 %v71
    %v251 = vunpack.c.l.b16 %v72
    %v252 = vunpack.c.h.b16 %v72
    %v253 = vunpack.c.l.b16 %v73
    %v254 = vunpack.c.h.b16 %v73
    %v255 = vunpack.c.l.b16 %v74
    %v256 = vunpack.c.h.b16 %v74
    %v257 = vunpack.c.l.b16 %v75
    %v258 = vunpack.c.h.b16 %v75
    %v259 = vunpack.c.l.b16 %v76
    %v260 = vunpack.c.h.b16 %v76
    %v261 = vunpack.c.l.b16 %v77
    %v262 = vunpack.c.h.b16 %v77
    %v263 = vunpack.c.l.b16 %v78
    %v264 = vunpack.c.h.b16 %v78
    %v265 = vunpack.c.l.b16 %v79
    %v266 = vunpack.c.h.b16 %v79
    %v267 = vunpack.c.l.b16 %v80
    %v268 = vunpack.c.h.b16 %v80
    %v269 = vunpack.c.l.b16 %v81
    %v270 = vunpack.c.h.b16 %v81
    %v271 = vunpack.c.l.b16 %v82
    %v272 = vunpack.c.h.b16 %v82
    %v273 = vunpack.c.l.b16 %v83
    %v274 = vunpack.c.h.b16 %v83
    %v275 = vunpack.c.l.b16 %v84
    %v276 = vunpack.c.h.b16 %v84
    %v277 = vunpack.c.l.b16 %v85
    %v278 = vunpack.c.h.b16 %v85
    %v279 = vunpack.c.l.b16 %v86
    %v280 = vunpack.c.h.b16 %v86
    %v281 = vunpack.c.l.b16 %v87
    %v282 = vunpack.c.h.b16 %v87
    %v283 = vunpack.c.l.b16 %v88
    %v284 = vunpack.c.h.b16 %v88
    %v285 = vunpack.c.l.b16 %v89
    %v286 = vunpack.c.h.b16 %v89
    %v287 = vunpack.c.l.b16 %v90
    %v288 = vunpack.c.h.b16 %v90
    %v289 = vunpack.c.l.b16 %v91
    %v290 = vunpack.c.h.b16 %v91
    %v291 = vunpack.c.l.b16 %v92
    %v292 = vunpack.c.h.b16 %v92
    %v293 = vunpack.c.l.b16 %v93
    %v294 = vunpack.c.h.b16 %v93
    %v295 = vunpack.c.l.b16 %v94
    %v296 = vunpack.c.h.b16 %v94
    %v297 = vunpack.c.l.b16 %v95
    %v298 = vunpack.c.h.b16 %v95
    %v299 = vunpack.c.l.b16 %v96
    %v300 = vunpack.c.h.b16 %v96
    %v301 = vunpack.c.l.b16 %v97
    %v302 = vunpack.c.h.b16 %v97
    %v303 = vunpack.c.l.b16 %v98
    %v304 = vunpack.c.h.b16 %v98
    %v305 = vunpack.c.l.b16 %v99
    %v306 = vunpack.c.h.b16 %v99
    %v307 = vunpack.c.l.b16 %v100
    %v308 = vunpack.c.h.b16 %v100
    %v309 = vunpack.c.l.b16 %v101
    %v310 = vunpack.c.h.b16 %v101
    %v311 = vunpack.c.l.b16 %v102
    %v312 = vunpack.c.h.b16 %v102
    %v313 = vunpack.c.l.b16 %v103
    %v314 = vunpack.c.h.b16 %v103
    %v315 = vunpack.c.l.b16 %v104
    %v316 = vunpack.c.h.b16 %v104
    %v317 = vunpack.c.l.b16 %v105
    %v318 = vunpack.c.h.b16 %v105
    %v319 = vunpack.c.l.b16 %v106
    %v320 = vunpack.c.h.b16 %v106
    %v321 = vunpack.c.l.b16 %v107
    %v322 = vunpack.c.h.b16 %v107
    %v323 = vunpack.c.l.b16 %v108
    %v324 = vunpack.c.h.b16 %v108
    %v325 = vunpack.c.l.b16 %v109
    %v326 = vunpack.c.h.b16 %v109
    %v327 = vunpack.c.l.b16 %v110
    %v328 = vunpack.c.h.b16 %v110
    %v329 = vunpack.c.l.b16 %v111
    %v330 = vunpack.c.h.b16 %v111
    %v331 = vunpack.c.l.b16 %v112
    %v332 = vunpack.c.h.b16 %v112
    %v333 = vunpack.c.l.b16 %v113
    %v334 = vunpack.c.h.b16 %v113
    %v335 = vunpack.c.l.b16 %v114
    %v336 = vunpack.c.h.b16 %v114
    %v337 = vunpack.c.l.b16 %v115
    %v338 = vunpack.c.h.b16 %v115
    %v339 = vunpack.c.l.b16 %v116
    %v340 = vunpack.c.h.b16 %v116
    %v341 = vunpack.c.l.b16 %v117
    %v342 = vunpack.c.h.b16 %v117
    %v343 = vunpack.c.l.b16 %v118
    %v344 = vunpack.c.h.b16 %v118
    %v345 = vunpack.c.l.b16 %v119
    %v346 = vunpack.c.h.b16 %v119
    %v347 = vunpack.c.l.b16 %v120
    %v348 = vunpack.c.h.b16 %v120
    %v349 = vunpack.c.l.b16 %v121
    %v350 = vunpack.c.h.b16 %v121
    %v351 = vunpack.c.l.b16 %v122
    %v352 = vunpack.c.h.b16 %v122
    %v353 = vunpack.c.l.b16 %v123
    %v354 = vunpack.c.h.b16 %v123
    %v355 = vunpack.c.l.b16 %v124
    %v356 = vunpack.c.h.b16 %v124
    %v357 = vunpack.c.l.b16 %v125
    %v358 = vunpack.c.h.b16 %v125
    %v359 = vunpack.c.l.b16 %v126
    %v360 = vunpack.c.h.b16 %v126
    %v361 = vpack.c.b16 %v241, %v233
    %v362 = vpack.c.b16 %v242, %v234
    %v363 = vpack.c.b16 %v243, %v235
    %v364 = vpack.c.b16 %v244, %v236
    %v365 = vpack.c.b16 %v245, %v237
    %v366 = vpack.c.b16 %v246, %v238
    %v367 = vpack.c.b16 %v247, %v239
    %v368 = vpack.c.b16 %v248, %v240
    %v369 = vpack.c.b16 %v257, %v249
    %v370 = vpack.c.b16 %v258, %v250
    %v371 = vpack.c.b16 %v259, %v251
    %v372 = vpack.c.b16 %v260, %v252
    %v373 = vpack.c.b16 %v261, %v253
    %v374 = vpack.c.b16 %v262, %v254
    %v375 = vpack.c.b16 %v263, %v255
    %v376 = vpack.c.b16 %v264, %v256
    %v377 = vpack.c.b16 %v273, %v265
    %v378 = vpack.c.b16 %v274, %v266
    %v379 = vpack.c.b16 %v275, %v267
    %v380 = vpack.c.b16 %v276, %v268
    %v381 = vpack.c.b16 %v277, %v269
    %v382 = vpack.c.b16 %v278, %v270
    %v383 = vpack.c.b16 %v279, %v271
    %v384 = vpack.c.b16 %v280, %v272
    %v385 = vpack.c.b16 %v289, %v281
    %v386 = vpack.c.b16 %v290, %v282
    %v387 = vpack.c.b16 %v291, %v283
    %v388 = vpack.c.b16 %v292, %v284
    %v389 = vpack.c.b16 %v293, %v285
    %v390 = vpack.c.b16 %v294, %v286
    %v391 = vpack.c.b16 %v295, %v287
    %v392 = vpack.c.b16 %v296, %v288
    %v393 = vpack.c.b16 %v305, %v297
    %v394 = vpack.c.b16 %v306, %v298
    %v395 = vpack.c.b16 %v307, %v299
    %v396 = vpack.c.b16 %v308, %v300
    %v397 = vpack.c.b16 %v309, %v301
    %v398 = vpack.c.b16 %v310, %v302
    %v399 = vpack.c.b16 %v311, %v303
    %v400 = vpack.c.b16 %v312, %v304
    %v401 = vpack.c.b16 %v321, %v313
    %v402 = vpack.c.b16 %v322, %v314
    %v403 = vpack.c.b16 %v323, %v315
    %v404 = vpack.c.b16 %v324, %v316
    %v405 = vpack.c.b16 %v325, %v317
    %v406 = vpack.c.b16 %v326, %v318
    %v407 = vpack.c.b16 %v327, %v319
    %v408 = vpack.c.b16 %v328, %v320
    %v409 = vpack.c.b16 %v337, %v329
    %v410 = vpack.c.b16 %v338, %v330
    %v411 = vpack.c.b16 %v339, %v331
    %v412 = vpack.c.b16 %v340, %v332
    %v413 = vpack.c.b16 %v341, %v333
    %v414 = vpack.c.b16 %v342, %v334
    %v415 = vpack.c.b16 %v343, %v335
    %v416 = vpack.c.b16 %v344, %v336
    %v417 = vpack.c.b16 %v353, %v345
    %v418 = vpack.c.b16 %v354, %v346
    %v419 = vpack.c.b16 %v355, %v347
    %v420 = vpack.c.b16 %v356, %v348
    %v421 = vpack.c.b16 %v357, %v349
    %v422 = vpack.c.b16 %v358, %v350
    %v423 = vpack.c.b16 %v359, %v351
    %v424 = vpack.c.b16 %v360, %v352
    %489 = vmatpush.bf16.msra.mxu0 %v417
    %490 = vmatpush.bf16.msra.mxu0 %v409
    %491 = vmatpush.bf16.msra.mxu0 %v401
    %492 = vmatpush.bf16.msra.mxu0 %v393
    %493 = vmatpush.bf16.msra.mxu0 %v385
    %494 = vmatpush.bf16.msra.mxu0 %v377
    %495 = vmatpush.bf16.msra.mxu0 %v369
    %496 = vmatpush.bf16.msra.mxu0 %v361
    %497 = vmatmul.bf16.gmra.mxu0 %v161
    %v498 = vpop.f32.mrf.mxu0
    %v499 = vadd.f32 %v129, %v498
    %v500 = vpop.f32.mrf.mxu0
    %v501 = vadd.f32 %v129, %v500
    %502 = vmatmul.bf16.gmra.mxu0 %v162
    %v503 = vpop.f32.mrf.mxu0
    %v504 = vadd.f32 %v129, %v503
    %v505 = vpop.f32.mrf.mxu0
    %v506 = vadd.f32 %v129, %v505
    %507 = vmatmul.bf16.gmra.mxu0 %v163
    %v508 = vpop.f32.mrf.mxu0
    %v509 = vadd.f32 %v129, %v508
    %v510 = vpop.f32.mrf.mxu0
    %v511 = vadd.f32 %v129, %v510
    %512 = vmatmul.bf16.gmra.mxu0 %v164
    %v513 = vpop.f32.mrf.mxu0
    %v514 = vadd.f32 %v129, %v513
    %v515 = vpop.f32.mrf.mxu0
    %v516 = vadd.f32 %v129, %v515
    %517 = vdwg.mxu0
    %518 = vmatpush.bf16.msra.mxu0 %v418
    %519 = vmatpush.bf16.msra.mxu0 %v410
    %520 = vmatpush.bf16.msra.mxu0 %v402
    %521 = vmatpush.bf16.msra.mxu0 %v394
    %522 = vmatpush.bf16.msra.mxu0 %v386
    %523 = vmatpush.bf16.msra.mxu0 %v378
    %524 = vmatpush.bf16.msra.mxu0 %v370
    %525 = vmatpush.bf16.msra.mxu0 %v362
    %526 = vmatmul.bf16.gmra.mxu0 %v161
    %v527 = vpop.f32.mrf.mxu0
    %v528 = vadd.f32 %v130, %v527
    %v529 = vpop.f32.mrf.mxu0
    %v530 = vadd.f32 %v130, %v529
    %531 = vmatmul.bf16.gmra.mxu0 %v162
    %v532 = vpop.f32.mrf.mxu0
    %v533 = vadd.f32 %v130, %v532
    %v534 = vpop.f32.mrf.mxu0
    %v535 = vadd.f32 %v130, %v534
    %536 = vmatmul.bf16.gmra.mxu0 %v163
    %v537 = vpop.f32.mrf.mxu0
    %v538 = vadd.f32 %v130, %v537
    %v539 = vpop.f32.mrf.mxu0
    %v540 = vadd.f32 %v130, %v539
    %541 = vmatmul.bf16.gmra.mxu0 %v164
    %v542 = vpop.f32.mrf.mxu0
    %v543 = vadd.f32 %v130, %v542
    %v544 = vpop.f32.mrf.mxu0
    %v545 = vadd.f32 %v130, %v544
    %546 = vdwg.mxu0
    %547 = vmatpush.bf16.msra.mxu0 %v419
    %548 = vmatpush.bf16.msra.mxu0 %v411
    %549 = vmatpush.bf16.msra.mxu0 %v403
    %550 = vmatpush.bf16.msra.mxu0 %v395
    %551 = vmatpush.bf16.msra.mxu0 %v387
    %552 = vmatpush.bf16.msra.mxu0 %v379
    %553 = vmatpush.bf16.msra.mxu0 %v371
    %554 = vmatpush.bf16.msra.mxu0 %v363
    %555 = vmatmul.bf16.gmra.mxu0 %v161
    %v556 = vpop.f32.mrf.mxu0
    %v557 = vadd.f32 %v131, %v556
    %v558 = vpop.f32.mrf.mxu0
    %v559 = vadd.f32 %v131, %v558
    %560 = vmatmul.bf16.gmra.mxu0 %v162
    %v561 = vpop.f32.mrf.mxu0
    %v562 = vadd.f32 %v131, %v561
    %v563 = vpop.f32.mrf.mxu0
    %v564 = vadd.f32 %v131, %v563
    %565 = vmatmul.bf16.gmra.mxu0 %v163
    %v566 = vpop.f32.mrf.mxu0
    %v567 = vadd.f32 %v131, %v566
    %v568 = vpop.f32.mrf.mxu0
    %v569 = vadd.f32 %v131, %v568
    %570 = vmatmul.bf16.gmra.mxu0 %v164
    %v571 = vpop.f32.mrf.mxu0
    %v572 = vadd.f32 %v131, %v571
    %v573 = vpop.f32.mrf.mxu0
    %v574 = vadd.f32 %v131, %v573
    %575 = vdwg.mxu0
    %576 = vmatpush.bf16.msra.mxu0 %v420
    %577 = vmatpush.bf16.msra.mxu0 %v412
    %578 = vmatpush.bf16.msra.mxu0 %v404
    %579 = vmatpush.bf16.msra.mxu0 %v396
    %580 = vmatpush.bf16.msra.mxu0 %v388
    %581 = vmatpush.bf16.msra.mxu0 %v380
    %582 = vmatpush.bf16.msra.mxu0 %v372
    %583 = vmatpush.bf16.msra.mxu0 %v364
    %584 = vmatmul.bf16.gmra.mxu0 %v161
    %v585 = vpop.f32.mrf.mxu0
    %v586 = vadd.f32 %v132, %v585
    %v587 = vpop.f32.mrf.mxu0
    %v588 = vadd.f32 %v132, %v587
    %589 = vmatmul.bf16.gmra.mxu0 %v162
    %v590 = vpop.f32.mrf.mxu0
    %v591 = vadd.f32 %v132, %v590
    %v592 = vpop.f32.mrf.mxu0
    %v593 = vadd.f32 %v132, %v592
    %594 = vmatmul.bf16.gmra.mxu0 %v163
    %v595 = vpop.f32.mrf.mxu0
    %v596 = vadd.f32 %v132, %v595
    %v597 = vpop.f32.mrf.mxu0
    %v598 = vadd.f32 %v132, %v597
    %599 = vmatmul.bf16.gmra.mxu0 %v164
    %v600 = vpop.f32.mrf.mxu0
    %v601 = vadd.f32 %v132, %v600
    %v602 = vpop.f32.mrf.mxu0
    %v603 = vadd.f32 %v132, %v602
    %604 = vdwg.mxu0
    %605 = vmatpush.bf16.msra.mxu0 %v421
    %606 = vmatpush.bf16.msra.mxu0 %v413
    %607 = vmatpush.bf16.msra.mxu0 %v405
    %608 = vmatpush.bf16.msra.mxu0 %v397
    %609 = vmatpush.bf16.msra.mxu0 %v389
    %610 = vmatpush.bf16.msra.mxu0 %v381
    %611 = vmatpush.bf16.msra.mxu0 %v373
    %612 = vmatpush.bf16.msra.mxu0 %v365
    %613 = vmatmul.bf16.gmra.mxu0 %v161
    %v614 = vpop.f32.mrf.mxu0
    %v615 = vadd.f32 %v133, %v614
    %v616 = vpop.f32.mrf.mxu0
    %v617 = vadd.f32 %v133, %v616
    %618 = vmatmul.bf16.gmra.mxu0 %v162
    %v619 = vpop.f32.mrf.mxu0
    %v620 = vadd.f32 %v133, %v619
    %v621 = vpop.f32.mrf.mxu0
    %v622 = vadd.f32 %v133, %v621
    %623 = vmatmul.bf16.gmra.mxu0 %v163
    %v624 = vpop.f32.mrf.mxu0
    %v625 = vadd.f32 %v133, %v624
    %v626 = vpop.f32.mrf.mxu0
    %v627 = vadd.f32 %v133, %v626
    %628 = vmatmul.bf16.gmra.mxu0 %v164
    %v629 = vpop.f32.mrf.mxu0
    %v630 = vadd.f32 %v133, %v629
    %v631 = vpop.f32.mrf.mxu0
    %v632 = vadd.f32 %v133, %v631
    %633 = vdwg.mxu0
    %634 = vmatpush.bf16.msra.mxu0 %v422
    %635 = vmatpush.bf16.msra.mxu0 %v414
    %636 = vmatpush.bf16.msra.mxu0 %v406
    %637 = vmatpush.bf16.msra.mxu0 %v398
    %638 = vmatpush.bf16.msra.mxu0 %v390
    %639 = vmatpush.bf16.msra.mxu0 %v382
    %640 = vmatpush.bf16.msra.mxu0 %v374
    %641 = vmatpush.bf16.msra.mxu0 %v366
    %642 = vmatmul.bf16.gmra.mxu0 %v161
    %v643 = vpop.f32.mrf.mxu0
    %v644 = vadd.f32 %v134, %v643
    %v645 = vpop.f32.mrf.mxu0
    %v646 = vadd.f32 %v134, %v645
    %647 = vmatmul.bf16.gmra.mxu0 %v162
    %v648 = vpop.f32.mrf.mxu0
    %v649 = vadd.f32 %v134, %v648
    %v650 = vpop.f32.mrf.mxu0
    %v651 = vadd.f32 %v134, %v650
    %652 = vmatmul.bf16.gmra.mxu0 %v163
    %v653 = vpop.f32.mrf.mxu0
    %v654 = vadd.f32 %v134, %v653
    %v655 = vpop.f32.mrf.mxu0
    %v656 = vadd.f32 %v134, %v655
    %657 = vmatmul.bf16.gmra.mxu0 %v164
    %v658 = vpop.f32.mrf.mxu0
    %v659 = vadd.f32 %v134, %v658
    %v660 = vpop.f32.mrf.mxu0
    %v661 = vadd.f32 %v134, %v660
    %662 = vdwg.mxu0
    %663 = vmatpush.bf16.msra.mxu0 %v423
    %664 = vmatpush.bf16.msra.mxu0 %v415
    %665 = vmatpush.bf16.msra.mxu0 %v407
    %666 = vmatpush.bf16.msra.mxu0 %v399
    %667 = vmatpush.bf16.msra.mxu0 %v391
    %668 = vmatpush.bf16.msra.mxu0 %v383
    %669 = vmatpush.bf16.msra.mxu0 %v375
    %670 = vmatpush.bf16.msra.mxu0 %v367
    %671 = vmatmul.bf16.gmra.mxu0 %v161
    %v672 = vpop.f32.mrf.mxu0
    %v673 = vadd.f32 %v135, %v672
    %v674 = vpop.f32.mrf.mxu0
    %v675 = vadd.f32 %v135, %v674
    %676 = vmatmul.bf16.gmra.mxu0 %v162
    %v677 = vpop.f32.mrf.mxu0
    %v678 = vadd.f32 %v135, %v677
    %v679 = vpop.f32.mrf.mxu0
    %v680 = vadd.f32 %v135, %v679
    %681 = vmatmul.bf16.gmra.mxu0 %v163
    %v682 = vpop.f32.mrf.mxu0
    %v683 = vadd.f32 %v135, %v682
    %v684 = vpop.f32.mrf.mxu0
    %v685 = vadd.f32 %v135, %v684
    %686 = vmatmul.bf16.gmra.mxu0 %v164
    %v687 = vpop.f32.mrf.mxu0
    %v688 = vadd.f32 %v135, %v687
    %v689 = vpop.f32.mrf.mxu0
    %v690 = vadd.f32 %v135, %v689
    %691 = vdwg.mxu0
    %692 = vmatpush.bf16.msra.mxu0 %v424
    %693 = vmatpush.bf16.msra.mxu0 %v416
    %694 = vmatpush.bf16.msra.mxu0 %v408
    %695 = vmatpush.bf16.msra.mxu0 %v400
    %696 = vmatpush.bf16.msra.mxu0 %v392
    %697 = vmatpush.bf16.msra.mxu0 %v384
    %698 = vmatpush.bf16.msra.mxu0 %v376
    %699 = vmatpush.bf16.msra.mxu0 %v368
    %700 = vmatmul.bf16.gmra.mxu0 %v161
    %v701 = vpop.f32.mrf.mxu0
    %v702 = vadd.f32 %v136, %v701
    %v703 = vpop.f32.mrf.mxu0
    %v704 = vadd.f32 %v136, %v703
    %705 = vmatmul.bf16.gmra.mxu0 %v162
    %v706 = vpop.f32.mrf.mxu0
    %v707 = vadd.f32 %v136, %v706
    %v708 = vpop.f32.mrf.mxu0
    %v709 = vadd.f32 %v136, %v708
    %710 = vmatmul.bf16.gmra.mxu0 %v163
    %v711 = vpop.f32.mrf.mxu0
    %v712 = vadd.f32 %v136, %v711
    %v713 = vpop.f32.mrf.mxu0
    %v714 = vadd.f32 %v136, %v713
    %715 = vmatmul.bf16.gmra.mxu0 %v164
    %v716 = vpop.f32.mrf.mxu0
    %v717 = vadd.f32 %v136, %v716
    %v718 = vpop.f32.mrf.mxu0
    %v719 = vadd.f32 %v136, %v718
    %720 = vdwg.mxu0
    %721 = vst [vmem:[#allocation2] sm:$0xff] %v499
    %722 = vst [vmem:[#allocation2 + $0x8] sm:$0xff] %v528
    %723 = vst [vmem:[#allocation2 + $0x10] sm:$0xff] %v557
    %724 = vst [vmem:[#allocation2 + $0x18] sm:$0xff] %v586
    %725 = vst [vmem:[#allocation2 + $0x20] sm:$0xff] %v615
    %726 = vst [vmem:[#allocation2 + $0x28] sm:$0xff] %v644
    %727 = vst [vmem:[#allocation2 + $0x30] sm:$0xff] %v673
    %728 = vst [vmem:[#allocation2 + $0x38] sm:$0xff] %v702
    %729 = vst [vmem:[#allocation2 + $0x40] sm:$0xff] %v501
    %730 = vst [vmem:[#allocation2 + $0x48] sm:$0xff] %v530
    %731 = vst [vmem:[#allocation2 + $0x50] sm:$0xff] %v559
    %732 = vst [vmem:[#allocation2 + $0x58] sm:$0xff] %v588
    %733 = vst [vmem:[#allocation2 + $0x60] sm:$0xff] %v617
    %734 = vst [vmem:[#allocation2 + $0x68] sm:$0xff] %v646
    %735 = vst [vmem:[#allocation2 + $0x70] sm:$0xff] %v675
    %736 = vst [vmem:[#allocation2 + $0x78] sm:$0xff] %v704
    %737 = vst [vmem:[#allocation2 + $0x80] sm:$0xff] %v504
    %738 = vst [vmem:[#allocation2 + $0x88] sm:$0xff] %v533
    %739 = vst [vmem:[#allocation2 + $0x90] sm:$0xff] %v562
    %740 = vst [vmem:[#allocation2 + $0x98] sm:$0xff] %v591
    %741 = vst [vmem:[#allocation2 + $0xa0] sm:$0xff] %v620
    %742 = vst [vmem:[#allocation2 + $0xa8] sm:$0xff] %v649
    %743 = vst [vmem:[#allocation2 + $0xb0] sm:$0xff] %v678
    %744 = vst [vmem:[#allocation2 + $0xb8] sm:$0xff] %v707
    %745 = vst [vmem:[#allocation2 + $0xc0] sm:$0xff] %v506
    %746 = vst [vmem:[#allocation2 + $0xc8] sm:$0xff] %v535
    %747 = vst [vmem:[#allocation2 + $0xd0] sm:$0xff] %v564
    %748 = vst [vmem:[#allocation2 + $0xd8] sm:$0xff] %v593
    %749 = vst [vmem:[#allocation2 + $0xe0] sm:$0xff] %v622
    %750 = vst [vmem:[#allocation2 + $0xe8] sm:$0xff] %v651
    %751 = vst [vmem:[#allocation2 + $0xf0] sm:$0xff] %v680
    %752 = vst [vmem:[#allocation2 + $0xf8] sm:$0xff] %v709
    %753 = vst [vmem:[#allocation2 + $0x100] sm:$0xff] %v509
    %754 = vst [vmem:[#allocation2 + $0x108] sm:$0xff] %v538
    %755 = vst [vmem:[#allocation2 + $0x110] sm:$0xff] %v567
    %756 = vst [vmem:[#allocation2 + $0x118] sm:$0xff] %v596
    %757 = vst [vmem:[#allocation2 + $0x120] sm:$0xff] %v625
    %758 = vst [vmem:[#allocation2 + $0x128] sm:$0xff] %v654
    %759 = vst [vmem:[#allocation2 + $0x130] sm:$0xff] %v683
    %760 = vst [vmem:[#allocation2 + $0x138] sm:$0xff] %v712
    %761 = vst [vmem:[#allocation2 + $0x140] sm:$0xff] %v511
    %762 = vst [vmem:[#allocation2 + $0x148] sm:$0xff] %v540
    %763 = vst [vmem:[#allocation2 + $0x150] sm:$0xff] %v569
    %764 = vst [vmem:[#allocation2 + $0x158] sm:$0xff] %v598
    %765 = vst [vmem:[#allocation2 + $0x160] sm:$0xff] %v627
    %766 = vst [vmem:[#allocation2 + $0x168] sm:$0xff] %v656
    %767 = vst [vmem:[#allocation2 + $0x170] sm:$0xff] %v685
    %768 = vst [vmem:[#allocation2 + $0x178] sm:$0xff] %v714
    %769 = vst [vmem:[#allocation2 + $0x180] sm:$0xff] %v514
    %770 = vst [vmem:[#allocation2 + $0x188] sm:$0xff] %v543
    %771 = vst [vmem:[#allocation2 + $0x190] sm:$0xff] %v572
    %772 = vst [vmem:[#allocation2 + $0x198] sm:$0xff] %v601
    %773 = vst [vmem:[#allocation2 + $0x1a0] sm:$0xff] %v630
    %774 = vst [vmem:[#allocation2 + $0x1a8] sm:$0xff] %v659
    %775 = vst [vmem:[#allocation2 + $0x1b0] sm:$0xff] %v688
    %776 = vst [vmem:[#allocation2 + $0x1b8] sm:$0xff] %v717
    %777 = vst [vmem:[#allocation2 + $0x1c0] sm:$0xff] %v516
    %778 = vst [vmem:[#allocation2 + $0x1c8] sm:$0xff] %v545
    %779 = vst [vmem:[#allocation2 + $0x1d0] sm:$0xff] %v574
    %780 = vst [vmem:[#allocation2 + $0x1d8] sm:$0xff] %v603
    %781 = vst [vmem:[#allocation2 + $0x1e0] sm:$0xff] %v632
    %782 = vst [vmem:[#allocation2 + $0x1e8] sm:$0xff] %v661
    %783 = vst [vmem:[#allocation2 + $0x1f0] sm:$0xff] %v690
    %784 = vst [vmem:[#allocation2 + $0x1f8] sm:$0xff] %v719
    %785 = vst [vmem:[#allocation3] sm:$0xff] 0.0
    %786 = vst [vmem:[#allocation3 + $0x8] sm:$0xff] 0.0
    %787 = vst [vmem:[#allocation4] sm:$0xff] 0.0
    %788 = vst [vmem:[#allocation4 + $0x8] sm:$0xff] 0.0
    %v789 = vld [vmem:[%s5] sm:$0x1]
    %v791 = vperm.slane %v789, 0
    %v793 = vadd.f32 %v791, 0.0
    %794 = vst [vmem:[%s6] sm:$0xff] %v793
    %795 = vst [vmem:[%s6 + $0x8] sm:$0xff] %v793
    %796 = vst [vmem:[%s6 + $0x10] sm:$0xff] %v793
    %797 = vst [vmem:[%s6 + $0x18] sm:$0xff] %v793
    %798 = vst [vmem:[%s6 + $0x20] sm:$0xff] %v793
    %799 = vst [vmem:[%s6 + $0x28] sm:$0xff] %v793
    %800 = vst [vmem:[%s6 + $0x30] sm:$0xff] %v793
    %801 = vst [vmem:[%s6 + $0x38] sm:$0xff] %v793
    %v802 = vld [vmem:[#allocation3] sm:$0xff]
    %v803 = vld [vmem:[#allocation3 + $0x8] sm:$0xff]
    %v804 = vpack.c.bf16 %v802, %v802
    %v805 = vpack.c.bf16 %v803, %v803
    %v806 = vld [vmem:[#allocation7] sm:$0xff]
    %v807 = vld [vmem:[#allocation7 + $0x8] sm:$0xff]
    %v808 = vld [vmem:[#allocation7 + $0x10] sm:$0xff]
    %v809 = vld [vmem:[#allocation7 + $0x18] sm:$0xff]
    %v810 = vld [vmem:[#allocation7 + $0x20] sm:$0xff]
    %v811 = vld [vmem:[#allocation7 + $0x28] sm:$0xff]
    %v812 = vld [vmem:[#allocation7 + $0x30] sm:$0xff]
    %v813 = vld [vmem:[#allocation7 + $0x38] sm:$0xff]
    %v814 = vld [vmem:[#allocation7 + $0x40] sm:$0xff]
    %v815 = vld [vmem:[#allocation7 + $0x48] sm:$0xff]
    %v816 = vld [vmem:[#allocation7 + $0x50] sm:$0xff]
    %v817 = vld [vmem:[#allocation7 + $0x58] sm:$0xff]
    %v818 = vld [vmem:[#allocation7 + $0x60] sm:$0xff]
    %v819 = vld [vmem:[#allocation7 + $0x68] sm:$0xff]
    %v820 = vld [vmem:[#allocation7 + $0x70] sm:$0xff]
    %v821 = vld [vmem:[#allocation7 + $0x78] sm:$0xff]
    %v822 = vld [vmem:[#allocation7 + $0x80] sm:$0xff]
    %v823 = vld [vmem:[#allocation7 + $0x88] sm:$0xff]
    %v824 = vld [vmem:[#allocation7 + $0x90] sm:$0xff]
    %v825 = vld [vmem:[#allocation7 + $0x98] sm:$0xff]
    %v826 = vld [vmem:[#allocation7 + $0xa0] sm:$0xff]
    %v827 = vld [vmem:[#allocation7 + $0xa8] sm:$0xff]
    %v828 = vld [vmem:[#allocation7 + $0xb0] sm:$0xff]
    %v829 = vld [vmem:[#allocation7 + $0xb8] sm:$0xff]
    %v830 = vld [vmem:[#allocation7 + $0xc0] sm:$0xff]
    %v831 = vld [vmem:[#allocation7 + $0xc8] sm:$0xff]
    %v832 = vld [vmem:[#allocation7 + $0xd0] sm:$0xff]
    %v833 = vld [vmem:[#allocation7 + $0xd8] sm:$0xff]
    %v834 = vld [vmem:[#allocation7 + $0xe0] sm:$0xff]
    %v835 = vld [vmem:[#allocation7 + $0xe8] sm:$0xff]
    %v836 = vld [vmem:[#allocation7 + $0xf0] sm:$0xff]
    %v837 = vld [vmem:[#allocation7 + $0xf8] sm:$0xff]
    %v838 = vld [vmem:[#allocation7 + $0x100] sm:$0xff]
    %v839 = vld [vmem:[#allocation7 + $0x108] sm:$0xff]
    %v840 = vld [vmem:[#allocation7 + $0x110] sm:$0xff]
    %v841 = vld [vmem:[#allocation7 + $0x118] sm:$0xff]
    %v842 = vld [vmem:[#allocation7 + $0x120] sm:$0xff]
    %v843 = vld [vmem:[#allocation7 + $0x128] sm:$0xff]
    %v844 = vld [vmem:[#allocation7 + $0x130] sm:$0xff]
    %v845 = vld [vmem:[#allocation7 + $0x138] sm:$0xff]
    %v846 = vld [vmem:[#allocation7 + $0x140] sm:$0xff]
    %v847 = vld [vmem:[#allocation7 + $0x148] sm:$0xff]
    %v848 = vld [vmem:[#allocation7 + $0x150] sm:$0xff]
    %v849 = vld [vmem:[#allocation7 + $0x158] sm:$0xff]
    %v850 = vld [vmem:[#allocation7 + $0x160] sm:$0xff]
    %v851 = vld [vmem:[#allocation7 + $0x168] sm:$0xff]
    %v852 = vld [vmem:[#allocation7 + $0x170] sm:$0xff]
    %v853 = vld [vmem:[#allocation7 + $0x178] sm:$0xff]
    %v854 = vld [vmem:[#allocation7 + $0x180] sm:$0xff]
    %v855 = vld [vmem:[#allocation7 + $0x188] sm:$0xff]
    %v856 = vld [vmem:[#allocation7 + $0x190] sm:$0xff]
    %v857 = vld [vmem:[#allocation7 + $0x198] sm:$0xff]
    %v858 = vld [vmem:[#allocation7 + $0x1a0] sm:$0xff]
    %v859 = vld [vmem:[#allocation7 + $0x1a8] sm:$0xff]
    %v860 = vld [vmem:[#allocation7 + $0x1b0] sm:$0xff]
    %v861 = vld [vmem:[#allocation7 + $0x1b8] sm:$0xff]
    %v862 = vld [vmem:[#allocation7 + $0x1c0] sm:$0xff]
    %v863 = vld [vmem:[#allocation7 + $0x1c8] sm:$0xff]
    %v864 = vld [vmem:[#allocation7 + $0x1d0] sm:$0xff]
    %v865 = vld [vmem:[#allocation7 + $0x1d8] sm:$0xff]
    %v866 = vld [vmem:[#allocation7 + $0x1e0] sm:$0xff]
    %v867 = vld [vmem:[#allocation7 + $0x1e8] sm:$0xff]
    %v868 = vld [vmem:[#allocation7 + $0x1f0] sm:$0xff]
    %v869 = vld [vmem:[#allocation7 + $0x1f8] sm:$0xff]
    %v870 = vld [vmem:[#allocation7 + $0x200] sm:$0xff]
    %v871 = vld [vmem:[#allocation7 + $0x208] sm:$0xff]
    %v872 = vld [vmem:[#allocation7 + $0x210] sm:$0xff]
    %v873 = vld [vmem:[#allocation7 + $0x218] sm:$0xff]
    %v874 = vld [vmem:[#allocation7 + $0x220] sm:$0xff]
    %v875 = vld [vmem:[#allocation7 + $0x228] sm:$0xff]
    %v876 = vld [vmem:[#allocation7 + $0x230] sm:$0xff]
    %v877 = vld [vmem:[#allocation7 + $0x238] sm:$0xff]
    %v878 = vld [vmem:[#allocation7 + $0x240] sm:$0xff]
    %v879 = vld [vmem:[#allocation7 + $0x248] sm:$0xff]
    %v880 = vld [vmem:[#allocation7 + $0x250] sm:$0xff]
    %v881 = vld [vmem:[#allocation7 + $0x258] sm:$0xff]
    %v882 = vld [vmem:[#allocation7 + $0x260] sm:$0xff]
    %v883 = vld [vmem:[#allocation7 + $0x268] sm:$0xff]
    %v884 = vld [vmem:[#allocation7 + $0x270] sm:$0xff]
    %v885 = vld [vmem:[#allocation7 + $0x278] sm:$0xff]
    %v886 = vld [vmem:[#allocation7 + $0x280] sm:$0xff]
    %v887 = vld [vmem:[#allocation7 + $0x288] sm:$0xff]
    %v888 = vld [vmem:[#allocation7 + $0x290] sm:$0xff]
    %v889 = vld [vmem:[#allocation7 + $0x298] sm:$0xff]
    %v890 = vld [vmem:[#allocation7 + $0x2a0] sm:$0xff]
    %v891 = vld [vmem:[#allocation7 + $0x2a8] sm:$0xff]
    %v892 = vld [vmem:[#allocation7 + $0x2b0] sm:$0xff]
    %v893 = vld [vmem:[#allocation7 + $0x2b8] sm:$0xff]
    %v894 = vld [vmem:[#allocation7 + $0x2c0] sm:$0xff]
    %v895 = vld [vmem:[#allocation7 + $0x2c8] sm:$0xff]
    %v896 = vld [vmem:[#allocation7 + $0x2d0] sm:$0xff]
    %v897 = vld [vmem:[#allocation7 + $0x2d8] sm:$0xff]
    %v898 = vld [vmem:[#allocation7 + $0x2e0] sm:$0xff]
    %v899 = vld [vmem:[#allocation7 + $0x2e8] sm:$0xff]
    %v900 = vld [vmem:[#allocation7 + $0x2f0] sm:$0xff]
    %v901 = vld [vmem:[#allocation7 + $0x2f8] sm:$0xff]
    %v902 = vld [vmem:[#allocation7 + $0x300] sm:$0xff]
    %v903 = vld [vmem:[#allocation7 + $0x308] sm:$0xff]
    %v904 = vld [vmem:[#allocation7 + $0x310] sm:$0xff]
    %v905 = vld [vmem:[#allocation7 + $0x318] sm:$0xff]
    %v906 = vld [vmem:[#allocation7 + $0x320] sm:$0xff]
    %v907 = vld [vmem:[#allocation7 + $0x328] sm:$0xff]
    %v908 = vld [vmem:[#allocation7 + $0x330] sm:$0xff]
    %v909 = vld [vmem:[#allocation7 + $0x338] sm:$0xff]
    %v910 = vld [vmem:[#allocation7 + $0x340] sm:$0xff]
    %v911 = vld [vmem:[#allocation7 + $0x348] sm:$0xff]
    %v912 = vld [vmem:[#allocation7 + $0x350] sm:$0xff]
    %v913 = vld [vmem:[#allocation7 + $0x358] sm:$0xff]
    %v914 = vld [vmem:[#allocation7 + $0x360] sm:$0xff]
    %v915 = vld [vmem:[#allocation7 + $0x368] sm:$0xff]
    %v916 = vld [vmem:[#allocation7 + $0x370] sm:$0xff]
    %v917 = vld [vmem:[#allocation7 + $0x378] sm:$0xff]
    %v918 = vld [vmem:[#allocation7 + $0x380] sm:$0xff]
    %v919 = vld [vmem:[#allocation7 + $0x388] sm:$0xff]
    %v920 = vld [vmem:[#allocation7 + $0x390] sm:$0xff]
    %v921 = vld [vmem:[#allocation7 + $0x398] sm:$0xff]
    %v922 = vld [vmem:[#allocation7 + $0x3a0] sm:$0xff]
    %v923 = vld [vmem:[#allocation7 + $0x3a8] sm:$0xff]
    %v924 = vld [vmem:[#allocation7 + $0x3b0] sm:$0xff]
    %v925 = vld [vmem:[#allocation7 + $0x3b8] sm:$0xff]
    %v926 = vld [vmem:[#allocation7 + $0x3c0] sm:$0xff]
    %v927 = vld [vmem:[#allocation7 + $0x3c8] sm:$0xff]
    %v928 = vld [vmem:[#allocation7 + $0x3d0] sm:$0xff]
    %v929 = vld [vmem:[#allocation7 + $0x3d8] sm:$0xff]
    %v930 = vld [vmem:[#allocation7 + $0x3e0] sm:$0xff]
    %v931 = vld [vmem:[#allocation7 + $0x3e8] sm:$0xff]
    %v932 = vld [vmem:[#allocation7 + $0x3f0] sm:$0xff]
    %v933 = vld [vmem:[#allocation7 + $0x3f8] sm:$0xff]
    %v1062 = vunpack.c.l.b16 %v806
    %v1063 = vunpack.c.h.b16 %v806
    %v1064 = vunpack.c.l.b16 %v807
    %v1065 = vunpack.c.h.b16 %v807
    %v1066 = vunpack.c.l.b16 %v808
    %v1067 = vunpack.c.h.b16 %v808
    %v1068 = vunpack.c.l.b16 %v809
    %v1069 = vunpack.c.h.b16 %v809
    %v1070 = vunpack.c.l.b16 %v810
    %v1071 = vunpack.c.h.b16 %v810
    %v1072 = vunpack.c.l.b16 %v811
    %v1073 = vunpack.c.h.b16 %v811
    %v1074 = vunpack.c.l.b16 %v812
    %v1075 = vunpack.c.h.b16 %v812
    %v1076 = vunpack.c.l.b16 %v813
    %v1077 = vunpack.c.h.b16 %v813
    %v1078 = vunpack.c.l.b16 %v814
    %v1079 = vunpack.c.h.b16 %v814
    %v1080 = vunpack.c.l.b16 %v815
    %v1081 = vunpack.c.h.b16 %v815
    %v1082 = vunpack.c.l.b16 %v816
    %v1083 = vunpack.c.h.b16 %v816
    %v1084 = vunpack.c.l.b16 %v817
    %v1085 = vunpack.c.h.b16 %v817
    %v1086 = vunpack.c.l.b16 %v818
    %v1087 = vunpack.c.h.b16 %v818
    %v1088 = vunpack.c.l.b16 %v819
    %v1089 = vunpack.c.h.b16 %v819
    %v1090 = vunpack.c.l.b16 %v820
    %v1091 = vunpack.c.h.b16 %v820
    %v1092 = vunpack.c.l.b16 %v821
    %v1093 = vunpack.c.h.b16 %v821
    %v1094 = vunpack.c.l.b16 %v822
    %v1095 = vunpack.c.h.b16 %v822
    %v1096 = vunpack.c.l.b16 %v823
    %v1097 = vunpack.c.h.b16 %v823
    %v1098 = vunpack.c.l.b16 %v824
    %v1099 = vunpack.c.h.b16 %v824
    %v1100 = vunpack.c.l.b16 %v825
    %v1101 = vunpack.c.h.b16 %v825
    %v1102 = vunpack.c.l.b16 %v826
    %v1103 = vunpack.c.h.b16 %v826
    %v1104 = vunpack.c.l.b16 %v827
    %v1105 = vunpack.c.h.b16 %v827
    %v1106 = vunpack.c.l.b16 %v828
    %v1107 = vunpack.c.h.b16 %v828
    %v1108 = vunpack.c.l.b16 %v829
    %v1109 = vunpack.c.h.b16 %v829
    %v1110 = vunpack.c.l.b16 %v830
    %v1111 = vunpack.c.h.b16 %v830
    %v1112 = vunpack.c.l.b16 %v831
    %v1113 = vunpack.c.h.b16 %v831
    %v1114 = vunpack.c.l.b16 %v832
    %v1115 = vunpack.c.h.b16 %v832
    %v1116 = vunpack.c.l.b16 %v833
    %v1117 = vunpack.c.h.b16 %v833
    %v1118 = vunpack.c.l.b16 %v834
    %v1119 = vunpack.c.h.b16 %v834
    %v1120 = vunpack.c.l.b16 %v835
    %v1121 = vunpack.c.h.b16 %v835
    %v1122 = vunpack.c.l.b16 %v836
    %v1123 = vunpack.c.h.b16 %v836
    %v1124 = vunpack.c.l.b16 %v837
    %v1125 = vunpack.c.h.b16 %v837
    %v1126 = vunpack.c.l.b16 %v838
    %v1127 = vunpack.c.h.b16 %v838
    %v1128 = vunpack.c.l.b16 %v839
    %v1129 = vunpack.c.h.b16 %v839
    %v1130 = vunpack.c.l.b16 %v840
    %v1131 = vunpack.c.h.b16 %v840
    %v1132 = vunpack.c.l.b16 %v841
    %v1133 = vunpack.c.h.b16 %v841
    %v1134 = vunpack.c.l.b16 %v842
    %v1135 = vunpack.c.h.b16 %v842
    %v1136 = vunpack.c.l.b16 %v843
    %v1137 = vunpack.c.h.b16 %v843
    %v1138 = vunpack.c.l.b16 %v844
    %v1139 = vunpack.c.h.b16 %v844
    %v1140 = vunpack.c.l.b16 %v845
    %v1141 = vunpack.c.h.b16 %v845
    %v1142 = vunpack.c.l.b16 %v846
    %v1143 = vunpack.c.h.b16 %v846
    %v1144 = vunpack.c.l.b16 %v847
    %v1145 = vunpack.c.h.b16 %v847
    %v1146 = vunpack.c.l.b16 %v848
    %v1147 = vunpack.c.h.b16 %v848
    %v1148 = vunpack.c.l.b16 %v849
    %v1149 = vunpack.c.h.b16 %v849
    %v1150 = vunpack.c.l.b16 %v850
    %v1151 = vunpack.c.h.b16 %v850
    %v1152 = vunpack.c.l.b16 %v851
    %v1153 = vunpack.c.h.b16 %v851
    %v1154 = vunpack.c.l.b16 %v852
    %v1155 = vunpack.c.h.b16 %v852
    %v1156 = vunpack.c.l.b16 %v853
    %v1157 = vunpack.c.h.b16 %v853
    %v1158 = vunpack.c.l.b16 %v854
    %v1159 = vunpack.c.h.b16 %v854
    %v1160 = vunpack.c.l.b16 %v855
    %v1161 = vunpack.c.h.b16 %v855
    %v1162 = vunpack.c.l.b16 %v856
    %v1163 = vunpack.c.h.b16 %v856
    %v1164 = vunpack.c.l.b16 %v857
    %v1165 = vunpack.c.h.b16 %v857
    %v1166 = vunpack.c.l.b16 %v858
    %v1167 = vunpack.c.h.b16 %v858
    %v1168 = vunpack.c.l.b16 %v859
    %v1169 = vunpack.c.h.b16 %v859
    %v1170 = vunpack.c.l.b16 %v860
    %v1171 = vunpack.c.h.b16 %v860
    %v1172 = vunpack.c.l.b16 %v861
    %v1173 = vunpack.c.h.b16 %v861
    %v1174 = vunpack.c.l.b16 %v862
    %v1175 = vunpack.c.h.b16 %v862
    %v1176 = vunpack.c.l.b16 %v863
    %v1177 = vunpack.c.h.b16 %v863
    %v1178 = vunpack.c.l.b16 %v864
    %v1179 = vunpack.c.h.b16 %v864
    %v1180 = vunpack.c.l.b16 %v865
    %v1181 = vunpack.c.h.b16 %v865
    %v1182 = vunpack.c.l.b16 %v866
    %v1183 = vunpack.c.h.b16 %v866
    %v1184 = vunpack.c.l.b16 %v867
    %v1185 = vunpack.c.h.b16 %v867
    %v1186 = vunpack.c.l.b16 %v868
    %v1187 = vunpack.c.h.b16 %v868
    %v1188 = vunpack.c.l.b16 %v869
    %v1189 = vunpack.c.h.b16 %v869
    %v1190 = vunpack.c.l.b16 %v870
    %v1191 = vunpack.c.h.b16 %v870
    %v1192 = vunpack.c.l.b16 %v871
    %v1193 = vunpack.c.h.b16 %v871
    %v1194 = vunpack.c.l.b16 %v872
    %v1195 = vunpack.c.h.b16 %v872
    %v1196 = vunpack.c.l.b16 %v873
    %v1197 = vunpack.c.h.b16 %v873
    %v1198 = vunpack.c.l.b16 %v874
    %v1199 = vunpack.c.h.b16 %v874
    %v1200 = vunpack.c.l.b16 %v875
    %v1201 = vunpack.c.h.b16 %v875
    %v1202 = vunpack.c.l.b16 %v876
    %v1203 = vunpack.c.h.b16 %v876
    %v1204 = vunpack.c.l.b16 %v877
    %v1205 = vunpack.c.h.b16 %v877
    %v1206 = vunpack.c.l.b16 %v878
    %v1207 = vunpack.c.h.b16 %v878
    %v1208 = vunpack.c.l.b16 %v879
    %v1209 = vunpack.c.h.b16 %v879
    %v1210 = vunpack.c.l.b16 %v880
    %v1211 = vunpack.c.h.b16 %v880
    %v1212 = vunpack.c.l.b16 %v881
    %v1213 = vunpack.c.h.b16 %v881
    %v1214 = vunpack.c.l.b16 %v882
    %v1215 = vunpack.c.h.b16 %v882
    %v1216 = vunpack.c.l.b16 %v883
    %v1217 = vunpack.c.h.b16 %v883
    %v1218 = vunpack.c.l.b16 %v884
    %v1219 = vunpack.c.h.b16 %v884
    %v1220 = vunpack.c.l.b16 %v885
    %v1221 = vunpack.c.h.b16 %v885
    %v1222 = vunpack.c.l.b16 %v886
    %v1223 = vunpack.c.h.b16 %v886
    %v1224 = vunpack.c.l.b16 %v887
    %v1225 = vunpack.c.h.b16 %v887
    %v1226 = vunpack.c.l.b16 %v888
    %v1227 = vunpack.c.h.b16 %v888
    %v1228 = vunpack.c.l.b16 %v889
    %v1229 = vunpack.c.h.b16 %v889
    %v1230 = vunpack.c.l.b16 %v890
    %v1231 = vunpack.c.h.b16 %v890
    %v1232 = vunpack.c.l.b16 %v891
    %v1233 = vunpack.c.h.b16 %v891
    %v1234 = vunpack.c.l.b16 %v892
    %v1235 = vunpack.c.h.b16 %v892
    %v1236 = vunpack.c.l.b16 %v893
    %v1237 = vunpack.c.h.b16 %v893
    %v1238 = vunpack.c.l.b16 %v894
    %v1239 = vunpack.c.h.b16 %v894
    %v1240 = vunpack.c.l.b16 %v895
    %v1241 = vunpack.c.h.b16 %v895
    %v1242 = vunpack.c.l.b16 %v896
    %v1243 = vunpack.c.h.b16 %v896
    %v1244 = vunpack.c.l.b16 %v897
    %v1245 = vunpack.c.h.b16 %v897
    %v1246 = vunpack.c.l.b16 %v898
    %v1247 = vunpack.c.h.b16 %v898
    %v1248 = vunpack.c.l.b16 %v899
    %v1249 = vunpack.c.h.b16 %v899
    %v1250 = vunpack.c.l.b16 %v900
    %v1251 = vunpack.c.h.b16 %v900
    %v1252 = vunpack.c.l.b16 %v901
    %v1253 = vunpack.c.h.b16 %v901
    %v1254 = vunpack.c.l.b16 %v902
    %v1255 = vunpack.c.h.b16 %v902
    %v1256 = vunpack.c.l.b16 %v903
    %v1257 = vunpack.c.h.b16 %v903
    %v1258 = vunpack.c.l.b16 %v904
    %v1259 = vunpack.c.h.b16 %v904
    %v1260 = vunpack.c.l.b16 %v905
    %v1261 = vunpack.c.h.b16 %v905
    %v1262 = vunpack.c.l.b16 %v906
    %v1263 = vunpack.c.h.b16 %v906
    %v1264 = vunpack.c.l.b16 %v907
    %v1265 = vunpack.c.h.b16 %v907
    %v1266 = vunpack.c.l.b16 %v908
    %v1267 = vunpack.c.h.b16 %v908
    %v1268 = vunpack.c.l.b16 %v909
    %v1269 = vunpack.c.h.b16 %v909
    %v1270 = vunpack.c.l.b16 %v910
    %v1271 = vunpack.c.h.b16 %v910
    %v1272 = vunpack.c.l.b16 %v911
    %v1273 = vunpack.c.h.b16 %v911
    %v1274 = vunpack.c.l.b16 %v912
    %v1275 = vunpack.c.h.b16 %v912
    %v1276 = vunpack.c.l.b16 %v913
    %v1277 = vunpack.c.h.b16 %v913
    %v1278 = vunpack.c.l.b16 %v914
    %v1279 = vunpack.c.h.b16 %v914
    %v1280 = vunpack.c.l.b16 %v915
    %v1281 = vunpack.c.h.b16 %v915
    %v1282 = vunpack.c.l.b16 %v916
    %v1283 = vunpack.c.h.b16 %v916
    %v1284 = vunpack.c.l.b16 %v917
    %v1285 = vunpack.c.h.b16 %v917
    %v1286 = vunpack.c.l.b16 %v918
    %v1287 = vunpack.c.h.b16 %v918
    %v1288 = vunpack.c.l.b16 %v919
    %v1289 = vunpack.c.h.b16 %v919
    %v1290 = vunpack.c.l.b16 %v920
    %v1291 = vunpack.c.h.b16 %v920
    %v1292 = vunpack.c.l.b16 %v921
    %v1293 = vunpack.c.h.b16 %v921
    %v1294 = vunpack.c.l.b16 %v922
    %v1295 = vunpack.c.h.b16 %v922
    %v1296 = vunpack.c.l.b16 %v923
    %v1297 = vunpack.c.h.b16 %v923
    %v1298 = vunpack.c.l.b16 %v924
    %v1299 = vunpack.c.h.b16 %v924
    %v1300 = vunpack.c.l.b16 %v925
    %v1301 = vunpack.c.h.b16 %v925
    %v1302 = vunpack.c.l.b16 %v926
    %v1303 = vunpack.c.h.b16 %v926
    %v1304 = vunpack.c.l.b16 %v927
    %v1305 = vunpack.c.h.b16 %v927
    %v1306 = vunpack.c.l.b16 %v928
    %v1307 = vunpack.c.h.b16 %v928
    %v1308 = vunpack.c.l.b16 %v929
    %v1309 = vunpack.c.h.b16 %v929
    %v1310 = vunpack.c.l.b16 %v930
    %v1311 = vunpack.c.h.b16 %v930
    %v1312 = vunpack.c.l.b16 %v931
    %v1313 = vunpack.c.h.b16 %v931
    %v1314 = vunpack.c.l.b16 %v932
    %v1315 = vunpack.c.h.b16 %v932
    %v1316 = vunpack.c.l.b16 %v933
    %v1317 = vunpack.c.h.b16 %v933
    %v1318 = vpack.c.b16 %v1070, %v1062
    %v1319 = vpack.c.b16 %v1071, %v1063
    %v1320 = vpack.c.b16 %v1072, %v1064
    %v1321 = vpack.c.b16 %v1073, %v1065
    %v1322 = vpack.c.b16 %v1074, %v1066
    %v1323 = vpack.c.b16 %v1075, %v1067
    %v1324 = vpack.c.b16 %v1076, %v1068
    %v1325 = vpack.c.b16 %v1077, %v1069
    %v1326 = vpack.c.b16 %v1086, %v1078
    %v1327 = vpack.c.b16 %v1087, %v1079
    %v1328 = vpack.c.b16 %v1088, %v1080
    %v1329 = vpack.c.b16 %v1089, %v1081
    %v1330 = vpack.c.b16 %v1090, %v1082
    %v1331 = vpack.c.b16 %v1091, %v1083
    %v1332 = vpack.c.b16 %v1092, %v1084
    %v1333 = vpack.c.b16 %v1093, %v1085
    %v1334 = vpack.c.b16 %v1102, %v1094
    %v1335 = vpack.c.b16 %v1103, %v1095
    %v1336 = vpack.c.b16 %v1104, %v1096
    %v1337 = vpack.c.b16 %v1105, %v1097
    %v1338 = vpack.c.b16 %v1106, %v1098
    %v1339 = vpack.c.b16 %v1107, %v1099
    %v1340 = vpack.c.b16 %v1108, %v1100
    %v1341 = vpack.c.b16 %v1109, %v1101
    %v1342 = vpack.c.b16 %v1118, %v1110
    %v1343 = vpack.c.b16 %v1119, %v1111
    %v1344 = vpack.c.b16 %v1120, %v1112
    %v1345 = vpack.c.b16 %v1121, %v1113
    %v1346 = vpack.c.b16 %v1122, %v1114
    %v1347 = vpack.c.b16 %v1123, %v1115
    %v1348 = vpack.c.b16 %v1124, %v1116
    %v1349 = vpack.c.b16 %v1125, %v1117
    %v1350 = vpack.c.b16 %v1134, %v1126
    %v1351 = vpack.c.b16 %v1135, %v1127
    %v1352 = vpack.c.b16 %v1136, %v1128
    %v1353 = vpack.c.b16 %v1137, %v1129
    %v1354 = vpack.c.b16 %v1138, %v1130
    %v1355 = vpack.c.b16 %v1139, %v1131
    %v1356 = vpack.c.b16 %v1140, %v1132
    %v1357 = vpack.c.b16 %v1141, %v1133
    %v1358 = vpack.c.b16 %v1150, %v1142
    %v1359 = vpack.c.b16 %v1151, %v1143
    %v1360 = vpack.c.b16 %v1152, %v1144
    %v1361 = vpack.c.b16 %v1153, %v1145
    %v1362 = vpack.c.b16 %v1154, %v1146
    %v1363 = vpack.c.b16 %v1155, %v1147
    %v1364 = vpack.c.b16 %v1156, %v1148
    %v1365 = vpack.c.b16 %v1157, %v1149
    %v1366 = vpack.c.b16 %v1166, %v1158
    %v1367 = vpack.c.b16 %v1167, %v1159
    %v1368 = vpack.c.b16 %v1168, %v1160
    %v1369 = vpack.c.b16 %v1169, %v1161
    %v1370 = vpack.c.b16 %v1170, %v1162
    %v1371 = vpack.c.b16 %v1171, %v1163
    %v1372 = vpack.c.b16 %v1172, %v1164
    %v1373 = vpack.c.b16 %v1173, %v1165
    %v1374 = vpack.c.b16 %v1182, %v1174
    %v1375 = vpack.c.b16 %v1183, %v1175
    %v1376 = vpack.c.b16 %v1184, %v1176
    %v1377 = vpack.c.b16 %v1185, %v1177
    %v1378 = vpack.c.b16 %v1186, %v1178
    %v1379 = vpack.c.b16 %v1187, %v1179
    %v1380 = vpack.c.b16 %v1188, %v1180
    %v1381 = vpack.c.b16 %v1189, %v1181
    %v1382 = vpack.c.b16 %v1198, %v1190
    %v1383 = vpack.c.b16 %v1199, %v1191
    %v1384 = vpack.c.b16 %v1200, %v1192
    %v1385 = vpack.c.b16 %v1201, %v1193
    %v1386 = vpack.c.b16 %v1202, %v1194
    %v1387 = vpack.c.b16 %v1203, %v1195
    %v1388 = vpack.c.b16 %v1204, %v1196
    %v1389 = vpack.c.b16 %v1205, %v1197
    %v1390 = vpack.c.b16 %v1214, %v1206
    %v1391 = vpack.c.b16 %v1215, %v1207
    %v1392 = vpack.c.b16 %v1216, %v1208
    %v1393 = vpack.c.b16 %v1217, %v1209
    %v1394 = vpack.c.b16 %v1218, %v1210
    %v1395 = vpack.c.b16 %v1219, %v1211
    %v1396 = vpack.c.b16 %v1220, %v1212
    %v1397 = vpack.c.b16 %v1221, %v1213
    %v1398 = vpack.c.b16 %v1230, %v1222
    %v1399 = vpack.c.b16 %v1231, %v1223
    %v1400 = vpack.c.b16 %v1232, %v1224
    %v1401 = vpack.c.b16 %v1233, %v1225
    %v1402 = vpack.c.b16 %v1234, %v1226
    %v1403 = vpack.c.b16 %v1235, %v1227
    %v1404 = vpack.c.b16 %v1236, %v1228
    %v1405 = vpack.c.b16 %v1237, %v1229
    %v1406 = vpack.c.b16 %v1246, %v1238
    %v1407 = vpack.c.b16 %v1247, %v1239
    %v1408 = vpack.c.b16 %v1248, %v1240
    %v1409 = vpack.c.b16 %v1249, %v1241
    %v1410 = vpack.c.b16 %v1250, %v1242
    %v1411 = vpack.c.b16 %v1251, %v1243
    %v1412 = vpack.c.b16 %v1252, %v1244
    %v1413 = vpack.c.b16 %v1253, %v1245
    %v1414 = vpack.c.b16 %v1262, %v1254
    %v1415 = vpack.c.b16 %v1263, %v1255
    %v1416 = vpack.c.b16 %v1264, %v1256
    %v1417 = vpack.c.b16 %v1265, %v1257
    %v1418 = vpack.c.b16 %v1266, %v1258
    %v1419 = vpack.c.b16 %v1267, %v1259
    %v1420 = vpack.c.b16 %v1268, %v1260
    %v1421 = vpack.c.b16 %v1269, %v1261
    %v1422 = vpack.c.b16 %v1278, %v1270
    %v1423 = vpack.c.b16 %v1279, %v1271
    %v1424 = vpack.c.b16 %v1280, %v1272
    %v1425 = vpack.c.b16 %v1281, %v1273
    %v1426 = vpack.c.b16 %v1282, %v1274
    %v1427 = vpack.c.b16 %v1283, %v1275
    %v1428 = vpack.c.b16 %v1284, %v1276
    %v1429 = vpack.c.b16 %v1285, %v1277
    %v1430 = vpack.c.b16 %v1294, %v1286
    %v1431 = vpack.c.b16 %v1295, %v1287
    %v1432 = vpack.c.b16 %v1296, %v1288
    %v1433 = vpack.c.b16 %v1297, %v1289
    %v1434 = vpack.c.b16 %v1298, %v1290
    %v1435 = vpack.c.b16 %v1299, %v1291
    %v1436 = vpack.c.b16 %v1300, %v1292
    %v1437 = vpack.c.b16 %v1301, %v1293
    %v1438 = vpack.c.b16 %v1310, %v1302
    %v1439 = vpack.c.b16 %v1311, %v1303
    %v1440 = vpack.c.b16 %v1312, %v1304
    %v1441 = vpack.c.b16 %v1313, %v1305
    %v1442 = vpack.c.b16 %v1314, %v1306
    %v1443 = vpack.c.b16 %v1315, %v1307
    %v1444 = vpack.c.b16 %v1316, %v1308
    %v1445 = vpack.c.b16 %v1317, %v1309
    %1574 = vmatpush.bf16.msra.mxu0 %v1374
    %1575 = vmatpush.bf16.msra.mxu0 %v1366
    %1576 = vmatpush.bf16.msra.mxu0 %v1358
    %1577 = vmatpush.bf16.msra.mxu0 %v1350
    %1578 = vmatpush.bf16.msra.mxu0 %v1342
    %1579 = vmatpush.bf16.msra.mxu0 %v1334
    %1580 = vmatpush.bf16.msra.mxu0 %v1326
    %1581 = vmatpush.bf16.msra.mxu0 %v1318
    %1582 = vmatmul.bf16.gmra.mxu0 %v804
    %v1583 = vpop.f32.mrf.mxu0
    %v1584 = vadd.f32 0.0, %v1583
    %v1585 = vpop.f32.mrf.mxu0
    %1586 = vdwg.mxu0
    %1587 = vmatpush.bf16.msra.mxu0 %v1438
    %1588 = vmatpush.bf16.msra.mxu0 %v1430
    %1589 = vmatpush.bf16.msra.mxu0 %v1422
    %1590 = vmatpush.bf16.msra.mxu0 %v1414
    %1591 = vmatpush.bf16.msra.mxu0 %v1406
    %1592 = vmatpush.bf16.msra.mxu0 %v1398
    %1593 = vmatpush.bf16.msra.mxu0 %v1390
    %1594 = vmatpush.bf16.msra.mxu0 %v1382
    %1595 = vmatmul.bf16.gmra.mxu0 %v805
    %v1596 = vpop.f32.mrf.mxu0
    %v1597 = vadd.f32 %v1584, %v1596
    %v1598 = vpop.f32.mrf.mxu0
    %1599 = vdwg.mxu0
    %1600 = vmatpush.bf16.msra.mxu0 %v1375
    %1601 = vmatpush.bf16.msra.mxu0 %v1367
    %1602 = vmatpush.bf16.msra.mxu0 %v1359
    %1603 = vmatpush.bf16.msra.mxu0 %v1351
    %1604 = vmatpush.bf16.msra.mxu0 %v1343
    %1605 = vmatpush.bf16.msra.mxu0 %v1335
    %1606 = vmatpush.bf16.msra.mxu0 %v1327
    %1607 = vmatpush.bf16.msra.mxu0 %v1319
    %1608 = vmatmul.bf16.gmra.mxu0 %v804
    %v1609 = vpop.f32.mrf.mxu0
    %v1610 = vadd.f32 0.0, %v1609
    %v1611 = vpop.f32.mrf.mxu0
    %1612 = vdwg.mxu0
    %1613 = vmatpush.bf16.msra.mxu0 %v1439
    %1614 = vmatpush.bf16.msra.mxu0 %v1431
    %1615 = vmatpush.bf16.msra.mxu0 %v1423
    %1616 = vmatpush.bf16.msra.mxu0 %v1415
    %1617 = vmatpush.bf16.msra.mxu0 %v1407
    %1618 = vmatpush.bf16.msra.mxu0 %v1399
    %1619 = vmatpush.bf16.msra.mxu0 %v1391
    %1620 = vmatpush.bf16.msra.mxu0 %v1383
    %1621 = vmatmul.bf16.gmra.mxu0 %v805
    %v1622 = vpop.f32.mrf.mxu0
    %v1623 = vadd.f32 %v1610, %v1622
    %v1624 = vpop.f32.mrf.mxu0
    %1625 = vdwg.mxu0
    %1626 = vmatpush.bf16.msra.mxu0 %v1376
    %1627 = vmatpush.bf16.msra.mxu0 %v1368
    %1628 = vmatpush.bf16.msra.mxu0 %v1360
    %1629 = vmatpush.bf16.msra.mxu0 %v1352
    %1630 = vmatpush.bf16.msra.mxu0 %v1344
    %1631 = vmatpush.bf16.msra.mxu0 %v1336
    %1632 = vmatpush.bf16.msra.mxu0 %v1328
    %1633 = vmatpush.bf16.msra.mxu0 %v1320
    %1634 = vmatmul.bf16.gmra.mxu0 %v804
    %v1635 = vpop.f32.mrf.mxu0
    %v1636 = vadd.f32 0.0, %v1635
    %v1637 = vpop.f32.mrf.mxu0
    %1638 = vdwg.mxu0
    %1639 = vmatpush.bf16.msra.mxu0 %v1440
    %1640 = vmatpush.bf16.msra.mxu0 %v1432
    %1641 = vmatpush.bf16.msra.mxu0 %v1424
    %1642 = vmatpush.bf16.msra.mxu0 %v1416
    %1643 = vmatpush.bf16.msra.mxu0 %v1408
    %1644 = vmatpush.bf16.msra.mxu0 %v1400
    %1645 = vmatpush.bf16.msra.mxu0 %v1392
    %1646 = vmatpush.bf16.msra.mxu0 %v1384
    %1647 = vmatmul.bf16.gmra.mxu0 %v805
    %v1648 = vpop.f32.mrf.mxu0
    %v1649 = vadd.f32 %v1636, %v1648
    %v1650 = vpop.f32.mrf.mxu0
    %1651 = vdwg.mxu0
    %1652 = vmatpush.bf16.msra.mxu0 %v1377
    %1653 = vmatpush.bf16.msra.mxu0 %v1369
    %1654 = vmatpush.bf16.msra.mxu0 %v1361
    %1655 = vmatpush.bf16.msra.mxu0 %v1353
    %1656 = vmatpush.bf16.msra.mxu0 %v1345
    %1657 = vmatpush.bf16.msra.mxu0 %v1337
    %1658 = vmatpush.bf16.msra.mxu0 %v1329
    %1659 = vmatpush.bf16.msra.mxu0 %v1321
    %1660 = vmatmul.bf16.gmra.mxu0 %v804
    %v1661 = vpop.f32.mrf.mxu0
    %v1662 = vadd.f32 0.0, %v1661
    %v1663 = vpop.f32.mrf.mxu0
    %1664 = vdwg.mxu0
    %1665 = vmatpush.bf16.msra.mxu0 %v1441
    %1666 = vmatpush.bf16.msra.mxu0 %v1433
    %1667 = vmatpush.bf16.msra.mxu0 %v1425
    %1668 = vmatpush.bf16.msra.mxu0 %v1417
    %1669 = vmatpush.bf16.msra.mxu0 %v1409
    %1670 = vmatpush.bf16.msra.mxu0 %v1401
    %1671 = vmatpush.bf16.msra.mxu0 %v1393
    %1672 = vmatpush.bf16.msra.mxu0 %v1385
    %1673 = vmatmul.bf16.gmra.mxu0 %v805
    %v1674 = vpop.f32.mrf.mxu0
    %v1675 = vadd.f32 %v1662, %v1674
    %v1676 = vpop.f32.mrf.mxu0
    %1677 = vdwg.mxu0
    %1678 = vmatpush.bf16.msra.mxu0 %v1378
    %1679 = vmatpush.bf16.msra.mxu0 %v1370
    %1680 = vmatpush.bf16.msra.mxu0 %v1362
    %1681 = vmatpush.bf16.msra.mxu0 %v1354
    %1682 = vmatpush.bf16.msra.mxu0 %v1346
    %1683 = vmatpush.bf16.msra.mxu0 %v1338
    %1684 = vmatpush.bf16.msra.mxu0 %v1330
    %1685 = vmatpush.bf16.msra.mxu0 %v1322
    %1686 = vmatmul.bf16.gmra.mxu0 %v804
    %v1687 = vpop.f32.mrf.mxu0
    %v1688 = vadd.f32 0.0, %v1687
    %v1689 = vpop.f32.mrf.mxu0
    %1690 = vdwg.mxu0
    %1691 = vmatpush.bf16.msra.mxu0 %v1442
    %1692 = vmatpush.bf16.msra.mxu0 %v1434
    %1693 = vmatpush.bf16.msra.mxu0 %v1426
    %1694 = vmatpush.bf16.msra.mxu0 %v1418
    %1695 = vmatpush.bf16.msra.mxu0 %v1410
    %1696 = vmatpush.bf16.msra.mxu0 %v1402
    %1697 = vmatpush.bf16.msra.mxu0 %v1394
    %1698 = vmatpush.bf16.msra.mxu0 %v1386
    %1699 = vmatmul.bf16.gmra.mxu0 %v805
    %v1700 = vpop.f32.mrf.mxu0
    %v1701 = vadd.f32 %v1688, %v1700
    %v1702 = vpop.f32.mrf.mxu0
    %1703 = vdwg.mxu0
    %1704 = vmatpush.bf16.msra.mxu0 %v1379
    %1705 = vmatpush.bf16.msra.mxu0 %v1371
    %1706 = vmatpush.bf16.msra.mxu0 %v1363
    %1707 = vmatpush.bf16.msra.mxu0 %v1355
    %1708 = vmatpush.bf16.msra.mxu0 %v1347
    %1709 = vmatpush.bf16.msra.mxu0 %v1339
    %1710 = vmatpush.bf16.msra.mxu0 %v1331
    %1711 = vmatpush.bf16.msra.mxu0 %v1323
    %1712 = vmatmul.bf16.gmra.mxu0 %v804
    %v1713 = vpop.f32.mrf.mxu0
    %v1714 = vadd.f32 0.0, %v1713
    %v1715 = vpop.f32.mrf.mxu0
    %1716 = vdwg.mxu0
    %1717 = vmatpush.bf16.msra.mxu0 %v1443
    %1718 = vmatpush.bf16.msra.mxu0 %v1435
    %1719 = vmatpush.bf16.msra.mxu0 %v1427
    %1720 = vmatpush.bf16.msra.mxu0 %v1419
    %1721 = vmatpush.bf16.msra.mxu0 %v1411
    %1722 = vmatpush.bf16.msra.mxu0 %v1403
    %1723 = vmatpush.bf16.msra.mxu0 %v1395
    %1724 = vmatpush.bf16.msra.mxu0 %v1387
    %1725 = vmatmul.bf16.gmra.mxu0 %v805
    %v1726 = vpop.f32.mrf.mxu0
    %v1727 = vadd.f32 %v1714, %v1726
    %v1728 = vpop.f32.mrf.mxu0
    %1729 = vdwg.mxu0
    %1730 = vmatpush.bf16.msra.mxu0 %v1380
    %1731 = vmatpush.bf16.msra.mxu0 %v1372
    %1732 = vmatpush.bf16.msra.mxu0 %v1364
    %1733 = vmatpush.bf16.msra.mxu0 %v1356
    %1734 = vmatpush.bf16.msra.mxu0 %v1348
    %1735 = vmatpush.bf16.msra.mxu0 %v1340
    %1736 = vmatpush.bf16.msra.mxu0 %v1332
    %1737 = vmatpush.bf16.msra.mxu0 %v1324
    %1738 = vmatmul.bf16.gmra.mxu0 %v804
    %v1739 = vpop.f32.mrf.mxu0
    %v1740 = vadd.f32 0.0, %v1739
    %v1741 = vpop.f32.mrf.mxu0
    %1742 = vdwg.mxu0
    %1743 = vmatpush.bf16.msra.mxu0 %v1444
    %1744 = vmatpush.bf16.msra.mxu0 %v1436
    %1745 = vmatpush.bf16.msra.mxu0 %v1428
    %1746 = vmatpush.bf16.msra.mxu0 %v1420
    %1747 = vmatpush.bf16.msra.mxu0 %v1412
    %1748 = vmatpush.bf16.msra.mxu0 %v1404
    %1749 = vmatpush.bf16.msra.mxu0 %v1396
    %1750 = vmatpush.bf16.msra.mxu0 %v1388
    %1751 = vmatmul.bf16.gmra.mxu0 %v805
    %v1752 = vpop.f32.mrf.mxu0
    %v1753 = vadd.f32 %v1740, %v1752
    %v1754 = vpop.f32.mrf.mxu0
    %1755 = vdwg.mxu0
    %1756 = vmatpush.bf16.msra.mxu0 %v1381
    %1757 = vmatpush.bf16.msra.mxu0 %v1373
    %1758 = vmatpush.bf16.msra.mxu0 %v1365
    %1759 = vmatpush.bf16.msra.mxu0 %v1357
    %1760 = vmatpush.bf16.msra.mxu0 %v1349
    %1761 = vmatpush.bf16.msra.mxu0 %v1341
    %1762 = vmatpush.bf16.msra.mxu0 %v1333
    %1763 = vmatpush.bf16.msra.mxu0 %v1325
    %1764 = vmatmul.bf16.gmra.mxu0 %v804
    %v1765 = vpop.f32.mrf.mxu0
    %v1766 = vadd.f32 0.0, %v1765
    %v1767 = vpop.f32.mrf.mxu0
    %1768 = vdwg.mxu0
    %1769 = vmatpush.bf16.msra.mxu0 %v1445
    %1770 = vmatpush.bf16.msra.mxu0 %v1437
    %1771 = vmatpush.bf16.msra.mxu0 %v1429
    %1772 = vmatpush.bf16.msra.mxu0 %v1421
    %1773 = vmatpush.bf16.msra.mxu0 %v1413
    %1774 = vmatpush.bf16.msra.mxu0 %v1405
    %1775 = vmatpush.bf16.msra.mxu0 %v1397
    %1776 = vmatpush.bf16.msra.mxu0 %v1389
    %1777 = vmatmul.bf16.gmra.mxu0 %v805
    %v1778 = vpop.f32.mrf.mxu0
    %v1779 = vadd.f32 %v1766, %v1778
    %v1780 = vpop.f32.mrf.mxu0
    %1781 = vdwg.mxu0
    %v1782 = vld [vmem:[#allocation2] sm:$0xff]
    %v1783 = vld [vmem:[#allocation2 + $0x8] sm:$0xff]
    %v1784 = vld [vmem:[#allocation2 + $0x10] sm:$0xff]
    %v1785 = vld [vmem:[#allocation2 + $0x18] sm:$0xff]
    %v1786 = vadd.f32 %v1782, %v1597
    %v1787 = vadd.f32 %v1783, %v1623
    %v1788 = vadd.f32 %v1784, %v1649
    %v1789 = vadd.f32 %v1785, %v1675
    %v1790 = vld [vmem:[#allocation2 + $0x1e0] sm:$0xff]
    %v1791 = vld [vmem:[#allocation2 + $0x1e8] sm:$0xff]
    %v1792 = vld [vmem:[#allocation2 + $0x1f0] sm:$0xff]
    %v1793 = vld [vmem:[#allocation2 + $0x1f8] sm:$0xff]
    %v1794 = vadd.f32 %v1790, %v1701
    %v1795 = vadd.f32 %v1791, %v1727
    %v1796 = vadd.f32 %v1792, %v1753
    %v1797 = vadd.f32 %v1793, %v1779
    %v1798 = vxor.u32 %v1786, 2147483648
    %v1799 = vxor.u32 %v1794, 2147483648
    %v1800 = vmul.f32 %v1798, 1.442695
    %v1801 = vpow.pop %v1800
    %v1802 = vmul.f32 %v1799, 1.442695
    %v1803 = vpow.pop %v1802
    %v1804 = vadd.f32 %v1801, 1.0
    %v1805 = vadd.f32 %v1803, 1.0
    %v1806 = vrcp.pop %v1804
    %v1807 = vmul.f32 %v1804, %v1806
    %v1808 = vsub.f32 1.0, %v1807
    %v1809 = vmul.f32 %v1806, %v1808
    %v1810 = vadd.f32 %v1806, %v1809
    %vm1811 = vweird.f32 %v1804
    %vm1812 = vweird.f32 %v1806
    %vm1813 = vmor %vm1811, %vm1812
    %v1814 = vsel %vm1813, %v1806, %v1810
    %v1815 = vand.u32 2147483647, %v1804
    %vm1816 = vcmp.eq.f32.partialorder %v1815, 8.507059e+37
    %v1817 = vand.u32 %v1804, 2147483648
    %v1818 = vor.u32 1.1754944e-38, %v1817
    %v1819 = vsel %vm1816, %v1818, %v1814
    %v1820 = vmul.f32 1.0, %v1819
    %v1821 = vrcp.pop %v1805
    %v1822 = vmul.f32 %v1805, %v1821
    %v1823 = vsub.f32 1.0, %v1822
    %v1824 = vmul.f32 %v1821, %v1823
    %v1825 = vadd.f32 %v1821, %v1824
    %vm1826 = vweird.f32 %v1805
    %vm1827 = vweird.f32 %v1821
    %vm1828 = vmor %vm1826, %vm1827
    %v1829 = vsel %vm1828, %v1821, %v1825
    %v1830 = vand.u32 2147483647, %v1805
    %vm1831 = vcmp.eq.f32.partialorder %v1830, 8.507059e+37
    %v1832 = vand.u32 %v1805, 2147483648
    %v1833 = vor.u32 1.1754944e-38, %v1832
    %v1834 = vsel %vm1831, %v1833, %v1829
    %v1835 = vmul.f32 1.0, %v1834
    %v1836 = vxor.u32 %v1787, 2147483648
    %v1837 = vxor.u32 %v1795, 2147483648
    %v1838 = vmul.f32 %v1836, 1.442695
    %v1839 = vpow.pop %v1838
    %v1840 = vmul.f32 %v1837, 1.442695
    %v1841 = vpow.pop %v1840
    %v1842 = vadd.f32 %v1839, 1.0
    %v1843 = vadd.f32 %v1841, 1.0
    %v1844 = vrcp.pop %v1842
    %v1845 = vmul.f32 %v1842, %v1844
    %v1846 = vsub.f32 1.0, %v1845
    %v1847 = vmul.f32 %v1844, %v1846
    %v1848 = vadd.f32 %v1844, %v1847
    %vm1849 = vweird.f32 %v1842
    %vm1850 = vweird.f32 %v1844
    %vm1851 = vmor %vm1849, %vm1850
    %v1852 = vsel %vm1851, %v1844, %v1848
    %v1853 = vand.u32 2147483647, %v1842
    %vm1854 = vcmp.eq.f32.partialorder %v1853, 8.507059e+37
    %v1855 = vand.u32 %v1842, 2147483648
    %v1856 = vor.u32 1.1754944e-38, %v1855
    %v1857 = vsel %vm1854, %v1856, %v1852
    %v1858 = vmul.f32 1.0, %v1857
    %v1859 = vrcp.pop %v1843
    %v1860 = vmul.f32 %v1843, %v1859
    %v1861 = vsub.f32 1.0, %v1860
    %v1862 = vmul.f32 %v1859, %v1861
    %v1863 = vadd.f32 %v1859, %v1862
    %vm1864 = vweird.f32 %v1843
    %vm1865 = vweird.f32 %v1859
    %vm1866 = vmor %vm1864, %vm1865
    %v1867 = vsel %vm1866, %v1859, %v1863
    %v1868 = vand.u32 2147483647, %v1843
    %vm1869 = vcmp.eq.f32.partialorder %v1868, 8.507059e+37
    %v1870 = vand.u32 %v1843, 2147483648
    %v1871 = vor.u32 1.1754944e-38, %v1870
    %v1872 = vsel %vm1869, %v1871, %v1867
    %v1873 = vmul.f32 1.0, %v1872
    %v1874 = vtanh.pop %v1788
    %v1875 = vtanh.pop %v1796
    %v1876 = vxor.u32 %v1789, 2147483648
    %v1877 = vxor.u32 %v1797, 2147483648
    %v1878 = vmul.f32 %v1876, 1.442695
    %v1879 = vpow.pop %v1878
    %v1880 = vmul.f32 %v1877, 1.442695
    %v1881 = vpow.pop %v1880
    %v1882 = vadd.f32 %v1879, 1.0
    %v1883 = vadd.f32 %v1881, 1.0
    %v1884 = vrcp.pop %v1882
    %v1885 = vmul.f32 %v1882, %v1884
    %v1886 = vsub.f32 1.0, %v1885
    %v1887 = vmul.f32 %v1884, %v1886
    %v1888 = vadd.f32 %v1884, %v1887
    %vm1889 = vweird.f32 %v1882
    %vm1890 = vweird.f32 %v1884
    %vm1891 = vmor %vm1889, %vm1890
    %v1892 = vsel %vm1891, %v1884, %v1888
    %v1893 = vand.u32 2147483647, %v1882
    %vm1894 = vcmp.eq.f32.partialorder %v1893, 8.507059e+37
    %v1895 = vand.u32 %v1882, 2147483648
    %v1896 = vor.u32 1.1754944e-38, %v1895
    %v1897 = vsel %vm1894, %v1896, %v1892
    %v1898 = vmul.f32 1.0, %v1897
    %v1899 = vrcp.pop %v1883
    %v1900 = vmul.f32 %v1883, %v1899
    %v1901 = vsub.f32 1.0, %v1900
    %v1902 = vmul.f32 %v1899, %v1901
    %v1903 = vadd.f32 %v1899, %v1902
    %vm1904 = vweird.f32 %v1883
    %vm1905 = vweird.f32 %v1899
    %vm1906 = vmor %vm1904, %vm1905
    %v1907 = vsel %vm1906, %v1899, %v1903
    %v1908 = vand.u32 2147483647, %v1883
    %vm1909 = vcmp.eq.f32.partialorder %v1908, 8.507059e+37
    %v1910 = vand.u32 %v1883, 2147483648
    %v1911 = vor.u32 1.1754944e-38, %v1910
    %v1912 = vsel %vm1909, %v1911, %v1907
    %v1913 = vmul.f32 1.0, %v1912
    %v1914 = vld [vmem:[#allocation4] sm:$0xff]
    %v1915 = vld [vmem:[#allocation4 + $0x8] sm:$0xff]
    %v1916 = vmul.f32 %v1858, %v1914
    %v1917 = vmul.f32 %v1873, %v1915
    %v1918 = vmul.f32 %v1820, %v1874
    %v1919 = vmul.f32 %v1835, %v1875
    %v1920 = vadd.f32 %v1916, %v1918
    %v1921 = vadd.f32 %v1917, %v1919
    %v1922 = vtanh.pop %v1920
    %v1923 = vtanh.pop %v1921
    %v1924 = vmul.f32 %v1898, %v1922
    %v1925 = vmul.f32 %v1913, %v1923
    %1926 = vst [vmem:[#allocation4] sm:$0xff] %v1920
    %1927 = vst [vmem:[#allocation4 + $0x8] sm:$0xff] %v1921
    %1928 = vst [vmem:[#allocation3] sm:$0xff] %v1924
    %1929 = vst [vmem:[#allocation3 + $0x8] sm:$0xff] %v1925
    %v1930 = vpack.c.bf16 %v1925, %v1924
    %v1931 = vld [vmem:[%s6] sm:$0xff]
    %v1932 = vld [vmem:[%s4] sm:$0xf]
    %v1933 = vld [vmem:[%s4 + $0x4] sm:$0xf]
    %v1934 = vld [vmem:[%s4 + $0x8] sm:$0xf]
    %v1935 = vld [vmem:[%s4 + $0xc] sm:$0xf]
    %v1936 = vld [vmem:[%s4 + $0x10] sm:$0xf]
    %v1937 = vld [vmem:[%s4 + $0x14] sm:$0xf]
    %v1938 = vld [vmem:[%s4 + $0x18] sm:$0xf]
    %v1939 = vld [vmem:[%s4 + $0x1c] sm:$0xf]
    %v1940 = vld [vmem:[%s4 + $0x20] sm:$0xf]
    %v1941 = vld [vmem:[%s4 + $0x24] sm:$0xf]
    %v1942 = vld [vmem:[%s4 + $0x28] sm:$0xf]
    %v1943 = vld [vmem:[%s4 + $0x2c] sm:$0xf]
    %v1944 = vld [vmem:[%s4 + $0x30] sm:$0xf]
    %v1945 = vld [vmem:[%s4 + $0x34] sm:$0xf]
    %v1946 = vld [vmem:[%s4 + $0x38] sm:$0xf]
    %v1947 = vld [vmem:[%s4 + $0x3c] sm:$0xf]
    %v1964 = vunpack.c.l.b16 %v1932
    %v1965 = vunpack.c.l.b16 %v1933
    %v1966 = vunpack.c.l.b16 %v1934
    %v1967 = vunpack.c.l.b16 %v1935
    %v1968 = vunpack.c.l.b16 %v1936
    %v1969 = vunpack.c.l.b16 %v1937
    %v1970 = vunpack.c.l.b16 %v1938
    %v1971 = vunpack.c.l.b16 %v1939
    %v1972 = vunpack.c.l.b16 %v1940
    %v1973 = vunpack.c.l.b16 %v1941
    %v1974 = vunpack.c.l.b16 %v1942
    %v1975 = vunpack.c.l.b16 %v1943
    %v1976 = vunpack.c.l.b16 %v1944
    %v1977 = vunpack.c.l.b16 %v1945
    %v1978 = vunpack.c.l.b16 %v1946
    %v1979 = vunpack.c.l.b16 %v1947
    %v1980 = vpack.c.b16 %v1965, %v1964
    %v1981 = vpack.c.b16 %v1967, %v1966
    %v1982 = vpack.c.b16 %v1969, %v1968
    %v1983 = vpack.c.b16 %v1971, %v1970
    %v1984 = vpack.c.b16 %v1973, %v1972
    %v1985 = vpack.c.b16 %v1975, %v1974
    %v1986 = vpack.c.b16 %v1977, %v1976
    %v1987 = vpack.c.b16 %v1979, %v1978
    %1996 = vmatpush.bf16.msra.mxu0 %v1987
    %1997 = vmatpush.bf16.msra.mxu0 %v1986
    %1998 = vmatpush.bf16.msra.mxu0 %v1985
    %1999 = vmatpush.bf16.msra.mxu0 %v1984
    %2000 = vmatpush.bf16.msra.mxu0 %v1983
    %2001 = vmatpush.bf16.msra.mxu0 %v1982
    %2002 = vmatpush.bf16.msra.mxu0 %v1981
    %2003 = vmatpush.bf16.msra.mxu0 %v1980
    %2004 = vmatmul.bf16.gmra.mxu0 %v1930
    %v2005 = vpop.f32.mrf.mxu0
    %v2006 = vadd.f32 0.0, %v2005
    %v2007 = vpop.f32.mrf.mxu0
    %2008 = vdwg.mxu0
    %v2009 = vadd.f32 %v1931, %v2006
    %2010 = vst [vmem:[%s6] sm:$0xff] %v2009
    %v2011 = vld [vmem:[%s6 + $0x38] sm:$0xff]
    %v2012 = vld [vmem:[%s4 + $0x40] sm:$0xf]
    %v2013 = vld [vmem:[%s4 + $0x44] sm:$0xf]
    %v2014 = vld [vmem:[%s4 + $0x48] sm:$0xf]
    %v2015 = vld [vmem:[%s4 + $0x4c] sm:$0xf]
    %v2016 = vld [vmem:[%s4 + $0x50] sm:$0xf]
    %v2017 = vld [vmem:[%s4 + $0x54] sm:$0xf]
    %v2018 = vld [vmem:[%s4 + $0x58] sm:$0xf]
    %v2019 = vld [vmem:[%s4 + $0x5c] sm:$0xf]
    %v2020 = vld [vmem:[%s4 + $0x60] sm:$0xf]
    %v2021 = vld [vmem:[%s4 + $0x64] sm:$0xf]
    %v2022 = vld [vmem:[%s4 + $0x68] sm:$0xf]
    %v2023 = vld [vmem:[%s4 + $0x6c] sm:$0xf]
    %v2024 = vld [vmem:[%s4 + $0x70] sm:$0xf]
    %v2025 = vld [vmem:[%s4 + $0x74] sm:$0xf]
    %v2026 = vld [vmem:[%s4 + $0x78] sm:$0xf]
    %v2027 = vld [vmem:[%s4 + $0x7c] sm:$0xf]
    %v2029 = vunpack.c.h.b16 %v1930
    %v2030 = vpack.c.b16 %v2029, %v2029
    %v2048 = vunpack.c.l.b16 %v2012
    %v2049 = vunpack.c.l.b16 %v2013
    %v2050 = vunpack.c.l.b16 %v2014
    %v2051 = vunpack.c.l.b16 %v2015
    %v2052 = vunpack.c.l.b16 %v2016
    %v2053 = vunpack.c.l.b16 %v2017
    %v2054 = vunpack.c.l.b16 %v2018
    %v2055 = vunpack.c.l.b16 %v2019
    %v2056 = vunpack.c.l.b16 %v2020
    %v2057 = vunpack.c.l.b16 %v2021
    %v2058 = vunpack.c.l.b16 %v2022
    %v2059 = vunpack.c.l.b16 %v2023
    %v2060 = vunpack.c.l.b16 %v2024
    %v2061 = vunpack.c.l.b16 %v2025
    %v2062 = vunpack.c.l.b16 %v2026
    %v2063 = vunpack.c.l.b16 %v2027
    %v2064 = vpack.c.b16 %v2049, %v2048
    %v2065 = vpack.c.b16 %v2051, %v2050
    %v2066 = vpack.c.b16 %v2053, %v2052
    %v2067 = vpack.c.b16 %v2055, %v2054
    %v2068 = vpack.c.b16 %v2057, %v2056
    %v2069 = vpack.c.b16 %v2059, %v2058
    %v2070 = vpack.c.b16 %v2061, %v2060
    %v2071 = vpack.c.b16 %v2063, %v2062
    %2080 = vmatpush.bf16.msra.mxu0 %v2071
    %2081 = vmatpush.bf16.msra.mxu0 %v2070
    %2082 = vmatpush.bf16.msra.mxu0 %v2069
    %2083 = vmatpush.bf16.msra.mxu0 %v2068
    %2084 = vmatpush.bf16.msra.mxu0 %v2067
    %2085 = vmatpush.bf16.msra.mxu0 %v2066
    %2086 = vmatpush.bf16.msra.mxu0 %v2065
    %2087 = vmatpush.bf16.msra.mxu0 %v2064
    %2088 = vmatmul.bf16.gmra.mxu0 %v2030
    %v2089 = vpop.f32.mrf.mxu0
    %v2090 = vadd.f32 0.0, %v2089
    %v2091 = vpop.f32.mrf.mxu0
    %2092 = vdwg.mxu0
    %v2093 = vadd.f32 %v2011, %v2090
    %2094 = vst [vmem:[%s6 + $0x38] sm:$0xff] %v2093
    %v2095 = vld [vmem:[#allocation3] sm:$0xff]
    %v2096 = vld [vmem:[#allocation3 + $0x8] sm:$0xff]
    %v2097 = vpack.c.bf16 %v2095, %v2095
    %v2098 = vpack.c.bf16 %v2096, %v2096
    %v2099 = vld [vmem:[#allocation7] sm:$0xff]
    %v2100 = vld [vmem:[#allocation7 + $0x8] sm:$0xff]
    %v2101 = vld [vmem:[#allocation7 + $0x10] sm:$0xff]
    %v2102 = vld [vmem:[#allocation7 + $0x18] sm:$0xff]
    %v2103 = vld [vmem:[#allocation7 + $0x20] sm:$0xff]
    %v2104 = vld [vmem:[#allocation7 + $0x28] sm:$0xff]
    %v2105 = vld [vmem:[#allocation7 + $0x30] sm:$0xff]
    %v2106 = vld [vmem:[#allocation7 + $0x38] sm:$0xff]
    %v2107 = vld [vmem:[#allocation7 + $0x40] sm:$0xff]
    %v2108 = vld [vmem:[#allocation7 + $0x48] sm:$0xff]
    %v2109 = vld [vmem:[#allocation7 + $0x50] sm:$0xff]
    %v2110 = vld [vmem:[#allocation7 + $0x58] sm:$0xff]
    %v2111 = vld [vmem:[#allocation7 + $0x60] sm:$0xff]
    %v2112 = vld [vmem:[#allocation7 + $0x68] sm:$0xff]
    %v2113 = vld [vmem:[#allocation7 + $0x70] sm:$0xff]
    %v2114 = vld [vmem:[#allocation7 + $0x78] sm:$0xff]
    %v2115 = vld [vmem:[#allocation7 + $0x80] sm:$0xff]
    %v2116 = vld [vmem:[#allocation7 + $0x88] sm:$0xff]
    %v2117 = vld [vmem:[#allocation7 + $0x90] sm:$0xff]
    %v2118 = vld [vmem:[#allocation7 + $0x98] sm:$0xff]
    %v2119 = vld [vmem:[#allocation7 + $0xa0] sm:$0xff]
    %v2120 = vld [vmem:[#allocation7 + $0xa8] sm:$0xff]
    %v2121 = vld [vmem:[#allocation7 + $0xb0] sm:$0xff]
    %v2122 = vld [vmem:[#allocation7 + $0xb8] sm:$0xff]
    %v2123 = vld [vmem:[#allocation7 + $0xc0] sm:$0xff]
    %v2124 = vld [vmem:[#allocation7 + $0xc8] sm:$0xff]
    %v2125 = vld [vmem:[#allocation7 + $0xd0] sm:$0xff]
    %v2126 = vld [vmem:[#allocation7 + $0xd8] sm:$0xff]
    %v2127 = vld [vmem:[#allocation7 + $0xe0] sm:$0xff]
    %v2128 = vld [vmem:[#allocation7 + $0xe8] sm:$0xff]
    %v2129 = vld [vmem:[#allocation7 + $0xf0] sm:$0xff]
    %v2130 = vld [vmem:[#allocation7 + $0xf8] sm:$0xff]
    %v2131 = vld [vmem:[#allocation7 + $0x100] sm:$0xff]
    %v2132 = vld [vmem:[#allocation7 + $0x108] sm:$0xff]
    %v2133 = vld [vmem:[#allocation7 + $0x110] sm:$0xff]
    %v2134 = vld [vmem:[#allocation7 + $0x118] sm:$0xff]
    %v2135 = vld [vmem:[#allocation7 + $0x120] sm:$0xff]
    %v2136 = vld [vmem:[#allocation7 + $0x128] sm:$0xff]
    %v2137 = vld [vmem:[#allocation7 + $0x130] sm:$0xff]
    %v2138 = vld [vmem:[#allocation7 + $0x138] sm:$0xff]
    %v2139 = vld [vmem:[#allocation7 + $0x140] sm:$0xff]
    %v2140 = vld [vmem:[#allocation7 + $0x148] sm:$0xff]
    %v2141 = vld [vmem:[#allocation7 + $0x150] sm:$0xff]
    %v2142 = vld [vmem:[#allocation7 + $0x158] sm:$0xff]
    %v2143 = vld [vmem:[#allocation7 + $0x160] sm:$0xff]
    %v2144 = vld [vmem:[#allocation7 + $0x168] sm:$0xff]
    %v2145 = vld [vmem:[#allocation7 + $0x170] sm:$0xff]
    %v2146 = vld [vmem:[#allocation7 + $0x178] sm:$0xff]
    %v2147 = vld [vmem:[#allocation7 + $0x180] sm:$0xff]
    %v2148 = vld [vmem:[#allocation7 + $0x188] sm:$0xff]
    %v2149 = vld [vmem:[#allocation7 + $0x190] sm:$0xff]
    %v2150 = vld [vmem:[#allocation7 + $0x198] sm:$0xff]
    %v2151 = vld [vmem:[#allocation7 + $0x1a0] sm:$0xff]
    %v2152 = vld [vmem:[#allocation7 + $0x1a8] sm:$0xff]
    %v2153 = vld [vmem:[#allocation7 + $0x1b0] sm:$0xff]
    %v2154 = vld [vmem:[#allocation7 + $0x1b8] sm:$0xff]
    %v2155 = vld [vmem:[#allocation7 + $0x1c0] sm:$0xff]
    %v2156 = vld [vmem:[#allocation7 + $0x1c8] sm:$0xff]
    %v2157 = vld [vmem:[#allocation7 + $0x1d0] sm:$0xff]
    %v2158 = vld [vmem:[#allocation7 + $0x1d8] sm:$0xff]
    %v2159 = vld [vmem:[#allocation7 + $0x1e0] sm:$0xff]
    %v2160 = vld [vmem:[#allocation7 + $0x1e8] sm:$0xff]
    %v2161 = vld [vmem:[#allocation7 + $0x1f0] sm:$0xff]
    %v2162 = vld [vmem:[#allocation7 + $0x1f8] sm:$0xff]
    %v2163 = vld [vmem:[#allocation7 + $0x200] sm:$0xff]
    %v2164 = vld [vmem:[#allocation7 + $0x208] sm:$0xff]
    %v2165 = vld [vmem:[#allocation7 + $0x210] sm:$0xff]
    %v2166 = vld [vmem:[#allocation7 + $0x218] sm:$0xff]
    %v2167 = vld [vmem:[#allocation7 + $0x220] sm:$0xff]
    %v2168 = vld [vmem:[#allocation7 + $0x228] sm:$0xff]
    %v2169 = vld [vmem:[#allocation7 + $0x230] sm:$0xff]
    %v2170 = vld [vmem:[#allocation7 + $0x238] sm:$0xff]
    %v2171 = vld [vmem:[#allocation7 + $0x240] sm:$0xff]
    %v2172 = vld [vmem:[#allocation7 + $0x248] sm:$0xff]
    %v2173 = vld [vmem:[#allocation7 + $0x250] sm:$0xff]
    %v2174 = vld [vmem:[#allocation7 + $0x258] sm:$0xff]
    %v2175 = vld [vmem:[#allocation7 + $0x260] sm:$0xff]
    %v2176 = vld [vmem:[#allocation7 + $0x268] sm:$0xff]
    %v2177 = vld [vmem:[#allocation7 + $0x270] sm:$0xff]
    %v2178 = vld [vmem:[#allocation7 + $0x278] sm:$0xff]
    %v2179 = vld [vmem:[#allocation7 + $0x280] sm:$0xff]
    %v2180 = vld [vmem:[#allocation7 + $0x288] sm:$0xff]
    %v2181 = vld [vmem:[#allocation7 + $0x290] sm:$0xff]
    %v2182 = vld [vmem:[#allocation7 + $0x298] sm:$0xff]
    %v2183 = vld [vmem:[#allocation7 + $0x2a0] sm:$0xff]
    %v2184 = vld [vmem:[#allocation7 + $0x2a8] sm:$0xff]
    %v2185 = vld [vmem:[#allocation7 + $0x2b0] sm:$0xff]
    %v2186 = vld [vmem:[#allocation7 + $0x2b8] sm:$0xff]
    %v2187 = vld [vmem:[#allocation7 + $0x2c0] sm:$0xff]
    %v2188 = vld [vmem:[#allocation7 + $0x2c8] sm:$0xff]
    %v2189 = vld [vmem:[#allocation7 + $0x2d0] sm:$0xff]
    %v2190 = vld [vmem:[#allocation7 + $0x2d8] sm:$0xff]
    %v2191 = vld [vmem:[#allocation7 + $0x2e0] sm:$0xff]
    %v2192 = vld [vmem:[#allocation7 + $0x2e8] sm:$0xff]
    %v2193 = vld [vmem:[#allocation7 + $0x2f0] sm:$0xff]
    %v2194 = vld [vmem:[#allocation7 + $0x2f8] sm:$0xff]
    %v2195 = vld [vmem:[#allocation7 + $0x300] sm:$0xff]
    %v2196 = vld [vmem:[#allocation7 + $0x308] sm:$0xff]
    %v2197 = vld [vmem:[#allocation7 + $0x310] sm:$0xff]
    %v2198 = vld [vmem:[#allocation7 + $0x318] sm:$0xff]
    %v2199 = vld [vmem:[#allocation7 + $0x320] sm:$0xff]
    %v2200 = vld [vmem:[#allocation7 + $0x328] sm:$0xff]
    %v2201 = vld [vmem:[#allocation7 + $0x330] sm:$0xff]
    %v2202 = vld [vmem:[#allocation7 + $0x338] sm:$0xff]
    %v2203 = vld [vmem:[#allocation7 + $0x340] sm:$0xff]
    %v2204 = vld [vmem:[#allocation7 + $0x348] sm:$0xff]
    %v2205 = vld [vmem:[#allocation7 + $0x350] sm:$0xff]
    %v2206 = vld [vmem:[#allocation7 + $0x358] sm:$0xff]
    %v2207 = vld [vmem:[#allocation7 + $0x360] sm:$0xff]
    %v2208 = vld [vmem:[#allocation7 + $0x368] sm:$0xff]
    %v2209 = vld [vmem:[#allocation7 + $0x370] sm:$0xff]
    %v2210 = vld [vmem:[#allocation7 + $0x378] sm:$0xff]
    %v2211 = vld [vmem:[#allocation7 + $0x380] sm:$0xff]
    %v2212 = vld [vmem:[#allocation7 + $0x388] sm:$0xff]
    %v2213 = vld [vmem:[#allocation7 + $0x390] sm:$0xff]
    %v2214 = vld [vmem:[#allocation7 + $0x398] sm:$0xff]
    %v2215 = vld [vmem:[#allocation7 + $0x3a0] sm:$0xff]
    %v2216 = vld [vmem:[#allocation7 + $0x3a8] sm:$0xff]
    %v2217 = vld [vmem:[#allocation7 + $0x3b0] sm:$0xff]
    %v2218 = vld [vmem:[#allocation7 + $0x3b8] sm:$0xff]
    %v2219 = vld [vmem:[#allocation7 + $0x3c0] sm:$0xff]
    %v2220 = vld [vmem:[#allocation7 + $0x3c8] sm:$0xff]
    %v2221 = vld [vmem:[#allocation7 + $0x3d0] sm:$0xff]
    %v2222 = vld [vmem:[#allocation7 + $0x3d8] sm:$0xff]
    %v2223 = vld [vmem:[#allocation7 + $0x3e0] sm:$0xff]
    %v2224 = vld [vmem:[#allocation7 + $0x3e8] sm:$0xff]
    %v2225 = vld [vmem:[#allocation7 + $0x3f0] sm:$0xff]
    %v2226 = vld [vmem:[#allocation7 + $0x3f8] sm:$0xff]
    %v2355 = vunpack.c.l.b16 %v2099
    %v2356 = vunpack.c.h.b16 %v2099
    %v2357 = vunpack.c.l.b16 %v2100
    %v2358 = vunpack.c.h.b16 %v2100
    %v2359 = vunpack.c.l.b16 %v2101
    %v2360 = vunpack.c.h.b16 %v2101
    %v2361 = vunpack.c.l.b16 %v2102
    %v2362 = vunpack.c.h.b16 %v2102
    %v2363 = vunpack.c.l.b16 %v2103
    %v2364 = vunpack.c.h.b16 %v2103
    %v2365 = vunpack.c.l.b16 %v2104
    %v2366 = vunpack.c.h.b16 %v2104
    %v2367 = vunpack.c.l.b16 %v2105
    %v2368 = vunpack.c.h.b16 %v2105
    %v2369 = vunpack.c.l.b16 %v2106
    %v2370 = vunpack.c.h.b16 %v2106
    %v2371 = vunpack.c.l.b16 %v2107
    %v2372 = vunpack.c.h.b16 %v2107
    %v2373 = vunpack.c.l.b16 %v2108
    %v2374 = vunpack.c.h.b16 %v2108
    %v2375 = vunpack.c.l.b16 %v2109
    %v2376 = vunpack.c.h.b16 %v2109
    %v2377 = vunpack.c.l.b16 %v2110
    %v2378 = vunpack.c.h.b16 %v2110
    %v2379 = vunpack.c.l.b16 %v2111
    %v2380 = vunpack.c.h.b16 %v2111
    %v2381 = vunpack.c.l.b16 %v2112
    %v2382 = vunpack.c.h.b16 %v2112
    %v2383 = vunpack.c.l.b16 %v2113
    %v2384 = vunpack.c.h.b16 %v2113
    %v2385 = vunpack.c.l.b16 %v2114
    %v2386 = vunpack.c.h.b16 %v2114
    %v2387 = vunpack.c.l.b16 %v2115
    %v2388 = vunpack.c.h.b16 %v2115
    %v2389 = vunpack.c.l.b16 %v2116
    %v2390 = vunpack.c.h.b16 %v2116
    %v2391 = vunpack.c.l.b16 %v2117
    %v2392 = vunpack.c.h.b16 %v2117
    %v2393 = vunpack.c.l.b16 %v2118
    %v2394 = vunpack.c.h.b16 %v2118
    %v2395 = vunpack.c.l.b16 %v2119
    %v2396 = vunpack.c.h.b16 %v2119
    %v2397 = vunpack.c.l.b16 %v2120
    %v2398 = vunpack.c.h.b16 %v2120
    %v2399 = vunpack.c.l.b16 %v2121
    %v2400 = vunpack.c.h.b16 %v2121
    %v2401 = vunpack.c.l.b16 %v2122
    %v2402 = vunpack.c.h.b16 %v2122
    %v2403 = vunpack.c.l.b16 %v2123
    %v2404 = vunpack.c.h.b16 %v2123
    %v2405 = vunpack.c.l.b16 %v2124
    %v2406 = vunpack.c.h.b16 %v2124
    %v2407 = vunpack.c.l.b16 %v2125
    %v2408 = vunpack.c.h.b16 %v2125
    %v2409 = vunpack.c.l.b16 %v2126
    %v2410 = vunpack.c.h.b16 %v2126
    %v2411 = vunpack.c.l.b16 %v2127
    %v2412 = vunpack.c.h.b16 %v2127
    %v2413 = vunpack.c.l.b16 %v2128
    %v2414 = vunpack.c.h.b16 %v2128
    %v2415 = vunpack.c.l.b16 %v2129
    %v2416 = vunpack.c.h.b16 %v2129
    %v2417 = vunpack.c.l.b16 %v2130
    %v2418 = vunpack.c.h.b16 %v2130
    %v2419 = vunpack.c.l.b16 %v2131
    %v2420 = vunpack.c.h.b16 %v2131
    %v2421 = vunpack.c.l.b16 %v2132
    %v2422 = vunpack.c.h.b16 %v2132
    %v2423 = vunpack.c.l.b16 %v2133
    %v2424 = vunpack.c.h.b16 %v2133
    %v2425 = vunpack.c.l.b16 %v2134
    %v2426 = vunpack.c.h.b16 %v2134
    %v2427 = vunpack.c.l.b16 %v2135
    %v2428 = vunpack.c.h.b16 %v2135
    %v2429 = vunpack.c.l.b16 %v2136
    %v2430 = vunpack.c.h.b16 %v2136
    %v2431 = vunpack.c.l.b16 %v2137
    %v2432 = vunpack.c.h.b16 %v2137
    %v2433 = vunpack.c.l.b16 %v2138
    %v2434 = vunpack.c.h.b16 %v2138
    %v2435 = vunpack.c.l.b16 %v2139
    %v2436 = vunpack.c.h.b16 %v2139
    %v2437 = vunpack.c.l.b16 %v2140
    %v2438 = vunpack.c.h.b16 %v2140
    %v2439 = vunpack.c.l.b16 %v2141
    %v2440 = vunpack.c.h.b16 %v2141
    %v2441 = vunpack.c.l.b16 %v2142
    %v2442 = vunpack.c.h.b16 %v2142
    %v2443 = vunpack.c.l.b16 %v2143
    %v2444 = vunpack.c.h.b16 %v2143
    %v2445 = vunpack.c.l.b16 %v2144
    %v2446 = vunpack.c.h.b16 %v2144
    %v2447 = vunpack.c.l.b16 %v2145
    %v2448 = vunpack.c.h.b16 %v2145
    %v2449 = vunpack.c.l.b16 %v2146
    %v2450 = vunpack.c.h.b16 %v2146
    %v2451 = vunpack.c.l.b16 %v2147
    %v2452 = vunpack.c.h.b16 %v2147
    %v2453 = vunpack.c.l.b16 %v2148
    %v2454 = vunpack.c.h.b16 %v2148
    %v2455 = vunpack.c.l.b16 %v2149
    %v2456 = vunpack.c.h.b16 %v2149
    %v2457 = vunpack.c.l.b16 %v2150
    %v2458 = vunpack.c.h.b16 %v2150
    %v2459 = vunpack.c.l.b16 %v2151
    %v2460 = vunpack.c.h.b16 %v2151
    %v2461 = vunpack.c.l.b16 %v2152
    %v2462 = vunpack.c.h.b16 %v2152
    %v2463 = vunpack.c.l.b16 %v2153
    %v2464 = vunpack.c.h.b16 %v2153
    %v2465 = vunpack.c.l.b16 %v2154
    %v2466 = vunpack.c.h.b16 %v2154
    %v2467 = vunpack.c.l.b16 %v2155
    %v2468 = vunpack.c.h.b16 %v2155
    %v2469 = vunpack.c.l.b16 %v2156
    %v2470 = vunpack.c.h.b16 %v2156
    %v2471 = vunpack.c.l.b16 %v2157
    %v2472 = vunpack.c.h.b16 %v2157
    %v2473 = vunpack.c.l.b16 %v2158
    %v2474 = vunpack.c.h.b16 %v2158
    %v2475 = vunpack.c.l.b16 %v2159
    %v2476 = vunpack.c.h.b16 %v2159
    %v2477 = vunpack.c.l.b16 %v2160
    %v2478 = vunpack.c.h.b16 %v2160
    %v2479 = vunpack.c.l.b16 %v2161
    %v2480 = vunpack.c.h.b16 %v2161
    %v2481 = vunpack.c.l.b16 %v2162
    %v2482 = vunpack.c.h.b16 %v2162
    %v2483 = vunpack.c.l.b16 %v2163
    %v2484 = vunpack.c.h.b16 %v2163
    %v2485 = vunpack.c.l.b16 %v2164
    %v2486 = vunpack.c.h.b16 %v2164
    %v2487 = vunpack.c.l.b16 %v2165
    %v2488 = vunpack.c.h.b16 %v2165
    %v2489 = vunpack.c.l.b16 %v2166
    %v2490 = vunpack.c.h.b16 %v2166
    %v2491 = vunpack.c.l.b16 %v2167
    %v2492 = vunpack.c.h.b16 %v2167
    %v2493 = vunpack.c.l.b16 %v2168
    %v2494 = vunpack.c.h.b16 %v2168
    %v2495 = vunpack.c.l.b16 %v2169
    %v2496 = vunpack.c.h.b16 %v2169
    %v2497 = vunpack.c.l.b16 %v2170
    %v2498 = vunpack.c.h.b16 %v2170
    %v2499 = vunpack.c.l.b16 %v2171
    %v2500 = vunpack.c.h.b16 %v2171
    %v2501 = vunpack.c.l.b16 %v2172
    %v2502 = vunpack.c.h.b16 %v2172
    %v2503 = vunpack.c.l.b16 %v2173
    %v2504 = vunpack.c.h.b16 %v2173
    %v2505 = vunpack.c.l.b16 %v2174
    %v2506 = vunpack.c.h.b16 %v2174
    %v2507 = vunpack.c.l.b16 %v2175
    %v2508 = vunpack.c.h.b16 %v2175
    %v2509 = vunpack.c.l.b16 %v2176
    %v2510 = vunpack.c.h.b16 %v2176
    %v2511 = vunpack.c.l.b16 %v2177
    %v2512 = vunpack.c.h.b16 %v2177
    %v2513 = vunpack.c.l.b16 %v2178
    %v2514 = vunpack.c.h.b16 %v2178
    %v2515 = vunpack.c.l.b16 %v2179
    %v2516 = vunpack.c.h.b16 %v2179
    %v2517 = vunpack.c.l.b16 %v2180
    %v2518 = vunpack.c.h.b16 %v2180
    %v2519 = vunpack.c.l.b16 %v2181
    %v2520 = vunpack.c.h.b16 %v2181
    %v2521 = vunpack.c.l.b16 %v2182
    %v2522 = vunpack.c.h.b16 %v2182
    %v2523 = vunpack.c.l.b16 %v2183
    %v2524 = vunpack.c.h.b16 %v2183
    %v2525 = vunpack.c.l.b16 %v2184
    %v2526 = vunpack.c.h.b16 %v2184
    %v2527 = vunpack.c.l.b16 %v2185
    %v2528 = vunpack.c.h.b16 %v2185
    %v2529 = vunpack.c.l.b16 %v2186
    %v2530 = vunpack.c.h.b16 %v2186
    %v2531 = vunpack.c.l.b16 %v2187
    %v2532 = vunpack.c.h.b16 %v2187
    %v2533 = vunpack.c.l.b16 %v2188
    %v2534 = vunpack.c.h.b16 %v2188
    %v2535 = vunpack.c.l.b16 %v2189
    %v2536 = vunpack.c.h.b16 %v2189
    %v2537 = vunpack.c.l.b16 %v2190
    %v2538 = vunpack.c.h.b16 %v2190
    %v2539 = vunpack.c.l.b16 %v2191
    %v2540 = vunpack.c.h.b16 %v2191
    %v2541 = vunpack.c.l.b16 %v2192
    %v2542 = vunpack.c.h.b16 %v2192
    %v2543 = vunpack.c.l.b16 %v2193
    %v2544 = vunpack.c.h.b16 %v2193
    %v2545 = vunpack.c.l.b16 %v2194
    %v2546 = vunpack.c.h.b16 %v2194
    %v2547 = vunpack.c.l.b16 %v2195
    %v2548 = vunpack.c.h.b16 %v2195
    %v2549 = vunpack.c.l.b16 %v2196
    %v2550 = vunpack.c.h.b16 %v2196
    %v2551 = vunpack.c.l.b16 %v2197
    %v2552 = vunpack.c.h.b16 %v2197
    %v2553 = vunpack.c.l.b16 %v2198
    %v2554 = vunpack.c.h.b16 %v2198
    %v2555 = vunpack.c.l.b16 %v2199
    %v2556 = vunpack.c.h.b16 %v2199
    %v2557 = vunpack.c.l.b16 %v2200
    %v2558 = vunpack.c.h.b16 %v2200
    %v2559 = vunpack.c.l.b16 %v2201
    %v2560 = vunpack.c.h.b16 %v2201
    %v2561 = vunpack.c.l.b16 %v2202
    %v2562 = vunpack.c.h.b16 %v2202
    %v2563 = vunpack.c.l.b16 %v2203
    %v2564 = vunpack.c.h.b16 %v2203
    %v2565 = vunpack.c.l.b16 %v2204
    %v2566 = vunpack.c.h.b16 %v2204
    %v2567 = vunpack.c.l.b16 %v2205
    %v2568 = vunpack.c.h.b16 %v2205
    %v2569 = vunpack.c.l.b16 %v2206
    %v2570 = vunpack.c.h.b16 %v2206
    %v2571 = vunpack.c.l.b16 %v2207
    %v2572 = vunpack.c.h.b16 %v2207
    %v2573 = vunpack.c.l.b16 %v2208
    %v2574 = vunpack.c.h.b16 %v2208
    %v2575 = vunpack.c.l.b16 %v2209
    %v2576 = vunpack.c.h.b16 %v2209
    %v2577 = vunpack.c.l.b16 %v2210
    %v2578 = vunpack.c.h.b16 %v2210
    %v2579 = vunpack.c.l.b16 %v2211
    %v2580 = vunpack.c.h.b16 %v2211
    %v2581 = vunpack.c.l.b16 %v2212
    %v2582 = vunpack.c.h.b16 %v2212
    %v2583 = vunpack.c.l.b16 %v2213
    %v2584 = vunpack.c.h.b16 %v2213
    %v2585 = vunpack.c.l.b16 %v2214
    %v2586 = vunpack.c.h.b16 %v2214
    %v2587 = vunpack.c.l.b16 %v2215
    %v2588 = vunpack.c.h.b16 %v2215
    %v2589 = vunpack.c.l.b16 %v2216
    %v2590 = vunpack.c.h.b16 %v2216
    %v2591 = vunpack.c.l.b16 %v2217
    %v2592 = vunpack.c.h.b16 %v2217
    %v2593 = vunpack.c.l.b16 %v2218
    %v2594 = vunpack.c.h.b16 %v2218
    %v2595 = vunpack.c.l.b16 %v2219
    %v2596 = vunpack.c.h.b16 %v2219
    %v2597 = vunpack.c.l.b16 %v2220
    %v2598 = vunpack.c.h.b16 %v2220
    %v2599 = vunpack.c.l.b16 %v2221
    %v2600 = vunpack.c.h.b16 %v2221
    %v2601 = vunpack.c.l.b16 %v2222
    %v2602 = vunpack.c.h.b16 %v2222
    %v2603 = vunpack.c.l.b16 %v2223
    %v2604 = vunpack.c.h.b16 %v2223
    %v2605 = vunpack.c.l.b16 %v2224
    %v2606 = vunpack.c.h.b16 %v2224
    %v2607 = vunpack.c.l.b16 %v2225
    %v2608 = vunpack.c.h.b16 %v2225
    %v2609 = vunpack.c.l.b16 %v2226
    %v2610 = vunpack.c.h.b16 %v2226
    %v2611 = vpack.c.b16 %v2363, %v2355
    %v2612 = vpack.c.b16 %v2364, %v2356
    %v2613 = vpack.c.b16 %v2365, %v2357
    %v2614 = vpack.c.b16 %v2366, %v2358
    %v2615 = vpack.c.b16 %v2367, %v2359
    %v2616 = vpack.c.b16 %v2368, %v2360
    %v2617 = vpack.c.b16 %v2369, %v2361
    %v2618 = vpack.c.b16 %v2370, %v2362
    %v2619 = vpack.c.b16 %v2379, %v2371
    %v2620 = vpack.c.b16 %v2380, %v2372
    %v2621 = vpack.c.b16 %v2381, %v2373
    %v2622 = vpack.c.b16 %v2382, %v2374
    %v2623 = vpack.c.b16 %v2383, %v2375
    %v2624 = vpack.c.b16 %v2384, %v2376
    %v2625 = vpack.c.b16 %v2385, %v2377
    %v2626 = vpack.c.b16 %v2386, %v2378
    %v2627 = vpack.c.b16 %v2395, %v2387
    %v2628 = vpack.c.b16 %v2396, %v2388
    %v2629 = vpack.c.b16 %v2397, %v2389
    %v2630 = vpack.c.b16 %v2398, %v2390
    %v2631 = vpack.c.b16 %v2399, %v2391
    %v2632 = vpack.c.b16 %v2400, %v2392
    %v2633 = vpack.c.b16 %v2401, %v2393
    %v2634 = vpack.c.b16 %v2402, %v2394
    %v2635 = vpack.c.b16 %v2411, %v2403
    %v2636 = vpack.c.b16 %v2412, %v2404
    %v2637 = vpack.c.b16 %v2413, %v2405
    %v2638 = vpack.c.b16 %v2414, %v2406
    %v2639 = vpack.c.b16 %v2415, %v2407
    %v2640 = vpack.c.b16 %v2416, %v2408
    %v2641 = vpack.c.b16 %v2417, %v2409
    %v2642 = vpack.c.b16 %v2418, %v2410
    %v2643 = vpack.c.b16 %v2427, %v2419
    %v2644 = vpack.c.b16 %v2428, %v2420
    %v2645 = vpack.c.b16 %v2429, %v2421
    %v2646 = vpack.c.b16 %v2430, %v2422
    %v2647 = vpack.c.b16 %v2431, %v2423
    %v2648 = vpack.c.b16 %v2432, %v2424
    %v2649 = vpack.c.b16 %v2433, %v2425
    %v2650 = vpack.c.b16 %v2434, %v2426
    %v2651 = vpack.c.b16 %v2443, %v2435
    %v2652 = vpack.c.b16 %v2444, %v2436
    %v2653 = vpack.c.b16 %v2445, %v2437
    %v2654 = vpack.c.b16 %v2446, %v2438
    %v2655 = vpack.c.b16 %v2447, %v2439
    %v2656 = vpack.c.b16 %v2448, %v2440
    %v2657 = vpack.c.b16 %v2449, %v2441
    %v2658 = vpack.c.b16 %v2450, %v2442
    %v2659 = vpack.c.b16 %v2459, %v2451
    %v2660 = vpack.c.b16 %v2460, %v2452
    %v2661 = vpack.c.b16 %v2461, %v2453
    %v2662 = vpack.c.b16 %v2462, %v2454
    %v2663 = vpack.c.b16 %v2463, %v2455
    %v2664 = vpack.c.b16 %v2464, %v2456
    %v2665 = vpack.c.b16 %v2465, %v2457
    %v2666 = vpack.c.b16 %v2466, %v2458
    %v2667 = vpack.c.b16 %v2475, %v2467
    %v2668 = vpack.c.b16 %v2476, %v2468
    %v2669 = vpack.c.b16 %v2477, %v2469
    %v2670 = vpack.c.b16 %v2478, %v2470
    %v2671 = vpack.c.b16 %v2479, %v2471
    %v2672 = vpack.c.b16 %v2480, %v2472
    %v2673 = vpack.c.b16 %v2481, %v2473
    %v2674 = vpack.c.b16 %v2482, %v2474
    %v2675 = vpack.c.b16 %v2491, %v2483
    %v2676 = vpack.c.b16 %v2492, %v2484
    %v2677 = vpack.c.b16 %v2493, %v2485
    %v2678 = vpack.c.b16 %v2494, %v2486
    %v2679 = vpack.c.b16 %v2495, %v2487
    %v2680 = vpack.c.b16 %v2496, %v2488
    %v2681 = vpack.c.b16 %v2497, %v2489
    %v2682 = vpack.c.b16 %v2498, %v2490
    %v2683 = vpack.c.b16 %v2507, %v2499
    %v2684 = vpack.c.b16 %v2508, %v2500
    %v2685 = vpack.c.b16 %v2509, %v2501
    %v2686 = vpack.c.b16 %v2510, %v2502
    %v2687 = vpack.c.b16 %v2511, %v2503
    %v2688 = vpack.c.b16 %v2512, %v2504
    %v2689 = vpack.c.b16 %v2513, %v2505
    %v2690 = vpack.c.b16 %v2514, %v2506
    %v2691 = vpack.c.b16 %v2523, %v2515
    %v2692 = vpack.c.b16 %v2524, %v2516
    %v2693 = vpack.c.b16 %v2525, %v2517
    %v2694 = vpack.c.b16 %v2526, %v2518
    %v2695 = vpack.c.b16 %v2527, %v2519
    %v2696 = vpack.c.b16 %v2528, %v2520
    %v2697 = vpack.c.b16 %v2529, %v2521
    %v2698 = vpack.c.b16 %v2530, %v2522
    %v2699 = vpack.c.b16 %v2539, %v2531
    %v2700 = vpack.c.b16 %v2540, %v2532
    %v2701 = vpack.c.b16 %v2541, %v2533
    %v2702 = vpack.c.b16 %v2542, %v2534
    %v2703 = vpack.c.b16 %v2543, %v2535
    %v2704 = vpack.c.b16 %v2544, %v2536
    %v2705 = vpack.c.b16 %v2545, %v2537
    %v2706 = vpack.c.b16 %v2546, %v2538
    %v2707 = vpack.c.b16 %v2555, %v2547
    %v2708 = vpack.c.b16 %v2556, %v2548
    %v2709 = vpack.c.b16 %v2557, %v2549
    %v2710 = vpack.c.b16 %v2558, %v2550
    %v2711 = vpack.c.b16 %v2559, %v2551
    %v2712 = vpack.c.b16 %v2560, %v2552
    %v2713 = vpack.c.b16 %v2561, %v2553
    %v2714 = vpack.c.b16 %v2562, %v2554
    %v2715 = vpack.c.b16 %v2571, %v2563
    %v2716 = vpack.c.b16 %v2572, %v2564
    %v2717 = vpack.c.b16 %v2573, %v2565
    %v2718 = vpack.c.b16 %v2574, %v2566
    %v2719 = vpack.c.b16 %v2575, %v2567
    %v2720 = vpack.c.b16 %v2576, %v2568
    %v2721 = vpack.c.b16 %v2577, %v2569
    %v2722 = vpack.c.b16 %v2578, %v2570
    %v2723 = vpack.c.b16 %v2587, %v2579
    %v2724 = vpack.c.b16 %v2588, %v2580
    %v2725 = vpack.c.b16 %v2589, %v2581
    %v2726 = vpack.c.b16 %v2590, %v2582
    %v2727 = vpack.c.b16 %v2591, %v2583
    %v2728 = vpack.c.b16 %v2592, %v2584
    %v2729 = vpack.c.b16 %v2593, %v2585
    %v2730 = vpack.c.b16 %v2594, %v2586
    %v2731 = vpack.c.b16 %v2603, %v2595
    %v2732 = vpack.c.b16 %v2604, %v2596
    %v2733 = vpack.c.b16 %v2605, %v2597
    %v2734 = vpack.c.b16 %v2606, %v2598
    %v2735 = vpack.c.b16 %v2607, %v2599
    %v2736 = vpack.c.b16 %v2608, %v2600
    %v2737 = vpack.c.b16 %v2609, %v2601
    %v2738 = vpack.c.b16 %v2610, %v2602
    %2867 = vmatpush.bf16.msra.mxu0 %v2667
    %2868 = vmatpush.bf16.msra.mxu0 %v2659
    %2869 = vmatpush.bf16.msra.mxu0 %v2651
    %2870 = vmatpush.bf16.msra.mxu0 %v2643
    %2871 = vmatpush.bf16.msra.mxu0 %v2635
    %2872 = vmatpush.bf16.msra.mxu0 %v2627
    %2873 = vmatpush.bf16.msra.mxu0 %v2619
    %2874 = vmatpush.bf16.msra.mxu0 %v2611
    %2875 = vmatmul.bf16.gmra.mxu0 %v2097
    %v2876 = vpop.f32.mrf.mxu0
    %v2877 = vadd.f32 0.0, %v2876
    %v2878 = vpop.f32.mrf.mxu0
    %2879 = vdwg.mxu0
    %2880 = vmatpush.bf16.msra.mxu0 %v2731
    %2881 = vmatpush.bf16.msra.mxu0 %v2723
    %2882 = vmatpush.bf16.msra.mxu0 %v2715
    %2883 = vmatpush.bf16.msra.mxu0 %v2707
    %2884 = vmatpush.bf16.msra.mxu0 %v2699
    %2885 = vmatpush.bf16.msra.mxu0 %v2691
    %2886 = vmatpush.bf16.msra.mxu0 %v2683
    %2887 = vmatpush.bf16.msra.mxu0 %v2675
    %2888 = vmatmul.bf16.gmra.mxu0 %v2098
    %v2889 = vpop.f32.mrf.mxu0
    %v2890 = vadd.f32 %v2877, %v2889
    %v2891 = vpop.f32.mrf.mxu0
    %2892 = vdwg.mxu0
    %2893 = vmatpush.bf16.msra.mxu0 %v2668
    %2894 = vmatpush.bf16.msra.mxu0 %v2660
    %2895 = vmatpush.bf16.msra.mxu0 %v2652
    %2896 = vmatpush.bf16.msra.mxu0 %v2644
    %2897 = vmatpush.bf16.msra.mxu0 %v2636
    %2898 = vmatpush.bf16.msra.mxu0 %v2628
    %2899 = vmatpush.bf16.msra.mxu0 %v2620
    %2900 = vmatpush.bf16.msra.mxu0 %v2612
    %2901 = vmatmul.bf16.gmra.mxu0 %v2097
    %v2902 = vpop.f32.mrf.mxu0
    %v2903 = vadd.f32 0.0, %v2902
    %v2904 = vpop.f32.mrf.mxu0
    %2905 = vdwg.mxu0
    %2906 = vmatpush.bf16.msra.mxu0 %v2732
    %2907 = vmatpush.bf16.msra.mxu0 %v2724
    %2908 = vmatpush.bf16.msra.mxu0 %v2716
    %2909 = vmatpush.bf16.msra.mxu0 %v2708
    %2910 = vmatpush.bf16.msra.mxu0 %v2700
    %2911 = vmatpush.bf16.msra.mxu0 %v2692
    %2912 = vmatpush.bf16.msra.mxu0 %v2684
    %2913 = vmatpush.bf16.msra.mxu0 %v2676
    %2914 = vmatmul.bf16.gmra.mxu0 %v2098
    %v2915 = vpop.f32.mrf.mxu0
    %v2916 = vadd.f32 %v2903, %v2915
    %v2917 = vpop.f32.mrf.mxu0
    %2918 = vdwg.mxu0
    %2919 = vmatpush.bf16.msra.mxu0 %v2669
    %2920 = vmatpush.bf16.msra.mxu0 %v2661
    %2921 = vmatpush.bf16.msra.mxu0 %v2653
    %2922 = vmatpush.bf16.msra.mxu0 %v2645
    %2923 = vmatpush.bf16.msra.mxu0 %v2637
    %2924 = vmatpush.bf16.msra.mxu0 %v2629
    %2925 = vmatpush.bf16.msra.mxu0 %v2621
    %2926 = vmatpush.bf16.msra.mxu0 %v2613
    %2927 = vmatmul.bf16.gmra.mxu0 %v2097
    %v2928 = vpop.f32.mrf.mxu0
    %v2929 = vadd.f32 0.0, %v2928
    %v2930 = vpop.f32.mrf.mxu0
    %2931 = vdwg.mxu0
    %2932 = vmatpush.bf16.msra.mxu0 %v2733
    %2933 = vmatpush.bf16.msra.mxu0 %v2725
    %2934 = vmatpush.bf16.msra.mxu0 %v2717
    %2935 = vmatpush.bf16.msra.mxu0 %v2709
    %2936 = vmatpush.bf16.msra.mxu0 %v2701
    %2937 = vmatpush.bf16.msra.mxu0 %v2693
    %2938 = vmatpush.bf16.msra.mxu0 %v2685
    %2939 = vmatpush.bf16.msra.mxu0 %v2677
    %2940 = vmatmul.bf16.gmra.mxu0 %v2098
    %v2941 = vpop.f32.mrf.mxu0
    %v2942 = vadd.f32 %v2929, %v2941
    %v2943 = vpop.f32.mrf.mxu0
    %2944 = vdwg.mxu0
    %2945 = vmatpush.bf16.msra.mxu0 %v2670
    %2946 = vmatpush.bf16.msra.mxu0 %v2662
    %2947 = vmatpush.bf16.msra.mxu0 %v2654
    %2948 = vmatpush.bf16.msra.mxu0 %v2646
    %2949 = vmatpush.bf16.msra.mxu0 %v2638
    %2950 = vmatpush.bf16.msra.mxu0 %v2630
    %2951 = vmatpush.bf16.msra.mxu0 %v2622
    %2952 = vmatpush.bf16.msra.mxu0 %v2614
    %2953 = vmatmul.bf16.gmra.mxu0 %v2097
    %v2954 = vpop.f32.mrf.mxu0
    %v2955 = vadd.f32 0.0, %v2954
    %v2956 = vpop.f32.mrf.mxu0
    %2957 = vdwg.mxu0
    %2958 = vmatpush.bf16.msra.mxu0 %v2734
    %2959 = vmatpush.bf16.msra.mxu0 %v2726
    %2960 = vmatpush.bf16.msra.mxu0 %v2718
    %2961 = vmatpush.bf16.msra.mxu0 %v2710
    %2962 = vmatpush.bf16.msra.mxu0 %v2702
    %2963 = vmatpush.bf16.msra.mxu0 %v2694
    %2964 = vmatpush.bf16.msra.mxu0 %v2686
    %2965 = vmatpush.bf16.msra.mxu0 %v2678
    %2966 = vmatmul.bf16.gmra.mxu0 %v2098
    %v2967 = vpop.f32.mrf.mxu0
    %v2968 = vadd.f32 %v2955, %v2967
    %v2969 = vpop.f32.mrf.mxu0
    %2970 = vdwg.mxu0
    %2971 = vmatpush.bf16.msra.mxu0 %v2671
    %2972 = vmatpush.bf16.msra.mxu0 %v2663
    %2973 = vmatpush.bf16.msra.mxu0 %v2655
    %2974 = vmatpush.bf16.msra.mxu0 %v2647
    %2975 = vmatpush.bf16.msra.mxu0 %v2639
    %2976 = vmatpush.bf16.msra.mxu0 %v2631
    %2977 = vmatpush.bf16.msra.mxu0 %v2623
    %2978 = vmatpush.bf16.msra.mxu0 %v2615
    %2979 = vmatmul.bf16.gmra.mxu0 %v2097
    %v2980 = vpop.f32.mrf.mxu0
    %v2981 = vadd.f32 0.0, %v2980
    %v2982 = vpop.f32.mrf.mxu0
    %2983 = vdwg.mxu0
    %2984 = vmatpush.bf16.msra.mxu0 %v2735
    %2985 = vmatpush.bf16.msra.mxu0 %v2727
    %2986 = vmatpush.bf16.msra.mxu0 %v2719
    %2987 = vmatpush.bf16.msra.mxu0 %v2711
    %2988 = vmatpush.bf16.msra.mxu0 %v2703
    %2989 = vmatpush.bf16.msra.mxu0 %v2695
    %2990 = vmatpush.bf16.msra.mxu0 %v2687
    %2991 = vmatpush.bf16.msra.mxu0 %v2679
    %2992 = vmatmul.bf16.gmra.mxu0 %v2098
    %v2993 = vpop.f32.mrf.mxu0
    %v2994 = vadd.f32 %v2981, %v2993
    %v2995 = vpop.f32.mrf.mxu0
    %2996 = vdwg.mxu0
    %2997 = vmatpush.bf16.msra.mxu0 %v2672
    %2998 = vmatpush.bf16.msra.mxu0 %v2664
    %2999 = vmatpush.bf16.msra.mxu0 %v2656
    %3000 = vmatpush.bf16.msra.mxu0 %v2648
    %3001 = vmatpush.bf16.msra.mxu0 %v2640
    %3002 = vmatpush.bf16.msra.mxu0 %v2632
    %3003 = vmatpush.bf16.msra.mxu0 %v2624
    %3004 = vmatpush.bf16.msra.mxu0 %v2616
    %3005 = vmatmul.bf16.gmra.mxu0 %v2097
    %v3006 = vpop.f32.mrf.mxu0
    %v3007 = vadd.f32 0.0, %v3006
    %v3008 = vpop.f32.mrf.mxu0
    %3009 = vdwg.mxu0
    %3010 = vmatpush.bf16.msra.mxu0 %v2736
    %3011 = vmatpush.bf16.msra.mxu0 %v2728
    %3012 = vmatpush.bf16.msra.mxu0 %v2720
    %3013 = vmatpush.bf16.msra.mxu0 %v2712
    %3014 = vmatpush.bf16.msra.mxu0 %v2704
    %3015 = vmatpush.bf16.msra.mxu0 %v2696
    %3016 = vmatpush.bf16.msra.mxu0 %v2688
    %3017 = vmatpush.bf16.msra.mxu0 %v2680
    %3018 = vmatmul.bf16.gmra.mxu0 %v2098
    %v3019 = vpop.f32.mrf.mxu0
    %v3020 = vadd.f32 %v3007, %v3019
    %v3021 = vpop.f32.mrf.mxu0
    %3022 = vdwg.mxu0
    %3023 = vmatpush.bf16.msra.mxu0 %v2673
    %3024 = vmatpush.bf16.msra.mxu0 %v2665
    %3025 = vmatpush.bf16.msra.mxu0 %v2657
    %3026 = vmatpush.bf16.msra.mxu0 %v2649
    %3027 = vmatpush.bf16.msra.mxu0 %v2641
    %3028 = vmatpush.bf16.msra.mxu0 %v2633
    %3029 = vmatpush.bf16.msra.mxu0 %v2625
    %3030 = vmatpush.bf16.msra.mxu0 %v2617
    %3031 = vmatmul.bf16.gmra.mxu0 %v2097
    %v3032 = vpop.f32.mrf.mxu0
    %v3033 = vadd.f32 0.0, %v3032
    %v3034 = vpop.f32.mrf.mxu0
    %3035 = vdwg.mxu0
    %3036 = vmatpush.bf16.msra.mxu0 %v2737
    %3037 = vmatpush.bf16.msra.mxu0 %v2729
    %3038 = vmatpush.bf16.msra.mxu0 %v2721
    %3039 = vmatpush.bf16.msra.mxu0 %v2713
    %3040 = vmatpush.bf16.msra.mxu0 %v2705
    %3041 = vmatpush.bf16.msra.mxu0 %v2697
    %3042 = vmatpush.bf16.msra.mxu0 %v2689
    %3043 = vmatpush.bf16.msra.mxu0 %v2681
    %3044 = vmatmul.bf16.gmra.mxu0 %v2098
    %v3045 = vpop.f32.mrf.mxu0
    %v3046 = vadd.f32 %v3033, %v3045
    %v3047 = vpop.f32.mrf.mxu0
    %3048 = vdwg.mxu0
    %3049 = vmatpush.bf16.msra.mxu0 %v2674
    %3050 = vmatpush.bf16.msra.mxu0 %v2666
    %3051 = vmatpush.bf16.msra.mxu0 %v2658
    %3052 = vmatpush.bf16.msra.mxu0 %v2650
    %3053 = vmatpush.bf16.msra.mxu0 %v2642
    %3054 = vmatpush.bf16.msra.mxu0 %v2634
    %3055 = vmatpush.bf16.msra.mxu0 %v2626
    %3056 = vmatpush.bf16.msra.mxu0 %v2618
    %3057 = vmatmul.bf16.gmra.mxu0 %v2097
    %v3058 = vpop.f32.mrf.mxu0
    %v3059 = vadd.f32 0.0, %v3058
    %v3060 = vpop.f32.mrf.mxu0
    %3061 = vdwg.mxu0
    %3062 = vmatpush.bf16.msra.mxu0 %v2738
    %3063 = vmatpush.bf16.msra.mxu0 %v2730
    %3064 = vmatpush.bf16.msra.mxu0 %v2722
    %3065 = vmatpush.bf16.msra.mxu0 %v2714
    %3066 = vmatpush.bf16.msra.mxu0 %v2706
    %3067 = vmatpush.bf16.msra.mxu0 %v2698
    %3068 = vmatpush.bf16.msra.mxu0 %v2690
    %3069 = vmatpush.bf16.msra.mxu0 %v2682
    %3070 = vmatmul.bf16.gmra.mxu0 %v2098
    %v3071 = vpop.f32.mrf.mxu0
    %v3072 = vadd.f32 %v3059, %v3071
    %v3073 = vpop.f32.mrf.mxu0
    %3074 = vdwg.mxu0
    %v3075 = vld [vmem:[#allocation2 + $0x40] sm:$0xff]
    %v3076 = vld [vmem:[#allocation2 + $0x48] sm:$0xff]
    %v3077 = vld [vmem:[#allocation2 + $0x50] sm:$0xff]
    %v3078 = vld [vmem:[#allocation2 + $0x58] sm:$0xff]
    %v3079 = vadd.f32 %v3075, %v2890
    %v3080 = vadd.f32 %v3076, %v2916
    %v3081 = vadd.f32 %v3077, %v2942
    %v3082 = vadd.f32 %v3078, %v2968
    %v3083 = vld [vmem:[#allocation2 + $0x1a0] sm:$0xff]
    %v3084 = vld [vmem:[#allocation2 + $0x1a8] sm:$0xff]
    %v3085 = vld [vmem:[#allocation2 + $0x1b0] sm:$0xff]
    %v3086 = vld [vmem:[#allocation2 + $0x1b8] sm:$0xff]
    %v3087 = vadd.f32 %v3083, %v2994
    %v3088 = vadd.f32 %v3084, %v3020
    %v3089 = vadd.f32 %v3085, %v3046
    %v3090 = vadd.f32 %v3086, %v3072
    %v3091 = vxor.u32 %v3079, 2147483648
    %v3092 = vxor.u32 %v3087, 2147483648
    %v3093 = vmul.f32 %v3091, 1.442695
    %v3094 = vpow.pop %v3093
    %v3095 = vmul.f32 %v3092, 1.442695
    %v3096 = vpow.pop %v3095
    %v3097 = vadd.f32 %v3094, 1.0
    %v3098 = vadd.f32 %v3096, 1.0
    %v3099 = vrcp.pop %v3097
    %v3100 = vmul.f32 %v3097, %v3099
    %v3101 = vsub.f32 1.0, %v3100
    %v3102 = vmul.f32 %v3099, %v3101
    %v3103 = vadd.f32 %v3099, %v3102
    %vm3104 = vweird.f32 %v3097
    %vm3105 = vweird.f32 %v3099
    %vm3106 = vmor %vm3104, %vm3105
    %v3107 = vsel %vm3106, %v3099, %v3103
    %v3108 = vand.u32 2147483647, %v3097
    %vm3109 = vcmp.eq.f32.partialorder %v3108, 8.507059e+37
    %v3110 = vand.u32 %v3097, 2147483648
    %v3111 = vor.u32 1.1754944e-38, %v3110
    %v3112 = vsel %vm3109, %v3111, %v3107
    %v3113 = vmul.f32 1.0, %v3112
    %v3114 = vrcp.pop %v3098
    %v3115 = vmul.f32 %v3098, %v3114
    %v3116 = vsub.f32 1.0, %v3115
    %v3117 = vmul.f32 %v3114, %v3116
    %v3118 = vadd.f32 %v3114, %v3117
    %vm3119 = vweird.f32 %v3098
    %vm3120 = vweird.f32 %v3114
    %vm3121 = vmor %vm3119, %vm3120
    %v3122 = vsel %vm3121, %v3114, %v3118
    %v3123 = vand.u32 2147483647, %v3098
    %vm3124 = vcmp.eq.f32.partialorder %v3123, 8.507059e+37
    %v3125 = vand.u32 %v3098, 2147483648
    %v3126 = vor.u32 1.1754944e-38, %v3125
    %v3127 = vsel %vm3124, %v3126, %v3122
    %v3128 = vmul.f32 1.0, %v3127
    %v3129 = vxor.u32 %v3080, 2147483648
    %v3130 = vxor.u32 %v3088, 2147483648
    %v3131 = vmul.f32 %v3129, 1.442695
    %v3132 = vpow.pop %v3131
    %v3133 = vmul.f32 %v3130, 1.442695
    %v3134 = vpow.pop %v3133
    %v3135 = vadd.f32 %v3132, 1.0
    %v3136 = vadd.f32 %v3134, 1.0
    %v3137 = vrcp.pop %v3135
    %v3138 = vmul.f32 %v3135, %v3137
    %v3139 = vsub.f32 1.0, %v3138
    %v3140 = vmul.f32 %v3137, %v3139
    %v3141 = vadd.f32 %v3137, %v3140
    %vm3142 = vweird.f32 %v3135
    %vm3143 = vweird.f32 %v3137
    %vm3144 = vmor %vm3142, %vm3143
    %v3145 = vsel %vm3144, %v3137, %v3141
    %v3146 = vand.u32 2147483647, %v3135
    %vm3147 = vcmp.eq.f32.partialorder %v3146, 8.507059e+37
    %v3148 = vand.u32 %v3135, 2147483648
    %v3149 = vor.u32 1.1754944e-38, %v3148
    %v3150 = vsel %vm3147, %v3149, %v3145
    %v3151 = vmul.f32 1.0, %v3150
    %v3152 = vrcp.pop %v3136
    %v3153 = vmul.f32 %v3136, %v3152
    %v3154 = vsub.f32 1.0, %v3153
    %v3155 = vmul.f32 %v3152, %v3154
    %v3156 = vadd.f32 %v3152, %v3155
    %vm3157 = vweird.f32 %v3136
    %vm3158 = vweird.f32 %v3152
    %vm3159 = vmor %vm3157, %vm3158
    %v3160 = vsel %vm3159, %v3152, %v3156
    %v3161 = vand.u32 2147483647, %v3136
    %vm3162 = vcmp.eq.f32.partialorder %v3161, 8.507059e+37
    %v3163 = vand.u32 %v3136, 2147483648
    %v3164 = vor.u32 1.1754944e-38, %v3163
    %v3165 = vsel %vm3162, %v3164, %v3160
    %v3166 = vmul.f32 1.0, %v3165
    %v3167 = vtanh.pop %v3081
    %v3168 = vtanh.pop %v3089
    %v3169 = vxor.u32 %v3082, 2147483648
    %v3170 = vxor.u32 %v3090, 2147483648
    %v3171 = vmul.f32 %v3169, 1.442695
    %v3172 = vpow.pop %v3171
    %v3173 = vmul.f32 %v3170, 1.442695
    %v3174 = vpow.pop %v3173
    %v3175 = vadd.f32 %v3172, 1.0
    %v3176 = vadd.f32 %v3174, 1.0
    %v3177 = vrcp.pop %v3175
    %v3178 = vmul.f32 %v3175, %v3177
    %v3179 = vsub.f32 1.0, %v3178
    %v3180 = vmul.f32 %v3177, %v3179
    %v3181 = vadd.f32 %v3177, %v3180
    %vm3182 = vweird.f32 %v3175
    %vm3183 = vweird.f32 %v3177
    %vm3184 = vmor %vm3182, %vm3183
    %v3185 = vsel %vm3184, %v3177, %v3181
    %v3186 = vand.u32 2147483647, %v3175
    %vm3187 = vcmp.eq.f32.partialorder %v3186, 8.507059e+37
    %v3188 = vand.u32 %v3175, 2147483648
    %v3189 = vor.u32 1.1754944e-38, %v3188
    %v3190 = vsel %vm3187, %v3189, %v3185
    %v3191 = vmul.f32 1.0, %v3190
    %v3192 = vrcp.pop %v3176
    %v3193 = vmul.f32 %v3176, %v3192
    %v3194 = vsub.f32 1.0, %v3193
    %v3195 = vmul.f32 %v3192, %v3194
    %v3196 = vadd.f32 %v3192, %v3195
    %vm3197 = vweird.f32 %v3176
    %vm3198 = vweird.f32 %v3192
    %vm3199 = vmor %vm3197, %vm3198
    %v3200 = vsel %vm3199, %v3192, %v3196
    %v3201 = vand.u32 2147483647, %v3176
    %vm3202 = vcmp.eq.f32.partialorder %v3201, 8.507059e+37
    %v3203 = vand.u32 %v3176, 2147483648
    %v3204 = vor.u32 1.1754944e-38, %v3203
    %v3205 = vsel %vm3202, %v3204, %v3200
    %v3206 = vmul.f32 1.0, %v3205
    %v3207 = vld [vmem:[#allocation4] sm:$0xff]
    %v3208 = vld [vmem:[#allocation4 + $0x8] sm:$0xff]
    %v3209 = vmul.f32 %v3151, %v3207
    %v3210 = vmul.f32 %v3166, %v3208
    %v3211 = vmul.f32 %v3113, %v3167
    %v3212 = vmul.f32 %v3128, %v3168
    %v3213 = vadd.f32 %v3209, %v3211
    %v3214 = vadd.f32 %v3210, %v3212
    %v3215 = vtanh.pop %v3213
    %v3216 = vtanh.pop %v3214
    %v3217 = vmul.f32 %v3191, %v3215
    %v3218 = vmul.f32 %v3206, %v3216
    %3219 = vst [vmem:[#allocation4] sm:$0xff] %v3213
    %3220 = vst [vmem:[#allocation4 + $0x8] sm:$0xff] %v3214
    %3221 = vst [vmem:[#allocation3] sm:$0xff] %v3217
    %3222 = vst [vmem:[#allocation3 + $0x8] sm:$0xff] %v3218
    %v3223 = vpack.c.bf16 %v3218, %v3217
    %v3224 = vld [vmem:[%s6 + $0x8] sm:$0xff]
    %v3225 = vld [vmem:[%s4] sm:$0xf]
    %v3226 = vld [vmem:[%s4 + $0x4] sm:$0xf]
    %v3227 = vld [vmem:[%s4 + $0x8] sm:$0xf]
    %v3228 = vld [vmem:[%s4 + $0xc] sm:$0xf]
    %v3229 = vld [vmem:[%s4 + $0x10] sm:$0xf]
    %v3230 = vld [vmem:[%s4 + $0x14] sm:$0xf]
    %v3231 = vld [vmem:[%s4 + $0x18] sm:$0xf]
    %v3232 = vld [vmem:[%s4 + $0x1c] sm:$0xf]
    %v3233 = vld [vmem:[%s4 + $0x20] sm:$0xf]
    %v3234 = vld [vmem:[%s4 + $0x24] sm:$0xf]
    %v3235 = vld [vmem:[%s4 + $0x28] sm:$0xf]
    %v3236 = vld [vmem:[%s4 + $0x2c] sm:$0xf]
    %v3237 = vld [vmem:[%s4 + $0x30] sm:$0xf]
    %v3238 = vld [vmem:[%s4 + $0x34] sm:$0xf]
    %v3239 = vld [vmem:[%s4 + $0x38] sm:$0xf]
    %v3240 = vld [vmem:[%s4 + $0x3c] sm:$0xf]
    %v3257 = vunpack.c.l.b16 %v3225
    %v3258 = vunpack.c.l.b16 %v3226
    %v3259 = vunpack.c.l.b16 %v3227
    %v3260 = vunpack.c.l.b16 %v3228
    %v3261 = vunpack.c.l.b16 %v3229
    %v3262 = vunpack.c.l.b16 %v3230
    %v3263 = vunpack.c.l.b16 %v3231
    %v3264 = vunpack.c.l.b16 %v3232
    %v3265 = vunpack.c.l.b16 %v3233
    %v3266 = vunpack.c.l.b16 %v3234
    %v3267 = vunpack.c.l.b16 %v3235
    %v3268 = vunpack.c.l.b16 %v3236
    %v3269 = vunpack.c.l.b16 %v3237
    %v3270 = vunpack.c.l.b16 %v3238
    %v3271 = vunpack.c.l.b16 %v3239
    %v3272 = vunpack.c.l.b16 %v3240
    %v3273 = vpack.c.b16 %v3258, %v3257
    %v3274 = vpack.c.b16 %v3260, %v3259
    %v3275 = vpack.c.b16 %v3262, %v3261
    %v3276 = vpack.c.b16 %v3264, %v3263
    %v3277 = vpack.c.b16 %v3266, %v3265
    %v3278 = vpack.c.b16 %v3268, %v3267
    %v3279 = vpack.c.b16 %v3270, %v3269
    %v3280 = vpack.c.b16 %v3272, %v3271
    %3289 = vmatpush.bf16.msra.mxu0 %v3280
    %3290 = vmatpush.bf16.msra.mxu0 %v3279
    %3291 = vmatpush.bf16.msra.mxu0 %v3278
    %3292 = vmatpush.bf16.msra.mxu0 %v3277
    %3293 = vmatpush.bf16.msra.mxu0 %v3276
    %3294 = vmatpush.bf16.msra.mxu0 %v3275
    %3295 = vmatpush.bf16.msra.mxu0 %v3274
    %3296 = vmatpush.bf16.msra.mxu0 %v3273
    %3297 = vmatmul.bf16.gmra.mxu0 %v3223
    %v3298 = vpop.f32.mrf.mxu0
    %v3299 = vadd.f32 0.0, %v3298
    %v3300 = vpop.f32.mrf.mxu0
    %3301 = vdwg.mxu0
    %v3302 = vadd.f32 %v3224, %v3299
    %3303 = vst [vmem:[%s6 + $0x8] sm:$0xff] %v3302
    %v3304 = vld [vmem:[%s6 + $0x30] sm:$0xff]
    %v3305 = vld [vmem:[%s4 + $0x40] sm:$0xf]
    %v3306 = vld [vmem:[%s4 + $0x44] sm:$0xf]
    %v3307 = vld [vmem:[%s4 + $0x48] sm:$0xf]
    %v3308 = vld [vmem:[%s4 + $0x4c] sm:$0xf]
    %v3309 = vld [vmem:[%s4 + $0x50] sm:$0xf]
    %v3310 = vld [vmem:[%s4 + $0x54] sm:$0xf]
    %v3311 = vld [vmem:[%s4 + $0x58] sm:$0xf]
    %v3312 = vld [vmem:[%s4 + $0x5c] sm:$0xf]
    %v3313 = vld [vmem:[%s4 + $0x60] sm:$0xf]
    %v3314 = vld [vmem:[%s4 + $0x64] sm:$0xf]
    %v3315 = vld [vmem:[%s4 + $0x68] sm:$0xf]
    %v3316 = vld [vmem:[%s4 + $0x6c] sm:$0xf]
    %v3317 = vld [vmem:[%s4 + $0x70] sm:$0xf]
    %v3318 = vld [vmem:[%s4 + $0x74] sm:$0xf]
    %v3319 = vld [vmem:[%s4 + $0x78] sm:$0xf]
    %v3320 = vld [vmem:[%s4 + $0x7c] sm:$0xf]
    %v3322 = vunpack.c.h.b16 %v3223
    %v3323 = vpack.c.b16 %v3322, %v3322
    %v3341 = vunpack.c.l.b16 %v3305
    %v3342 = vunpack.c.l.b16 %v3306
    %v3343 = vunpack.c.l.b16 %v3307
    %v3344 = vunpack.c.l.b16 %v3308
    %v3345 = vunpack.c.l.b16 %v3309
    %v3346 = vunpack.c.l.b16 %v3310
    %v3347 = vunpack.c.l.b16 %v3311
    %v3348 = vunpack.c.l.b16 %v3312
    %v3349 = vunpack.c.l.b16 %v3313
    %v3350 = vunpack.c.l.b16 %v3314
    %v3351 = vunpack.c.l.b16 %v3315
    %v3352 = vunpack.c.l.b16 %v3316
    %v3353 = vunpack.c.l.b16 %v3317
    %v3354 = vunpack.c.l.b16 %v3318
    %v3355 = vunpack.c.l.b16 %v3319
    %v3356 = vunpack.c.l.b16 %v3320
    %v3357 = vpack.c.b16 %v3342, %v3341
    %v3358 = vpack.c.b16 %v3344, %v3343
    %v3359 = vpack.c.b16 %v3346, %v3345
    %v3360 = vpack.c.b16 %v3348, %v3347
    %v3361 = vpack.c.b16 %v3350, %v3349
    %v3362 = vpack.c.b16 %v3352, %v3351
    %v3363 = vpack.c.b16 %v3354, %v3353
    %v3364 = vpack.c.b16 %v3356, %v3355
    %3373 = vmatpush.bf16.msra.mxu0 %v3364
    %3374 = vmatpush.bf16.msra.mxu0 %v3363
    %3375 = vmatpush.bf16.msra.mxu0 %v3362
    %3376 = vmatpush.bf16.msra.mxu0 %v3361
    %3377 = vmatpush.bf16.msra.mxu0 %v3360
    %3378 = vmatpush.bf16.msra.mxu0 %v3359
    %3379 = vmatpush.bf16.msra.mxu0 %v3358
    %3380 = vmatpush.bf16.msra.mxu0 %v3357
    %3381 = vmatmul.bf16.gmra.mxu0 %v3323
    %v3382 = vpop.f32.mrf.mxu0
    %v3383 = vadd.f32 0.0, %v3382
    %v3384 = vpop.f32.mrf.mxu0
    %3385 = vdwg.mxu0
    %v3386 = vadd.f32 %v3304, %v3383
    %3387 = vst [vmem:[%s6 + $0x30] sm:$0xff] %v3386
    %v3388 = vld [vmem:[#allocation3] sm:$0xff]
    %v3389 = vld [vmem:[#allocation3 + $0x8] sm:$0xff]
    %v3390 = vpack.c.bf16 %v3388, %v3388
    %v3391 = vpack.c.bf16 %v3389, %v3389
    %v3392 = vld [vmem:[#allocation7] sm:$0xff]
    %v3393 = vld [vmem:[#allocation7 + $0x8] sm:$0xff]
    %v3394 = vld [vmem:[#allocation7 + $0x10] sm:$0xff]
    %v3395 = vld [vmem:[#allocation7 + $0x18] sm:$0xff]
    %v3396 = vld [vmem:[#allocation7 + $0x20] sm:$0xff]
    %v3397 = vld [vmem:[#allocation7 + $0x28] sm:$0xff]
    %v3398 = vld [vmem:[#allocation7 + $0x30] sm:$0xff]
    %v3399 = vld [vmem:[#allocation7 + $0x38] sm:$0xff]
    %v3400 = vld [vmem:[#allocation7 + $0x40] sm:$0xff]
    %v3401 = vld [vmem:[#allocation7 + $0x48] sm:$0xff]
    %v3402 = vld [vmem:[#allocation7 + $0x50] sm:$0xff]
    %v3403 = vld [vmem:[#allocation7 + $0x58] sm:$0xff]
    %v3404 = vld [vmem:[#allocation7 + $0x60] sm:$0xff]
    %v3405 = vld [vmem:[#allocation7 + $0x68] sm:$0xff]
    %v3406 = vld [vmem:[#allocation7 + $0x70] sm:$0xff]
    %v3407 = vld [vmem:[#allocation7 + $0x78] sm:$0xff]
    %v3408 = vld [vmem:[#allocation7 + $0x80] sm:$0xff]
    %v3409 = vld [vmem:[#allocation7 + $0x88] sm:$0xff]
    %v3410 = vld [vmem:[#allocation7 + $0x90] sm:$0xff]
    %v3411 = vld [vmem:[#allocation7 + $0x98] sm:$0xff]
    %v3412 = vld [vmem:[#allocation7 + $0xa0] sm:$0xff]
    %v3413 = vld [vmem:[#allocation7 + $0xa8] sm:$0xff]
    %v3414 = vld [vmem:[#allocation7 + $0xb0] sm:$0xff]
    %v3415 = vld [vmem:[#allocation7 + $0xb8] sm:$0xff]
    %v3416 = vld [vmem:[#allocation7 + $0xc0] sm:$0xff]
    %v3417 = vld [vmem:[#allocation7 + $0xc8] sm:$0xff]
    %v3418 = vld [vmem:[#allocation7 + $0xd0] sm:$0xff]
    %v3419 = vld [vmem:[#allocation7 + $0xd8] sm:$0xff]
    %v3420 = vld [vmem:[#allocation7 + $0xe0] sm:$0xff]
    %v3421 = vld [vmem:[#allocation7 + $0xe8] sm:$0xff]
    %v3422 = vld [vmem:[#allocation7 + $0xf0] sm:$0xff]
    %v3423 = vld [vmem:[#allocation7 + $0xf8] sm:$0xff]
    %v3424 = vld [vmem:[#allocation7 + $0x100] sm:$0xff]
    %v3425 = vld [vmem:[#allocation7 + $0x108] sm:$0xff]
    %v3426 = vld [vmem:[#allocation7 + $0x110] sm:$0xff]
    %v3427 = vld [vmem:[#allocation7 + $0x118] sm:$0xff]
    %v3428 = vld [vmem:[#allocation7 + $0x120] sm:$0xff]
    %v3429 = vld [vmem:[#allocation7 + $0x128] sm:$0xff]
    %v3430 = vld [vmem:[#allocation7 + $0x130] sm:$0xff]
    %v3431 = vld [vmem:[#allocation7 + $0x138] sm:$0xff]
    %v3432 = vld [vmem:[#allocation7 + $0x140] sm:$0xff]
    %v3433 = vld [vmem:[#allocation7 + $0x148] sm:$0xff]
    %v3434 = vld [vmem:[#allocation7 + $0x150] sm:$0xff]
    %v3435 = vld [vmem:[#allocation7 + $0x158] sm:$0xff]
    %v3436 = vld [vmem:[#allocation7 + $0x160] sm:$0xff]
    %v3437 = vld [vmem:[#allocation7 + $0x168] sm:$0xff]
    %v3438 = vld [vmem:[#allocation7 + $0x170] sm:$0xff]
    %v3439 = vld [vmem:[#allocation7 + $0x178] sm:$0xff]
    %v3440 = vld [vmem:[#allocation7 + $0x180] sm:$0xff]
    %v3441 = vld [vmem:[#allocation7 + $0x188] sm:$0xff]
    %v3442 = vld [vmem:[#allocation7 + $0x190] sm:$0xff]
    %v3443 = vld [vmem:[#allocation7 + $0x198] sm:$0xff]
    %v3444 = vld [vmem:[#allocation7 + $0x1a0] sm:$0xff]
    %v3445 = vld [vmem:[#allocation7 + $0x1a8] sm:$0xff]
    %v3446 = vld [vmem:[#allocation7 + $0x1b0] sm:$0xff]
    %v3447 = vld [vmem:[#allocation7 + $0x1b8] sm:$0xff]
    %v3448 = vld [vmem:[#allocation7 + $0x1c0] sm:$0xff]
    %v3449 = vld [vmem:[#allocation7 + $0x1c8] sm:$0xff]
    %v3450 = vld [vmem:[#allocation7 + $0x1d0] sm:$0xff]
    %v3451 = vld [vmem:[#allocation7 + $0x1d8] sm:$0xff]
    %v3452 = vld [vmem:[#allocation7 + $0x1e0] sm:$0xff]
    %v3453 = vld [vmem:[#allocation7 + $0x1e8] sm:$0xff]
    %v3454 = vld [vmem:[#allocation7 + $0x1f0] sm:$0xff]
    %v3455 = vld [vmem:[#allocation7 + $0x1f8] sm:$0xff]
    %v3456 = vld [vmem:[#allocation7 + $0x200] sm:$0xff]
    %v3457 = vld [vmem:[#allocation7 + $0x208] sm:$0xff]
    %v3458 = vld [vmem:[#allocation7 + $0x210] sm:$0xff]
    %v3459 = vld [vmem:[#allocation7 + $0x218] sm:$0xff]
    %v3460 = vld [vmem:[#allocation7 + $0x220] sm:$0xff]
    %v3461 = vld [vmem:[#allocation7 + $0x228] sm:$0xff]
    %v3462 = vld [vmem:[#allocation7 + $0x230] sm:$0xff]
    %v3463 = vld [vmem:[#allocation7 + $0x238] sm:$0xff]
    %v3464 = vld [vmem:[#allocation7 + $0x240] sm:$0xff]
    %v3465 = vld [vmem:[#allocation7 + $0x248] sm:$0xff]
    %v3466 = vld [vmem:[#allocation7 + $0x250] sm:$0xff]
    %v3467 = vld [vmem:[#allocation7 + $0x258] sm:$0xff]
    %v3468 = vld [vmem:[#allocation7 + $0x260] sm:$0xff]
    %v3469 = vld [vmem:[#allocation7 + $0x268] sm:$0xff]
    %v3470 = vld [vmem:[#allocation7 + $0x270] sm:$0xff]
    %v3471 = vld [vmem:[#allocation7 + $0x278] sm:$0xff]
    %v3472 = vld [vmem:[#allocation7 + $0x280] sm:$0xff]
    %v3473 = vld [vmem:[#allocation7 + $0x288] sm:$0xff]
    %v3474 = vld [vmem:[#allocation7 + $0x290] sm:$0xff]
    %v3475 = vld [vmem:[#allocation7 + $0x298] sm:$0xff]
    %v3476 = vld [vmem:[#allocation7 + $0x2a0] sm:$0xff]
    %v3477 = vld [vmem:[#allocation7 + $0x2a8] sm:$0xff]
    %v3478 = vld [vmem:[#allocation7 + $0x2b0] sm:$0xff]
    %v3479 = vld [vmem:[#allocation7 + $0x2b8] sm:$0xff]
    %v3480 = vld [vmem:[#allocation7 + $0x2c0] sm:$0xff]
    %v3481 = vld [vmem:[#allocation7 + $0x2c8] sm:$0xff]
    %v3482 = vld [vmem:[#allocation7 + $0x2d0] sm:$0xff]
    %v3483 = vld [vmem:[#allocation7 + $0x2d8] sm:$0xff]
    %v3484 = vld [vmem:[#allocation7 + $0x2e0] sm:$0xff]
    %v3485 = vld [vmem:[#allocation7 + $0x2e8] sm:$0xff]
    %v3486 = vld [vmem:[#allocation7 + $0x2f0] sm:$0xff]
    %v3487 = vld [vmem:[#allocation7 + $0x2f8] sm:$0xff]
    %v3488 = vld [vmem:[#allocation7 + $0x300] sm:$0xff]
    %v3489 = vld [vmem:[#allocation7 + $0x308] sm:$0xff]
    %v3490 = vld [vmem:[#allocation7 + $0x310] sm:$0xff]
    %v3491 = vld [vmem:[#allocation7 + $0x318] sm:$0xff]
    %v3492 = vld [vmem:[#allocation7 + $0x320] sm:$0xff]
    %v3493 = vld [vmem:[#allocation7 + $0x328] sm:$0xff]
    %v3494 = vld [vmem:[#allocation7 + $0x330] sm:$0xff]
    %v3495 = vld [vmem:[#allocation7 + $0x338] sm:$0xff]
    %v3496 = vld [vmem:[#allocation7 + $0x340] sm:$0xff]
    %v3497 = vld [vmem:[#allocation7 + $0x348] sm:$0xff]
    %v3498 = vld [vmem:[#allocation7 + $0x350] sm:$0xff]
    %v3499 = vld [vmem:[#allocation7 + $0x358] sm:$0xff]
    %v3500 = vld [vmem:[#allocation7 + $0x360] sm:$0xff]
    %v3501 = vld [vmem:[#allocation7 + $0x368] sm:$0xff]
    %v3502 = vld [vmem:[#allocation7 + $0x370] sm:$0xff]
    %v3503 = vld [vmem:[#allocation7 + $0x378] sm:$0xff]
    %v3504 = vld [vmem:[#allocation7 + $0x380] sm:$0xff]
    %v3505 = vld [vmem:[#allocation7 + $0x388] sm:$0xff]
    %v3506 = vld [vmem:[#allocation7 + $0x390] sm:$0xff]
    %v3507 = vld [vmem:[#allocation7 + $0x398] sm:$0xff]
    %v3508 = vld [vmem:[#allocation7 + $0x3a0] sm:$0xff]
    %v3509 = vld [vmem:[#allocation7 + $0x3a8] sm:$0xff]
    %v3510 = vld [vmem:[#allocation7 + $0x3b0] sm:$0xff]
    %v3511 = vld [vmem:[#allocation7 + $0x3b8] sm:$0xff]
    %v3512 = vld [vmem:[#allocation7 + $0x3c0] sm:$0xff]
    %v3513 = vld [vmem:[#allocation7 + $0x3c8] sm:$0xff]
    %v3514 = vld [vmem:[#allocation7 + $0x3d0] sm:$0xff]
    %v3515 = vld [vmem:[#allocation7 + $0x3d8] sm:$0xff]
    %v3516 = vld [vmem:[#allocation7 + $0x3e0] sm:$0xff]
    %v3517 = vld [vmem:[#allocation7 + $0x3e8] sm:$0xff]
    %v3518 = vld [vmem:[#allocation7 + $0x3f0] sm:$0xff]
    %v3519 = vld [vmem:[#allocation7 + $0x3f8] sm:$0xff]
    %v3648 = vunpack.c.l.b16 %v3392
    %v3649 = vunpack.c.h.b16 %v3392
    %v3650 = vunpack.c.l.b16 %v3393
    %v3651 = vunpack.c.h.b16 %v3393
    %v3652 = vunpack.c.l.b16 %v3394
    %v3653 = vunpack.c.h.b16 %v3394
    %v3654 = vunpack.c.l.b16 %v3395
    %v3655 = vunpack.c.h.b16 %v3395
    %v3656 = vunpack.c.l.b16 %v3396
    %v3657 = vunpack.c.h.b16 %v3396
    %v3658 = vunpack.c.l.b16 %v3397
    %v3659 = vunpack.c.h.b16 %v3397
    %v3660 = vunpack.c.l.b16 %v3398
    %v3661 = vunpack.c.h.b16 %v3398
    %v3662 = vunpack.c.l.b16 %v3399
    %v3663 = vunpack.c.h.b16 %v3399
    %v3664 = vunpack.c.l.b16 %v3400
    %v3665 = vunpack.c.h.b16 %v3400
    %v3666 = vunpack.c.l.b16 %v3401
    %v3667 = vunpack.c.h.b16 %v3401
    %v3668 = vunpack.c.l.b16 %v3402
    %v3669 = vunpack.c.h.b16 %v3402
    %v3670 = vunpack.c.l.b16 %v3403
    %v3671 = vunpack.c.h.b16 %v3403
    %v3672 = vunpack.c.l.b16 %v3404
    %v3673 = vunpack.c.h.b16 %v3404
    %v3674 = vunpack.c.l.b16 %v3405
    %v3675 = vunpack.c.h.b16 %v3405
    %v3676 = vunpack.c.l.b16 %v3406
    %v3677 = vunpack.c.h.b16 %v3406
    %v3678 = vunpack.c.l.b16 %v3407
    %v3679 = vunpack.c.h.b16 %v3407
    %v3680 = vunpack.c.l.b16 %v3408
    %v3681 = vunpack.c.h.b16 %v3408
    %v3682 = vunpack.c.l.b16 %v3409
    %v3683 = vunpack.c.h.b16 %v3409
    %v3684 = vunpack.c.l.b16 %v3410
    %v3685 = vunpack.c.h.b16 %v3410
    %v3686 = vunpack.c.l.b16 %v3411
    %v3687 = vunpack.c.h.b16 %v3411
    %v3688 = vunpack.c.l.b16 %v3412
    %v3689 = vunpack.c.h.b16 %v3412
    %v3690 = vunpack.c.l.b16 %v3413
    %v3691 = vunpack.c.h.b16 %v3413
    %v3692 = vunpack.c.l.b16 %v3414
    %v3693 = vunpack.c.h.b16 %v3414
    %v3694 = vunpack.c.l.b16 %v3415
    %v3695 = vunpack.c.h.b16 %v3415
    %v3696 = vunpack.c.l.b16 %v3416
    %v3697 = vunpack.c.h.b16 %v3416
    %v3698 = vunpack.c.l.b16 %v3417
    %v3699 = vunpack.c.h.b16 %v3417
    %v3700 = vunpack.c.l.b16 %v3418
    %v3701 = vunpack.c.h.b16 %v3418
    %v3702 = vunpack.c.l.b16 %v3419
    %v3703 = vunpack.c.h.b16 %v3419
    %v3704 = vunpack.c.l.b16 %v3420
    %v3705 = vunpack.c.h.b16 %v3420
    %v3706 = vunpack.c.l.b16 %v3421
    %v3707 = vunpack.c.h.b16 %v3421
    %v3708 = vunpack.c.l.b16 %v3422
    %v3709 = vunpack.c.h.b16 %v3422
    %v3710 = vunpack.c.l.b16 %v3423
    %v3711 = vunpack.c.h.b16 %v3423
    %v3712 = vunpack.c.l.b16 %v3424
    %v3713 = vunpack.c.h.b16 %v3424
    %v3714 = vunpack.c.l.b16 %v3425
    %v3715 = vunpack.c.h.b16 %v3425
    %v3716 = vunpack.c.l.b16 %v3426
    %v3717 = vunpack.c.h.b16 %v3426
    %v3718 = vunpack.c.l.b16 %v3427
    %v3719 = vunpack.c.h.b16 %v3427
    %v3720 = vunpack.c.l.b16 %v3428
    %v3721 = vunpack.c.h.b16 %v3428
    %v3722 = vunpack.c.l.b16 %v3429
    %v3723 = vunpack.c.h.b16 %v3429
    %v3724 = vunpack.c.l.b16 %v3430
    %v3725 = vunpack.c.h.b16 %v3430
    %v3726 = vunpack.c.l.b16 %v3431
    %v3727 = vunpack.c.h.b16 %v3431
    %v3728 = vunpack.c.l.b16 %v3432
    %v3729 = vunpack.c.h.b16 %v3432
    %v3730 = vunpack.c.l.b16 %v3433
    %v3731 = vunpack.c.h.b16 %v3433
    %v3732 = vunpack.c.l.b16 %v3434
    %v3733 = vunpack.c.h.b16 %v3434
    %v3734 = vunpack.c.l.b16 %v3435
    %v3735 = vunpack.c.h.b16 %v3435
    %v3736 = vunpack.c.l.b16 %v3436
    %v3737 = vunpack.c.h.b16 %v3436
    %v3738 = vunpack.c.l.b16 %v3437
    %v3739 = vunpack.c.h.b16 %v3437
    %v3740 = vunpack.c.l.b16 %v3438
    %v3741 = vunpack.c.h.b16 %v3438
    %v3742 = vunpack.c.l.b16 %v3439
    %v3743 = vunpack.c.h.b16 %v3439
    %v3744 = vunpack.c.l.b16 %v3440
    %v3745 = vunpack.c.h.b16 %v3440
    %v3746 = vunpack.c.l.b16 %v3441
    %v3747 = vunpack.c.h.b16 %v3441
    %v3748 = vunpack.c.l.b16 %v3442
    %v3749 = vunpack.c.h.b16 %v3442
    %v3750 = vunpack.c.l.b16 %v3443
    %v3751 = vunpack.c.h.b16 %v3443
    %v3752 = vunpack.c.l.b16 %v3444
    %v3753 = vunpack.c.h.b16 %v3444
    %v3754 = vunpack.c.l.b16 %v3445
    %v3755 = vunpack.c.h.b16 %v3445
    %v3756 = vunpack.c.l.b16 %v3446
    %v3757 = vunpack.c.h.b16 %v3446
    %v3758 = vunpack.c.l.b16 %v3447
    %v3759 = vunpack.c.h.b16 %v3447
    %v3760 = vunpack.c.l.b16 %v3448
    %v3761 = vunpack.c.h.b16 %v3448
    %v3762 = vunpack.c.l.b16 %v3449
    %v3763 = vunpack.c.h.b16 %v3449
    %v3764 = vunpack.c.l.b16 %v3450
    %v3765 = vunpack.c.h.b16 %v3450
    %v3766 = vunpack.c.l.b16 %v3451
    %v3767 = vunpack.c.h.b16 %v3451
    %v3768 = vunpack.c.l.b16 %v3452
    %v3769 = vunpack.c.h.b16 %v3452
    %v3770 = vunpack.c.l.b16 %v3453
    %v3771 = vunpack.c.h.b16 %v3453
    %v3772 = vunpack.c.l.b16 %v3454
    %v3773 = vunpack.c.h.b16 %v3454
    %v3774 = vunpack.c.l.b16 %v3455
    %v3775 = vunpack.c.h.b16 %v3455
    %v3776 = vunpack.c.l.b16 %v3456
    %v3777 = vunpack.c.h.b16 %v3456
    %v3778 = vunpack.c.l.b16 %v3457
    %v3779 = vunpack.c.h.b16 %v3457
    %v3780 = vunpack.c.l.b16 %v3458
    %v3781 = vunpack.c.h.b16 %v3458
    %v3782 = vunpack.c.l.b16 %v3459
    %v3783 = vunpack.c.h.b16 %v3459
    %v3784 = vunpack.c.l.b16 %v3460
    %v3785 = vunpack.c.h.b16 %v3460
    %v3786 = vunpack.c.l.b16 %v3461
    %v3787 = vunpack.c.h.b16 %v3461
    %v3788 = vunpack.c.l.b16 %v3462
    %v3789 = vunpack.c.h.b16 %v3462
    %v3790 = vunpack.c.l.b16 %v3463
    %v3791 = vunpack.c.h.b16 %v3463
    %v3792 = vunpack.c.l.b16 %v3464
    %v3793 = vunpack.c.h.b16 %v3464
    %v3794 = vunpack.c.l.b16 %v3465
    %v3795 = vunpack.c.h.b16 %v3465
    %v3796 = vunpack.c.l.b16 %v3466
    %v3797 = vunpack.c.h.b16 %v3466
    %v3798 = vunpack.c.l.b16 %v3467
    %v3799 = vunpack.c.h.b16 %v3467
    %v3800 = vunpack.c.l.b16 %v3468
    %v3801 = vunpack.c.h.b16 %v3468
    %v3802 = vunpack.c.l.b16 %v3469
    %v3803 = vunpack.c.h.b16 %v3469
    %v3804 = vunpack.c.l.b16 %v3470
    %v3805 = vunpack.c.h.b16 %v3470
    %v3806 = vunpack.c.l.b16 %v3471
    %v3807 = vunpack.c.h.b16 %v3471
    %v3808 = vunpack.c.l.b16 %v3472
    %v3809 = vunpack.c.h.b16 %v3472
    %v3810 = vunpack.c.l.b16 %v3473
    %v3811 = vunpack.c.h.b16 %v3473
    %v3812 = vunpack.c.l.b16 %v3474
    %v3813 = vunpack.c.h.b16 %v3474
    %v3814 = vunpack.c.l.b16 %v3475
    %v3815 = vunpack.c.h.b16 %v3475
    %v3816 = vunpack.c.l.b16 %v3476
    %v3817 = vunpack.c.h.b16 %v3476
    %v3818 = vunpack.c.l.b16 %v3477
    %v3819 = vunpack.c.h.b16 %v3477
    %v3820 = vunpack.c.l.b16 %v3478
    %v3821 = vunpack.c.h.b16 %v3478
    %v3822 = vunpack.c.l.b16 %v3479
    %v3823 = vunpack.c.h.b16 %v3479
    %v3824 = vunpack.c.l.b16 %v3480
    %v3825 = vunpack.c.h.b16 %v3480
    %v3826 = vunpack.c.l.b16 %v3481
    %v3827 = vunpack.c.h.b16 %v3481
    %v3828 = vunpack.c.l.b16 %v3482
    %v3829 = vunpack.c.h.b16 %v3482
    %v3830 = vunpack.c.l.b16 %v3483
    %v3831 = vunpack.c.h.b16 %v3483
    %v3832 = vunpack.c.l.b16 %v3484
    %v3833 = vunpack.c.h.b16 %v3484
    %v3834 = vunpack.c.l.b16 %v3485
    %v3835 = vunpack.c.h.b16 %v3485
    %v3836 = vunpack.c.l.b16 %v3486
    %v3837 = vunpack.c.h.b16 %v3486
    %v3838 = vunpack.c.l.b16 %v3487
    %v3839 = vunpack.c.h.b16 %v3487
    %v3840 = vunpack.c.l.b16 %v3488
    %v3841 = vunpack.c.h.b16 %v3488
    %v3842 = vunpack.c.l.b16 %v3489
    %v3843 = vunpack.c.h.b16 %v3489
    %v3844 = vunpack.c.l.b16 %v3490
    %v3845 = vunpack.c.h.b16 %v3490
    %v3846 = vunpack.c.l.b16 %v3491
    %v3847 = vunpack.c.h.b16 %v3491
    %v3848 = vunpack.c.l.b16 %v3492
    %v3849 = vunpack.c.h.b16 %v3492
    %v3850 = vunpack.c.l.b16 %v3493
    %v3851 = vunpack.c.h.b16 %v3493
    %v3852 = vunpack.c.l.b16 %v3494
    %v3853 = vunpack.c.h.b16 %v3494
    %v3854 = vunpack.c.l.b16 %v3495
    %v3855 = vunpack.c.h.b16 %v3495
    %v3856 = vunpack.c.l.b16 %v3496
    %v3857 = vunpack.c.h.b16 %v3496
    %v3858 = vunpack.c.l.b16 %v3497
    %v3859 = vunpack.c.h.b16 %v3497
    %v3860 = vunpack.c.l.b16 %v3498
    %v3861 = vunpack.c.h.b16 %v3498
    %v3862 = vunpack.c.l.b16 %v3499
    %v3863 = vunpack.c.h.b16 %v3499
    %v3864 = vunpack.c.l.b16 %v3500
    %v3865 = vunpack.c.h.b16 %v3500
    %v3866 = vunpack.c.l.b16 %v3501
    %v3867 = vunpack.c.h.b16 %v3501
    %v3868 = vunpack.c.l.b16 %v3502
    %v3869 = vunpack.c.h.b16 %v3502
    %v3870 = vunpack.c.l.b16 %v3503
    %v3871 = vunpack.c.h.b16 %v3503
    %v3872 = vunpack.c.l.b16 %v3504
    %v3873 = vunpack.c.h.b16 %v3504
    %v3874 = vunpack.c.l.b16 %v3505
    %v3875 = vunpack.c.h.b16 %v3505
    %v3876 = vunpack.c.l.b16 %v3506
    %v3877 = vunpack.c.h.b16 %v3506
    %v3878 = vunpack.c.l.b16 %v3507
    %v3879 = vunpack.c.h.b16 %v3507
    %v3880 = vunpack.c.l.b16 %v3508
    %v3881 = vunpack.c.h.b16 %v3508
    %v3882 = vunpack.c.l.b16 %v3509
    %v3883 = vunpack.c.h.b16 %v3509
    %v3884 = vunpack.c.l.b16 %v3510
    %v3885 = vunpack.c.h.b16 %v3510
    %v3886 = vunpack.c.l.b16 %v3511
    %v3887 = vunpack.c.h.b16 %v3511
    %v3888 = vunpack.c.l.b16 %v3512
    %v3889 = vunpack.c.h.b16 %v3512
    %v3890 = vunpack.c.l.b16 %v3513
    %v3891 = vunpack.c.h.b16 %v3513
    %v3892 = vunpack.c.l.b16 %v3514
    %v3893 = vunpack.c.h.b16 %v3514
    %v3894 = vunpack.c.l.b16 %v3515
    %v3895 = vunpack.c.h.b16 %v3515
    %v3896 = vunpack.c.l.b16 %v3516
    %v3897 = vunpack.c.h.b16 %v3516
    %v3898 = vunpack.c.l.b16 %v3517
    %v3899 = vunpack.c.h.b16 %v3517
    %v3900 = vunpack.c.l.b16 %v3518
    %v3901 = vunpack.c.h.b16 %v3518
    %v3902 = vunpack.c.l.b16 %v3519
    %v3903 = vunpack.c.h.b16 %v3519
    %v3904 = vpack.c.b16 %v3656, %v3648
    %v3905 = vpack.c.b16 %v3657, %v3649
    %v3906 = vpack.c.b16 %v3658, %v3650
    %v3907 = vpack.c.b16 %v3659, %v3651
    %v3908 = vpack.c.b16 %v3660, %v3652
    %v3909 = vpack.c.b16 %v3661, %v3653
    %v3910 = vpack.c.b16 %v3662, %v3654
    %v3911 = vpack.c.b16 %v3663, %v3655
    %v3912 = vpack.c.b16 %v3672, %v3664
    %v3913 = vpack.c.b16 %v3673, %v3665
    %v3914 = vpack.c.b16 %v3674, %v3666
    %v3915 = vpack.c.b16 %v3675, %v3667
    %v3916 = vpack.c.b16 %v3676, %v3668
    %v3917 = vpack.c.b16 %v3677, %v3669
    %v3918 = vpack.c.b16 %v3678, %v3670
    %v3919 = vpack.c.b16 %v3679, %v3671
    %v3920 = vpack.c.b16 %v3688, %v3680
    %v3921 = vpack.c.b16 %v3689, %v3681
    %v3922 = vpack.c.b16 %v3690, %v3682
    %v3923 = vpack.c.b16 %v3691, %v3683
    %v3924 = vpack.c.b16 %v3692, %v3684
    %v3925 = vpack.c.b16 %v3693, %v3685
    %v3926 = vpack.c.b16 %v3694, %v3686
    %v3927 = vpack.c.b16 %v3695, %v3687
    %v3928 = vpack.c.b16 %v3704, %v3696
    %v3929 = vpack.c.b16 %v3705, %v3697
    %v3930 = vpack.c.b16 %v3706, %v3698
    %v3931 = vpack.c.b16 %v3707, %v3699
    %v3932 = vpack.c.b16 %v3708, %v3700
    %v3933 = vpack.c.b16 %v3709, %v3701
    %v3934 = vpack.c.b16 %v3710, %v3702
    %v3935 = vpack.c.b16 %v3711, %v3703
    %v3936 = vpack.c.b16 %v3720, %v3712
    %v3937 = vpack.c.b16 %v3721, %v3713
    %v3938 = vpack.c.b16 %v3722, %v3714
    %v3939 = vpack.c.b16 %v3723, %v3715
    %v3940 = vpack.c.b16 %v3724, %v3716
    %v3941 = vpack.c.b16 %v3725, %v3717
    %v3942 = vpack.c.b16 %v3726, %v3718
    %v3943 = vpack.c.b16 %v3727, %v3719
    %v3944 = vpack.c.b16 %v3736, %v3728
    %v3945 = vpack.c.b16 %v3737, %v3729
    %v3946 = vpack.c.b16 %v3738, %v3730
    %v3947 = vpack.c.b16 %v3739, %v3731
    %v3948 = vpack.c.b16 %v3740, %v3732
    %v3949 = vpack.c.b16 %v3741, %v3733
    %v3950 = vpack.c.b16 %v3742, %v3734
    %v3951 = vpack.c.b16 %v3743, %v3735
    %v3952 = vpack.c.b16 %v3752, %v3744
    %v3953 = vpack.c.b16 %v3753, %v3745
    %v3954 = vpack.c.b16 %v3754, %v3746
    %v3955 = vpack.c.b16 %v3755, %v3747
    %v3956 = vpack.c.b16 %v3756, %v3748
    %v3957 = vpack.c.b16 %v3757, %v3749
    %v3958 = vpack.c.b16 %v3758, %v3750
    %v3959 = vpack.c.b16 %v3759, %v3751
    %v3960 = vpack.c.b16 %v3768, %v3760
    %v3961 = vpack.c.b16 %v3769, %v3761
    %v3962 = vpack.c.b16 %v3770, %v3762
    %v3963 = vpack.c.b16 %v3771, %v3763
    %v3964 = vpack.c.b16 %v3772, %v3764
    %v3965 = vpack.c.b16 %v3773, %v3765
    %v3966 = vpack.c.b16 %v3774, %v3766
    %v3967 = vpack.c.b16 %v3775, %v3767
    %v3968 = vpack.c.b16 %v3784, %v3776
    %v3969 = vpack.c.b16 %v3785, %v3777
    %v3970 = vpack.c.b16 %v3786, %v3778
    %v3971 = vpack.c.b16 %v3787, %v3779
    %v3972 = vpack.c.b16 %v3788, %v3780
    %v3973 = vpack.c.b16 %v3789, %v3781
    %v3974 = vpack.c.b16 %v3790, %v3782
    %v3975 = vpack.c.b16 %v3791, %v3783
    %v3976 = vpack.c.b16 %v3800, %v3792
    %v3977 = vpack.c.b16 %v3801, %v3793
    %v3978 = vpack.c.b16 %v3802, %v3794
    %v3979 = vpack.c.b16 %v3803, %v3795
    %v3980 = vpack.c.b16 %v3804, %v3796
    %v3981 = vpack.c.b16 %v3805, %v3797
    %v3982 = vpack.c.b16 %v3806, %v3798
    %v3983 = vpack.c.b16 %v3807, %v3799
    %v3984 = vpack.c.b16 %v3816, %v3808
    %v3985 = vpack.c.b16 %v3817, %v3809
    %v3986 = vpack.c.b16 %v3818, %v3810
    %v3987 = vpack.c.b16 %v3819, %v3811
    %v3988 = vpack.c.b16 %v3820, %v3812
    %v3989 = vpack.c.b16 %v3821, %v3813
    %v3990 = vpack.c.b16 %v3822, %v3814
    %v3991 = vpack.c.b16 %v3823, %v3815
    %v3992 = vpack.c.b16 %v3832, %v3824
    %v3993 = vpack.c.b16 %v3833, %v3825
    %v3994 = vpack.c.b16 %v3834, %v3826
    %v3995 = vpack.c.b16 %v3835, %v3827
    %v3996 = vpack.c.b16 %v3836, %v3828
    %v3997 = vpack.c.b16 %v3837, %v3829
    %v3998 = vpack.c.b16 %v3838, %v3830
    %v3999 = vpack.c.b16 %v3839, %v3831
    %v4000 = vpack.c.b16 %v3848, %v3840
    %v4001 = vpack.c.b16 %v3849, %v3841
    %v4002 = vpack.c.b16 %v3850, %v3842
    %v4003 = vpack.c.b16 %v3851, %v3843
    %v4004 = vpack.c.b16 %v3852, %v3844
    %v4005 = vpack.c.b16 %v3853, %v3845
    %v4006 = vpack.c.b16 %v3854, %v3846
    %v4007 = vpack.c.b16 %v3855, %v3847
    %v4008 = vpack.c.b16 %v3864, %v3856
    %v4009 = vpack.c.b16 %v3865, %v3857
    %v4010 = vpack.c.b16 %v3866, %v3858
    %v4011 = vpack.c.b16 %v3867, %v3859
    %v4012 = vpack.c.b16 %v3868, %v3860
    %v4013 = vpack.c.b16 %v3869, %v3861
    %v4014 = vpack.c.b16 %v3870, %v3862
    %v4015 = vpack.c.b16 %v3871, %v3863
    %v4016 = vpack.c.b16 %v3880, %v3872
    %v4017 = vpack.c.b16 %v3881, %v3873
    %v4018 = vpack.c.b16 %v3882, %v3874
    %v4019 = vpack.c.b16 %v3883, %v3875
    %v4020 = vpack.c.b16 %v3884, %v3876
    %v4021 = vpack.c.b16 %v3885, %v3877
    %v4022 = vpack.c.b16 %v3886, %v3878
    %v4023 = vpack.c.b16 %v3887, %v3879
    %v4024 = vpack.c.b16 %v3896, %v3888
    %v4025 = vpack.c.b16 %v3897, %v3889
    %v4026 = vpack.c.b16 %v3898, %v3890
    %v4027 = vpack.c.b16 %v3899, %v3891
    %v4028 = vpack.c.b16 %v3900, %v3892
    %v4029 = vpack.c.b16 %v3901, %v3893
    %v4030 = vpack.c.b16 %v3902, %v3894
    %v4031 = vpack.c.b16 %v3903, %v3895
    %4160 = vmatpush.bf16.msra.mxu0 %v3960
    %4161 = vmatpush.bf16.msra.mxu0 %v3952
    %4162 = vmatpush.bf16.msra.mxu0 %v3944
    %4163 = vmatpush.bf16.msra.mxu0 %v3936
    %4164 = vmatpush.bf16.msra.mxu0 %v3928
    %4165 = vmatpush.bf16.msra.mxu0 %v3920
    %4166 = vmatpush.bf16.msra.mxu0 %v3912
    %4167 = vmatpush.bf16.msra.mxu0 %v3904
    %4168 = vmatmul.bf16.gmra.mxu0 %v3390
    %v4169 = vpop.f32.mrf.mxu0
    %v4170 = vadd.f32 0.0, %v4169
    %v4171 = vpop.f32.mrf.mxu0
    %4172 = vdwg.mxu0
    %4173 = vmatpush.bf16.msra.mxu0 %v4024
    %4174 = vmatpush.bf16.msra.mxu0 %v4016
    %4175 = vmatpush.bf16.msra.mxu0 %v4008
    %4176 = vmatpush.bf16.msra.mxu0 %v4000
    %4177 = vmatpush.bf16.msra.mxu0 %v3992
    %4178 = vmatpush.bf16.msra.mxu0 %v3984
    %4179 = vmatpush.bf16.msra.mxu0 %v3976
    %4180 = vmatpush.bf16.msra.mxu0 %v3968
    %4181 = vmatmul.bf16.gmra.mxu0 %v3391
    %v4182 = vpop.f32.mrf.mxu0
    %v4183 = vadd.f32 %v4170, %v4182
    %v4184 = vpop.f32.mrf.mxu0
    %4185 = vdwg.mxu0
    %4186 = vmatpush.bf16.msra.mxu0 %v3961
    %4187 = vmatpush.bf16.msra.mxu0 %v3953
    %4188 = vmatpush.bf16.msra.mxu0 %v3945
    %4189 = vmatpush.bf16.msra.mxu0 %v3937
    %4190 = vmatpush.bf16.msra.mxu0 %v3929
    %4191 = vmatpush.bf16.msra.mxu0 %v3921
    %4192 = vmatpush.bf16.msra.mxu0 %v3913
    %4193 = vmatpush.bf16.msra.mxu0 %v3905
    %4194 = vmatmul.bf16.gmra.mxu0 %v3390
    %v4195 = vpop.f32.mrf.mxu0
    %v4196 = vadd.f32 0.0, %v4195
    %v4197 = vpop.f32.mrf.mxu0
    %4198 = vdwg.mxu0
    %4199 = vmatpush.bf16.msra.mxu0 %v4025
    %4200 = vmatpush.bf16.msra.mxu0 %v4017
    %4201 = vmatpush.bf16.msra.mxu0 %v4009
    %4202 = vmatpush.bf16.msra.mxu0 %v4001
    %4203 = vmatpush.bf16.msra.mxu0 %v3993
    %4204 = vmatpush.bf16.msra.mxu0 %v3985
    %4205 = vmatpush.bf16.msra.mxu0 %v3977
    %4206 = vmatpush.bf16.msra.mxu0 %v3969
    %4207 = vmatmul.bf16.gmra.mxu0 %v3391
    %v4208 = vpop.f32.mrf.mxu0
    %v4209 = vadd.f32 %v4196, %v4208
    %v4210 = vpop.f32.mrf.mxu0
    %4211 = vdwg.mxu0
    %4212 = vmatpush.bf16.msra.mxu0 %v3962
    %4213 = vmatpush.bf16.msra.mxu0 %v3954
    %4214 = vmatpush.bf16.msra.mxu0 %v3946
    %4215 = vmatpush.bf16.msra.mxu0 %v3938
    %4216 = vmatpush.bf16.msra.mxu0 %v3930
    %4217 = vmatpush.bf16.msra.mxu0 %v3922
    %4218 = vmatpush.bf16.msra.mxu0 %v3914
    %4219 = vmatpush.bf16.msra.mxu0 %v3906
    %4220 = vmatmul.bf16.gmra.mxu0 %v3390
    %v4221 = vpop.f32.mrf.mxu0
    %v4222 = vadd.f32 0.0, %v4221
    %v4223 = vpop.f32.mrf.mxu0
    %4224 = vdwg.mxu0
    %4225 = vmatpush.bf16.msra.mxu0 %v4026
    %4226 = vmatpush.bf16.msra.mxu0 %v4018
    %4227 = vmatpush.bf16.msra.mxu0 %v4010
    %4228 = vmatpush.bf16.msra.mxu0 %v4002
    %4229 = vmatpush.bf16.msra.mxu0 %v3994
    %4230 = vmatpush.bf16.msra.mxu0 %v3986
    %4231 = vmatpush.bf16.msra.mxu0 %v3978
    %4232 = vmatpush.bf16.msra.mxu0 %v3970
    %4233 = vmatmul.bf16.gmra.mxu0 %v3391
    %v4234 = vpop.f32.mrf.mxu0
    %v4235 = vadd.f32 %v4222, %v4234
    %v4236 = vpop.f32.mrf.mxu0
    %4237 = vdwg.mxu0
    %4238 = vmatpush.bf16.msra.mxu0 %v3963
    %4239 = vmatpush.bf16.msra.mxu0 %v3955
    %4240 = vmatpush.bf16.msra.mxu0 %v3947
    %4241 = vmatpush.bf16.msra.mxu0 %v3939
    %4242 = vmatpush.bf16.msra.mxu0 %v3931
    %4243 = vmatpush.bf16.msra.mxu0 %v3923
    %4244 = vmatpush.bf16.msra.mxu0 %v3915
    %4245 = vmatpush.bf16.msra.mxu0 %v3907
    %4246 = vmatmul.bf16.gmra.mxu0 %v3390
    %v4247 = vpop.f32.mrf.mxu0
    %v4248 = vadd.f32 0.0, %v4247
    %v4249 = vpop.f32.mrf.mxu0
    %4250 = vdwg.mxu0
    %4251 = vmatpush.bf16.msra.mxu0 %v4027
    %4252 = vmatpush.bf16.msra.mxu0 %v4019
    %4253 = vmatpush.bf16.msra.mxu0 %v4011
    %4254 = vmatpush.bf16.msra.mxu0 %v4003
    %4255 = vmatpush.bf16.msra.mxu0 %v3995
    %4256 = vmatpush.bf16.msra.mxu0 %v3987
    %4257 = vmatpush.bf16.msra.mxu0 %v3979
    %4258 = vmatpush.bf16.msra.mxu0 %v3971
    %4259 = vmatmul.bf16.gmra.mxu0 %v3391
    %v4260 = vpop.f32.mrf.mxu0
    %v4261 = vadd.f32 %v4248, %v4260
    %v4262 = vpop.f32.mrf.mxu0
    %4263 = vdwg.mxu0
    %4264 = vmatpush.bf16.msra.mxu0 %v3964
    %4265 = vmatpush.bf16.msra.mxu0 %v3956
    %4266 = vmatpush.bf16.msra.mxu0 %v3948
    %4267 = vmatpush.bf16.msra.mxu0 %v3940
    %4268 = vmatpush.bf16.msra.mxu0 %v3932
    %4269 = vmatpush.bf16.msra.mxu0 %v3924
    %4270 = vmatpush.bf16.msra.mxu0 %v3916
    %4271 = vmatpush.bf16.msra.mxu0 %v3908
    %4272 = vmatmul.bf16.gmra.mxu0 %v3390
    %v4273 = vpop.f32.mrf.mxu0
    %v4274 = vadd.f32 0.0, %v4273
    %v4275 = vpop.f32.mrf.mxu0
    %4276 = vdwg.mxu0
    %4277 = vmatpush.bf16.msra.mxu0 %v4028
    %4278 = vmatpush.bf16.msra.mxu0 %v4020
    %4279 = vmatpush.bf16.msra.mxu0 %v4012
    %4280 = vmatpush.bf16.msra.mxu0 %v4004
    %4281 = vmatpush.bf16.msra.mxu0 %v3996
    %4282 = vmatpush.bf16.msra.mxu0 %v3988
    %4283 = vmatpush.bf16.msra.mxu0 %v3980
    %4284 = vmatpush.bf16.msra.mxu0 %v3972
    %4285 = vmatmul.bf16.gmra.mxu0 %v3391
    %v4286 = vpop.f32.mrf.mxu0
    %v4287 = vadd.f32 %v4274, %v4286
    %v4288 = vpop.f32.mrf.mxu0
    %4289 = vdwg.mxu0
    %4290 = vmatpush.bf16.msra.mxu0 %v3965
    %4291 = vmatpush.bf16.msra.mxu0 %v3957
    %4292 = vmatpush.bf16.msra.mxu0 %v3949
    %4293 = vmatpush.bf16.msra.mxu0 %v3941
    %4294 = vmatpush.bf16.msra.mxu0 %v3933
    %4295 = vmatpush.bf16.msra.mxu0 %v3925
    %4296 = vmatpush.bf16.msra.mxu0 %v3917
    %4297 = vmatpush.bf16.msra.mxu0 %v3909
    %4298 = vmatmul.bf16.gmra.mxu0 %v3390
    %v4299 = vpop.f32.mrf.mxu0
    %v4300 = vadd.f32 0.0, %v4299
    %v4301 = vpop.f32.mrf.mxu0
    %4302 = vdwg.mxu0
    %4303 = vmatpush.bf16.msra.mxu0 %v4029
    %4304 = vmatpush.bf16.msra.mxu0 %v4021
    %4305 = vmatpush.bf16.msra.mxu0 %v4013
    %4306 = vmatpush.bf16.msra.mxu0 %v4005
    %4307 = vmatpush.bf16.msra.mxu0 %v3997
    %4308 = vmatpush.bf16.msra.mxu0 %v3989
    %4309 = vmatpush.bf16.msra.mxu0 %v3981
    %4310 = vmatpush.bf16.msra.mxu0 %v3973
    %4311 = vmatmul.bf16.gmra.mxu0 %v3391
    %v4312 = vpop.f32.mrf.mxu0
    %v4313 = vadd.f32 %v4300, %v4312
    %v4314 = vpop.f32.mrf.mxu0
    %4315 = vdwg.mxu0
    %4316 = vmatpush.bf16.msra.mxu0 %v3966
    %4317 = vmatpush.bf16.msra.mxu0 %v3958
    %4318 = vmatpush.bf16.msra.mxu0 %v3950
    %4319 = vmatpush.bf16.msra.mxu0 %v3942
    %4320 = vmatpush.bf16.msra.mxu0 %v3934
    %4321 = vmatpush.bf16.msra.mxu0 %v3926
    %4322 = vmatpush.bf16.msra.mxu0 %v3918
    %4323 = vmatpush.bf16.msra.mxu0 %v3910
    %4324 = vmatmul.bf16.gmra.mxu0 %v3390
    %v4325 = vpop.f32.mrf.mxu0
    %v4326 = vadd.f32 0.0, %v4325
    %v4327 = vpop.f32.mrf.mxu0
    %4328 = vdwg.mxu0
    %4329 = vmatpush.bf16.msra.mxu0 %v4030
    %4330 = vmatpush.bf16.msra.mxu0 %v4022
    %4331 = vmatpush.bf16.msra.mxu0 %v4014
    %4332 = vmatpush.bf16.msra.mxu0 %v4006
    %4333 = vmatpush.bf16.msra.mxu0 %v3998
    %4334 = vmatpush.bf16.msra.mxu0 %v3990
    %4335 = vmatpush.bf16.msra.mxu0 %v3982
    %4336 = vmatpush.bf16.msra.mxu0 %v3974
    %4337 = vmatmul.bf16.gmra.mxu0 %v3391
    %v4338 = vpop.f32.mrf.mxu0
    %v4339 = vadd.f32 %v4326, %v4338
    %v4340 = vpop.f32.mrf.mxu0
    %4341 = vdwg.mxu0
    %4342 = vmatpush.bf16.msra.mxu0 %v3967
    %4343 = vmatpush.bf16.msra.mxu0 %v3959
    %4344 = vmatpush.bf16.msra.mxu0 %v3951
    %4345 = vmatpush.bf16.msra.mxu0 %v3943
    %4346 = vmatpush.bf16.msra.mxu0 %v3935
    %4347 = vmatpush.bf16.msra.mxu0 %v3927
    %4348 = vmatpush.bf16.msra.mxu0 %v3919
    %4349 = vmatpush.bf16.msra.mxu0 %v3911
    %4350 = vmatmul.bf16.gmra.mxu0 %v3390
    %v4351 = vpop.f32.mrf.mxu0
    %v4352 = vadd.f32 0.0, %v4351
    %v4353 = vpop.f32.mrf.mxu0
    %4354 = vdwg.mxu0
    %4355 = vmatpush.bf16.msra.mxu0 %v4031
    %4356 = vmatpush.bf16.msra.mxu0 %v4023
    %4357 = vmatpush.bf16.msra.mxu0 %v4015
    %4358 = vmatpush.bf16.msra.mxu0 %v4007
    %4359 = vmatpush.bf16.msra.mxu0 %v3999
    %4360 = vmatpush.bf16.msra.mxu0 %v3991
    %4361 = vmatpush.bf16.msra.mxu0 %v3983
    %4362 = vmatpush.bf16.msra.mxu0 %v3975
    %4363 = vmatmul.bf16.gmra.mxu0 %v3391
    %v4364 = vpop.f32.mrf.mxu0
    %v4365 = vadd.f32 %v4352, %v4364
    %v4366 = vpop.f32.mrf.mxu0
    %4367 = vdwg.mxu0
    %v4368 = vld [vmem:[#allocation2 + $0x80] sm:$0xff]
    %v4369 = vld [vmem:[#allocation2 + $0x88] sm:$0xff]
    %v4370 = vld [vmem:[#allocation2 + $0x90] sm:$0xff]
    %v4371 = vld [vmem:[#allocation2 + $0x98] sm:$0xff]
    %v4372 = vadd.f32 %v4368, %v4183
    %v4373 = vadd.f32 %v4369, %v4209
    %v4374 = vadd.f32 %v4370, %v4235
    %v4375 = vadd.f32 %v4371, %v4261
    %v4376 = vld [vmem:[#allocation2 + $0x160] sm:$0xff]
    %v4377 = vld [vmem:[#allocation2 + $0x168] sm:$0xff]
    %v4378 = vld [vmem:[#allocation2 + $0x170] sm:$0xff]
    %v4379 = vld [vmem:[#allocation2 + $0x178] sm:$0xff]
    %v4380 = vadd.f32 %v4376, %v4287
    %v4381 = vadd.f32 %v4377, %v4313
    %v4382 = vadd.f32 %v4378, %v4339
    %v4383 = vadd.f32 %v4379, %v4365
    %v4384 = vxor.u32 %v4372, 2147483648
    %v4385 = vxor.u32 %v4380, 2147483648
    %v4386 = vmul.f32 %v4384, 1.442695
    %v4387 = vpow.pop %v4386
    %v4388 = vmul.f32 %v4385, 1.442695
    %v4389 = vpow.pop %v4388
    %v4390 = vadd.f32 %v4387, 1.0
    %v4391 = vadd.f32 %v4389, 1.0
    %v4392 = vrcp.pop %v4390
    %v4393 = vmul.f32 %v4390, %v4392
    %v4394 = vsub.f32 1.0, %v4393
    %v4395 = vmul.f32 %v4392, %v4394
    %v4396 = vadd.f32 %v4392, %v4395
    %vm4397 = vweird.f32 %v4390
    %vm4398 = vweird.f32 %v4392
    %vm4399 = vmor %vm4397, %vm4398
    %v4400 = vsel %vm4399, %v4392, %v4396
    %v4401 = vand.u32 2147483647, %v4390
    %vm4402 = vcmp.eq.f32.partialorder %v4401, 8.507059e+37
    %v4403 = vand.u32 %v4390, 2147483648
    %v4404 = vor.u32 1.1754944e-38, %v4403
    %v4405 = vsel %vm4402, %v4404, %v4400
    %v4406 = vmul.f32 1.0, %v4405
    %v4407 = vrcp.pop %v4391
    %v4408 = vmul.f32 %v4391, %v4407
    %v4409 = vsub.f32 1.0, %v4408
    %v4410 = vmul.f32 %v4407, %v4409
    %v4411 = vadd.f32 %v4407, %v4410
    %vm4412 = vweird.f32 %v4391
    %vm4413 = vweird.f32 %v4407
    %vm4414 = vmor %vm4412, %vm4413
    %v4415 = vsel %vm4414, %v4407, %v4411
    %v4416 = vand.u32 2147483647, %v4391
    %vm4417 = vcmp.eq.f32.partialorder %v4416, 8.507059e+37
    %v4418 = vand.u32 %v4391, 2147483648
    %v4419 = vor.u32 1.1754944e-38, %v4418
    %v4420 = vsel %vm4417, %v4419, %v4415
    %v4421 = vmul.f32 1.0, %v4420
    %v4422 = vxor.u32 %v4373, 2147483648
    %v4423 = vxor.u32 %v4381, 2147483648
    %v4424 = vmul.f32 %v4422, 1.442695
    %v4425 = vpow.pop %v4424
    %v4426 = vmul.f32 %v4423, 1.442695
    %v4427 = vpow.pop %v4426
    %v4428 = vadd.f32 %v4425, 1.0
    %v4429 = vadd.f32 %v4427, 1.0
    %v4430 = vrcp.pop %v4428
    %v4431 = vmul.f32 %v4428, %v4430
    %v4432 = vsub.f32 1.0, %v4431
    %v4433 = vmul.f32 %v4430, %v4432
    %v4434 = vadd.f32 %v4430, %v4433
    %vm4435 = vweird.f32 %v4428
    %vm4436 = vweird.f32 %v4430
    %vm4437 = vmor %vm4435, %vm4436
    %v4438 = vsel %vm4437, %v4430, %v4434
    %v4439 = vand.u32 2147483647, %v4428
    %vm4440 = vcmp.eq.f32.partialorder %v4439, 8.507059e+37
    %v4441 = vand.u32 %v4428, 2147483648
    %v4442 = vor.u32 1.1754944e-38, %v4441
    %v4443 = vsel %vm4440, %v4442, %v4438
    %v4444 = vmul.f32 1.0, %v4443
    %v4445 = vrcp.pop %v4429
    %v4446 = vmul.f32 %v4429, %v4445
    %v4447 = vsub.f32 1.0, %v4446
    %v4448 = vmul.f32 %v4445, %v4447
    %v4449 = vadd.f32 %v4445, %v4448
    %vm4450 = vweird.f32 %v4429
    %vm4451 = vweird.f32 %v4445
    %vm4452 = vmor %vm4450, %vm4451
    %v4453 = vsel %vm4452, %v4445, %v4449
    %v4454 = vand.u32 2147483647, %v4429
    %vm4455 = vcmp.eq.f32.partialorder %v4454, 8.507059e+37
    %v4456 = vand.u32 %v4429, 2147483648
    %v4457 = vor.u32 1.1754944e-38, %v4456
    %v4458 = vsel %vm4455, %v4457, %v4453
    %v4459 = vmul.f32 1.0, %v4458
    %v4460 = vtanh.pop %v4374
    %v4461 = vtanh.pop %v4382
    %v4462 = vxor.u32 %v4375, 2147483648
    %v4463 = vxor.u32 %v4383, 2147483648
    %v4464 = vmul.f32 %v4462, 1.442695
    %v4465 = vpow.pop %v4464
    %v4466 = vmul.f32 %v4463, 1.442695
    %v4467 = vpow.pop %v4466
    %v4468 = vadd.f32 %v4465, 1.0
    %v4469 = vadd.f32 %v4467, 1.0
    %v4470 = vrcp.pop %v4468
    %v4471 = vmul.f32 %v4468, %v4470
    %v4472 = vsub.f32 1.0, %v4471
    %v4473 = vmul.f32 %v4470, %v4472
    %v4474 = vadd.f32 %v4470, %v4473
    %vm4475 = vweird.f32 %v4468
    %vm4476 = vweird.f32 %v4470
    %vm4477 = vmor %vm4475, %vm4476
    %v4478 = vsel %vm4477, %v4470, %v4474
    %v4479 = vand.u32 2147483647, %v4468
    %vm4480 = vcmp.eq.f32.partialorder %v4479, 8.507059e+37
    %v4481 = vand.u32 %v4468, 2147483648
    %v4482 = vor.u32 1.1754944e-38, %v4481
    %v4483 = vsel %vm4480, %v4482, %v4478
    %v4484 = vmul.f32 1.0, %v4483
    %v4485 = vrcp.pop %v4469
    %v4486 = vmul.f32 %v4469, %v4485
    %v4487 = vsub.f32 1.0, %v4486
    %v4488 = vmul.f32 %v4485, %v4487
    %v4489 = vadd.f32 %v4485, %v4488
    %vm4490 = vweird.f32 %v4469
    %vm4491 = vweird.f32 %v4485
    %vm4492 = vmor %vm4490, %vm4491
    %v4493 = vsel %vm4492, %v4485, %v4489
    %v4494 = vand.u32 2147483647, %v4469
    %vm4495 = vcmp.eq.f32.partialorder %v4494, 8.507059e+37
    %v4496 = vand.u32 %v4469, 2147483648
    %v4497 = vor.u32 1.1754944e-38, %v4496
    %v4498 = vsel %vm4495, %v4497, %v4493
    %v4499 = vmul.f32 1.0, %v4498
    %v4500 = vld [vmem:[#allocation4] sm:$0xff]
    %v4501 = vld [vmem:[#allocation4 + $0x8] sm:$0xff]
    %v4502 = vmul.f32 %v4444, %v4500
    %v4503 = vmul.f32 %v4459, %v4501
    %v4504 = vmul.f32 %v4406, %v4460
    %v4505 = vmul.f32 %v4421, %v4461
    %v4506 = vadd.f32 %v4502, %v4504
    %v4507 = vadd.f32 %v4503, %v4505
    %v4508 = vtanh.pop %v4506
    %v4509 = vtanh.pop %v4507
    %v4510 = vmul.f32 %v4484, %v4508
    %v4511 = vmul.f32 %v4499, %v4509
    %4512 = vst [vmem:[#allocation4] sm:$0xff] %v4506
    %4513 = vst [vmem:[#allocation4 + $0x8] sm:$0xff] %v4507
    %4514 = vst [vmem:[#allocation3] sm:$0xff] %v4510
    %4515 = vst [vmem:[#allocation3 + $0x8] sm:$0xff] %v4511
    %v4516 = vpack.c.bf16 %v4511, %v4510
    %v4517 = vld [vmem:[%s6 + $0x10] sm:$0xff]
    %v4518 = vld [vmem:[%s4] sm:$0xf]
    %v4519 = vld [vmem:[%s4 + $0x4] sm:$0xf]
    %v4520 = vld [vmem:[%s4 + $0x8] sm:$0xf]
    %v4521 = vld [vmem:[%s4 + $0xc] sm:$0xf]
    %v4522 = vld [vmem:[%s4 + $0x10] sm:$0xf]
    %v4523 = vld [vmem:[%s4 + $0x14] sm:$0xf]
    %v4524 = vld [vmem:[%s4 + $0x18] sm:$0xf]
    %v4525 = vld [vmem:[%s4 + $0x1c] sm:$0xf]
    %v4526 = vld [vmem:[%s4 + $0x20] sm:$0xf]
    %v4527 = vld [vmem:[%s4 + $0x24] sm:$0xf]
    %v4528 = vld [vmem:[%s4 + $0x28] sm:$0xf]
    %v4529 = vld [vmem:[%s4 + $0x2c] sm:$0xf]
    %v4530 = vld [vmem:[%s4 + $0x30] sm:$0xf]
    %v4531 = vld [vmem:[%s4 + $0x34] sm:$0xf]
    %v4532 = vld [vmem:[%s4 + $0x38] sm:$0xf]
    %v4533 = vld [vmem:[%s4 + $0x3c] sm:$0xf]
    %v4550 = vunpack.c.l.b16 %v4518
    %v4551 = vunpack.c.l.b16 %v4519
    %v4552 = vunpack.c.l.b16 %v4520
    %v4553 = vunpack.c.l.b16 %v4521
    %v4554 = vunpack.c.l.b16 %v4522
    %v4555 = vunpack.c.l.b16 %v4523
    %v4556 = vunpack.c.l.b16 %v4524
    %v4557 = vunpack.c.l.b16 %v4525
    %v4558 = vunpack.c.l.b16 %v4526
    %v4559 = vunpack.c.l.b16 %v4527
    %v4560 = vunpack.c.l.b16 %v4528
    %v4561 = vunpack.c.l.b16 %v4529
    %v4562 = vunpack.c.l.b16 %v4530
    %v4563 = vunpack.c.l.b16 %v4531
    %v4564 = vunpack.c.l.b16 %v4532
    %v4565 = vunpack.c.l.b16 %v4533
    %v4566 = vpack.c.b16 %v4551, %v4550
    %v4567 = vpack.c.b16 %v4553, %v4552
    %v4568 = vpack.c.b16 %v4555, %v4554
    %v4569 = vpack.c.b16 %v4557, %v4556
    %v4570 = vpack.c.b16 %v4559, %v4558
    %v4571 = vpack.c.b16 %v4561, %v4560
    %v4572 = vpack.c.b16 %v4563, %v4562
    %v4573 = vpack.c.b16 %v4565, %v4564
    %4582 = vmatpush.bf16.msra.mxu0 %v4573
    %4583 = vmatpush.bf16.msra.mxu0 %v4572
    %4584 = vmatpush.bf16.msra.mxu0 %v4571
    %4585 = vmatpush.bf16.msra.mxu0 %v4570
    %4586 = vmatpush.bf16.msra.mxu0 %v4569
    %4587 = vmatpush.bf16.msra.mxu0 %v4568
    %4588 = vmatpush.bf16.msra.mxu0 %v4567
    %4589 = vmatpush.bf16.msra.mxu0 %v4566
    %4590 = vmatmul.bf16.gmra.mxu0 %v4516
    %v4591 = vpop.f32.mrf.mxu0
    %v4592 = vadd.f32 0.0, %v4591
    %v4593 = vpop.f32.mrf.mxu0
    %4594 = vdwg.mxu0
    %v4595 = vadd.f32 %v4517, %v4592
    %4596 = vst [vmem:[%s6 + $0x10] sm:$0xff] %v4595
    %v4597 = vld [vmem:[%s6 + $0x28] sm:$0xff]
    %v4598 = vld [vmem:[%s4 + $0x40] sm:$0xf]
    %v4599 = vld [vmem:[%s4 + $0x44] sm:$0xf]
    %v4600 = vld [vmem:[%s4 + $0x48] sm:$0xf]
    %v4601 = vld [vmem:[%s4 + $0x4c] sm:$0xf]
    %v4602 = vld [vmem:[%s4 + $0x50] sm:$0xf]
    %v4603 = vld [vmem:[%s4 + $0x54] sm:$0xf]
    %v4604 = vld [vmem:[%s4 + $0x58] sm:$0xf]
    %v4605 = vld [vmem:[%s4 + $0x5c] sm:$0xf]
    %v4606 = vld [vmem:[%s4 + $0x60] sm:$0xf]
    %v4607 = vld [vmem:[%s4 + $0x64] sm:$0xf]
    %v4608 = vld [vmem:[%s4 + $0x68] sm:$0xf]
    %v4609 = vld [vmem:[%s4 + $0x6c] sm:$0xf]
    %v4610 = vld [vmem:[%s4 + $0x70] sm:$0xf]
    %v4611 = vld [vmem:[%s4 + $0x74] sm:$0xf]
    %v4612 = vld [vmem:[%s4 + $0x78] sm:$0xf]
    %v4613 = vld [vmem:[%s4 + $0x7c] sm:$0xf]
    %v4615 = vunpack.c.h.b16 %v4516
    %v4616 = vpack.c.b16 %v4615, %v4615
    %v4634 = vunpack.c.l.b16 %v4598
    %v4635 = vunpack.c.l.b16 %v4599
    %v4636 = vunpack.c.l.b16 %v4600
    %v4637 = vunpack.c.l.b16 %v4601
    %v4638 = vunpack.c.l.b16 %v4602
    %v4639 = vunpack.c.l.b16 %v4603
    %v4640 = vunpack.c.l.b16 %v4604
    %v4641 = vunpack.c.l.b16 %v4605
    %v4642 = vunpack.c.l.b16 %v4606
    %v4643 = vunpack.c.l.b16 %v4607
    %v4644 = vunpack.c.l.b16 %v4608
    %v4645 = vunpack.c.l.b16 %v4609
    %v4646 = vunpack.c.l.b16 %v4610
    %v4647 = vunpack.c.l.b16 %v4611
    %v4648 = vunpack.c.l.b16 %v4612
    %v4649 = vunpack.c.l.b16 %v4613
    %v4650 = vpack.c.b16 %v4635, %v4634
    %v4651 = vpack.c.b16 %v4637, %v4636
    %v4652 = vpack.c.b16 %v4639, %v4638
    %v4653 = vpack.c.b16 %v4641, %v4640
    %v4654 = vpack.c.b16 %v4643, %v4642
    %v4655 = vpack.c.b16 %v4645, %v4644
    %v4656 = vpack.c.b16 %v4647, %v4646
    %v4657 = vpack.c.b16 %v4649, %v4648
    %4666 = vmatpush.bf16.msra.mxu0 %v4657
    %4667 = vmatpush.bf16.msra.mxu0 %v4656
    %4668 = vmatpush.bf16.msra.mxu0 %v4655
    %4669 = vmatpush.bf16.msra.mxu0 %v4654
    %4670 = vmatpush.bf16.msra.mxu0 %v4653
    %4671 = vmatpush.bf16.msra.mxu0 %v4652
    %4672 = vmatpush.bf16.msra.mxu0 %v4651
    %4673 = vmatpush.bf16.msra.mxu0 %v4650
    %4674 = vmatmul.bf16.gmra.mxu0 %v4616
    %v4675 = vpop.f32.mrf.mxu0
    %v4676 = vadd.f32 0.0, %v4675
    %v4677 = vpop.f32.mrf.mxu0
    %4678 = vdwg.mxu0
    %v4679 = vadd.f32 %v4597, %v4676
    %4680 = vst [vmem:[%s6 + $0x28] sm:$0xff] %v4679
    %v4681 = vld [vmem:[#allocation3] sm:$0xff]
    %v4682 = vld [vmem:[#allocation3 + $0x8] sm:$0xff]
    %v4683 = vpack.c.bf16 %v4681, %v4681
    %v4684 = vpack.c.bf16 %v4682, %v4682
    %v4685 = vld [vmem:[#allocation7] sm:$0xff]
    %v4686 = vld [vmem:[#allocation7 + $0x8] sm:$0xff]
    %v4687 = vld [vmem:[#allocation7 + $0x10] sm:$0xff]
    %v4688 = vld [vmem:[#allocation7 + $0x18] sm:$0xff]
    %v4689 = vld [vmem:[#allocation7 + $0x20] sm:$0xff]
    %v4690 = vld [vmem:[#allocation7 + $0x28] sm:$0xff]
    %v4691 = vld [vmem:[#allocation7 + $0x30] sm:$0xff]
    %v4692 = vld [vmem:[#allocation7 + $0x38] sm:$0xff]
    %v4693 = vld [vmem:[#allocation7 + $0x40] sm:$0xff]
    %v4694 = vld [vmem:[#allocation7 + $0x48] sm:$0xff]
    %v4695 = vld [vmem:[#allocation7 + $0x50] sm:$0xff]
    %v4696 = vld [vmem:[#allocation7 + $0x58] sm:$0xff]
    %v4697 = vld [vmem:[#allocation7 + $0x60] sm:$0xff]
    %v4698 = vld [vmem:[#allocation7 + $0x68] sm:$0xff]
    %v4699 = vld [vmem:[#allocation7 + $0x70] sm:$0xff]
    %v4700 = vld [vmem:[#allocation7 + $0x78] sm:$0xff]
    %v4701 = vld [vmem:[#allocation7 + $0x80] sm:$0xff]
    %v4702 = vld [vmem:[#allocation7 + $0x88] sm:$0xff]
    %v4703 = vld [vmem:[#allocation7 + $0x90] sm:$0xff]
    %v4704 = vld [vmem:[#allocation7 + $0x98] sm:$0xff]
    %v4705 = vld [vmem:[#allocation7 + $0xa0] sm:$0xff]
    %v4706 = vld [vmem:[#allocation7 + $0xa8] sm:$0xff]
    %v4707 = vld [vmem:[#allocation7 + $0xb0] sm:$0xff]
    %v4708 = vld [vmem:[#allocation7 + $0xb8] sm:$0xff]
    %v4709 = vld [vmem:[#allocation7 + $0xc0] sm:$0xff]
    %v4710 = vld [vmem:[#allocation7 + $0xc8] sm:$0xff]
    %v4711 = vld [vmem:[#allocation7 + $0xd0] sm:$0xff]
    %v4712 = vld [vmem:[#allocation7 + $0xd8] sm:$0xff]
    %v4713 = vld [vmem:[#allocation7 + $0xe0] sm:$0xff]
    %v4714 = vld [vmem:[#allocation7 + $0xe8] sm:$0xff]
    %v4715 = vld [vmem:[#allocation7 + $0xf0] sm:$0xff]
    %v4716 = vld [vmem:[#allocation7 + $0xf8] sm:$0xff]
    %v4717 = vld [vmem:[#allocation7 + $0x100] sm:$0xff]
    %v4718 = vld [vmem:[#allocation7 + $0x108] sm:$0xff]
    %v4719 = vld [vmem:[#allocation7 + $0x110] sm:$0xff]
    %v4720 = vld [vmem:[#allocation7 + $0x118] sm:$0xff]
    %v4721 = vld [vmem:[#allocation7 + $0x120] sm:$0xff]
    %v4722 = vld [vmem:[#allocation7 + $0x128] sm:$0xff]
    %v4723 = vld [vmem:[#allocation7 + $0x130] sm:$0xff]
    %v4724 = vld [vmem:[#allocation7 + $0x138] sm:$0xff]
    %v4725 = vld [vmem:[#allocation7 + $0x140] sm:$0xff]
    %v4726 = vld [vmem:[#allocation7 + $0x148] sm:$0xff]
    %v4727 = vld [vmem:[#allocation7 + $0x150] sm:$0xff]
    %v4728 = vld [vmem:[#allocation7 + $0x158] sm:$0xff]
    %v4729 = vld [vmem:[#allocation7 + $0x160] sm:$0xff]
    %v4730 = vld [vmem:[#allocation7 + $0x168] sm:$0xff]
    %v4731 = vld [vmem:[#allocation7 + $0x170] sm:$0xff]
    %v4732 = vld [vmem:[#allocation7 + $0x178] sm:$0xff]
    %v4733 = vld [vmem:[#allocation7 + $0x180] sm:$0xff]
    %v4734 = vld [vmem:[#allocation7 + $0x188] sm:$0xff]
    %v4735 = vld [vmem:[#allocation7 + $0x190] sm:$0xff]
    %v4736 = vld [vmem:[#allocation7 + $0x198] sm:$0xff]
    %v4737 = vld [vmem:[#allocation7 + $0x1a0] sm:$0xff]
    %v4738 = vld [vmem:[#allocation7 + $0x1a8] sm:$0xff]
    %v4739 = vld [vmem:[#allocation7 + $0x1b0] sm:$0xff]
    %v4740 = vld [vmem:[#allocation7 + $0x1b8] sm:$0xff]
    %v4741 = vld [vmem:[#allocation7 + $0x1c0] sm:$0xff]
    %v4742 = vld [vmem:[#allocation7 + $0x1c8] sm:$0xff]
    %v4743 = vld [vmem:[#allocation7 + $0x1d0] sm:$0xff]
    %v4744 = vld [vmem:[#allocation7 + $0x1d8] sm:$0xff]
    %v4745 = vld [vmem:[#allocation7 + $0x1e0] sm:$0xff]
    %v4746 = vld [vmem:[#allocation7 + $0x1e8] sm:$0xff]
    %v4747 = vld [vmem:[#allocation7 + $0x1f0] sm:$0xff]
    %v4748 = vld [vmem:[#allocation7 + $0x1f8] sm:$0xff]
    %v4749 = vld [vmem:[#allocation7 + $0x200] sm:$0xff]
    %v4750 = vld [vmem:[#allocation7 + $0x208] sm:$0xff]
    %v4751 = vld [vmem:[#allocation7 + $0x210] sm:$0xff]
    %v4752 = vld [vmem:[#allocation7 + $0x218] sm:$0xff]
    %v4753 = vld [vmem:[#allocation7 + $0x220] sm:$0xff]
    %v4754 = vld [vmem:[#allocation7 + $0x228] sm:$0xff]
    %v4755 = vld [vmem:[#allocation7 + $0x230] sm:$0xff]
    %v4756 = vld [vmem:[#allocation7 + $0x238] sm:$0xff]
    %v4757 = vld [vmem:[#allocation7 + $0x240] sm:$0xff]
    %v4758 = vld [vmem:[#allocation7 + $0x248] sm:$0xff]
    %v4759 = vld [vmem:[#allocation7 + $0x250] sm:$0xff]
    %v4760 = vld [vmem:[#allocation7 + $0x258] sm:$0xff]
    %v4761 = vld [vmem:[#allocation7 + $0x260] sm:$0xff]
    %v4762 = vld [vmem:[#allocation7 + $0x268] sm:$0xff]
    %v4763 = vld [vmem:[#allocation7 + $0x270] sm:$0xff]
    %v4764 = vld [vmem:[#allocation7 + $0x278] sm:$0xff]
    %v4765 = vld [vmem:[#allocation7 + $0x280] sm:$0xff]
    %v4766 = vld [vmem:[#allocation7 + $0x288] sm:$0xff]
    %v4767 = vld [vmem:[#allocation7 + $0x290] sm:$0xff]
    %v4768 = vld [vmem:[#allocation7 + $0x298] sm:$0xff]
    %v4769 = vld [vmem:[#allocation7 + $0x2a0] sm:$0xff]
    %v4770 = vld [vmem:[#allocation7 + $0x2a8] sm:$0xff]
    %v4771 = vld [vmem:[#allocation7 + $0x2b0] sm:$0xff]
    %v4772 = vld [vmem:[#allocation7 + $0x2b8] sm:$0xff]
    %v4773 = vld [vmem:[#allocation7 + $0x2c0] sm:$0xff]
    %v4774 = vld [vmem:[#allocation7 + $0x2c8] sm:$0xff]
    %v4775 = vld [vmem:[#allocation7 + $0x2d0] sm:$0xff]
    %v4776 = vld [vmem:[#allocation7 + $0x2d8] sm:$0xff]
    %v4777 = vld [vmem:[#allocation7 + $0x2e0] sm:$0xff]
    %v4778 = vld [vmem:[#allocation7 + $0x2e8] sm:$0xff]
    %v4779 = vld [vmem:[#allocation7 + $0x2f0] sm:$0xff]
    %v4780 = vld [vmem:[#allocation7 + $0x2f8] sm:$0xff]
    %v4781 = vld [vmem:[#allocation7 + $0x300] sm:$0xff]
    %v4782 = vld [vmem:[#allocation7 + $0x308] sm:$0xff]
    %v4783 = vld [vmem:[#allocation7 + $0x310] sm:$0xff]
    %v4784 = vld [vmem:[#allocation7 + $0x318] sm:$0xff]
    %v4785 = vld [vmem:[#allocation7 + $0x320] sm:$0xff]
    %v4786 = vld [vmem:[#allocation7 + $0x328] sm:$0xff]
    %v4787 = vld [vmem:[#allocation7 + $0x330] sm:$0xff]
    %v4788 = vld [vmem:[#allocation7 + $0x338] sm:$0xff]
    %v4789 = vld [vmem:[#allocation7 + $0x340] sm:$0xff]
    %v4790 = vld [vmem:[#allocation7 + $0x348] sm:$0xff]
    %v4791 = vld [vmem:[#allocation7 + $0x350] sm:$0xff]
    %v4792 = vld [vmem:[#allocation7 + $0x358] sm:$0xff]
    %v4793 = vld [vmem:[#allocation7 + $0x360] sm:$0xff]
    %v4794 = vld [vmem:[#allocation7 + $0x368] sm:$0xff]
    %v4795 = vld [vmem:[#allocation7 + $0x370] sm:$0xff]
    %v4796 = vld [vmem:[#allocation7 + $0x378] sm:$0xff]
    %v4797 = vld [vmem:[#allocation7 + $0x380] sm:$0xff]
    %v4798 = vld [vmem:[#allocation7 + $0x388] sm:$0xff]
    %v4799 = vld [vmem:[#allocation7 + $0x390] sm:$0xff]
    %v4800 = vld [vmem:[#allocation7 + $0x398] sm:$0xff]
    %v4801 = vld [vmem:[#allocation7 + $0x3a0] sm:$0xff]
    %v4802 = vld [vmem:[#allocation7 + $0x3a8] sm:$0xff]
    %v4803 = vld [vmem:[#allocation7 + $0x3b0] sm:$0xff]
    %v4804 = vld [vmem:[#allocation7 + $0x3b8] sm:$0xff]
    %v4805 = vld [vmem:[#allocation7 + $0x3c0] sm:$0xff]
    %v4806 = vld [vmem:[#allocation7 + $0x3c8] sm:$0xff]
    %v4807 = vld [vmem:[#allocation7 + $0x3d0] sm:$0xff]
    %v4808 = vld [vmem:[#allocation7 + $0x3d8] sm:$0xff]
    %v4809 = vld [vmem:[#allocation7 + $0x3e0] sm:$0xff]
    %v4810 = vld [vmem:[#allocation7 + $0x3e8] sm:$0xff]
    %v4811 = vld [vmem:[#allocation7 + $0x3f0] sm:$0xff]
    %v4812 = vld [vmem:[#allocation7 + $0x3f8] sm:$0xff]
    %v4941 = vunpack.c.l.b16 %v4685
    %v4942 = vunpack.c.h.b16 %v4685
    %v4943 = vunpack.c.l.b16 %v4686
    %v4944 = vunpack.c.h.b16 %v4686
    %v4945 = vunpack.c.l.b16 %v4687
    %v4946 = vunpack.c.h.b16 %v4687
    %v4947 = vunpack.c.l.b16 %v4688
    %v4948 = vunpack.c.h.b16 %v4688
    %v4949 = vunpack.c.l.b16 %v4689
    %v4950 = vunpack.c.h.b16 %v4689
    %v4951 = vunpack.c.l.b16 %v4690
    %v4952 = vunpack.c.h.b16 %v4690
    %v4953 = vunpack.c.l.b16 %v4691
    %v4954 = vunpack.c.h.b16 %v4691
    %v4955 = vunpack.c.l.b16 %v4692
    %v4956 = vunpack.c.h.b16 %v4692
    %v4957 = vunpack.c.l.b16 %v4693
    %v4958 = vunpack.c.h.b16 %v4693
    %v4959 = vunpack.c.l.b16 %v4694
    %v4960 = vunpack.c.h.b16 %v4694
    %v4961 = vunpack.c.l.b16 %v4695
    %v4962 = vunpack.c.h.b16 %v4695
    %v4963 = vunpack.c.l.b16 %v4696
    %v4964 = vunpack.c.h.b16 %v4696
    %v4965 = vunpack.c.l.b16 %v4697
    %v4966 = vunpack.c.h.b16 %v4697
    %v4967 = vunpack.c.l.b16 %v4698
    %v4968 = vunpack.c.h.b16 %v4698
    %v4969 = vunpack.c.l.b16 %v4699
    %v4970 = vunpack.c.h.b16 %v4699
    %v4971 = vunpack.c.l.b16 %v4700
    %v4972 = vunpack.c.h.b16 %v4700
    %v4973 = vunpack.c.l.b16 %v4701
    %v4974 = vunpack.c.h.b16 %v4701
    %v4975 = vunpack.c.l.b16 %v4702
    %v4976 = vunpack.c.h.b16 %v4702
    %v4977 = vunpack.c.l.b16 %v4703
    %v4978 = vunpack.c.h.b16 %v4703
    %v4979 = vunpack.c.l.b16 %v4704
    %v4980 = vunpack.c.h.b16 %v4704
    %v4981 = vunpack.c.l.b16 %v4705
    %v4982 = vunpack.c.h.b16 %v4705
    %v4983 = vunpack.c.l.b16 %v4706
    %v4984 = vunpack.c.h.b16 %v4706
    %v4985 = vunpack.c.l.b16 %v4707
    %v4986 = vunpack.c.h.b16 %v4707
    %v4987 = vunpack.c.l.b16 %v4708
    %v4988 = vunpack.c.h.b16 %v4708
    %v4989 = vunpack.c.l.b16 %v4709
    %v4990 = vunpack.c.h.b16 %v4709
    %v4991 = vunpack.c.l.b16 %v4710
    %v4992 = vunpack.c.h.b16 %v4710
    %v4993 = vunpack.c.l.b16 %v4711
    %v4994 = vunpack.c.h.b16 %v4711
    %v4995 = vunpack.c.l.b16 %v4712
    %v4996 = vunpack.c.h.b16 %v4712
    %v4997 = vunpack.c.l.b16 %v4713
    %v4998 = vunpack.c.h.b16 %v4713
    %v4999 = vunpack.c.l.b16 %v4714
    %v5000 = vunpack.c.h.b16 %v4714
    %v5001 = vunpack.c.l.b16 %v4715
    %v5002 = vunpack.c.h.b16 %v4715
    %v5003 = vunpack.c.l.b16 %v4716
    %v5004 = vunpack.c.h.b16 %v4716
    %v5005 = vunpack.c.l.b16 %v4717
    %v5006 = vunpack.c.h.b16 %v4717
    %v5007 = vunpack.c.l.b16 %v4718
    %v5008 = vunpack.c.h.b16 %v4718
    %v5009 = vunpack.c.l.b16 %v4719
    %v5010 = vunpack.c.h.b16 %v4719
    %v5011 = vunpack.c.l.b16 %v4720
    %v5012 = vunpack.c.h.b16 %v4720
    %v5013 = vunpack.c.l.b16 %v4721
    %v5014 = vunpack.c.h.b16 %v4721
    %v5015 = vunpack.c.l.b16 %v4722
    %v5016 = vunpack.c.h.b16 %v4722
    %v5017 = vunpack.c.l.b16 %v4723
    %v5018 = vunpack.c.h.b16 %v4723
    %v5019 = vunpack.c.l.b16 %v4724
    %v5020 = vunpack.c.h.b16 %v4724
    %v5021 = vunpack.c.l.b16 %v4725
    %v5022 = vunpack.c.h.b16 %v4725
    %v5023 = vunpack.c.l.b16 %v4726
    %v5024 = vunpack.c.h.b16 %v4726
    %v5025 = vunpack.c.l.b16 %v4727
    %v5026 = vunpack.c.h.b16 %v4727
    %v5027 = vunpack.c.l.b16 %v4728
    %v5028 = vunpack.c.h.b16 %v4728
    %v5029 = vunpack.c.l.b16 %v4729
    %v5030 = vunpack.c.h.b16 %v4729
    %v5031 = vunpack.c.l.b16 %v4730
    %v5032 = vunpack.c.h.b16 %v4730
    %v5033 = vunpack.c.l.b16 %v4731
    %v5034 = vunpack.c.h.b16 %v4731
    %v5035 = vunpack.c.l.b16 %v4732
    %v5036 = vunpack.c.h.b16 %v4732
    %v5037 = vunpack.c.l.b16 %v4733
    %v5038 = vunpack.c.h.b16 %v4733
    %v5039 = vunpack.c.l.b16 %v4734
    %v5040 = vunpack.c.h.b16 %v4734
    %v5041 = vunpack.c.l.b16 %v4735
    %v5042 = vunpack.c.h.b16 %v4735
    %v5043 = vunpack.c.l.b16 %v4736
    %v5044 = vunpack.c.h.b16 %v4736
    %v5045 = vunpack.c.l.b16 %v4737
    %v5046 = vunpack.c.h.b16 %v4737
    %v5047 = vunpack.c.l.b16 %v4738
    %v5048 = vunpack.c.h.b16 %v4738
    %v5049 = vunpack.c.l.b16 %v4739
    %v5050 = vunpack.c.h.b16 %v4739
    %v5051 = vunpack.c.l.b16 %v4740
    %v5052 = vunpack.c.h.b16 %v4740
    %v5053 = vunpack.c.l.b16 %v4741
    %v5054 = vunpack.c.h.b16 %v4741
    %v5055 = vunpack.c.l.b16 %v4742
    %v5056 = vunpack.c.h.b16 %v4742
    %v5057 = vunpack.c.l.b16 %v4743
    %v5058 = vunpack.c.h.b16 %v4743
    %v5059 = vunpack.c.l.b16 %v4744
    %v5060 = vunpack.c.h.b16 %v4744
    %v5061 = vunpack.c.l.b16 %v4745
    %v5062 = vunpack.c.h.b16 %v4745
    %v5063 = vunpack.c.l.b16 %v4746
    %v5064 = vunpack.c.h.b16 %v4746
    %v5065 = vunpack.c.l.b16 %v4747
    %v5066 = vunpack.c.h.b16 %v4747
    %v5067 = vunpack.c.l.b16 %v4748
    %v5068 = vunpack.c.h.b16 %v4748
    %v5069 = vunpack.c.l.b16 %v4749
    %v5070 = vunpack.c.h.b16 %v4749
    %v5071 = vunpack.c.l.b16 %v4750
    %v5072 = vunpack.c.h.b16 %v4750
    %v5073 = vunpack.c.l.b16 %v4751
    %v5074 = vunpack.c.h.b16 %v4751
    %v5075 = vunpack.c.l.b16 %v4752
    %v5076 = vunpack.c.h.b16 %v4752
    %v5077 = vunpack.c.l.b16 %v4753
    %v5078 = vunpack.c.h.b16 %v4753
    %v5079 = vunpack.c.l.b16 %v4754
    %v5080 = vunpack.c.h.b16 %v4754
    %v5081 = vunpack.c.l.b16 %v4755
    %v5082 = vunpack.c.h.b16 %v4755
    %v5083 = vunpack.c.l.b16 %v4756
    %v5084 = vunpack.c.h.b16 %v4756
    %v5085 = vunpack.c.l.b16 %v4757
    %v5086 = vunpack.c.h.b16 %v4757
    %v5087 = vunpack.c.l.b16 %v4758
    %v5088 = vunpack.c.h.b16 %v4758
    %v5089 = vunpack.c.l.b16 %v4759
    %v5090 = vunpack.c.h.b16 %v4759
    %v5091 = vunpack.c.l.b16 %v4760
    %v5092 = vunpack.c.h.b16 %v4760
    %v5093 = vunpack.c.l.b16 %v4761
    %v5094 = vunpack.c.h.b16 %v4761
    %v5095 = vunpack.c.l.b16 %v4762
    %v5096 = vunpack.c.h.b16 %v4762
    %v5097 = vunpack.c.l.b16 %v4763
    %v5098 = vunpack.c.h.b16 %v4763
    %v5099 = vunpack.c.l.b16 %v4764
    %v5100 = vunpack.c.h.b16 %v4764
    %v5101 = vunpack.c.l.b16 %v4765
    %v5102 = vunpack.c.h.b16 %v4765
    %v5103 = vunpack.c.l.b16 %v4766
    %v5104 = vunpack.c.h.b16 %v4766
    %v5105 = vunpack.c.l.b16 %v4767
    %v5106 = vunpack.c.h.b16 %v4767
    %v5107 = vunpack.c.l.b16 %v4768
    %v5108 = vunpack.c.h.b16 %v4768
    %v5109 = vunpack.c.l.b16 %v4769
    %v5110 = vunpack.c.h.b16 %v4769
    %v5111 = vunpack.c.l.b16 %v4770
    %v5112 = vunpack.c.h.b16 %v4770
    %v5113 = vunpack.c.l.b16 %v4771
    %v5114 = vunpack.c.h.b16 %v4771
    %v5115 = vunpack.c.l.b16 %v4772
    %v5116 = vunpack.c.h.b16 %v4772
    %v5117 = vunpack.c.l.b16 %v4773
    %v5118 = vunpack.c.h.b16 %v4773
    %v5119 = vunpack.c.l.b16 %v4774
    %v5120 = vunpack.c.h.b16 %v4774
    %v5121 = vunpack.c.l.b16 %v4775
    %v5122 = vunpack.c.h.b16 %v4775
    %v5123 = vunpack.c.l.b16 %v4776
    %v5124 = vunpack.c.h.b16 %v4776
    %v5125 = vunpack.c.l.b16 %v4777
    %v5126 = vunpack.c.h.b16 %v4777
    %v5127 = vunpack.c.l.b16 %v4778
    %v5128 = vunpack.c.h.b16 %v4778
    %v5129 = vunpack.c.l.b16 %v4779
    %v5130 = vunpack.c.h.b16 %v4779
    %v5131 = vunpack.c.l.b16 %v4780
    %v5132 = vunpack.c.h.b16 %v4780
    %v5133 = vunpack.c.l.b16 %v4781
    %v5134 = vunpack.c.h.b16 %v4781
    %v5135 = vunpack.c.l.b16 %v4782
    %v5136 = vunpack.c.h.b16 %v4782
    %v5137 = vunpack.c.l.b16 %v4783
    %v5138 = vunpack.c.h.b16 %v4783
    %v5139 = vunpack.c.l.b16 %v4784
    %v5140 = vunpack.c.h.b16 %v4784
    %v5141 = vunpack.c.l.b16 %v4785
    %v5142 = vunpack.c.h.b16 %v4785
    %v5143 = vunpack.c.l.b16 %v4786
    %v5144 = vunpack.c.h.b16 %v4786
    %v5145 = vunpack.c.l.b16 %v4787
    %v5146 = vunpack.c.h.b16 %v4787
    %v5147 = vunpack.c.l.b16 %v4788
    %v5148 = vunpack.c.h.b16 %v4788
    %v5149 = vunpack.c.l.b16 %v4789
    %v5150 = vunpack.c.h.b16 %v4789
    %v5151 = vunpack.c.l.b16 %v4790
    %v5152 = vunpack.c.h.b16 %v4790
    %v5153 = vunpack.c.l.b16 %v4791
    %v5154 = vunpack.c.h.b16 %v4791
    %v5155 = vunpack.c.l.b16 %v4792
    %v5156 = vunpack.c.h.b16 %v4792
    %v5157 = vunpack.c.l.b16 %v4793
    %v5158 = vunpack.c.h.b16 %v4793
    %v5159 = vunpack.c.l.b16 %v4794
    %v5160 = vunpack.c.h.b16 %v4794
    %v5161 = vunpack.c.l.b16 %v4795
    %v5162 = vunpack.c.h.b16 %v4795
    %v5163 = vunpack.c.l.b16 %v4796
    %v5164 = vunpack.c.h.b16 %v4796
    %v5165 = vunpack.c.l.b16 %v4797
    %v5166 = vunpack.c.h.b16 %v4797
    %v5167 = vunpack.c.l.b16 %v4798
    %v5168 = vunpack.c.h.b16 %v4798
    %v5169 = vunpack.c.l.b16 %v4799
    %v5170 = vunpack.c.h.b16 %v4799
    %v5171 = vunpack.c.l.b16 %v4800
    %v5172 = vunpack.c.h.b16 %v4800
    %v5173 = vunpack.c.l.b16 %v4801
    %v5174 = vunpack.c.h.b16 %v4801
    %v5175 = vunpack.c.l.b16 %v4802
    %v5176 = vunpack.c.h.b16 %v4802
    %v5177 = vunpack.c.l.b16 %v4803
    %v5178 = vunpack.c.h.b16 %v4803
    %v5179 = vunpack.c.l.b16 %v4804
    %v5180 = vunpack.c.h.b16 %v4804
    %v5181 = vunpack.c.l.b16 %v4805
    %v5182 = vunpack.c.h.b16 %v4805
    %v5183 = vunpack.c.l.b16 %v4806
    %v5184 = vunpack.c.h.b16 %v4806
    %v5185 = vunpack.c.l.b16 %v4807
    %v5186 = vunpack.c.h.b16 %v4807
    %v5187 = vunpack.c.l.b16 %v4808
    %v5188 = vunpack.c.h.b16 %v4808
    %v5189 = vunpack.c.l.b16 %v4809
    %v5190 = vunpack.c.h.b16 %v4809
    %v5191 = vunpack.c.l.b16 %v4810
    %v5192 = vunpack.c.h.b16 %v4810
    %v5193 = vunpack.c.l.b16 %v4811
    %v5194 = vunpack.c.h.b16 %v4811
    %v5195 = vunpack.c.l.b16 %v4812
    %v5196 = vunpack.c.h.b16 %v4812
    %v5197 = vpack.c.b16 %v4949, %v4941
    %v5198 = vpack.c.b16 %v4950, %v4942
    %v5199 = vpack.c.b16 %v4951, %v4943
    %v5200 = vpack.c.b16 %v4952, %v4944
    %v5201 = vpack.c.b16 %v4953, %v4945
    %v5202 = vpack.c.b16 %v4954, %v4946
    %v5203 = vpack.c.b16 %v4955, %v4947
    %v5204 = vpack.c.b16 %v4956, %v4948
    %v5205 = vpack.c.b16 %v4965, %v4957
    %v5206 = vpack.c.b16 %v4966, %v4958
    %v5207 = vpack.c.b16 %v4967, %v4959
    %v5208 = vpack.c.b16 %v4968, %v4960
    %v5209 = vpack.c.b16 %v4969, %v4961
    %v5210 = vpack.c.b16 %v4970, %v4962
    %v5211 = vpack.c.b16 %v4971, %v4963
    %v5212 = vpack.c.b16 %v4972, %v4964
    %v5213 = vpack.c.b16 %v4981, %v4973
    %v5214 = vpack.c.b16 %v4982, %v4974
    %v5215 = vpack.c.b16 %v4983, %v4975
    %v5216 = vpack.c.b16 %v4984, %v4976
    %v5217 = vpack.c.b16 %v4985, %v4977
    %v5218 = vpack.c.b16 %v4986, %v4978
    %v5219 = vpack.c.b16 %v4987, %v4979
    %v5220 = vpack.c.b16 %v4988, %v4980
    %v5221 = vpack.c.b16 %v4997, %v4989
    %v5222 = vpack.c.b16 %v4998, %v4990
    %v5223 = vpack.c.b16 %v4999, %v4991
    %v5224 = vpack.c.b16 %v5000, %v4992
    %v5225 = vpack.c.b16 %v5001, %v4993
    %v5226 = vpack.c.b16 %v5002, %v4994
    %v5227 = vpack.c.b16 %v5003, %v4995
    %v5228 = vpack.c.b16 %v5004, %v4996
    %v5229 = vpack.c.b16 %v5013, %v5005
    %v5230 = vpack.c.b16 %v5014, %v5006
    %v5231 = vpack.c.b16 %v5015, %v5007
    %v5232 = vpack.c.b16 %v5016, %v5008
    %v5233 = vpack.c.b16 %v5017, %v5009
    %v5234 = vpack.c.b16 %v5018, %v5010
    %v5235 = vpack.c.b16 %v5019, %v5011
    %v5236 = vpack.c.b16 %v5020, %v5012
    %v5237 = vpack.c.b16 %v5029, %v5021
    %v5238 = vpack.c.b16 %v5030, %v5022
    %v5239 = vpack.c.b16 %v5031, %v5023
    %v5240 = vpack.c.b16 %v5032, %v5024
    %v5241 = vpack.c.b16 %v5033, %v5025
    %v5242 = vpack.c.b16 %v5034, %v5026
    %v5243 = vpack.c.b16 %v5035, %v5027
    %v5244 = vpack.c.b16 %v5036, %v5028
    %v5245 = vpack.c.b16 %v5045, %v5037
    %v5246 = vpack.c.b16 %v5046, %v5038
    %v5247 = vpack.c.b16 %v5047, %v5039
    %v5248 = vpack.c.b16 %v5048, %v5040
    %v5249 = vpack.c.b16 %v5049, %v5041
    %v5250 = vpack.c.b16 %v5050, %v5042
    %v5251 = vpack.c.b16 %v5051, %v5043
    %v5252 = vpack.c.b16 %v5052, %v5044
    %v5253 = vpack.c.b16 %v5061, %v5053
    %v5254 = vpack.c.b16 %v5062, %v5054
    %v5255 = vpack.c.b16 %v5063, %v5055
    %v5256 = vpack.c.b16 %v5064, %v5056
    %v5257 = vpack.c.b16 %v5065, %v5057
    %v5258 = vpack.c.b16 %v5066, %v5058
    %v5259 = vpack.c.b16 %v5067, %v5059
    %v5260 = vpack.c.b16 %v5068, %v5060
    %v5261 = vpack.c.b16 %v5077, %v5069
    %v5262 = vpack.c.b16 %v5078, %v5070
    %v5263 = vpack.c.b16 %v5079, %v5071
    %v5264 = vpack.c.b16 %v5080, %v5072
    %v5265 = vpack.c.b16 %v5081, %v5073
    %v5266 = vpack.c.b16 %v5082, %v5074
    %v5267 = vpack.c.b16 %v5083, %v5075
    %v5268 = vpack.c.b16 %v5084, %v5076
    %v5269 = vpack.c.b16 %v5093, %v5085
    %v5270 = vpack.c.b16 %v5094, %v5086
    %v5271 = vpack.c.b16 %v5095, %v5087
    %v5272 = vpack.c.b16 %v5096, %v5088
    %v5273 = vpack.c.b16 %v5097, %v5089
    %v5274 = vpack.c.b16 %v5098, %v5090
    %v5275 = vpack.c.b16 %v5099, %v5091
    %v5276 = vpack.c.b16 %v5100, %v5092
    %v5277 = vpack.c.b16 %v5109, %v5101
    %v5278 = vpack.c.b16 %v5110, %v5102
    %v5279 = vpack.c.b16 %v5111, %v5103
    %v5280 = vpack.c.b16 %v5112, %v5104
    %v5281 = vpack.c.b16 %v5113, %v5105
    %v5282 = vpack.c.b16 %v5114, %v5106
    %v5283 = vpack.c.b16 %v5115, %v5107
    %v5284 = vpack.c.b16 %v5116, %v5108
    %v5285 = vpack.c.b16 %v5125, %v5117
    %v5286 = vpack.c.b16 %v5126, %v5118
    %v5287 = vpack.c.b16 %v5127, %v5119
    %v5288 = vpack.c.b16 %v5128, %v5120
    %v5289 = vpack.c.b16 %v5129, %v5121
    %v5290 = vpack.c.b16 %v5130, %v5122
    %v5291 = vpack.c.b16 %v5131, %v5123
    %v5292 = vpack.c.b16 %v5132, %v5124
    %v5293 = vpack.c.b16 %v5141, %v5133
    %v5294 = vpack.c.b16 %v5142, %v5134
    %v5295 = vpack.c.b16 %v5143, %v5135
    %v5296 = vpack.c.b16 %v5144, %v5136
    %v5297 = vpack.c.b16 %v5145, %v5137
    %v5298 = vpack.c.b16 %v5146, %v5138
    %v5299 = vpack.c.b16 %v5147, %v5139
    %v5300 = vpack.c.b16 %v5148, %v5140
    %v5301 = vpack.c.b16 %v5157, %v5149
    %v5302 = vpack.c.b16 %v5158, %v5150
    %v5303 = vpack.c.b16 %v5159, %v5151
    %v5304 = vpack.c.b16 %v5160, %v5152
    %v5305 = vpack.c.b16 %v5161, %v5153
    %v5306 = vpack.c.b16 %v5162, %v5154
    %v5307 = vpack.c.b16 %v5163, %v5155
    %v5308 = vpack.c.b16 %v5164, %v5156
    %v5309 = vpack.c.b16 %v5173, %v5165
    %v5310 = vpack.c.b16 %v5174, %v5166
    %v5311 = vpack.c.b16 %v5175, %v5167
    %v5312 = vpack.c.b16 %v5176, %v5168
    %v5313 = vpack.c.b16 %v5177, %v5169
    %v5314 = vpack.c.b16 %v5178, %v5170
    %v5315 = vpack.c.b16 %v5179, %v5171
    %v5316 = vpack.c.b16 %v5180, %v5172
    %v5317 = vpack.c.b16 %v5189, %v5181
    %v5318 = vpack.c.b16 %v5190, %v5182
    %v5319 = vpack.c.b16 %v5191, %v5183
    %v5320 = vpack.c.b16 %v5192, %v5184
    %v5321 = vpack.c.b16 %v5193, %v5185
    %v5322 = vpack.c.b16 %v5194, %v5186
    %v5323 = vpack.c.b16 %v5195, %v5187
    %v5324 = vpack.c.b16 %v5196, %v5188
    %5453 = vmatpush.bf16.msra.mxu0 %v5253
    %5454 = vmatpush.bf16.msra.mxu0 %v5245
    %5455 = vmatpush.bf16.msra.mxu0 %v5237
    %5456 = vmatpush.bf16.msra.mxu0 %v5229
    %5457 = vmatpush.bf16.msra.mxu0 %v5221
    %5458 = vmatpush.bf16.msra.mxu0 %v5213
    %5459 = vmatpush.bf16.msra.mxu0 %v5205
    %5460 = vmatpush.bf16.msra.mxu0 %v5197
    %5461 = vmatmul.bf16.gmra.mxu0 %v4683
    %v5462 = vpop.f32.mrf.mxu0
    %v5463 = vadd.f32 0.0, %v5462
    %v5464 = vpop.f32.mrf.mxu0
    %5465 = vdwg.mxu0
    %5466 = vmatpush.bf16.msra.mxu0 %v5317
    %5467 = vmatpush.bf16.msra.mxu0 %v5309
    %5468 = vmatpush.bf16.msra.mxu0 %v5301
    %5469 = vmatpush.bf16.msra.mxu0 %v5293
    %5470 = vmatpush.bf16.msra.mxu0 %v5285
    %5471 = vmatpush.bf16.msra.mxu0 %v5277
    %5472 = vmatpush.bf16.msra.mxu0 %v5269
    %5473 = vmatpush.bf16.msra.mxu0 %v5261
    %5474 = vmatmul.bf16.gmra.mxu0 %v4684
    %v5475 = vpop.f32.mrf.mxu0
    %v5476 = vadd.f32 %v5463, %v5475
    %v5477 = vpop.f32.mrf.mxu0
    %5478 = vdwg.mxu0
    %5479 = vmatpush.bf16.msra.mxu0 %v5254
    %5480 = vmatpush.bf16.msra.mxu0 %v5246
    %5481 = vmatpush.bf16.msra.mxu0 %v5238
    %5482 = vmatpush.bf16.msra.mxu0 %v5230
    %5483 = vmatpush.bf16.msra.mxu0 %v5222
    %5484 = vmatpush.bf16.msra.mxu0 %v5214
    %5485 = vmatpush.bf16.msra.mxu0 %v5206
    %5486 = vmatpush.bf16.msra.mxu0 %v5198
    %5487 = vmatmul.bf16.gmra.mxu0 %v4683
    %v5488 = vpop.f32.mrf.mxu0
    %v5489 = vadd.f32 0.0, %v5488
    %v5490 = vpop.f32.mrf.mxu0
    %5491 = vdwg.mxu0
    %5492 = vmatpush.bf16.msra.mxu0 %v5318
    %5493 = vmatpush.bf16.msra.mxu0 %v5310
    %5494 = vmatpush.bf16.msra.mxu0 %v5302
    %5495 = vmatpush.bf16.msra.mxu0 %v5294
    %5496 = vmatpush.bf16.msra.mxu0 %v5286
    %5497 = vmatpush.bf16.msra.mxu0 %v5278
    %5498 = vmatpush.bf16.msra.mxu0 %v5270
    %5499 = vmatpush.bf16.msra.mxu0 %v5262
    %5500 = vmatmul.bf16.gmra.mxu0 %v4684
    %v5501 = vpop.f32.mrf.mxu0
    %v5502 = vadd.f32 %v5489, %v5501
    %v5503 = vpop.f32.mrf.mxu0
    %5504 = vdwg.mxu0
    %5505 = vmatpush.bf16.msra.mxu0 %v5255
    %5506 = vmatpush.bf16.msra.mxu0 %v5247
    %5507 = vmatpush.bf16.msra.mxu0 %v5239
    %5508 = vmatpush.bf16.msra.mxu0 %v5231
    %5509 = vmatpush.bf16.msra.mxu0 %v5223
    %5510 = vmatpush.bf16.msra.mxu0 %v5215
    %5511 = vmatpush.bf16.msra.mxu0 %v5207
    %5512 = vmatpush.bf16.msra.mxu0 %v5199
    %5513 = vmatmul.bf16.gmra.mxu0 %v4683
    %v5514 = vpop.f32.mrf.mxu0
    %v5515 = vadd.f32 0.0, %v5514
    %v5516 = vpop.f32.mrf.mxu0
    %5517 = vdwg.mxu0
    %5518 = vmatpush.bf16.msra.mxu0 %v5319
    %5519 = vmatpush.bf16.msra.mxu0 %v5311
    %5520 = vmatpush.bf16.msra.mxu0 %v5303
    %5521 = vmatpush.bf16.msra.mxu0 %v5295
    %5522 = vmatpush.bf16.msra.mxu0 %v5287
    %5523 = vmatpush.bf16.msra.mxu0 %v5279
    %5524 = vmatpush.bf16.msra.mxu0 %v5271
    %5525 = vmatpush.bf16.msra.mxu0 %v5263
    %5526 = vmatmul.bf16.gmra.mxu0 %v4684
    %v5527 = vpop.f32.mrf.mxu0
    %v5528 = vadd.f32 %v5515, %v5527
    %v5529 = vpop.f32.mrf.mxu0
    %5530 = vdwg.mxu0
    %5531 = vmatpush.bf16.msra.mxu0 %v5256
    %5532 = vmatpush.bf16.msra.mxu0 %v5248
    %5533 = vmatpush.bf16.msra.mxu0 %v5240
    %5534 = vmatpush.bf16.msra.mxu0 %v5232
    %5535 = vmatpush.bf16.msra.mxu0 %v5224
    %5536 = vmatpush.bf16.msra.mxu0 %v5216
    %5537 = vmatpush.bf16.msra.mxu0 %v5208
    %5538 = vmatpush.bf16.msra.mxu0 %v5200
    %5539 = vmatmul.bf16.gmra.mxu0 %v4683
    %v5540 = vpop.f32.mrf.mxu0
    %v5541 = vadd.f32 0.0, %v5540
    %v5542 = vpop.f32.mrf.mxu0
    %5543 = vdwg.mxu0
    %5544 = vmatpush.bf16.msra.mxu0 %v5320
    %5545 = vmatpush.bf16.msra.mxu0 %v5312
    %5546 = vmatpush.bf16.msra.mxu0 %v5304
    %5547 = vmatpush.bf16.msra.mxu0 %v5296
    %5548 = vmatpush.bf16.msra.mxu0 %v5288
    %5549 = vmatpush.bf16.msra.mxu0 %v5280
    %5550 = vmatpush.bf16.msra.mxu0 %v5272
    %5551 = vmatpush.bf16.msra.mxu0 %v5264
    %5552 = vmatmul.bf16.gmra.mxu0 %v4684
    %v5553 = vpop.f32.mrf.mxu0
    %v5554 = vadd.f32 %v5541, %v5553
    %v5555 = vpop.f32.mrf.mxu0
    %5556 = vdwg.mxu0
    %5557 = vmatpush.bf16.msra.mxu0 %v5257
    %5558 = vmatpush.bf16.msra.mxu0 %v5249
    %5559 = vmatpush.bf16.msra.mxu0 %v5241
    %5560 = vmatpush.bf16.msra.mxu0 %v5233
    %5561 = vmatpush.bf16.msra.mxu0 %v5225
    %5562 = vmatpush.bf16.msra.mxu0 %v5217
    %5563 = vmatpush.bf16.msra.mxu0 %v5209
    %5564 = vmatpush.bf16.msra.mxu0 %v5201
    %5565 = vmatmul.bf16.gmra.mxu0 %v4683
    %v5566 = vpop.f32.mrf.mxu0
    %v5567 = vadd.f32 0.0, %v5566
    %v5568 = vpop.f32.mrf.mxu0
    %5569 = vdwg.mxu0
    %5570 = vmatpush.bf16.msra.mxu0 %v5321
    %5571 = vmatpush.bf16.msra.mxu0 %v5313
    %5572 = vmatpush.bf16.msra.mxu0 %v5305
    %5573 = vmatpush.bf16.msra.mxu0 %v5297
    %5574 = vmatpush.bf16.msra.mxu0 %v5289
    %5575 = vmatpush.bf16.msra.mxu0 %v5281
    %5576 = vmatpush.bf16.msra.mxu0 %v5273
    %5577 = vmatpush.bf16.msra.mxu0 %v5265
    %5578 = vmatmul.bf16.gmra.mxu0 %v4684
    %v5579 = vpop.f32.mrf.mxu0
    %v5580 = vadd.f32 %v5567, %v5579
    %v5581 = vpop.f32.mrf.mxu0
    %5582 = vdwg.mxu0
    %5583 = vmatpush.bf16.msra.mxu0 %v5258
    %5584 = vmatpush.bf16.msra.mxu0 %v5250
    %5585 = vmatpush.bf16.msra.mxu0 %v5242
    %5586 = vmatpush.bf16.msra.mxu0 %v5234
    %5587 = vmatpush.bf16.msra.mxu0 %v5226
    %5588 = vmatpush.bf16.msra.mxu0 %v5218
    %5589 = vmatpush.bf16.msra.mxu0 %v5210
    %5590 = vmatpush.bf16.msra.mxu0 %v5202
    %5591 = vmatmul.bf16.gmra.mxu0 %v4683
    %v5592 = vpop.f32.mrf.mxu0
    %v5593 = vadd.f32 0.0, %v5592
    %v5594 = vpop.f32.mrf.mxu0
    %5595 = vdwg.mxu0
    %5596 = vmatpush.bf16.msra.mxu0 %v5322
    %5597 = vmatpush.bf16.msra.mxu0 %v5314
    %5598 = vmatpush.bf16.msra.mxu0 %v5306
    %5599 = vmatpush.bf16.msra.mxu0 %v5298
    %5600 = vmatpush.bf16.msra.mxu0 %v5290
    %5601 = vmatpush.bf16.msra.mxu0 %v5282
    %5602 = vmatpush.bf16.msra.mxu0 %v5274
    %5603 = vmatpush.bf16.msra.mxu0 %v5266
    %5604 = vmatmul.bf16.gmra.mxu0 %v4684
    %v5605 = vpop.f32.mrf.mxu0
    %v5606 = vadd.f32 %v5593, %v5605
    %v5607 = vpop.f32.mrf.mxu0
    %5608 = vdwg.mxu0
    %5609 = vmatpush.bf16.msra.mxu0 %v5259
    %5610 = vmatpush.bf16.msra.mxu0 %v5251
    %5611 = vmatpush.bf16.msra.mxu0 %v5243
    %5612 = vmatpush.bf16.msra.mxu0 %v5235
    %5613 = vmatpush.bf16.msra.mxu0 %v5227
    %5614 = vmatpush.bf16.msra.mxu0 %v5219
    %5615 = vmatpush.bf16.msra.mxu0 %v5211
    %5616 = vmatpush.bf16.msra.mxu0 %v5203
    %5617 = vmatmul.bf16.gmra.mxu0 %v4683
    %v5618 = vpop.f32.mrf.mxu0
    %v5619 = vadd.f32 0.0, %v5618
    %v5620 = vpop.f32.mrf.mxu0
    %5621 = vdwg.mxu0
    %5622 = vmatpush.bf16.msra.mxu0 %v5323
    %5623 = vmatpush.bf16.msra.mxu0 %v5315
    %5624 = vmatpush.bf16.msra.mxu0 %v5307
    %5625 = vmatpush.bf16.msra.mxu0 %v5299
    %5626 = vmatpush.bf16.msra.mxu0 %v5291
    %5627 = vmatpush.bf16.msra.mxu0 %v5283
    %5628 = vmatpush.bf16.msra.mxu0 %v5275
    %5629 = vmatpush.bf16.msra.mxu0 %v5267
    %5630 = vmatmul.bf16.gmra.mxu0 %v4684
    %v5631 = vpop.f32.mrf.mxu0
    %v5632 = vadd.f32 %v5619, %v5631
    %v5633 = vpop.f32.mrf.mxu0
    %5634 = vdwg.mxu0
    %5635 = vmatpush.bf16.msra.mxu0 %v5260
    %5636 = vmatpush.bf16.msra.mxu0 %v5252
    %5637 = vmatpush.bf16.msra.mxu0 %v5244
    %5638 = vmatpush.bf16.msra.mxu0 %v5236
    %5639 = vmatpush.bf16.msra.mxu0 %v5228
    %5640 = vmatpush.bf16.msra.mxu0 %v5220
    %5641 = vmatpush.bf16.msra.mxu0 %v5212
    %5642 = vmatpush.bf16.msra.mxu0 %v5204
    %5643 = vmatmul.bf16.gmra.mxu0 %v4683
    %v5644 = vpop.f32.mrf.mxu0
    %v5645 = vadd.f32 0.0, %v5644
    %v5646 = vpop.f32.mrf.mxu0
    %5647 = vdwg.mxu0
    %5648 = vmatpush.bf16.msra.mxu0 %v5324
    %5649 = vmatpush.bf16.msra.mxu0 %v5316
    %5650 = vmatpush.bf16.msra.mxu0 %v5308
    %5651 = vmatpush.bf16.msra.mxu0 %v5300
    %5652 = vmatpush.bf16.msra.mxu0 %v5292
    %5653 = vmatpush.bf16.msra.mxu0 %v5284
    %5654 = vmatpush.bf16.msra.mxu0 %v5276
    %5655 = vmatpush.bf16.msra.mxu0 %v5268
    %5656 = vmatmul.bf16.gmra.mxu0 %v4684
    %v5657 = vpop.f32.mrf.mxu0
    %v5658 = vadd.f32 %v5645, %v5657
    %v5659 = vpop.f32.mrf.mxu0
    %5660 = vdwg.mxu0
    %v5661 = vld [vmem:[#allocation2 + $0xc0] sm:$0xff]
    %v5662 = vld [vmem:[#allocation2 + $0xc8] sm:$0xff]
    %v5663 = vld [vmem:[#allocation2 + $0xd0] sm:$0xff]
    %v5664 = vld [vmem:[#allocation2 + $0xd8] sm:$0xff]
    %v5665 = vadd.f32 %v5661, %v5476
    %v5666 = vadd.f32 %v5662, %v5502
    %v5667 = vadd.f32 %v5663, %v5528
    %v5668 = vadd.f32 %v5664, %v5554
    %v5669 = vld [vmem:[#allocation2 + $0x120] sm:$0xff]
    %v5670 = vld [vmem:[#allocation2 + $0x128] sm:$0xff]
    %v5671 = vld [vmem:[#allocation2 + $0x130] sm:$0xff]
    %v5672 = vld [vmem:[#allocation2 + $0x138] sm:$0xff]
    %v5673 = vadd.f32 %v5669, %v5580
    %v5674 = vadd.f32 %v5670, %v5606
    %v5675 = vadd.f32 %v5671, %v5632
    %v5676 = vadd.f32 %v5672, %v5658
    %v5677 = vxor.u32 %v5665, 2147483648
    %v5678 = vxor.u32 %v5673, 2147483648
    %v5679 = vmul.f32 %v5677, 1.442695
    %v5680 = vpow.pop %v5679
    %v5681 = vmul.f32 %v5678, 1.442695
    %v5682 = vpow.pop %v5681
    %v5683 = vadd.f32 %v5680, 1.0
    %v5684 = vadd.f32 %v5682, 1.0
    %v5685 = vrcp.pop %v5683
    %v5686 = vmul.f32 %v5683, %v5685
    %v5687 = vsub.f32 1.0, %v5686
    %v5688 = vmul.f32 %v5685, %v5687
    %v5689 = vadd.f32 %v5685, %v5688
    %vm5690 = vweird.f32 %v5683
    %vm5691 = vweird.f32 %v5685
    %vm5692 = vmor %vm5690, %vm5691
    %v5693 = vsel %vm5692, %v5685, %v5689
    %v5694 = vand.u32 2147483647, %v5683
    %vm5695 = vcmp.eq.f32.partialorder %v5694, 8.507059e+37
    %v5696 = vand.u32 %v5683, 2147483648
    %v5697 = vor.u32 1.1754944e-38, %v5696
    %v5698 = vsel %vm5695, %v5697, %v5693
    %v5699 = vmul.f32 1.0, %v5698
    %v5700 = vrcp.pop %v5684
    %v5701 = vmul.f32 %v5684, %v5700
    %v5702 = vsub.f32 1.0, %v5701
    %v5703 = vmul.f32 %v5700, %v5702
    %v5704 = vadd.f32 %v5700, %v5703
    %vm5705 = vweird.f32 %v5684
    %vm5706 = vweird.f32 %v5700
    %vm5707 = vmor %vm5705, %vm5706
    %v5708 = vsel %vm5707, %v5700, %v5704
    %v5709 = vand.u32 2147483647, %v5684
    %vm5710 = vcmp.eq.f32.partialorder %v5709, 8.507059e+37
    %v5711 = vand.u32 %v5684, 2147483648
    %v5712 = vor.u32 1.1754944e-38, %v5711
    %v5713 = vsel %vm5710, %v5712, %v5708
    %v5714 = vmul.f32 1.0, %v5713
    %v5715 = vxor.u32 %v5666, 2147483648
    %v5716 = vxor.u32 %v5674, 2147483648
    %v5717 = vmul.f32 %v5715, 1.442695
    %v5718 = vpow.pop %v5717
    %v5719 = vmul.f32 %v5716, 1.442695
    %v5720 = vpow.pop %v5719
    %v5721 = vadd.f32 %v5718, 1.0
    %v5722 = vadd.f32 %v5720, 1.0
    %v5723 = vrcp.pop %v5721
    %v5724 = vmul.f32 %v5721, %v5723
    %v5725 = vsub.f32 1.0, %v5724
    %v5726 = vmul.f32 %v5723, %v5725
    %v5727 = vadd.f32 %v5723, %v5726
    %vm5728 = vweird.f32 %v5721
    %vm5729 = vweird.f32 %v5723
    %vm5730 = vmor %vm5728, %vm5729
    %v5731 = vsel %vm5730, %v5723, %v5727
    %v5732 = vand.u32 2147483647, %v5721
    %vm5733 = vcmp.eq.f32.partialorder %v5732, 8.507059e+37
    %v5734 = vand.u32 %v5721, 2147483648
    %v5735 = vor.u32 1.1754944e-38, %v5734
    %v5736 = vsel %vm5733, %v5735, %v5731
    %v5737 = vmul.f32 1.0, %v5736
    %v5738 = vrcp.pop %v5722
    %v5739 = vmul.f32 %v5722, %v5738
    %v5740 = vsub.f32 1.0, %v5739
    %v5741 = vmul.f32 %v5738, %v5740
    %v5742 = vadd.f32 %v5738, %v5741
    %vm5743 = vweird.f32 %v5722
    %vm5744 = vweird.f32 %v5738
    %vm5745 = vmor %vm5743, %vm5744
    %v5746 = vsel %vm5745, %v5738, %v5742
    %v5747 = vand.u32 2147483647, %v5722
    %vm5748 = vcmp.eq.f32.partialorder %v5747, 8.507059e+37
    %v5749 = vand.u32 %v5722, 2147483648
    %v5750 = vor.u32 1.1754944e-38, %v5749
    %v5751 = vsel %vm5748, %v5750, %v5746
    %v5752 = vmul.f32 1.0, %v5751
    %v5753 = vtanh.pop %v5667
    %v5754 = vtanh.pop %v5675
    %v5755 = vxor.u32 %v5668, 2147483648
    %v5756 = vxor.u32 %v5676, 2147483648
    %v5757 = vmul.f32 %v5755, 1.442695
    %v5758 = vpow.pop %v5757
    %v5759 = vmul.f32 %v5756, 1.442695
    %v5760 = vpow.pop %v5759
    %v5761 = vadd.f32 %v5758, 1.0
    %v5762 = vadd.f32 %v5760, 1.0
    %v5763 = vrcp.pop %v5761
    %v5764 = vmul.f32 %v5761, %v5763
    %v5765 = vsub.f32 1.0, %v5764
    %v5766 = vmul.f32 %v5763, %v5765
    %v5767 = vadd.f32 %v5763, %v5766
    %vm5768 = vweird.f32 %v5761
    %vm5769 = vweird.f32 %v5763
    %vm5770 = vmor %vm5768, %vm5769
    %v5771 = vsel %vm5770, %v5763, %v5767
    %v5772 = vand.u32 2147483647, %v5761
    %vm5773 = vcmp.eq.f32.partialorder %v5772, 8.507059e+37
    %v5774 = vand.u32 %v5761, 2147483648
    %v5775 = vor.u32 1.1754944e-38, %v5774
    %v5776 = vsel %vm5773, %v5775, %v5771
    %v5777 = vmul.f32 1.0, %v5776
    %v5778 = vrcp.pop %v5762
    %v5779 = vmul.f32 %v5762, %v5778
    %v5780 = vsub.f32 1.0, %v5779
    %v5781 = vmul.f32 %v5778, %v5780
    %v5782 = vadd.f32 %v5778, %v5781
    %vm5783 = vweird.f32 %v5762
    %vm5784 = vweird.f32 %v5778
    %vm5785 = vmor %vm5783, %vm5784
    %v5786 = vsel %vm5785, %v5778, %v5782
    %v5787 = vand.u32 2147483647, %v5762
    %vm5788 = vcmp.eq.f32.partialorder %v5787, 8.507059e+37
    %v5789 = vand.u32 %v5762, 2147483648
    %v5790 = vor.u32 1.1754944e-38, %v5789
    %v5791 = vsel %vm5788, %v5790, %v5786
    %v5792 = vmul.f32 1.0, %v5791
    %v5793 = vld [vmem:[#allocation4] sm:$0xff]
    %v5794 = vld [vmem:[#allocation4 + $0x8] sm:$0xff]
    %v5795 = vmul.f32 %v5737, %v5793
    %v5796 = vmul.f32 %v5752, %v5794
    %v5797 = vmul.f32 %v5699, %v5753
    %v5798 = vmul.f32 %v5714, %v5754
    %v5799 = vadd.f32 %v5795, %v5797
    %v5800 = vadd.f32 %v5796, %v5798
    %v5801 = vtanh.pop %v5799
    %v5802 = vtanh.pop %v5800
    %v5803 = vmul.f32 %v5777, %v5801
    %v5804 = vmul.f32 %v5792, %v5802
    %5805 = vst [vmem:[#allocation4] sm:$0xff] %v5799
    %5806 = vst [vmem:[#allocation4 + $0x8] sm:$0xff] %v5800
    %5807 = vst [vmem:[#allocation3] sm:$0xff] %v5803
    %5808 = vst [vmem:[#allocation3 + $0x8] sm:$0xff] %v5804
    %v5809 = vpack.c.bf16 %v5804, %v5803
    %v5810 = vld [vmem:[%s6 + $0x18] sm:$0xff]
    %v5811 = vld [vmem:[%s4] sm:$0xf]
    %v5812 = vld [vmem:[%s4 + $0x4] sm:$0xf]
    %v5813 = vld [vmem:[%s4 + $0x8] sm:$0xf]
    %v5814 = vld [vmem:[%s4 + $0xc] sm:$0xf]
    %v5815 = vld [vmem:[%s4 + $0x10] sm:$0xf]
    %v5816 = vld [vmem:[%s4 + $0x14] sm:$0xf]
    %v5817 = vld [vmem:[%s4 + $0x18] sm:$0xf]
    %v5818 = vld [vmem:[%s4 + $0x1c] sm:$0xf]
    %v5819 = vld [vmem:[%s4 + $0x20] sm:$0xf]
    %v5820 = vld [vmem:[%s4 + $0x24] sm:$0xf]
    %v5821 = vld [vmem:[%s4 + $0x28] sm:$0xf]
    %v5822 = vld [vmem:[%s4 + $0x2c] sm:$0xf]
    %v5823 = vld [vmem:[%s4 + $0x30] sm:$0xf]
    %v5824 = vld [vmem:[%s4 + $0x34] sm:$0xf]
    %v5825 = vld [vmem:[%s4 + $0x38] sm:$0xf]
    %v5826 = vld [vmem:[%s4 + $0x3c] sm:$0xf]
    %v5843 = vunpack.c.l.b16 %v5811
    %v5844 = vunpack.c.l.b16 %v5812
    %v5845 = vunpack.c.l.b16 %v5813
    %v5846 = vunpack.c.l.b16 %v5814
    %v5847 = vunpack.c.l.b16 %v5815
    %v5848 = vunpack.c.l.b16 %v5816
    %v5849 = vunpack.c.l.b16 %v5817
    %v5850 = vunpack.c.l.b16 %v5818
    %v5851 = vunpack.c.l.b16 %v5819
    %v5852 = vunpack.c.l.b16 %v5820
    %v5853 = vunpack.c.l.b16 %v5821
    %v5854 = vunpack.c.l.b16 %v5822
    %v5855 = vunpack.c.l.b16 %v5823
    %v5856 = vunpack.c.l.b16 %v5824
    %v5857 = vunpack.c.l.b16 %v5825
    %v5858 = vunpack.c.l.b16 %v5826
    %v5859 = vpack.c.b16 %v5844, %v5843
    %v5860 = vpack.c.b16 %v5846, %v5845
    %v5861 = vpack.c.b16 %v5848, %v5847
    %v5862 = vpack.c.b16 %v5850, %v5849
    %v5863 = vpack.c.b16 %v5852, %v5851
    %v5864 = vpack.c.b16 %v5854, %v5853
    %v5865 = vpack.c.b16 %v5856, %v5855
    %v5866 = vpack.c.b16 %v5858, %v5857
    %5875 = vmatpush.bf16.msra.mxu0 %v5866
    %5876 = vmatpush.bf16.msra.mxu0 %v5865
    %5877 = vmatpush.bf16.msra.mxu0 %v5864
    %5878 = vmatpush.bf16.msra.mxu0 %v5863
    %5879 = vmatpush.bf16.msra.mxu0 %v5862
    %5880 = vmatpush.bf16.msra.mxu0 %v5861
    %5881 = vmatpush.bf16.msra.mxu0 %v5860
    %5882 = vmatpush.bf16.msra.mxu0 %v5859
    %5883 = vmatmul.bf16.gmra.mxu0 %v5809
    %v5884 = vpop.f32.mrf.mxu0
    %v5885 = vadd.f32 0.0, %v5884
    %v5886 = vpop.f32.mrf.mxu0
    %5887 = vdwg.mxu0
    %v5888 = vadd.f32 %v5810, %v5885
    %5889 = vst [vmem:[%s6 + $0x18] sm:$0xff] %v5888
    %v5890 = vld [vmem:[%s6 + $0x20] sm:$0xff]
    %v5891 = vld [vmem:[%s4 + $0x40] sm:$0xf]
    %v5892 = vld [vmem:[%s4 + $0x44] sm:$0xf]
    %v5893 = vld [vmem:[%s4 + $0x48] sm:$0xf]
    %v5894 = vld [vmem:[%s4 + $0x4c] sm:$0xf]
    %v5895 = vld [vmem:[%s4 + $0x50] sm:$0xf]
    %v5896 = vld [vmem:[%s4 + $0x54] sm:$0xf]
    %v5897 = vld [vmem:[%s4 + $0x58] sm:$0xf]
    %v5898 = vld [vmem:[%s4 + $0x5c] sm:$0xf]
    %v5899 = vld [vmem:[%s4 + $0x60] sm:$0xf]
    %v5900 = vld [vmem:[%s4 + $0x64] sm:$0xf]
    %v5901 = vld [vmem:[%s4 + $0x68] sm:$0xf]
    %v5902 = vld [vmem:[%s4 + $0x6c] sm:$0xf]
    %v5903 = vld [vmem:[%s4 + $0x70] sm:$0xf]
    %v5904 = vld [vmem:[%s4 + $0x74] sm:$0xf]
    %v5905 = vld [vmem:[%s4 + $0x78] sm:$0xf]
    %v5906 = vld [vmem:[%s4 + $0x7c] sm:$0xf]
    %v5908 = vunpack.c.h.b16 %v5809
    %v5909 = vpack.c.b16 %v5908, %v5908
    %v5927 = vunpack.c.l.b16 %v5891
    %v5928 = vunpack.c.l.b16 %v5892
    %v5929 = vunpack.c.l.b16 %v5893
    %v5930 = vunpack.c.l.b16 %v5894
    %v5931 = vunpack.c.l.b16 %v5895
    %v5932 = vunpack.c.l.b16 %v5896
    %v5933 = vunpack.c.l.b16 %v5897
    %v5934 = vunpack.c.l.b16 %v5898
    %v5935 = vunpack.c.l.b16 %v5899
    %v5936 = vunpack.c.l.b16 %v5900
    %v5937 = vunpack.c.l.b16 %v5901
    %v5938 = vunpack.c.l.b16 %v5902
    %v5939 = vunpack.c.l.b16 %v5903
    %v5940 = vunpack.c.l.b16 %v5904
    %v5941 = vunpack.c.l.b16 %v5905
    %v5942 = vunpack.c.l.b16 %v5906
    %v5943 = vpack.c.b16 %v5928, %v5927
    %v5944 = vpack.c.b16 %v5930, %v5929
    %v5945 = vpack.c.b16 %v5932, %v5931
    %v5946 = vpack.c.b16 %v5934, %v5933
    %v5947 = vpack.c.b16 %v5936, %v5935
    %v5948 = vpack.c.b16 %v5938, %v5937
    %v5949 = vpack.c.b16 %v5940, %v5939
    %v5950 = vpack.c.b16 %v5942, %v5941
    %5959 = vmatpush.bf16.msra.mxu0 %v5950
    %5960 = vmatpush.bf16.msra.mxu0 %v5949
    %5961 = vmatpush.bf16.msra.mxu0 %v5948
    %5962 = vmatpush.bf16.msra.mxu0 %v5947
    %5963 = vmatpush.bf16.msra.mxu0 %v5946
    %5964 = vmatpush.bf16.msra.mxu0 %v5945
    %5965 = vmatpush.bf16.msra.mxu0 %v5944
    %5966 = vmatpush.bf16.msra.mxu0 %v5943
    %5967 = vmatmul.bf16.gmra.mxu0 %v5909
    %v5968 = vpop.f32.mrf.mxu0
    %v5969 = vadd.f32 0.0, %v5968
    %v5970 = vpop.f32.mrf.mxu0
    %5971 = vdwg.mxu0
    %v5972 = vadd.f32 %v5890, %v5969
    %5973 = vst [vmem:[%s6 + $0x20] sm:$0xff] %v5972
    %v5974 = vld [vmem:[#allocation3] sm:$0xff]
    %v5975 = vld [vmem:[#allocation3 + $0x8] sm:$0xff]
    %v5976 = vpack.c.bf16 %v5974, %v5974
    %v5977 = vpack.c.bf16 %v5975, %v5975
    %v5978 = vld [vmem:[#allocation7] sm:$0xff]
    %v5979 = vld [vmem:[#allocation7 + $0x8] sm:$0xff]
    %v5980 = vld [vmem:[#allocation7 + $0x10] sm:$0xff]
    %v5981 = vld [vmem:[#allocation7 + $0x18] sm:$0xff]
    %v5982 = vld [vmem:[#allocation7 + $0x20] sm:$0xff]
    %v5983 = vld [vmem:[#allocation7 + $0x28] sm:$0xff]
    %v5984 = vld [vmem:[#allocation7 + $0x30] sm:$0xff]
    %v5985 = vld [vmem:[#allocation7 + $0x38] sm:$0xff]
    %v5986 = vld [vmem:[#allocation7 + $0x40] sm:$0xff]
    %v5987 = vld [vmem:[#allocation7 + $0x48] sm:$0xff]
    %v5988 = vld [vmem:[#allocation7 + $0x50] sm:$0xff]
    %v5989 = vld [vmem:[#allocation7 + $0x58] sm:$0xff]
    %v5990 = vld [vmem:[#allocation7 + $0x60] sm:$0xff]
    %v5991 = vld [vmem:[#allocation7 + $0x68] sm:$0xff]
    %v5992 = vld [vmem:[#allocation7 + $0x70] sm:$0xff]
    %v5993 = vld [vmem:[#allocation7 + $0x78] sm:$0xff]
    %v5994 = vld [vmem:[#allocation7 + $0x80] sm:$0xff]
    %v5995 = vld [vmem:[#allocation7 + $0x88] sm:$0xff]
    %v5996 = vld [vmem:[#allocation7 + $0x90] sm:$0xff]
    %v5997 = vld [vmem:[#allocation7 + $0x98] sm:$0xff]
    %v5998 = vld [vmem:[#allocation7 + $0xa0] sm:$0xff]
    %v5999 = vld [vmem:[#allocation7 + $0xa8] sm:$0xff]
    %v6000 = vld [vmem:[#allocation7 + $0xb0] sm:$0xff]
    %v6001 = vld [vmem:[#allocation7 + $0xb8] sm:$0xff]
    %v6002 = vld [vmem:[#allocation7 + $0xc0] sm:$0xff]
    %v6003 = vld [vmem:[#allocation7 + $0xc8] sm:$0xff]
    %v6004 = vld [vmem:[#allocation7 + $0xd0] sm:$0xff]
    %v6005 = vld [vmem:[#allocation7 + $0xd8] sm:$0xff]
    %v6006 = vld [vmem:[#allocation7 + $0xe0] sm:$0xff]
    %v6007 = vld [vmem:[#allocation7 + $0xe8] sm:$0xff]
    %v6008 = vld [vmem:[#allocation7 + $0xf0] sm:$0xff]
    %v6009 = vld [vmem:[#allocation7 + $0xf8] sm:$0xff]
    %v6010 = vld [vmem:[#allocation7 + $0x100] sm:$0xff]
    %v6011 = vld [vmem:[#allocation7 + $0x108] sm:$0xff]
    %v6012 = vld [vmem:[#allocation7 + $0x110] sm:$0xff]
    %v6013 = vld [vmem:[#allocation7 + $0x118] sm:$0xff]
    %v6014 = vld [vmem:[#allocation7 + $0x120] sm:$0xff]
    %v6015 = vld [vmem:[#allocation7 + $0x128] sm:$0xff]
    %v6016 = vld [vmem:[#allocation7 + $0x130] sm:$0xff]
    %v6017 = vld [vmem:[#allocation7 + $0x138] sm:$0xff]
    %v6018 = vld [vmem:[#allocation7 + $0x140] sm:$0xff]
    %v6019 = vld [vmem:[#allocation7 + $0x148] sm:$0xff]
    %v6020 = vld [vmem:[#allocation7 + $0x150] sm:$0xff]
    %v6021 = vld [vmem:[#allocation7 + $0x158] sm:$0xff]
    %v6022 = vld [vmem:[#allocation7 + $0x160] sm:$0xff]
    %v6023 = vld [vmem:[#allocation7 + $0x168] sm:$0xff]
    %v6024 = vld [vmem:[#allocation7 + $0x170] sm:$0xff]
    %v6025 = vld [vmem:[#allocation7 + $0x178] sm:$0xff]
    %v6026 = vld [vmem:[#allocation7 + $0x180] sm:$0xff]
    %v6027 = vld [vmem:[#allocation7 + $0x188] sm:$0xff]
    %v6028 = vld [vmem:[#allocation7 + $0x190] sm:$0xff]
    %v6029 = vld [vmem:[#allocation7 + $0x198] sm:$0xff]
    %v6030 = vld [vmem:[#allocation7 + $0x1a0] sm:$0xff]
    %v6031 = vld [vmem:[#allocation7 + $0x1a8] sm:$0xff]
    %v6032 = vld [vmem:[#allocation7 + $0x1b0] sm:$0xff]
    %v6033 = vld [vmem:[#allocation7 + $0x1b8] sm:$0xff]
    %v6034 = vld [vmem:[#allocation7 + $0x1c0] sm:$0xff]
    %v6035 = vld [vmem:[#allocation7 + $0x1c8] sm:$0xff]
    %v6036 = vld [vmem:[#allocation7 + $0x1d0] sm:$0xff]
    %v6037 = vld [vmem:[#allocation7 + $0x1d8] sm:$0xff]
    %v6038 = vld [vmem:[#allocation7 + $0x1e0] sm:$0xff]
    %v6039 = vld [vmem:[#allocation7 + $0x1e8] sm:$0xff]
    %v6040 = vld [vmem:[#allocation7 + $0x1f0] sm:$0xff]
    %v6041 = vld [vmem:[#allocation7 + $0x1f8] sm:$0xff]
    %v6042 = vld [vmem:[#allocation7 + $0x200] sm:$0xff]
    %v6043 = vld [vmem:[#allocation7 + $0x208] sm:$0xff]
    %v6044 = vld [vmem:[#allocation7 + $0x210] sm:$0xff]
    %v6045 = vld [vmem:[#allocation7 + $0x218] sm:$0xff]
    %v6046 = vld [vmem:[#allocation7 + $0x220] sm:$0xff]
    %v6047 = vld [vmem:[#allocation7 + $0x228] sm:$0xff]
    %v6048 = vld [vmem:[#allocation7 + $0x230] sm:$0xff]
    %v6049 = vld [vmem:[#allocation7 + $0x238] sm:$0xff]
    %v6050 = vld [vmem:[#allocation7 + $0x240] sm:$0xff]
    %v6051 = vld [vmem:[#allocation7 + $0x248] sm:$0xff]
    %v6052 = vld [vmem:[#allocation7 + $0x250] sm:$0xff]
    %v6053 = vld [vmem:[#allocation7 + $0x258] sm:$0xff]
    %v6054 = vld [vmem:[#allocation7 + $0x260] sm:$0xff]
    %v6055 = vld [vmem:[#allocation7 + $0x268] sm:$0xff]
    %v6056 = vld [vmem:[#allocation7 + $0x270] sm:$0xff]
    %v6057 = vld [vmem:[#allocation7 + $0x278] sm:$0xff]
    %v6058 = vld [vmem:[#allocation7 + $0x280] sm:$0xff]
    %v6059 = vld [vmem:[#allocation7 + $0x288] sm:$0xff]
    %v6060 = vld [vmem:[#allocation7 + $0x290] sm:$0xff]
    %v6061 = vld [vmem:[#allocation7 + $0x298] sm:$0xff]
    %v6062 = vld [vmem:[#allocation7 + $0x2a0] sm:$0xff]
    %v6063 = vld [vmem:[#allocation7 + $0x2a8] sm:$0xff]
    %v6064 = vld [vmem:[#allocation7 + $0x2b0] sm:$0xff]
    %v6065 = vld [vmem:[#allocation7 + $0x2b8] sm:$0xff]
    %v6066 = vld [vmem:[#allocation7 + $0x2c0] sm:$0xff]
    %v6067 = vld [vmem:[#allocation7 + $0x2c8] sm:$0xff]
    %v6068 = vld [vmem:[#allocation7 + $0x2d0] sm:$0xff]
    %v6069 = vld [vmem:[#allocation7 + $0x2d8] sm:$0xff]
    %v6070 = vld [vmem:[#allocation7 + $0x2e0] sm:$0xff]
    %v6071 = vld [vmem:[#allocation7 + $0x2e8] sm:$0xff]
    %v6072 = vld [vmem:[#allocation7 + $0x2f0] sm:$0xff]
    %v6073 = vld [vmem:[#allocation7 + $0x2f8] sm:$0xff]
    %v6074 = vld [vmem:[#allocation7 + $0x300] sm:$0xff]
    %v6075 = vld [vmem:[#allocation7 + $0x308] sm:$0xff]
    %v6076 = vld [vmem:[#allocation7 + $0x310] sm:$0xff]
    %v6077 = vld [vmem:[#allocation7 + $0x318] sm:$0xff]
    %v6078 = vld [vmem:[#allocation7 + $0x320] sm:$0xff]
    %v6079 = vld [vmem:[#allocation7 + $0x328] sm:$0xff]
    %v6080 = vld [vmem:[#allocation7 + $0x330] sm:$0xff]
    %v6081 = vld [vmem:[#allocation7 + $0x338] sm:$0xff]
    %v6082 = vld [vmem:[#allocation7 + $0x340] sm:$0xff]
    %v6083 = vld [vmem:[#allocation7 + $0x348] sm:$0xff]
    %v6084 = vld [vmem:[#allocation7 + $0x350] sm:$0xff]
    %v6085 = vld [vmem:[#allocation7 + $0x358] sm:$0xff]
    %v6086 = vld [vmem:[#allocation7 + $0x360] sm:$0xff]
    %v6087 = vld [vmem:[#allocation7 + $0x368] sm:$0xff]
    %v6088 = vld [vmem:[#allocation7 + $0x370] sm:$0xff]
    %v6089 = vld [vmem:[#allocation7 + $0x378] sm:$0xff]
    %v6090 = vld [vmem:[#allocation7 + $0x380] sm:$0xff]
    %v6091 = vld [vmem:[#allocation7 + $0x388] sm:$0xff]
    %v6092 = vld [vmem:[#allocation7 + $0x390] sm:$0xff]
    %v6093 = vld [vmem:[#allocation7 + $0x398] sm:$0xff]
    %v6094 = vld [vmem:[#allocation7 + $0x3a0] sm:$0xff]
    %v6095 = vld [vmem:[#allocation7 + $0x3a8] sm:$0xff]
    %v6096 = vld [vmem:[#allocation7 + $0x3b0] sm:$0xff]
    %v6097 = vld [vmem:[#allocation7 + $0x3b8] sm:$0xff]
    %v6098 = vld [vmem:[#allocation7 + $0x3c0] sm:$0xff]
    %v6099 = vld [vmem:[#allocation7 + $0x3c8] sm:$0xff]
    %v6100 = vld [vmem:[#allocation7 + $0x3d0] sm:$0xff]
    %v6101 = vld [vmem:[#allocation7 + $0x3d8] sm:$0xff]
    %v6102 = vld [vmem:[#allocation7 + $0x3e0] sm:$0xff]
    %v6103 = vld [vmem:[#allocation7 + $0x3e8] sm:$0xff]
    %v6104 = vld [vmem:[#allocation7 + $0x3f0] sm:$0xff]
    %v6105 = vld [vmem:[#allocation7 + $0x3f8] sm:$0xff]
    %v6234 = vunpack.c.l.b16 %v5978
    %v6235 = vunpack.c.h.b16 %v5978
    %v6236 = vunpack.c.l.b16 %v5979
    %v6237 = vunpack.c.h.b16 %v5979
    %v6238 = vunpack.c.l.b16 %v5980
    %v6239 = vunpack.c.h.b16 %v5980
    %v6240 = vunpack.c.l.b16 %v5981
    %v6241 = vunpack.c.h.b16 %v5981
    %v6242 = vunpack.c.l.b16 %v5982
    %v6243 = vunpack.c.h.b16 %v5982
    %v6244 = vunpack.c.l.b16 %v5983
    %v6245 = vunpack.c.h.b16 %v5983
    %v6246 = vunpack.c.l.b16 %v5984
    %v6247 = vunpack.c.h.b16 %v5984
    %v6248 = vunpack.c.l.b16 %v5985
    %v6249 = vunpack.c.h.b16 %v5985
    %v6250 = vunpack.c.l.b16 %v5986
    %v6251 = vunpack.c.h.b16 %v5986
    %v6252 = vunpack.c.l.b16 %v5987
    %v6253 = vunpack.c.h.b16 %v5987
    %v6254 = vunpack.c.l.b16 %v5988
    %v6255 = vunpack.c.h.b16 %v5988
    %v6256 = vunpack.c.l.b16 %v5989
    %v6257 = vunpack.c.h.b16 %v5989
    %v6258 = vunpack.c.l.b16 %v5990
    %v6259 = vunpack.c.h.b16 %v5990
    %v6260 = vunpack.c.l.b16 %v5991
    %v6261 = vunpack.c.h.b16 %v5991
    %v6262 = vunpack.c.l.b16 %v5992
    %v6263 = vunpack.c.h.b16 %v5992
    %v6264 = vunpack.c.l.b16 %v5993
    %v6265 = vunpack.c.h.b16 %v5993
    %v6266 = vunpack.c.l.b16 %v5994
    %v6267 = vunpack.c.h.b16 %v5994
    %v6268 = vunpack.c.l.b16 %v5995
    %v6269 = vunpack.c.h.b16 %v5995
    %v6270 = vunpack.c.l.b16 %v5996
    %v6271 = vunpack.c.h.b16 %v5996
    %v6272 = vunpack.c.l.b16 %v5997
    %v6273 = vunpack.c.h.b16 %v5997
    %v6274 = vunpack.c.l.b16 %v5998
    %v6275 = vunpack.c.h.b16 %v5998
    %v6276 = vunpack.c.l.b16 %v5999
    %v6277 = vunpack.c.h.b16 %v5999
    %v6278 = vunpack.c.l.b16 %v6000
    %v6279 = vunpack.c.h.b16 %v6000
    %v6280 = vunpack.c.l.b16 %v6001
    %v6281 = vunpack.c.h.b16 %v6001
    %v6282 = vunpack.c.l.b16 %v6002
    %v6283 = vunpack.c.h.b16 %v6002
    %v6284 = vunpack.c.l.b16 %v6003
    %v6285 = vunpack.c.h.b16 %v6003
    %v6286 = vunpack.c.l.b16 %v6004
    %v6287 = vunpack.c.h.b16 %v6004
    %v6288 = vunpack.c.l.b16 %v6005
    %v6289 = vunpack.c.h.b16 %v6005
    %v6290 = vunpack.c.l.b16 %v6006
    %v6291 = vunpack.c.h.b16 %v6006
    %v6292 = vunpack.c.l.b16 %v6007
    %v6293 = vunpack.c.h.b16 %v6007
    %v6294 = vunpack.c.l.b16 %v6008
    %v6295 = vunpack.c.h.b16 %v6008
    %v6296 = vunpack.c.l.b16 %v6009
    %v6297 = vunpack.c.h.b16 %v6009
    %v6298 = vunpack.c.l.b16 %v6010
    %v6299 = vunpack.c.h.b16 %v6010
    %v6300 = vunpack.c.l.b16 %v6011
    %v6301 = vunpack.c.h.b16 %v6011
    %v6302 = vunpack.c.l.b16 %v6012
    %v6303 = vunpack.c.h.b16 %v6012
    %v6304 = vunpack.c.l.b16 %v6013
    %v6305 = vunpack.c.h.b16 %v6013
    %v6306 = vunpack.c.l.b16 %v6014
    %v6307 = vunpack.c.h.b16 %v6014
    %v6308 = vunpack.c.l.b16 %v6015
    %v6309 = vunpack.c.h.b16 %v6015
    %v6310 = vunpack.c.l.b16 %v6016
    %v6311 = vunpack.c.h.b16 %v6016
    %v6312 = vunpack.c.l.b16 %v6017
    %v6313 = vunpack.c.h.b16 %v6017
    %v6314 = vunpack.c.l.b16 %v6018
    %v6315 = vunpack.c.h.b16 %v6018
    %v6316 = vunpack.c.l.b16 %v6019
    %v6317 = vunpack.c.h.b16 %v6019
    %v6318 = vunpack.c.l.b16 %v6020
    %v6319 = vunpack.c.h.b16 %v6020
    %v6320 = vunpack.c.l.b16 %v6021
    %v6321 = vunpack.c.h.b16 %v6021
    %v6322 = vunpack.c.l.b16 %v6022
    %v6323 = vunpack.c.h.b16 %v6022
    %v6324 = vunpack.c.l.b16 %v6023
    %v6325 = vunpack.c.h.b16 %v6023
    %v6326 = vunpack.c.l.b16 %v6024
    %v6327 = vunpack.c.h.b16 %v6024
    %v6328 = vunpack.c.l.b16 %v6025
    %v6329 = vunpack.c.h.b16 %v6025
    %v6330 = vunpack.c.l.b16 %v6026
    %v6331 = vunpack.c.h.b16 %v6026
    %v6332 = vunpack.c.l.b16 %v6027
    %v6333 = vunpack.c.h.b16 %v6027
    %v6334 = vunpack.c.l.b16 %v6028
    %v6335 = vunpack.c.h.b16 %v6028
    %v6336 = vunpack.c.l.b16 %v6029
    %v6337 = vunpack.c.h.b16 %v6029
    %v6338 = vunpack.c.l.b16 %v6030
    %v6339 = vunpack.c.h.b16 %v6030
    %v6340 = vunpack.c.l.b16 %v6031
    %v6341 = vunpack.c.h.b16 %v6031
    %v6342 = vunpack.c.l.b16 %v6032
    %v6343 = vunpack.c.h.b16 %v6032
    %v6344 = vunpack.c.l.b16 %v6033
    %v6345 = vunpack.c.h.b16 %v6033
    %v6346 = vunpack.c.l.b16 %v6034
    %v6347 = vunpack.c.h.b16 %v6034
    %v6348 = vunpack.c.l.b16 %v6035
    %v6349 = vunpack.c.h.b16 %v6035
    %v6350 = vunpack.c.l.b16 %v6036
    %v6351 = vunpack.c.h.b16 %v6036
    %v6352 = vunpack.c.l.b16 %v6037
    %v6353 = vunpack.c.h.b16 %v6037
    %v6354 = vunpack.c.l.b16 %v6038
    %v6355 = vunpack.c.h.b16 %v6038
    %v6356 = vunpack.c.l.b16 %v6039
    %v6357 = vunpack.c.h.b16 %v6039
    %v6358 = vunpack.c.l.b16 %v6040
    %v6359 = vunpack.c.h.b16 %v6040
    %v6360 = vunpack.c.l.b16 %v6041
    %v6361 = vunpack.c.h.b16 %v6041
    %v6362 = vunpack.c.l.b16 %v6042
    %v6363 = vunpack.c.h.b16 %v6042
    %v6364 = vunpack.c.l.b16 %v6043
    %v6365 = vunpack.c.h.b16 %v6043
    %v6366 = vunpack.c.l.b16 %v6044
    %v6367 = vunpack.c.h.b16 %v6044
    %v6368 = vunpack.c.l.b16 %v6045
    %v6369 = vunpack.c.h.b16 %v6045
    %v6370 = vunpack.c.l.b16 %v6046
    %v6371 = vunpack.c.h.b16 %v6046
    %v6372 = vunpack.c.l.b16 %v6047
    %v6373 = vunpack.c.h.b16 %v6047
    %v6374 = vunpack.c.l.b16 %v6048
    %v6375 = vunpack.c.h.b16 %v6048
    %v6376 = vunpack.c.l.b16 %v6049
    %v6377 = vunpack.c.h.b16 %v6049
    %v6378 = vunpack.c.l.b16 %v6050
    %v6379 = vunpack.c.h.b16 %v6050
    %v6380 = vunpack.c.l.b16 %v6051
    %v6381 = vunpack.c.h.b16 %v6051
    %v6382 = vunpack.c.l.b16 %v6052
    %v6383 = vunpack.c.h.b16 %v6052
    %v6384 = vunpack.c.l.b16 %v6053
    %v6385 = vunpack.c.h.b16 %v6053
    %v6386 = vunpack.c.l.b16 %v6054
    %v6387 = vunpack.c.h.b16 %v6054
    %v6388 = vunpack.c.l.b16 %v6055
    %v6389 = vunpack.c.h.b16 %v6055
    %v6390 = vunpack.c.l.b16 %v6056
    %v6391 = vunpack.c.h.b16 %v6056
    %v6392 = vunpack.c.l.b16 %v6057
    %v6393 = vunpack.c.h.b16 %v6057
    %v6394 = vunpack.c.l.b16 %v6058
    %v6395 = vunpack.c.h.b16 %v6058
    %v6396 = vunpack.c.l.b16 %v6059
    %v6397 = vunpack.c.h.b16 %v6059
    %v6398 = vunpack.c.l.b16 %v6060
    %v6399 = vunpack.c.h.b16 %v6060
    %v6400 = vunpack.c.l.b16 %v6061
    %v6401 = vunpack.c.h.b16 %v6061
    %v6402 = vunpack.c.l.b16 %v6062
    %v6403 = vunpack.c.h.b16 %v6062
    %v6404 = vunpack.c.l.b16 %v6063
    %v6405 = vunpack.c.h.b16 %v6063
    %v6406 = vunpack.c.l.b16 %v6064
    %v6407 = vunpack.c.h.b16 %v6064
    %v6408 = vunpack.c.l.b16 %v6065
    %v6409 = vunpack.c.h.b16 %v6065
    %v6410 = vunpack.c.l.b16 %v6066
    %v6411 = vunpack.c.h.b16 %v6066
    %v6412 = vunpack.c.l.b16 %v6067
    %v6413 = vunpack.c.h.b16 %v6067
    %v6414 = vunpack.c.l.b16 %v6068
    %v6415 = vunpack.c.h.b16 %v6068
    %v6416 = vunpack.c.l.b16 %v6069
    %v6417 = vunpack.c.h.b16 %v6069
    %v6418 = vunpack.c.l.b16 %v6070
    %v6419 = vunpack.c.h.b16 %v6070
    %v6420 = vunpack.c.l.b16 %v6071
    %v6421 = vunpack.c.h.b16 %v6071
    %v6422 = vunpack.c.l.b16 %v6072
    %v6423 = vunpack.c.h.b16 %v6072
    %v6424 = vunpack.c.l.b16 %v6073
    %v6425 = vunpack.c.h.b16 %v6073
    %v6426 = vunpack.c.l.b16 %v6074
    %v6427 = vunpack.c.h.b16 %v6074
    %v6428 = vunpack.c.l.b16 %v6075
    %v6429 = vunpack.c.h.b16 %v6075
    %v6430 = vunpack.c.l.b16 %v6076
    %v6431 = vunpack.c.h.b16 %v6076
    %v6432 = vunpack.c.l.b16 %v6077
    %v6433 = vunpack.c.h.b16 %v6077
    %v6434 = vunpack.c.l.b16 %v6078
    %v6435 = vunpack.c.h.b16 %v6078
    %v6436 = vunpack.c.l.b16 %v6079
    %v6437 = vunpack.c.h.b16 %v6079
    %v6438 = vunpack.c.l.b16 %v6080
    %v6439 = vunpack.c.h.b16 %v6080
    %v6440 = vunpack.c.l.b16 %v6081
    %v6441 = vunpack.c.h.b16 %v6081
    %v6442 = vunpack.c.l.b16 %v6082
    %v6443 = vunpack.c.h.b16 %v6082
    %v6444 = vunpack.c.l.b16 %v6083
    %v6445 = vunpack.c.h.b16 %v6083
    %v6446 = vunpack.c.l.b16 %v6084
    %v6447 = vunpack.c.h.b16 %v6084
    %v6448 = vunpack.c.l.b16 %v6085
    %v6449 = vunpack.c.h.b16 %v6085
    %v6450 = vunpack.c.l.b16 %v6086
    %v6451 = vunpack.c.h.b16 %v6086
    %v6452 = vunpack.c.l.b16 %v6087
    %v6453 = vunpack.c.h.b16 %v6087
    %v6454 = vunpack.c.l.b16 %v6088
    %v6455 = vunpack.c.h.b16 %v6088
    %v6456 = vunpack.c.l.b16 %v6089
    %v6457 = vunpack.c.h.b16 %v6089
    %v6458 = vunpack.c.l.b16 %v6090
    %v6459 = vunpack.c.h.b16 %v6090
    %v6460 = vunpack.c.l.b16 %v6091
    %v6461 = vunpack.c.h.b16 %v6091
    %v6462 = vunpack.c.l.b16 %v6092
    %v6463 = vunpack.c.h.b16 %v6092
    %v6464 = vunpack.c.l.b16 %v6093
    %v6465 = vunpack.c.h.b16 %v6093
    %v6466 = vunpack.c.l.b16 %v6094
    %v6467 = vunpack.c.h.b16 %v6094
    %v6468 = vunpack.c.l.b16 %v6095
    %v6469 = vunpack.c.h.b16 %v6095
    %v6470 = vunpack.c.l.b16 %v6096
    %v6471 = vunpack.c.h.b16 %v6096
    %v6472 = vunpack.c.l.b16 %v6097
    %v6473 = vunpack.c.h.b16 %v6097
    %v6474 = vunpack.c.l.b16 %v6098
    %v6475 = vunpack.c.h.b16 %v6098
    %v6476 = vunpack.c.l.b16 %v6099
    %v6477 = vunpack.c.h.b16 %v6099
    %v6478 = vunpack.c.l.b16 %v6100
    %v6479 = vunpack.c.h.b16 %v6100
    %v6480 = vunpack.c.l.b16 %v6101
    %v6481 = vunpack.c.h.b16 %v6101
    %v6482 = vunpack.c.l.b16 %v6102
    %v6483 = vunpack.c.h.b16 %v6102
    %v6484 = vunpack.c.l.b16 %v6103
    %v6485 = vunpack.c.h.b16 %v6103
    %v6486 = vunpack.c.l.b16 %v6104
    %v6487 = vunpack.c.h.b16 %v6104
    %v6488 = vunpack.c.l.b16 %v6105
    %v6489 = vunpack.c.h.b16 %v6105
    %v6490 = vpack.c.b16 %v6242, %v6234
    %v6491 = vpack.c.b16 %v6243, %v6235
    %v6492 = vpack.c.b16 %v6244, %v6236
    %v6493 = vpack.c.b16 %v6245, %v6237
    %v6494 = vpack.c.b16 %v6246, %v6238
    %v6495 = vpack.c.b16 %v6247, %v6239
    %v6496 = vpack.c.b16 %v6248, %v6240
    %v6497 = vpack.c.b16 %v6249, %v6241
    %v6498 = vpack.c.b16 %v6258, %v6250
    %v6499 = vpack.c.b16 %v6259, %v6251
    %v6500 = vpack.c.b16 %v6260, %v6252
    %v6501 = vpack.c.b16 %v6261, %v6253
    %v6502 = vpack.c.b16 %v6262, %v6254
    %v6503 = vpack.c.b16 %v6263, %v6255
    %v6504 = vpack.c.b16 %v6264, %v6256
    %v6505 = vpack.c.b16 %v6265, %v6257
    %v6506 = vpack.c.b16 %v6274, %v6266
    %v6507 = vpack.c.b16 %v6275, %v6267
    %v6508 = vpack.c.b16 %v6276, %v6268
    %v6509 = vpack.c.b16 %v6277, %v6269
    %v6510 = vpack.c.b16 %v6278, %v6270
    %v6511 = vpack.c.b16 %v6279, %v6271
    %v6512 = vpack.c.b16 %v6280, %v6272
    %v6513 = vpack.c.b16 %v6281, %v6273
    %v6514 = vpack.c.b16 %v6290, %v6282
    %v6515 = vpack.c.b16 %v6291, %v6283
    %v6516 = vpack.c.b16 %v6292, %v6284
    %v6517 = vpack.c.b16 %v6293, %v6285
    %v6518 = vpack.c.b16 %v6294, %v6286
    %v6519 = vpack.c.b16 %v6295, %v6287
    %v6520 = vpack.c.b16 %v6296, %v6288
    %v6521 = vpack.c.b16 %v6297, %v6289
    %v6522 = vpack.c.b16 %v6306, %v6298
    %v6523 = vpack.c.b16 %v6307, %v6299
    %v6524 = vpack.c.b16 %v6308, %v6300
    %v6525 = vpack.c.b16 %v6309, %v6301
    %v6526 = vpack.c.b16 %v6310, %v6302
    %v6527 = vpack.c.b16 %v6311, %v6303
    %v6528 = vpack.c.b16 %v6312, %v6304
    %v6529 = vpack.c.b16 %v6313, %v6305
    %v6530 = vpack.c.b16 %v6322, %v6314
    %v6531 = vpack.c.b16 %v6323, %v6315
    %v6532 = vpack.c.b16 %v6324, %v6316
    %v6533 = vpack.c.b16 %v6325, %v6317
    %v6534 = vpack.c.b16 %v6326, %v6318
    %v6535 = vpack.c.b16 %v6327, %v6319
    %v6536 = vpack.c.b16 %v6328, %v6320
    %v6537 = vpack.c.b16 %v6329, %v6321
    %v6538 = vpack.c.b16 %v6338, %v6330
    %v6539 = vpack.c.b16 %v6339, %v6331
    %v6540 = vpack.c.b16 %v6340, %v6332
    %v6541 = vpack.c.b16 %v6341, %v6333
    %v6542 = vpack.c.b16 %v6342, %v6334
    %v6543 = vpack.c.b16 %v6343, %v6335
    %v6544 = vpack.c.b16 %v6344, %v6336
    %v6545 = vpack.c.b16 %v6345, %v6337
    %v6546 = vpack.c.b16 %v6354, %v6346
    %v6547 = vpack.c.b16 %v6355, %v6347
    %v6548 = vpack.c.b16 %v6356, %v6348
    %v6549 = vpack.c.b16 %v6357, %v6349
    %v6550 = vpack.c.b16 %v6358, %v6350
    %v6551 = vpack.c.b16 %v6359, %v6351
    %v6552 = vpack.c.b16 %v6360, %v6352
    %v6553 = vpack.c.b16 %v6361, %v6353
    %v6554 = vpack.c.b16 %v6370, %v6362
    %v6555 = vpack.c.b16 %v6371, %v6363
    %v6556 = vpack.c.b16 %v6372, %v6364
    %v6557 = vpack.c.b16 %v6373, %v6365
    %v6558 = vpack.c.b16 %v6374, %v6366
    %v6559 = vpack.c.b16 %v6375, %v6367
    %v6560 = vpack.c.b16 %v6376, %v6368
    %v6561 = vpack.c.b16 %v6377, %v6369
    %v6562 = vpack.c.b16 %v6386, %v6378
    %v6563 = vpack.c.b16 %v6387, %v6379
    %v6564 = vpack.c.b16 %v6388, %v6380
    %v6565 = vpack.c.b16 %v6389, %v6381
    %v6566 = vpack.c.b16 %v6390, %v6382
    %v6567 = vpack.c.b16 %v6391, %v6383
    %v6568 = vpack.c.b16 %v6392, %v6384
    %v6569 = vpack.c.b16 %v6393, %v6385
    %v6570 = vpack.c.b16 %v6402, %v6394
    %v6571 = vpack.c.b16 %v6403, %v6395
    %v6572 = vpack.c.b16 %v6404, %v6396
    %v6573 = vpack.c.b16 %v6405, %v6397
    %v6574 = vpack.c.b16 %v6406, %v6398
    %v6575 = vpack.c.b16 %v6407, %v6399
    %v6576 = vpack.c.b16 %v6408, %v6400
    %v6577 = vpack.c.b16 %v6409, %v6401
    %v6578 = vpack.c.b16 %v6418, %v6410
    %v6579 = vpack.c.b16 %v6419, %v6411
    %v6580 = vpack.c.b16 %v6420, %v6412
    %v6581 = vpack.c.b16 %v6421, %v6413
    %v6582 = vpack.c.b16 %v6422, %v6414
    %v6583 = vpack.c.b16 %v6423, %v6415
    %v6584 = vpack.c.b16 %v6424, %v6416
    %v6585 = vpack.c.b16 %v6425, %v6417
    %v6586 = vpack.c.b16 %v6434, %v6426
    %v6587 = vpack.c.b16 %v6435, %v6427
    %v6588 = vpack.c.b16 %v6436, %v6428
    %v6589 = vpack.c.b16 %v6437, %v6429
    %v6590 = vpack.c.b16 %v6438, %v6430
    %v6591 = vpack.c.b16 %v6439, %v6431
    %v6592 = vpack.c.b16 %v6440, %v6432
    %v6593 = vpack.c.b16 %v6441, %v6433
    %v6594 = vpack.c.b16 %v6450, %v6442
    %v6595 = vpack.c.b16 %v6451, %v6443
    %v6596 = vpack.c.b16 %v6452, %v6444
    %v6597 = vpack.c.b16 %v6453, %v6445
    %v6598 = vpack.c.b16 %v6454, %v6446
    %v6599 = vpack.c.b16 %v6455, %v6447
    %v6600 = vpack.c.b16 %v6456, %v6448
    %v6601 = vpack.c.b16 %v6457, %v6449
    %v6602 = vpack.c.b16 %v6466, %v6458
    %v6603 = vpack.c.b16 %v6467, %v6459
    %v6604 = vpack.c.b16 %v6468, %v6460
    %v6605 = vpack.c.b16 %v6469, %v6461
    %v6606 = vpack.c.b16 %v6470, %v6462
    %v6607 = vpack.c.b16 %v6471, %v6463
    %v6608 = vpack.c.b16 %v6472, %v6464
    %v6609 = vpack.c.b16 %v6473, %v6465
    %v6610 = vpack.c.b16 %v6482, %v6474
    %v6611 = vpack.c.b16 %v6483, %v6475
    %v6612 = vpack.c.b16 %v6484, %v6476
    %v6613 = vpack.c.b16 %v6485, %v6477
    %v6614 = vpack.c.b16 %v6486, %v6478
    %v6615 = vpack.c.b16 %v6487, %v6479
    %v6616 = vpack.c.b16 %v6488, %v6480
    %v6617 = vpack.c.b16 %v6489, %v6481
    %6746 = vmatpush.bf16.msra.mxu0 %v6546
    %6747 = vmatpush.bf16.msra.mxu0 %v6538
    %6748 = vmatpush.bf16.msra.mxu0 %v6530
    %6749 = vmatpush.bf16.msra.mxu0 %v6522
    %6750 = vmatpush.bf16.msra.mxu0 %v6514
    %6751 = vmatpush.bf16.msra.mxu0 %v6506
    %6752 = vmatpush.bf16.msra.mxu0 %v6498
    %6753 = vmatpush.bf16.msra.mxu0 %v6490
    %6754 = vmatmul.bf16.gmra.mxu0 %v5976
    %v6755 = vpop.f32.mrf.mxu0
    %v6756 = vadd.f32 0.0, %v6755
    %v6757 = vpop.f32.mrf.mxu0
    %6758 = vdwg.mxu0
    %6759 = vmatpush.bf16.msra.mxu0 %v6610
    %6760 = vmatpush.bf16.msra.mxu0 %v6602
    %6761 = vmatpush.bf16.msra.mxu0 %v6594
    %6762 = vmatpush.bf16.msra.mxu0 %v6586
    %6763 = vmatpush.bf16.msra.mxu0 %v6578
    %6764 = vmatpush.bf16.msra.mxu0 %v6570
    %6765 = vmatpush.bf16.msra.mxu0 %v6562
    %6766 = vmatpush.bf16.msra.mxu0 %v6554
    %6767 = vmatmul.bf16.gmra.mxu0 %v5977
    %v6768 = vpop.f32.mrf.mxu0
    %v6769 = vadd.f32 %v6756, %v6768
    %v6770 = vpop.f32.mrf.mxu0
    %6771 = vdwg.mxu0
    %6772 = vmatpush.bf16.msra.mxu0 %v6547
    %6773 = vmatpush.bf16.msra.mxu0 %v6539
    %6774 = vmatpush.bf16.msra.mxu0 %v6531
    %6775 = vmatpush.bf16.msra.mxu0 %v6523
    %6776 = vmatpush.bf16.msra.mxu0 %v6515
    %6777 = vmatpush.bf16.msra.mxu0 %v6507
    %6778 = vmatpush.bf16.msra.mxu0 %v6499
    %6779 = vmatpush.bf16.msra.mxu0 %v6491
    %6780 = vmatmul.bf16.gmra.mxu0 %v5976
    %v6781 = vpop.f32.mrf.mxu0
    %v6782 = vadd.f32 0.0, %v6781
    %v6783 = vpop.f32.mrf.mxu0
    %6784 = vdwg.mxu0
    %6785 = vmatpush.bf16.msra.mxu0 %v6611
    %6786 = vmatpush.bf16.msra.mxu0 %v6603
    %6787 = vmatpush.bf16.msra.mxu0 %v6595
    %6788 = vmatpush.bf16.msra.mxu0 %v6587
    %6789 = vmatpush.bf16.msra.mxu0 %v6579
    %6790 = vmatpush.bf16.msra.mxu0 %v6571
    %6791 = vmatpush.bf16.msra.mxu0 %v6563
    %6792 = vmatpush.bf16.msra.mxu0 %v6555
    %6793 = vmatmul.bf16.gmra.mxu0 %v5977
    %v6794 = vpop.f32.mrf.mxu0
    %v6795 = vadd.f32 %v6782, %v6794
    %v6796 = vpop.f32.mrf.mxu0
    %6797 = vdwg.mxu0
    %6798 = vmatpush.bf16.msra.mxu0 %v6548
    %6799 = vmatpush.bf16.msra.mxu0 %v6540
    %6800 = vmatpush.bf16.msra.mxu0 %v6532
    %6801 = vmatpush.bf16.msra.mxu0 %v6524
    %6802 = vmatpush.bf16.msra.mxu0 %v6516
    %6803 = vmatpush.bf16.msra.mxu0 %v6508
    %6804 = vmatpush.bf16.msra.mxu0 %v6500
    %6805 = vmatpush.bf16.msra.mxu0 %v6492
    %6806 = vmatmul.bf16.gmra.mxu0 %v5976
    %v6807 = vpop.f32.mrf.mxu0
    %v6808 = vadd.f32 0.0, %v6807
    %v6809 = vpop.f32.mrf.mxu0
    %6810 = vdwg.mxu0
    %6811 = vmatpush.bf16.msra.mxu0 %v6612
    %6812 = vmatpush.bf16.msra.mxu0 %v6604
    %6813 = vmatpush.bf16.msra.mxu0 %v6596
    %6814 = vmatpush.bf16.msra.mxu0 %v6588
    %6815 = vmatpush.bf16.msra.mxu0 %v6580
    %6816 = vmatpush.bf16.msra.mxu0 %v6572
    %6817 = vmatpush.bf16.msra.mxu0 %v6564
    %6818 = vmatpush.bf16.msra.mxu0 %v6556
    %6819 = vmatmul.bf16.gmra.mxu0 %v5977
    %v6820 = vpop.f32.mrf.mxu0
    %v6821 = vadd.f32 %v6808, %v6820
    %v6822 = vpop.f32.mrf.mxu0
    %6823 = vdwg.mxu0
    %6824 = vmatpush.bf16.msra.mxu0 %v6549
    %6825 = vmatpush.bf16.msra.mxu0 %v6541
    %6826 = vmatpush.bf16.msra.mxu0 %v6533
    %6827 = vmatpush.bf16.msra.mxu0 %v6525
    %6828 = vmatpush.bf16.msra.mxu0 %v6517
    %6829 = vmatpush.bf16.msra.mxu0 %v6509
    %6830 = vmatpush.bf16.msra.mxu0 %v6501
    %6831 = vmatpush.bf16.msra.mxu0 %v6493
    %6832 = vmatmul.bf16.gmra.mxu0 %v5976
    %v6833 = vpop.f32.mrf.mxu0
    %v6834 = vadd.f32 0.0, %v6833
    %v6835 = vpop.f32.mrf.mxu0
    %6836 = vdwg.mxu0
    %6837 = vmatpush.bf16.msra.mxu0 %v6613
    %6838 = vmatpush.bf16.msra.mxu0 %v6605
    %6839 = vmatpush.bf16.msra.mxu0 %v6597
    %6840 = vmatpush.bf16.msra.mxu0 %v6589
    %6841 = vmatpush.bf16.msra.mxu0 %v6581
    %6842 = vmatpush.bf16.msra.mxu0 %v6573
    %6843 = vmatpush.bf16.msra.mxu0 %v6565
    %6844 = vmatpush.bf16.msra.mxu0 %v6557
    %6845 = vmatmul.bf16.gmra.mxu0 %v5977
    %v6846 = vpop.f32.mrf.mxu0
    %v6847 = vadd.f32 %v6834, %v6846
    %v6848 = vpop.f32.mrf.mxu0
    %6849 = vdwg.mxu0
    %6850 = vmatpush.bf16.msra.mxu0 %v6550
    %6851 = vmatpush.bf16.msra.mxu0 %v6542
    %6852 = vmatpush.bf16.msra.mxu0 %v6534
    %6853 = vmatpush.bf16.msra.mxu0 %v6526
    %6854 = vmatpush.bf16.msra.mxu0 %v6518
    %6855 = vmatpush.bf16.msra.mxu0 %v6510
    %6856 = vmatpush.bf16.msra.mxu0 %v6502
    %6857 = vmatpush.bf16.msra.mxu0 %v6494
    %6858 = vmatmul.bf16.gmra.mxu0 %v5976
    %v6859 = vpop.f32.mrf.mxu0
    %v6860 = vadd.f32 0.0, %v6859
    %v6861 = vpop.f32.mrf.mxu0
    %6862 = vdwg.mxu0
    %6863 = vmatpush.bf16.msra.mxu0 %v6614
    %6864 = vmatpush.bf16.msra.mxu0 %v6606
    %6865 = vmatpush.bf16.msra.mxu0 %v6598
    %6866 = vmatpush.bf16.msra.mxu0 %v6590
    %6867 = vmatpush.bf16.msra.mxu0 %v6582
    %6868 = vmatpush.bf16.msra.mxu0 %v6574
    %6869 = vmatpush.bf16.msra.mxu0 %v6566
    %6870 = vmatpush.bf16.msra.mxu0 %v6558
    %6871 = vmatmul.bf16.gmra.mxu0 %v5977
    %v6872 = vpop.f32.mrf.mxu0
    %v6873 = vadd.f32 %v6860, %v6872
    %v6874 = vpop.f32.mrf.mxu0
    %6875 = vdwg.mxu0
    %6876 = vmatpush.bf16.msra.mxu0 %v6551
    %6877 = vmatpush.bf16.msra.mxu0 %v6543
    %6878 = vmatpush.bf16.msra.mxu0 %v6535
    %6879 = vmatpush.bf16.msra.mxu0 %v6527
    %6880 = vmatpush.bf16.msra.mxu0 %v6519
    %6881 = vmatpush.bf16.msra.mxu0 %v6511
    %6882 = vmatpush.bf16.msra.mxu0 %v6503
    %6883 = vmatpush.bf16.msra.mxu0 %v6495
    %6884 = vmatmul.bf16.gmra.mxu0 %v5976
    %v6885 = vpop.f32.mrf.mxu0
    %v6886 = vadd.f32 0.0, %v6885
    %v6887 = vpop.f32.mrf.mxu0
    %6888 = vdwg.mxu0
    %6889 = vmatpush.bf16.msra.mxu0 %v6615
    %6890 = vmatpush.bf16.msra.mxu0 %v6607
    %6891 = vmatpush.bf16.msra.mxu0 %v6599
    %6892 = vmatpush.bf16.msra.mxu0 %v6591
    %6893 = vmatpush.bf16.msra.mxu0 %v6583
    %6894 = vmatpush.bf16.msra.mxu0 %v6575
    %6895 = vmatpush.bf16.msra.mxu0 %v6567
    %6896 = vmatpush.bf16.msra.mxu0 %v6559
    %6897 = vmatmul.bf16.gmra.mxu0 %v5977
    %v6898 = vpop.f32.mrf.mxu0
    %v6899 = vadd.f32 %v6886, %v6898
    %v6900 = vpop.f32.mrf.mxu0
    %6901 = vdwg.mxu0
    %6902 = vmatpush.bf16.msra.mxu0 %v6552
    %6903 = vmatpush.bf16.msra.mxu0 %v6544
    %6904 = vmatpush.bf16.msra.mxu0 %v6536
    %6905 = vmatpush.bf16.msra.mxu0 %v6528
    %6906 = vmatpush.bf16.msra.mxu0 %v6520
    %6907 = vmatpush.bf16.msra.mxu0 %v6512
    %6908 = vmatpush.bf16.msra.mxu0 %v6504
    %6909 = vmatpush.bf16.msra.mxu0 %v6496
    %6910 = vmatmul.bf16.gmra.mxu0 %v5976
    %v6911 = vpop.f32.mrf.mxu0
    %v6912 = vadd.f32 0.0, %v6911
    %v6913 = vpop.f32.mrf.mxu0
    %6914 = vdwg.mxu0
    %6915 = vmatpush.bf16.msra.mxu0 %v6616
    %6916 = vmatpush.bf16.msra.mxu0 %v6608
    %6917 = vmatpush.bf16.msra.mxu0 %v6600
    %6918 = vmatpush.bf16.msra.mxu0 %v6592
    %6919 = vmatpush.bf16.msra.mxu0 %v6584
    %6920 = vmatpush.bf16.msra.mxu0 %v6576
    %6921 = vmatpush.bf16.msra.mxu0 %v6568
    %6922 = vmatpush.bf16.msra.mxu0 %v6560
    %6923 = vmatmul.bf16.gmra.mxu0 %v5977
    %v6924 = vpop.f32.mrf.mxu0
    %v6925 = vadd.f32 %v6912, %v6924
    %v6926 = vpop.f32.mrf.mxu0
    %6927 = vdwg.mxu0
    %6928 = vmatpush.bf16.msra.mxu0 %v6553
    %6929 = vmatpush.bf16.msra.mxu0 %v6545
    %6930 = vmatpush.bf16.msra.mxu0 %v6537
    %6931 = vmatpush.bf16.msra.mxu0 %v6529
    %6932 = vmatpush.bf16.msra.mxu0 %v6521
    %6933 = vmatpush.bf16.msra.mxu0 %v6513
    %6934 = vmatpush.bf16.msra.mxu0 %v6505
    %6935 = vmatpush.bf16.msra.mxu0 %v6497
    %6936 = vmatmul.bf16.gmra.mxu0 %v5976
    %v6937 = vpop.f32.mrf.mxu0
    %v6938 = vadd.f32 0.0, %v6937
    %v6939 = vpop.f32.mrf.mxu0
    %6940 = vdwg.mxu0
    %6941 = vmatpush.bf16.msra.mxu0 %v6617
    %6942 = vmatpush.bf16.msra.mxu0 %v6609
    %6943 = vmatpush.bf16.msra.mxu0 %v6601
    %6944 = vmatpush.bf16.msra.mxu0 %v6593
    %6945 = vmatpush.bf16.msra.mxu0 %v6585
    %6946 = vmatpush.bf16.msra.mxu0 %v6577
    %6947 = vmatpush.bf16.msra.mxu0 %v6569
    %6948 = vmatpush.bf16.msra.mxu0 %v6561
    %6949 = vmatmul.bf16.gmra.mxu0 %v5977
    %v6950 = vpop.f32.mrf.mxu0
    %v6951 = vadd.f32 %v6938, %v6950
    %v6952 = vpop.f32.mrf.mxu0
    %6953 = vdwg.mxu0
    %v6954 = vld [vmem:[#allocation2 + $0x100] sm:$0xff]
    %v6955 = vld [vmem:[#allocation2 + $0x108] sm:$0xff]
    %v6956 = vld [vmem:[#allocation2 + $0x110] sm:$0xff]
    %v6957 = vld [vmem:[#allocation2 + $0x118] sm:$0xff]
    %v6958 = vadd.f32 %v6954, %v6769
    %v6959 = vadd.f32 %v6955, %v6795
    %v6960 = vadd.f32 %v6956, %v6821
    %v6961 = vadd.f32 %v6957, %v6847
    %v6962 = vld [vmem:[#allocation2 + $0xe0] sm:$0xff]
    %v6963 = vld [vmem:[#allocation2 + $0xe8] sm:$0xff]
    %v6964 = vld [vmem:[#allocation2 + $0xf0] sm:$0xff]
    %v6965 = vld [vmem:[#allocation2 + $0xf8] sm:$0xff]
    %v6966 = vadd.f32 %v6962, %v6873
    %v6967 = vadd.f32 %v6963, %v6899
    %v6968 = vadd.f32 %v6964, %v6925
    %v6969 = vadd.f32 %v6965, %v6951
    %v6970 = vxor.u32 %v6958, 2147483648
    %v6971 = vxor.u32 %v6966, 2147483648
    %v6972 = vmul.f32 %v6970, 1.442695
    %v6973 = vpow.pop %v6972
    %v6974 = vmul.f32 %v6971, 1.442695
    %v6975 = vpow.pop %v6974
    %v6976 = vadd.f32 %v6973, 1.0
    %v6977 = vadd.f32 %v6975, 1.0
    %v6978 = vrcp.pop %v6976
    %v6979 = vmul.f32 %v6976, %v6978
    %v6980 = vsub.f32 1.0, %v6979
    %v6981 = vmul.f32 %v6978, %v6980
    %v6982 = vadd.f32 %v6978, %v6981
    %vm6983 = vweird.f32 %v6976
    %vm6984 = vweird.f32 %v6978
    %vm6985 = vmor %vm6983, %vm6984
    %v6986 = vsel %vm6985, %v6978, %v6982
    %v6987 = vand.u32 2147483647, %v6976
    %vm6988 = vcmp.eq.f32.partialorder %v6987, 8.507059e+37
    %v6989 = vand.u32 %v6976, 2147483648
    %v6990 = vor.u32 1.1754944e-38, %v6989
    %v6991 = vsel %vm6988, %v6990, %v6986
    %v6992 = vmul.f32 1.0, %v6991
    %v6993 = vrcp.pop %v6977
    %v6994 = vmul.f32 %v6977, %v6993
    %v6995 = vsub.f32 1.0, %v6994
    %v6996 = vmul.f32 %v6993, %v6995
    %v6997 = vadd.f32 %v6993, %v6996
    %vm6998 = vweird.f32 %v6977
    %vm6999 = vweird.f32 %v6993
    %vm7000 = vmor %vm6998, %vm6999
    %v7001 = vsel %vm7000, %v6993, %v6997
    %v7002 = vand.u32 2147483647, %v6977
    %vm7003 = vcmp.eq.f32.partialorder %v7002, 8.507059e+37
    %v7004 = vand.u32 %v6977, 2147483648
    %v7005 = vor.u32 1.1754944e-38, %v7004
    %v7006 = vsel %vm7003, %v7005, %v7001
    %v7007 = vmul.f32 1.0, %v7006
    %v7008 = vxor.u32 %v6959, 2147483648
    %v7009 = vxor.u32 %v6967, 2147483648
    %v7010 = vmul.f32 %v7008, 1.442695
    %v7011 = vpow.pop %v7010
    %v7012 = vmul.f32 %v7009, 1.442695
    %v7013 = vpow.pop %v7012
    %v7014 = vadd.f32 %v7011, 1.0
    %v7015 = vadd.f32 %v7013, 1.0
    %v7016 = vrcp.pop %v7014
    %v7017 = vmul.f32 %v7014, %v7016
    %v7018 = vsub.f32 1.0, %v7017
    %v7019 = vmul.f32 %v7016, %v7018
    %v7020 = vadd.f32 %v7016, %v7019
    %vm7021 = vweird.f32 %v7014
    %vm7022 = vweird.f32 %v7016
    %vm7023 = vmor %vm7021, %vm7022
    %v7024 = vsel %vm7023, %v7016, %v7020
    %v7025 = vand.u32 2147483647, %v7014
    %vm7026 = vcmp.eq.f32.partialorder %v7025, 8.507059e+37
    %v7027 = vand.u32 %v7014, 2147483648
    %v7028 = vor.u32 1.1754944e-38, %v7027
    %v7029 = vsel %vm7026, %v7028, %v7024
    %v7030 = vmul.f32 1.0, %v7029
    %v7031 = vrcp.pop %v7015
    %v7032 = vmul.f32 %v7015, %v7031
    %v7033 = vsub.f32 1.0, %v7032
    %v7034 = vmul.f32 %v7031, %v7033
    %v7035 = vadd.f32 %v7031, %v7034
    %vm7036 = vweird.f32 %v7015
    %vm7037 = vweird.f32 %v7031
    %vm7038 = vmor %vm7036, %vm7037
    %v7039 = vsel %vm7038, %v7031, %v7035
    %v7040 = vand.u32 2147483647, %v7015
    %vm7041 = vcmp.eq.f32.partialorder %v7040, 8.507059e+37
    %v7042 = vand.u32 %v7015, 2147483648
    %v7043 = vor.u32 1.1754944e-38, %v7042
    %v7044 = vsel %vm7041, %v7043, %v7039
    %v7045 = vmul.f32 1.0, %v7044
    %v7046 = vtanh.pop %v6960
    %v7047 = vtanh.pop %v6968
    %v7048 = vxor.u32 %v6961, 2147483648
    %v7049 = vxor.u32 %v6969, 2147483648
    %v7050 = vmul.f32 %v7048, 1.442695
    %v7051 = vpow.pop %v7050
    %v7052 = vmul.f32 %v7049, 1.442695
    %v7053 = vpow.pop %v7052
    %v7054 = vadd.f32 %v7051, 1.0
    %v7055 = vadd.f32 %v7053, 1.0
    %v7056 = vrcp.pop %v7054
    %v7057 = vmul.f32 %v7054, %v7056
    %v7058 = vsub.f32 1.0, %v7057
    %v7059 = vmul.f32 %v7056, %v7058
    %v7060 = vadd.f32 %v7056, %v7059
    %vm7061 = vweird.f32 %v7054
    %vm7062 = vweird.f32 %v7056
    %vm7063 = vmor %vm7061, %vm7062
    %v7064 = vsel %vm7063, %v7056, %v7060
    %v7065 = vand.u32 2147483647, %v7054
    %vm7066 = vcmp.eq.f32.partialorder %v7065, 8.507059e+37
    %v7067 = vand.u32 %v7054, 2147483648
    %v7068 = vor.u32 1.1754944e-38, %v7067
    %v7069 = vsel %vm7066, %v7068, %v7064
    %v7070 = vmul.f32 1.0, %v7069
    %v7071 = vrcp.pop %v7055
    %v7072 = vmul.f32 %v7055, %v7071
    %v7073 = vsub.f32 1.0, %v7072
    %v7074 = vmul.f32 %v7071, %v7073
    %v7075 = vadd.f32 %v7071, %v7074
    %vm7076 = vweird.f32 %v7055
    %vm7077 = vweird.f32 %v7071
    %vm7078 = vmor %vm7076, %vm7077
    %v7079 = vsel %vm7078, %v7071, %v7075
    %v7080 = vand.u32 2147483647, %v7055
    %vm7081 = vcmp.eq.f32.partialorder %v7080, 8.507059e+37
    %v7082 = vand.u32 %v7055, 2147483648
    %v7083 = vor.u32 1.1754944e-38, %v7082
    %v7084 = vsel %vm7081, %v7083, %v7079
    %v7085 = vmul.f32 1.0, %v7084
    %v7086 = vld [vmem:[#allocation4] sm:$0xff]
    %v7087 = vld [vmem:[#allocation4 + $0x8] sm:$0xff]
    %v7088 = vmul.f32 %v7030, %v7086
    %v7089 = vmul.f32 %v7045, %v7087
    %v7090 = vmul.f32 %v6992, %v7046
    %v7091 = vmul.f32 %v7007, %v7047
    %v7092 = vadd.f32 %v7088, %v7090
    %v7093 = vadd.f32 %v7089, %v7091
    %v7094 = vtanh.pop %v7092
    %v7095 = vtanh.pop %v7093
    %v7096 = vmul.f32 %v7070, %v7094
    %v7097 = vmul.f32 %v7085, %v7095
    %7098 = vst [vmem:[#allocation4] sm:$0xff] %v7092
    %7099 = vst [vmem:[#allocation4 + $0x8] sm:$0xff] %v7093
    %7100 = vst [vmem:[#allocation3] sm:$0xff] %v7096
    %7101 = vst [vmem:[#allocation3 + $0x8] sm:$0xff] %v7097
    %v7102 = vpack.c.bf16 %v7097, %v7096
    %v7103 = vld [vmem:[%s6 + $0x20] sm:$0xff]
    %v7104 = vld [vmem:[%s4] sm:$0xf]
    %v7105 = vld [vmem:[%s4 + $0x4] sm:$0xf]
    %v7106 = vld [vmem:[%s4 + $0x8] sm:$0xf]
    %v7107 = vld [vmem:[%s4 + $0xc] sm:$0xf]
    %v7108 = vld [vmem:[%s4 + $0x10] sm:$0xf]
    %v7109 = vld [vmem:[%s4 + $0x14] sm:$0xf]
    %v7110 = vld [vmem:[%s4 + $0x18] sm:$0xf]
    %v7111 = vld [vmem:[%s4 + $0x1c] sm:$0xf]
    %v7112 = vld [vmem:[%s4 + $0x20] sm:$0xf]
    %v7113 = vld [vmem:[%s4 + $0x24] sm:$0xf]
    %v7114 = vld [vmem:[%s4 + $0x28] sm:$0xf]
    %v7115 = vld [vmem:[%s4 + $0x2c] sm:$0xf]
    %v7116 = vld [vmem:[%s4 + $0x30] sm:$0xf]
    %v7117 = vld [vmem:[%s4 + $0x34] sm:$0xf]
    %v7118 = vld [vmem:[%s4 + $0x38] sm:$0xf]
    %v7119 = vld [vmem:[%s4 + $0x3c] sm:$0xf]
    %v7136 = vunpack.c.l.b16 %v7104
    %v7137 = vunpack.c.l.b16 %v7105
    %v7138 = vunpack.c.l.b16 %v7106
    %v7139 = vunpack.c.l.b16 %v7107
    %v7140 = vunpack.c.l.b16 %v7108
    %v7141 = vunpack.c.l.b16 %v7109
    %v7142 = vunpack.c.l.b16 %v7110
    %v7143 = vunpack.c.l.b16 %v7111
    %v7144 = vunpack.c.l.b16 %v7112
    %v7145 = vunpack.c.l.b16 %v7113
    %v7146 = vunpack.c.l.b16 %v7114
    %v7147 = vunpack.c.l.b16 %v7115
    %v7148 = vunpack.c.l.b16 %v7116
    %v7149 = vunpack.c.l.b16 %v7117
    %v7150 = vunpack.c.l.b16 %v7118
    %v7151 = vunpack.c.l.b16 %v7119
    %v7152 = vpack.c.b16 %v7137, %v7136
    %v7153 = vpack.c.b16 %v7139, %v7138
    %v7154 = vpack.c.b16 %v7141, %v7140
    %v7155 = vpack.c.b16 %v7143, %v7142
    %v7156 = vpack.c.b16 %v7145, %v7144
    %v7157 = vpack.c.b16 %v7147, %v7146
    %v7158 = vpack.c.b16 %v7149, %v7148
    %v7159 = vpack.c.b16 %v7151, %v7150
    %7168 = vmatpush.bf16.msra.mxu0 %v7159
    %7169 = vmatpush.bf16.msra.mxu0 %v7158
    %7170 = vmatpush.bf16.msra.mxu0 %v7157
    %7171 = vmatpush.bf16.msra.mxu0 %v7156
    %7172 = vmatpush.bf16.msra.mxu0 %v7155
    %7173 = vmatpush.bf16.msra.mxu0 %v7154
    %7174 = vmatpush.bf16.msra.mxu0 %v7153
    %7175 = vmatpush.bf16.msra.mxu0 %v7152
    %7176 = vmatmul.bf16.gmra.mxu0 %v7102
    %v7177 = vpop.f32.mrf.mxu0
    %v7178 = vadd.f32 0.0, %v7177
    %v7179 = vpop.f32.mrf.mxu0
    %7180 = vdwg.mxu0
    %v7181 = vadd.f32 %v7103, %v7178
    %7182 = vst [vmem:[%s6 + $0x20] sm:$0xff] %v7181
    %v7183 = vld [vmem:[%s6 + $0x18] sm:$0xff]
    %v7184 = vld [vmem:[%s4 + $0x40] sm:$0xf]
    %v7185 = vld [vmem:[%s4 + $0x44] sm:$0xf]
    %v7186 = vld [vmem:[%s4 + $0x48] sm:$0xf]
    %v7187 = vld [vmem:[%s4 + $0x4c] sm:$0xf]
    %v7188 = vld [vmem:[%s4 + $0x50] sm:$0xf]
    %v7189 = vld [vmem:[%s4 + $0x54] sm:$0xf]
    %v7190 = vld [vmem:[%s4 + $0x58] sm:$0xf]
    %v7191 = vld [vmem:[%s4 + $0x5c] sm:$0xf]
    %v7192 = vld [vmem:[%s4 + $0x60] sm:$0xf]
    %v7193 = vld [vmem:[%s4 + $0x64] sm:$0xf]
    %v7194 = vld [vmem:[%s4 + $0x68] sm:$0xf]
    %v7195 = vld [vmem:[%s4 + $0x6c] sm:$0xf]
    %v7196 = vld [vmem:[%s4 + $0x70] sm:$0xf]
    %v7197 = vld [vmem:[%s4 + $0x74] sm:$0xf]
    %v7198 = vld [vmem:[%s4 + $0x78] sm:$0xf]
    %v7199 = vld [vmem:[%s4 + $0x7c] sm:$0xf]
    %v7201 = vunpack.c.h.b16 %v7102
    %v7202 = vpack.c.b16 %v7201, %v7201
    %v7220 = vunpack.c.l.b16 %v7184
    %v7221 = vunpack.c.l.b16 %v7185
    %v7222 = vunpack.c.l.b16 %v7186
    %v7223 = vunpack.c.l.b16 %v7187
    %v7224 = vunpack.c.l.b16 %v7188
    %v7225 = vunpack.c.l.b16 %v7189
    %v7226 = vunpack.c.l.b16 %v7190
    %v7227 = vunpack.c.l.b16 %v7191
    %v7228 = vunpack.c.l.b16 %v7192
    %v7229 = vunpack.c.l.b16 %v7193
    %v7230 = vunpack.c.l.b16 %v7194
    %v7231 = vunpack.c.l.b16 %v7195
    %v7232 = vunpack.c.l.b16 %v7196
    %v7233 = vunpack.c.l.b16 %v7197
    %v7234 = vunpack.c.l.b16 %v7198
    %v7235 = vunpack.c.l.b16 %v7199
    %v7236 = vpack.c.b16 %v7221, %v7220
    %v7237 = vpack.c.b16 %v7223, %v7222
    %v7238 = vpack.c.b16 %v7225, %v7224
    %v7239 = vpack.c.b16 %v7227, %v7226
    %v7240 = vpack.c.b16 %v7229, %v7228
    %v7241 = vpack.c.b16 %v7231, %v7230
    %v7242 = vpack.c.b16 %v7233, %v7232
    %v7243 = vpack.c.b16 %v7235, %v7234
    %7252 = vmatpush.bf16.msra.mxu0 %v7243
    %7253 = vmatpush.bf16.msra.mxu0 %v7242
    %7254 = vmatpush.bf16.msra.mxu0 %v7241
    %7255 = vmatpush.bf16.msra.mxu0 %v7240
    %7256 = vmatpush.bf16.msra.mxu0 %v7239
    %7257 = vmatpush.bf16.msra.mxu0 %v7238
    %7258 = vmatpush.bf16.msra.mxu0 %v7237
    %7259 = vmatpush.bf16.msra.mxu0 %v7236
    %7260 = vmatmul.bf16.gmra.mxu0 %v7202
    %v7261 = vpop.f32.mrf.mxu0
    %v7262 = vadd.f32 0.0, %v7261
    %v7263 = vpop.f32.mrf.mxu0
    %7264 = vdwg.mxu0
    %v7265 = vadd.f32 %v7183, %v7262
    %7266 = vst [vmem:[%s6 + $0x18] sm:$0xff] %v7265
    %v7267 = vld [vmem:[#allocation3] sm:$0xff]
    %v7268 = vld [vmem:[#allocation3 + $0x8] sm:$0xff]
    %v7269 = vpack.c.bf16 %v7267, %v7267
    %v7270 = vpack.c.bf16 %v7268, %v7268
    %v7271 = vld [vmem:[#allocation7] sm:$0xff]
    %v7272 = vld [vmem:[#allocation7 + $0x8] sm:$0xff]
    %v7273 = vld [vmem:[#allocation7 + $0x10] sm:$0xff]
    %v7274 = vld [vmem:[#allocation7 + $0x18] sm:$0xff]
    %v7275 = vld [vmem:[#allocation7 + $0x20] sm:$0xff]
    %v7276 = vld [vmem:[#allocation7 + $0x28] sm:$0xff]
    %v7277 = vld [vmem:[#allocation7 + $0x30] sm:$0xff]
    %v7278 = vld [vmem:[#allocation7 + $0x38] sm:$0xff]
    %v7279 = vld [vmem:[#allocation7 + $0x40] sm:$0xff]
    %v7280 = vld [vmem:[#allocation7 + $0x48] sm:$0xff]
    %v7281 = vld [vmem:[#allocation7 + $0x50] sm:$0xff]
    %v7282 = vld [vmem:[#allocation7 + $0x58] sm:$0xff]
    %v7283 = vld [vmem:[#allocation7 + $0x60] sm:$0xff]
    %v7284 = vld [vmem:[#allocation7 + $0x68] sm:$0xff]
    %v7285 = vld [vmem:[#allocation7 + $0x70] sm:$0xff]
    %v7286 = vld [vmem:[#allocation7 + $0x78] sm:$0xff]
    %v7287 = vld [vmem:[#allocation7 + $0x80] sm:$0xff]
    %v7288 = vld [vmem:[#allocation7 + $0x88] sm:$0xff]
    %v7289 = vld [vmem:[#allocation7 + $0x90] sm:$0xff]
    %v7290 = vld [vmem:[#allocation7 + $0x98] sm:$0xff]
    %v7291 = vld [vmem:[#allocation7 + $0xa0] sm:$0xff]
    %v7292 = vld [vmem:[#allocation7 + $0xa8] sm:$0xff]
    %v7293 = vld [vmem:[#allocation7 + $0xb0] sm:$0xff]
    %v7294 = vld [vmem:[#allocation7 + $0xb8] sm:$0xff]
    %v7295 = vld [vmem:[#allocation7 + $0xc0] sm:$0xff]
    %v7296 = vld [vmem:[#allocation7 + $0xc8] sm:$0xff]
    %v7297 = vld [vmem:[#allocation7 + $0xd0] sm:$0xff]
    %v7298 = vld [vmem:[#allocation7 + $0xd8] sm:$0xff]
    %v7299 = vld [vmem:[#allocation7 + $0xe0] sm:$0xff]
    %v7300 = vld [vmem:[#allocation7 + $0xe8] sm:$0xff]
    %v7301 = vld [vmem:[#allocation7 + $0xf0] sm:$0xff]
    %v7302 = vld [vmem:[#allocation7 + $0xf8] sm:$0xff]
    %v7303 = vld [vmem:[#allocation7 + $0x100] sm:$0xff]
    %v7304 = vld [vmem:[#allocation7 + $0x108] sm:$0xff]
    %v7305 = vld [vmem:[#allocation7 + $0x110] sm:$0xff]
    %v7306 = vld [vmem:[#allocation7 + $0x118] sm:$0xff]
    %v7307 = vld [vmem:[#allocation7 + $0x120] sm:$0xff]
    %v7308 = vld [vmem:[#allocation7 + $0x128] sm:$0xff]
    %v7309 = vld [vmem:[#allocation7 + $0x130] sm:$0xff]
    %v7310 = vld [vmem:[#allocation7 + $0x138] sm:$0xff]
    %v7311 = vld [vmem:[#allocation7 + $0x140] sm:$0xff]
    %v7312 = vld [vmem:[#allocation7 + $0x148] sm:$0xff]
    %v7313 = vld [vmem:[#allocation7 + $0x150] sm:$0xff]
    %v7314 = vld [vmem:[#allocation7 + $0x158] sm:$0xff]
    %v7315 = vld [vmem:[#allocation7 + $0x160] sm:$0xff]
    %v7316 = vld [vmem:[#allocation7 + $0x168] sm:$0xff]
    %v7317 = vld [vmem:[#allocation7 + $0x170] sm:$0xff]
    %v7318 = vld [vmem:[#allocation7 + $0x178] sm:$0xff]
    %v7319 = vld [vmem:[#allocation7 + $0x180] sm:$0xff]
    %v7320 = vld [vmem:[#allocation7 + $0x188] sm:$0xff]
    %v7321 = vld [vmem:[#allocation7 + $0x190] sm:$0xff]
    %v7322 = vld [vmem:[#allocation7 + $0x198] sm:$0xff]
    %v7323 = vld [vmem:[#allocation7 + $0x1a0] sm:$0xff]
    %v7324 = vld [vmem:[#allocation7 + $0x1a8] sm:$0xff]
    %v7325 = vld [vmem:[#allocation7 + $0x1b0] sm:$0xff]
    %v7326 = vld [vmem:[#allocation7 + $0x1b8] sm:$0xff]
    %v7327 = vld [vmem:[#allocation7 + $0x1c0] sm:$0xff]
    %v7328 = vld [vmem:[#allocation7 + $0x1c8] sm:$0xff]
    %v7329 = vld [vmem:[#allocation7 + $0x1d0] sm:$0xff]
    %v7330 = vld [vmem:[#allocation7 + $0x1d8] sm:$0xff]
    %v7331 = vld [vmem:[#allocation7 + $0x1e0] sm:$0xff]
    %v7332 = vld [vmem:[#allocation7 + $0x1e8] sm:$0xff]
    %v7333 = vld [vmem:[#allocation7 + $0x1f0] sm:$0xff]
    %v7334 = vld [vmem:[#allocation7 + $0x1f8] sm:$0xff]
    %v7335 = vld [vmem:[#allocation7 + $0x200] sm:$0xff]
    %v7336 = vld [vmem:[#allocation7 + $0x208] sm:$0xff]
    %v7337 = vld [vmem:[#allocation7 + $0x210] sm:$0xff]
    %v7338 = vld [vmem:[#allocation7 + $0x218] sm:$0xff]
    %v7339 = vld [vmem:[#allocation7 + $0x220] sm:$0xff]
    %v7340 = vld [vmem:[#allocation7 + $0x228] sm:$0xff]
    %v7341 = vld [vmem:[#allocation7 + $0x230] sm:$0xff]
    %v7342 = vld [vmem:[#allocation7 + $0x238] sm:$0xff]
    %v7343 = vld [vmem:[#allocation7 + $0x240] sm:$0xff]
    %v7344 = vld [vmem:[#allocation7 + $0x248] sm:$0xff]
    %v7345 = vld [vmem:[#allocation7 + $0x250] sm:$0xff]
    %v7346 = vld [vmem:[#allocation7 + $0x258] sm:$0xff]
    %v7347 = vld [vmem:[#allocation7 + $0x260] sm:$0xff]
    %v7348 = vld [vmem:[#allocation7 + $0x268] sm:$0xff]
    %v7349 = vld [vmem:[#allocation7 + $0x270] sm:$0xff]
    %v7350 = vld [vmem:[#allocation7 + $0x278] sm:$0xff]
    %v7351 = vld [vmem:[#allocation7 + $0x280] sm:$0xff]
    %v7352 = vld [vmem:[#allocation7 + $0x288] sm:$0xff]
    %v7353 = vld [vmem:[#allocation7 + $0x290] sm:$0xff]
    %v7354 = vld [vmem:[#allocation7 + $0x298] sm:$0xff]
    %v7355 = vld [vmem:[#allocation7 + $0x2a0] sm:$0xff]
    %v7356 = vld [vmem:[#allocation7 + $0x2a8] sm:$0xff]
    %v7357 = vld [vmem:[#allocation7 + $0x2b0] sm:$0xff]
    %v7358 = vld [vmem:[#allocation7 + $0x2b8] sm:$0xff]
    %v7359 = vld [vmem:[#allocation7 + $0x2c0] sm:$0xff]
    %v7360 = vld [vmem:[#allocation7 + $0x2c8] sm:$0xff]
    %v7361 = vld [vmem:[#allocation7 + $0x2d0] sm:$0xff]
    %v7362 = vld [vmem:[#allocation7 + $0x2d8] sm:$0xff]
    %v7363 = vld [vmem:[#allocation7 + $0x2e0] sm:$0xff]
    %v7364 = vld [vmem:[#allocation7 + $0x2e8] sm:$0xff]
    %v7365 = vld [vmem:[#allocation7 + $0x2f0] sm:$0xff]
    %v7366 = vld [vmem:[#allocation7 + $0x2f8] sm:$0xff]
    %v7367 = vld [vmem:[#allocation7 + $0x300] sm:$0xff]
    %v7368 = vld [vmem:[#allocation7 + $0x308] sm:$0xff]
    %v7369 = vld [vmem:[#allocation7 + $0x310] sm:$0xff]
    %v7370 = vld [vmem:[#allocation7 + $0x318] sm:$0xff]
    %v7371 = vld [vmem:[#allocation7 + $0x320] sm:$0xff]
    %v7372 = vld [vmem:[#allocation7 + $0x328] sm:$0xff]
    %v7373 = vld [vmem:[#allocation7 + $0x330] sm:$0xff]
    %v7374 = vld [vmem:[#allocation7 + $0x338] sm:$0xff]
    %v7375 = vld [vmem:[#allocation7 + $0x340] sm:$0xff]
    %v7376 = vld [vmem:[#allocation7 + $0x348] sm:$0xff]
    %v7377 = vld [vmem:[#allocation7 + $0x350] sm:$0xff]
    %v7378 = vld [vmem:[#allocation7 + $0x358] sm:$0xff]
    %v7379 = vld [vmem:[#allocation7 + $0x360] sm:$0xff]
    %v7380 = vld [vmem:[#allocation7 + $0x368] sm:$0xff]
    %v7381 = vld [vmem:[#allocation7 + $0x370] sm:$0xff]
    %v7382 = vld [vmem:[#allocation7 + $0x378] sm:$0xff]
    %v7383 = vld [vmem:[#allocation7 + $0x380] sm:$0xff]
    %v7384 = vld [vmem:[#allocation7 + $0x388] sm:$0xff]
    %v7385 = vld [vmem:[#allocation7 + $0x390] sm:$0xff]
    %v7386 = vld [vmem:[#allocation7 + $0x398] sm:$0xff]
    %v7387 = vld [vmem:[#allocation7 + $0x3a0] sm:$0xff]
    %v7388 = vld [vmem:[#allocation7 + $0x3a8] sm:$0xff]
    %v7389 = vld [vmem:[#allocation7 + $0x3b0] sm:$0xff]
    %v7390 = vld [vmem:[#allocation7 + $0x3b8] sm:$0xff]
    %v7391 = vld [vmem:[#allocation7 + $0x3c0] sm:$0xff]
    %v7392 = vld [vmem:[#allocation7 + $0x3c8] sm:$0xff]
    %v7393 = vld [vmem:[#allocation7 + $0x3d0] sm:$0xff]
    %v7394 = vld [vmem:[#allocation7 + $0x3d8] sm:$0xff]
    %v7395 = vld [vmem:[#allocation7 + $0x3e0] sm:$0xff]
    %v7396 = vld [vmem:[#allocation7 + $0x3e8] sm:$0xff]
    %v7397 = vld [vmem:[#allocation7 + $0x3f0] sm:$0xff]
    %v7398 = vld [vmem:[#allocation7 + $0x3f8] sm:$0xff]
    %v7527 = vunpack.c.l.b16 %v7271
    %v7528 = vunpack.c.h.b16 %v7271
    %v7529 = vunpack.c.l.b16 %v7272
    %v7530 = vunpack.c.h.b16 %v7272
    %v7531 = vunpack.c.l.b16 %v7273
    %v7532 = vunpack.c.h.b16 %v7273
    %v7533 = vunpack.c.l.b16 %v7274
    %v7534 = vunpack.c.h.b16 %v7274
    %v7535 = vunpack.c.l.b16 %v7275
    %v7536 = vunpack.c.h.b16 %v7275
    %v7537 = vunpack.c.l.b16 %v7276
    %v7538 = vunpack.c.h.b16 %v7276
    %v7539 = vunpack.c.l.b16 %v7277
    %v7540 = vunpack.c.h.b16 %v7277
    %v7541 = vunpack.c.l.b16 %v7278
    %v7542 = vunpack.c.h.b16 %v7278
    %v7543 = vunpack.c.l.b16 %v7279
    %v7544 = vunpack.c.h.b16 %v7279
    %v7545 = vunpack.c.l.b16 %v7280
    %v7546 = vunpack.c.h.b16 %v7280
    %v7547 = vunpack.c.l.b16 %v7281
    %v7548 = vunpack.c.h.b16 %v7281
    %v7549 = vunpack.c.l.b16 %v7282
    %v7550 = vunpack.c.h.b16 %v7282
    %v7551 = vunpack.c.l.b16 %v7283
    %v7552 = vunpack.c.h.b16 %v7283
    %v7553 = vunpack.c.l.b16 %v7284
    %v7554 = vunpack.c.h.b16 %v7284
    %v7555 = vunpack.c.l.b16 %v7285
    %v7556 = vunpack.c.h.b16 %v7285
    %v7557 = vunpack.c.l.b16 %v7286
    %v7558 = vunpack.c.h.b16 %v7286
    %v7559 = vunpack.c.l.b16 %v7287
    %v7560 = vunpack.c.h.b16 %v7287
    %v7561 = vunpack.c.l.b16 %v7288
    %v7562 = vunpack.c.h.b16 %v7288
    %v7563 = vunpack.c.l.b16 %v7289
    %v7564 = vunpack.c.h.b16 %v7289
    %v7565 = vunpack.c.l.b16 %v7290
    %v7566 = vunpack.c.h.b16 %v7290
    %v7567 = vunpack.c.l.b16 %v7291
    %v7568 = vunpack.c.h.b16 %v7291
    %v7569 = vunpack.c.l.b16 %v7292
    %v7570 = vunpack.c.h.b16 %v7292
    %v7571 = vunpack.c.l.b16 %v7293
    %v7572 = vunpack.c.h.b16 %v7293
    %v7573 = vunpack.c.l.b16 %v7294
    %v7574 = vunpack.c.h.b16 %v7294
    %v7575 = vunpack.c.l.b16 %v7295
    %v7576 = vunpack.c.h.b16 %v7295
    %v7577 = vunpack.c.l.b16 %v7296
    %v7578 = vunpack.c.h.b16 %v7296
    %v7579 = vunpack.c.l.b16 %v7297
    %v7580 = vunpack.c.h.b16 %v7297
    %v7581 = vunpack.c.l.b16 %v7298
    %v7582 = vunpack.c.h.b16 %v7298
    %v7583 = vunpack.c.l.b16 %v7299
    %v7584 = vunpack.c.h.b16 %v7299
    %v7585 = vunpack.c.l.b16 %v7300
    %v7586 = vunpack.c.h.b16 %v7300
    %v7587 = vunpack.c.l.b16 %v7301
    %v7588 = vunpack.c.h.b16 %v7301
    %v7589 = vunpack.c.l.b16 %v7302
    %v7590 = vunpack.c.h.b16 %v7302
    %v7591 = vunpack.c.l.b16 %v7303
    %v7592 = vunpack.c.h.b16 %v7303
    %v7593 = vunpack.c.l.b16 %v7304
    %v7594 = vunpack.c.h.b16 %v7304
    %v7595 = vunpack.c.l.b16 %v7305
    %v7596 = vunpack.c.h.b16 %v7305
    %v7597 = vunpack.c.l.b16 %v7306
    %v7598 = vunpack.c.h.b16 %v7306
    %v7599 = vunpack.c.l.b16 %v7307
    %v7600 = vunpack.c.h.b16 %v7307
    %v7601 = vunpack.c.l.b16 %v7308
    %v7602 = vunpack.c.h.b16 %v7308
    %v7603 = vunpack.c.l.b16 %v7309
    %v7604 = vunpack.c.h.b16 %v7309
    %v7605 = vunpack.c.l.b16 %v7310
    %v7606 = vunpack.c.h.b16 %v7310
    %v7607 = vunpack.c.l.b16 %v7311
    %v7608 = vunpack.c.h.b16 %v7311
    %v7609 = vunpack.c.l.b16 %v7312
    %v7610 = vunpack.c.h.b16 %v7312
    %v7611 = vunpack.c.l.b16 %v7313
    %v7612 = vunpack.c.h.b16 %v7313
    %v7613 = vunpack.c.l.b16 %v7314
    %v7614 = vunpack.c.h.b16 %v7314
    %v7615 = vunpack.c.l.b16 %v7315
    %v7616 = vunpack.c.h.b16 %v7315
    %v7617 = vunpack.c.l.b16 %v7316
    %v7618 = vunpack.c.h.b16 %v7316
    %v7619 = vunpack.c.l.b16 %v7317
    %v7620 = vunpack.c.h.b16 %v7317
    %v7621 = vunpack.c.l.b16 %v7318
    %v7622 = vunpack.c.h.b16 %v7318
    %v7623 = vunpack.c.l.b16 %v7319
    %v7624 = vunpack.c.h.b16 %v7319
    %v7625 = vunpack.c.l.b16 %v7320
    %v7626 = vunpack.c.h.b16 %v7320
    %v7627 = vunpack.c.l.b16 %v7321
    %v7628 = vunpack.c.h.b16 %v7321
    %v7629 = vunpack.c.l.b16 %v7322
    %v7630 = vunpack.c.h.b16 %v7322
    %v7631 = vunpack.c.l.b16 %v7323
    %v7632 = vunpack.c.h.b16 %v7323
    %v7633 = vunpack.c.l.b16 %v7324
    %v7634 = vunpack.c.h.b16 %v7324
    %v7635 = vunpack.c.l.b16 %v7325
    %v7636 = vunpack.c.h.b16 %v7325
    %v7637 = vunpack.c.l.b16 %v7326
    %v7638 = vunpack.c.h.b16 %v7326
    %v7639 = vunpack.c.l.b16 %v7327
    %v7640 = vunpack.c.h.b16 %v7327
    %v7641 = vunpack.c.l.b16 %v7328
    %v7642 = vunpack.c.h.b16 %v7328
    %v7643 = vunpack.c.l.b16 %v7329
    %v7644 = vunpack.c.h.b16 %v7329
    %v7645 = vunpack.c.l.b16 %v7330
    %v7646 = vunpack.c.h.b16 %v7330
    %v7647 = vunpack.c.l.b16 %v7331
    %v7648 = vunpack.c.h.b16 %v7331
    %v7649 = vunpack.c.l.b16 %v7332
    %v7650 = vunpack.c.h.b16 %v7332
    %v7651 = vunpack.c.l.b16 %v7333
    %v7652 = vunpack.c.h.b16 %v7333
    %v7653 = vunpack.c.l.b16 %v7334
    %v7654 = vunpack.c.h.b16 %v7334
    %v7655 = vunpack.c.l.b16 %v7335
    %v7656 = vunpack.c.h.b16 %v7335
    %v7657 = vunpack.c.l.b16 %v7336
    %v7658 = vunpack.c.h.b16 %v7336
    %v7659 = vunpack.c.l.b16 %v7337
    %v7660 = vunpack.c.h.b16 %v7337
    %v7661 = vunpack.c.l.b16 %v7338
    %v7662 = vunpack.c.h.b16 %v7338
    %v7663 = vunpack.c.l.b16 %v7339
    %v7664 = vunpack.c.h.b16 %v7339
    %v7665 = vunpack.c.l.b16 %v7340
    %v7666 = vunpack.c.h.b16 %v7340
    %v7667 = vunpack.c.l.b16 %v7341
    %v7668 = vunpack.c.h.b16 %v7341
    %v7669 = vunpack.c.l.b16 %v7342
    %v7670 = vunpack.c.h.b16 %v7342
    %v7671 = vunpack.c.l.b16 %v7343
    %v7672 = vunpack.c.h.b16 %v7343
    %v7673 = vunpack.c.l.b16 %v7344
    %v7674 = vunpack.c.h.b16 %v7344
    %v7675 = vunpack.c.l.b16 %v7345
    %v7676 = vunpack.c.h.b16 %v7345
    %v7677 = vunpack.c.l.b16 %v7346
    %v7678 = vunpack.c.h.b16 %v7346
    %v7679 = vunpack.c.l.b16 %v7347
    %v7680 = vunpack.c.h.b16 %v7347
    %v7681 = vunpack.c.l.b16 %v7348
    %v7682 = vunpack.c.h.b16 %v7348
    %v7683 = vunpack.c.l.b16 %v7349
    %v7684 = vunpack.c.h.b16 %v7349
    %v7685 = vunpack.c.l.b16 %v7350
    %v7686 = vunpack.c.h.b16 %v7350
    %v7687 = vunpack.c.l.b16 %v7351
    %v7688 = vunpack.c.h.b16 %v7351
    %v7689 = vunpack.c.l.b16 %v7352
    %v7690 = vunpack.c.h.b16 %v7352
    %v7691 = vunpack.c.l.b16 %v7353
    %v7692 = vunpack.c.h.b16 %v7353
    %v7693 = vunpack.c.l.b16 %v7354
    %v7694 = vunpack.c.h.b16 %v7354
    %v7695 = vunpack.c.l.b16 %v7355
    %v7696 = vunpack.c.h.b16 %v7355
    %v7697 = vunpack.c.l.b16 %v7356
    %v7698 = vunpack.c.h.b16 %v7356
    %v7699 = vunpack.c.l.b16 %v7357
    %v7700 = vunpack.c.h.b16 %v7357
    %v7701 = vunpack.c.l.b16 %v7358
    %v7702 = vunpack.c.h.b16 %v7358
    %v7703 = vunpack.c.l.b16 %v7359
    %v7704 = vunpack.c.h.b16 %v7359
    %v7705 = vunpack.c.l.b16 %v7360
    %v7706 = vunpack.c.h.b16 %v7360
    %v7707 = vunpack.c.l.b16 %v7361
    %v7708 = vunpack.c.h.b16 %v7361
    %v7709 = vunpack.c.l.b16 %v7362
    %v7710 = vunpack.c.h.b16 %v7362
    %v7711 = vunpack.c.l.b16 %v7363
    %v7712 = vunpack.c.h.b16 %v7363
    %v7713 = vunpack.c.l.b16 %v7364
    %v7714 = vunpack.c.h.b16 %v7364
    %v7715 = vunpack.c.l.b16 %v7365
    %v7716 = vunpack.c.h.b16 %v7365
    %v7717 = vunpack.c.l.b16 %v7366
    %v7718 = vunpack.c.h.b16 %v7366
    %v7719 = vunpack.c.l.b16 %v7367
    %v7720 = vunpack.c.h.b16 %v7367
    %v7721 = vunpack.c.l.b16 %v7368
    %v7722 = vunpack.c.h.b16 %v7368
    %v7723 = vunpack.c.l.b16 %v7369
    %v7724 = vunpack.c.h.b16 %v7369
    %v7725 = vunpack.c.l.b16 %v7370
    %v7726 = vunpack.c.h.b16 %v7370
    %v7727 = vunpack.c.l.b16 %v7371
    %v7728 = vunpack.c.h.b16 %v7371
    %v7729 = vunpack.c.l.b16 %v7372
    %v7730 = vunpack.c.h.b16 %v7372
    %v7731 = vunpack.c.l.b16 %v7373
    %v7732 = vunpack.c.h.b16 %v7373
    %v7733 = vunpack.c.l.b16 %v7374
    %v7734 = vunpack.c.h.b16 %v7374
    %v7735 = vunpack.c.l.b16 %v7375
    %v7736 = vunpack.c.h.b16 %v7375
    %v7737 = vunpack.c.l.b16 %v7376
    %v7738 = vunpack.c.h.b16 %v7376
    %v7739 = vunpack.c.l.b16 %v7377
    %v7740 = vunpack.c.h.b16 %v7377
    %v7741 = vunpack.c.l.b16 %v7378
    %v7742 = vunpack.c.h.b16 %v7378
    %v7743 = vunpack.c.l.b16 %v7379
    %v7744 = vunpack.c.h.b16 %v7379
    %v7745 = vunpack.c.l.b16 %v7380
    %v7746 = vunpack.c.h.b16 %v7380
    %v7747 = vunpack.c.l.b16 %v7381
    %v7748 = vunpack.c.h.b16 %v7381
    %v7749 = vunpack.c.l.b16 %v7382
    %v7750 = vunpack.c.h.b16 %v7382
    %v7751 = vunpack.c.l.b16 %v7383
    %v7752 = vunpack.c.h.b16 %v7383
    %v7753 = vunpack.c.l.b16 %v7384
    %v7754 = vunpack.c.h.b16 %v7384
    %v7755 = vunpack.c.l.b16 %v7385
    %v7756 = vunpack.c.h.b16 %v7385
    %v7757 = vunpack.c.l.b16 %v7386
    %v7758 = vunpack.c.h.b16 %v7386
    %v7759 = vunpack.c.l.b16 %v7387
    %v7760 = vunpack.c.h.b16 %v7387
    %v7761 = vunpack.c.l.b16 %v7388
    %v7762 = vunpack.c.h.b16 %v7388
    %v7763 = vunpack.c.l.b16 %v7389
    %v7764 = vunpack.c.h.b16 %v7389
    %v7765 = vunpack.c.l.b16 %v7390
    %v7766 = vunpack.c.h.b16 %v7390
    %v7767 = vunpack.c.l.b16 %v7391
    %v7768 = vunpack.c.h.b16 %v7391
    %v7769 = vunpack.c.l.b16 %v7392
    %v7770 = vunpack.c.h.b16 %v7392
    %v7771 = vunpack.c.l.b16 %v7393
    %v7772 = vunpack.c.h.b16 %v7393
    %v7773 = vunpack.c.l.b16 %v7394
    %v7774 = vunpack.c.h.b16 %v7394
    %v7775 = vunpack.c.l.b16 %v7395
    %v7776 = vunpack.c.h.b16 %v7395
    %v7777 = vunpack.c.l.b16 %v7396
    %v7778 = vunpack.c.h.b16 %v7396
    %v7779 = vunpack.c.l.b16 %v7397
    %v7780 = vunpack.c.h.b16 %v7397
    %v7781 = vunpack.c.l.b16 %v7398
    %v7782 = vunpack.c.h.b16 %v7398
    %v7783 = vpack.c.b16 %v7535, %v7527
    %v7784 = vpack.c.b16 %v7536, %v7528
    %v7785 = vpack.c.b16 %v7537, %v7529
    %v7786 = vpack.c.b16 %v7538, %v7530
    %v7787 = vpack.c.b16 %v7539, %v7531
    %v7788 = vpack.c.b16 %v7540, %v7532
    %v7789 = vpack.c.b16 %v7541, %v7533
    %v7790 = vpack.c.b16 %v7542, %v7534
    %v7791 = vpack.c.b16 %v7551, %v7543
    %v7792 = vpack.c.b16 %v7552, %v7544
    %v7793 = vpack.c.b16 %v7553, %v7545
    %v7794 = vpack.c.b16 %v7554, %v7546
    %v7795 = vpack.c.b16 %v7555, %v7547
    %v7796 = vpack.c.b16 %v7556, %v7548
    %v7797 = vpack.c.b16 %v7557, %v7549
    %v7798 = vpack.c.b16 %v7558, %v7550
    %v7799 = vpack.c.b16 %v7567, %v7559
    %v7800 = vpack.c.b16 %v7568, %v7560
    %v7801 = vpack.c.b16 %v7569, %v7561
    %v7802 = vpack.c.b16 %v7570, %v7562
    %v7803 = vpack.c.b16 %v7571, %v7563
    %v7804 = vpack.c.b16 %v7572, %v7564
    %v7805 = vpack.c.b16 %v7573, %v7565
    %v7806 = vpack.c.b16 %v7574, %v7566
    %v7807 = vpack.c.b16 %v7583, %v7575
    %v7808 = vpack.c.b16 %v7584, %v7576
    %v7809 = vpack.c.b16 %v7585, %v7577
    %v7810 = vpack.c.b16 %v7586, %v7578
    %v7811 = vpack.c.b16 %v7587, %v7579
    %v7812 = vpack.c.b16 %v7588, %v7580
    %v7813 = vpack.c.b16 %v7589, %v7581
    %v7814 = vpack.c.b16 %v7590, %v7582
    %v7815 = vpack.c.b16 %v7599, %v7591
    %v7816 = vpack.c.b16 %v7600, %v7592
    %v7817 = vpack.c.b16 %v7601, %v7593
    %v7818 = vpack.c.b16 %v7602, %v7594
    %v7819 = vpack.c.b16 %v7603, %v7595
    %v7820 = vpack.c.b16 %v7604, %v7596
    %v7821 = vpack.c.b16 %v7605, %v7597
    %v7822 = vpack.c.b16 %v7606, %v7598
    %v7823 = vpack.c.b16 %v7615, %v7607
    %v7824 = vpack.c.b16 %v7616, %v7608
    %v7825 = vpack.c.b16 %v7617, %v7609
    %v7826 = vpack.c.b16 %v7618, %v7610
    %v7827 = vpack.c.b16 %v7619, %v7611
    %v7828 = vpack.c.b16 %v7620, %v7612
    %v7829 = vpack.c.b16 %v7621, %v7613
    %v7830 = vpack.c.b16 %v7622, %v7614
    %v7831 = vpack.c.b16 %v7631, %v7623
    %v7832 = vpack.c.b16 %v7632, %v7624
    %v7833 = vpack.c.b16 %v7633, %v7625
    %v7834 = vpack.c.b16 %v7634, %v7626
    %v7835 = vpack.c.b16 %v7635, %v7627
    %v7836 = vpack.c.b16 %v7636, %v7628
    %v7837 = vpack.c.b16 %v7637, %v7629
    %v7838 = vpack.c.b16 %v7638, %v7630
    %v7839 = vpack.c.b16 %v7647, %v7639
    %v7840 = vpack.c.b16 %v7648, %v7640
    %v7841 = vpack.c.b16 %v7649, %v7641
    %v7842 = vpack.c.b16 %v7650, %v7642
    %v7843 = vpack.c.b16 %v7651, %v7643
    %v7844 = vpack.c.b16 %v7652, %v7644
    %v7845 = vpack.c.b16 %v7653, %v7645
    %v7846 = vpack.c.b16 %v7654, %v7646
    %v7847 = vpack.c.b16 %v7663, %v7655
    %v7848 = vpack.c.b16 %v7664, %v7656
    %v7849 = vpack.c.b16 %v7665, %v7657
    %v7850 = vpack.c.b16 %v7666, %v7658
    %v7851 = vpack.c.b16 %v7667, %v7659
    %v7852 = vpack.c.b16 %v7668, %v7660
    %v7853 = vpack.c.b16 %v7669, %v7661
    %v7854 = vpack.c.b16 %v7670, %v7662
    %v7855 = vpack.c.b16 %v7679, %v7671
    %v7856 = vpack.c.b16 %v7680, %v7672
    %v7857 = vpack.c.b16 %v7681, %v7673
    %v7858 = vpack.c.b16 %v7682, %v7674
    %v7859 = vpack.c.b16 %v7683, %v7675
    %v7860 = vpack.c.b16 %v7684, %v7676
    %v7861 = vpack.c.b16 %v7685, %v7677
    %v7862 = vpack.c.b16 %v7686, %v7678
    %v7863 = vpack.c.b16 %v7695, %v7687
    %v7864 = vpack.c.b16 %v7696, %v7688
    %v7865 = vpack.c.b16 %v7697, %v7689
    %v7866 = vpack.c.b16 %v7698, %v7690
    %v7867 = vpack.c.b16 %v7699, %v7691
    %v7868 = vpack.c.b16 %v7700, %v7692
    %v7869 = vpack.c.b16 %v7701, %v7693
    %v7870 = vpack.c.b16 %v7702, %v7694
    %v7871 = vpack.c.b16 %v7711, %v7703
    %v7872 = vpack.c.b16 %v7712, %v7704
    %v7873 = vpack.c.b16 %v7713, %v7705
    %v7874 = vpack.c.b16 %v7714, %v7706
    %v7875 = vpack.c.b16 %v7715, %v7707
    %v7876 = vpack.c.b16 %v7716, %v7708
    %v7877 = vpack.c.b16 %v7717, %v7709
    %v7878 = vpack.c.b16 %v7718, %v7710
    %v7879 = vpack.c.b16 %v7727, %v7719
    %v7880 = vpack.c.b16 %v7728, %v7720
    %v7881 = vpack.c.b16 %v7729, %v7721
    %v7882 = vpack.c.b16 %v7730, %v7722
    %v7883 = vpack.c.b16 %v7731, %v7723
    %v7884 = vpack.c.b16 %v7732, %v7724
    %v7885 = vpack.c.b16 %v7733, %v7725
    %v7886 = vpack.c.b16 %v7734, %v7726
    %v7887 = vpack.c.b16 %v7743, %v7735
    %v7888 = vpack.c.b16 %v7744, %v7736
    %v7889 = vpack.c.b16 %v7745, %v7737
    %v7890 = vpack.c.b16 %v7746, %v7738
    %v7891 = vpack.c.b16 %v7747, %v7739
    %v7892 = vpack.c.b16 %v7748, %v7740
    %v7893 = vpack.c.b16 %v7749, %v7741
    %v7894 = vpack.c.b16 %v7750, %v7742
    %v7895 = vpack.c.b16 %v7759, %v7751
    %v7896 = vpack.c.b16 %v7760, %v7752
    %v7897 = vpack.c.b16 %v7761, %v7753
    %v7898 = vpack.c.b16 %v7762, %v7754
    %v7899 = vpack.c.b16 %v7763, %v7755
    %v7900 = vpack.c.b16 %v7764, %v7756
    %v7901 = vpack.c.b16 %v7765, %v7757
    %v7902 = vpack.c.b16 %v7766, %v7758
    %v7903 = vpack.c.b16 %v7775, %v7767
    %v7904 = vpack.c.b16 %v7776, %v7768
    %v7905 = vpack.c.b16 %v7777, %v7769
    %v7906 = vpack.c.b16 %v7778, %v7770
    %v7907 = vpack.c.b16 %v7779, %v7771
    %v7908 = vpack.c.b16 %v7780, %v7772
    %v7909 = vpack.c.b16 %v7781, %v7773
    %v7910 = vpack.c.b16 %v7782, %v7774
    %8039 = vmatpush.bf16.msra.mxu0 %v7839
    %8040 = vmatpush.bf16.msra.mxu0 %v7831
    %8041 = vmatpush.bf16.msra.mxu0 %v7823
    %8042 = vmatpush.bf16.msra.mxu0 %v7815
    %8043 = vmatpush.bf16.msra.mxu0 %v7807
    %8044 = vmatpush.bf16.msra.mxu0 %v7799
    %8045 = vmatpush.bf16.msra.mxu0 %v7791
    %8046 = vmatpush.bf16.msra.mxu0 %v7783
    %8047 = vmatmul.bf16.gmra.mxu0 %v7269
    %v8048 = vpop.f32.mrf.mxu0
    %v8049 = vadd.f32 0.0, %v8048
    %v8050 = vpop.f32.mrf.mxu0
    %8051 = vdwg.mxu0
    %8052 = vmatpush.bf16.msra.mxu0 %v7903
    %8053 = vmatpush.bf16.msra.mxu0 %v7895
    %8054 = vmatpush.bf16.msra.mxu0 %v7887
    %8055 = vmatpush.bf16.msra.mxu0 %v7879
    %8056 = vmatpush.bf16.msra.mxu0 %v7871
    %8057 = vmatpush.bf16.msra.mxu0 %v7863
    %8058 = vmatpush.bf16.msra.mxu0 %v7855
    %8059 = vmatpush.bf16.msra.mxu0 %v7847
    %8060 = vmatmul.bf16.gmra.mxu0 %v7270
    %v8061 = vpop.f32.mrf.mxu0
    %v8062 = vadd.f32 %v8049, %v8061
    %v8063 = vpop.f32.mrf.mxu0
    %8064 = vdwg.mxu0
    %8065 = vmatpush.bf16.msra.mxu0 %v7840
    %8066 = vmatpush.bf16.msra.mxu0 %v7832
    %8067 = vmatpush.bf16.msra.mxu0 %v7824
    %8068 = vmatpush.bf16.msra.mxu0 %v7816
    %8069 = vmatpush.bf16.msra.mxu0 %v7808
    %8070 = vmatpush.bf16.msra.mxu0 %v7800
    %8071 = vmatpush.bf16.msra.mxu0 %v7792
    %8072 = vmatpush.bf16.msra.mxu0 %v7784
    %8073 = vmatmul.bf16.gmra.mxu0 %v7269
    %v8074 = vpop.f32.mrf.mxu0
    %v8075 = vadd.f32 0.0, %v8074
    %v8076 = vpop.f32.mrf.mxu0
    %8077 = vdwg.mxu0
    %8078 = vmatpush.bf16.msra.mxu0 %v7904
    %8079 = vmatpush.bf16.msra.mxu0 %v7896
    %8080 = vmatpush.bf16.msra.mxu0 %v7888
    %8081 = vmatpush.bf16.msra.mxu0 %v7880
    %8082 = vmatpush.bf16.msra.mxu0 %v7872
    %8083 = vmatpush.bf16.msra.mxu0 %v7864
    %8084 = vmatpush.bf16.msra.mxu0 %v7856
    %8085 = vmatpush.bf16.msra.mxu0 %v7848
    %8086 = vmatmul.bf16.gmra.mxu0 %v7270
    %v8087 = vpop.f32.mrf.mxu0
    %v8088 = vadd.f32 %v8075, %v8087
    %v8089 = vpop.f32.mrf.mxu0
    %8090 = vdwg.mxu0
    %8091 = vmatpush.bf16.msra.mxu0 %v7841
    %8092 = vmatpush.bf16.msra.mxu0 %v7833
    %8093 = vmatpush.bf16.msra.mxu0 %v7825
    %8094 = vmatpush.bf16.msra.mxu0 %v7817
    %8095 = vmatpush.bf16.msra.mxu0 %v7809
    %8096 = vmatpush.bf16.msra.mxu0 %v7801
    %8097 = vmatpush.bf16.msra.mxu0 %v7793
    %8098 = vmatpush.bf16.msra.mxu0 %v7785
    %8099 = vmatmul.bf16.gmra.mxu0 %v7269
    %v8100 = vpop.f32.mrf.mxu0
    %v8101 = vadd.f32 0.0, %v8100
    %v8102 = vpop.f32.mrf.mxu0
    %8103 = vdwg.mxu0
    %8104 = vmatpush.bf16.msra.mxu0 %v7905
    %8105 = vmatpush.bf16.msra.mxu0 %v7897
    %8106 = vmatpush.bf16.msra.mxu0 %v7889
    %8107 = vmatpush.bf16.msra.mxu0 %v7881
    %8108 = vmatpush.bf16.msra.mxu0 %v7873
    %8109 = vmatpush.bf16.msra.mxu0 %v7865
    %8110 = vmatpush.bf16.msra.mxu0 %v7857
    %8111 = vmatpush.bf16.msra.mxu0 %v7849
    %8112 = vmatmul.bf16.gmra.mxu0 %v7270
    %v8113 = vpop.f32.mrf.mxu0
    %v8114 = vadd.f32 %v8101, %v8113
    %v8115 = vpop.f32.mrf.mxu0
    %8116 = vdwg.mxu0
    %8117 = vmatpush.bf16.msra.mxu0 %v7842
    %8118 = vmatpush.bf16.msra.mxu0 %v7834
    %8119 = vmatpush.bf16.msra.mxu0 %v7826
    %8120 = vmatpush.bf16.msra.mxu0 %v7818
    %8121 = vmatpush.bf16.msra.mxu0 %v7810
    %8122 = vmatpush.bf16.msra.mxu0 %v7802
    %8123 = vmatpush.bf16.msra.mxu0 %v7794
    %8124 = vmatpush.bf16.msra.mxu0 %v7786
    %8125 = vmatmul.bf16.gmra.mxu0 %v7269
    %v8126 = vpop.f32.mrf.mxu0
    %v8127 = vadd.f32 0.0, %v8126
    %v8128 = vpop.f32.mrf.mxu0
    %8129 = vdwg.mxu0
    %8130 = vmatpush.bf16.msra.mxu0 %v7906
    %8131 = vmatpush.bf16.msra.mxu0 %v7898
    %8132 = vmatpush.bf16.msra.mxu0 %v7890
    %8133 = vmatpush.bf16.msra.mxu0 %v7882
    %8134 = vmatpush.bf16.msra.mxu0 %v7874
    %8135 = vmatpush.bf16.msra.mxu0 %v7866
    %8136 = vmatpush.bf16.msra.mxu0 %v7858
    %8137 = vmatpush.bf16.msra.mxu0 %v7850
    %8138 = vmatmul.bf16.gmra.mxu0 %v7270
    %v8139 = vpop.f32.mrf.mxu0
    %v8140 = vadd.f32 %v8127, %v8139
    %v8141 = vpop.f32.mrf.mxu0
    %8142 = vdwg.mxu0
    %8143 = vmatpush.bf16.msra.mxu0 %v7843
    %8144 = vmatpush.bf16.msra.mxu0 %v7835
    %8145 = vmatpush.bf16.msra.mxu0 %v7827
    %8146 = vmatpush.bf16.msra.mxu0 %v7819
    %8147 = vmatpush.bf16.msra.mxu0 %v7811
    %8148 = vmatpush.bf16.msra.mxu0 %v7803
    %8149 = vmatpush.bf16.msra.mxu0 %v7795
    %8150 = vmatpush.bf16.msra.mxu0 %v7787
    %8151 = vmatmul.bf16.gmra.mxu0 %v7269
    %v8152 = vpop.f32.mrf.mxu0
    %v8153 = vadd.f32 0.0, %v8152
    %v8154 = vpop.f32.mrf.mxu0
    %8155 = vdwg.mxu0
    %8156 = vmatpush.bf16.msra.mxu0 %v7907
    %8157 = vmatpush.bf16.msra.mxu0 %v7899
    %8158 = vmatpush.bf16.msra.mxu0 %v7891
    %8159 = vmatpush.bf16.msra.mxu0 %v7883
    %8160 = vmatpush.bf16.msra.mxu0 %v7875
    %8161 = vmatpush.bf16.msra.mxu0 %v7867
    %8162 = vmatpush.bf16.msra.mxu0 %v7859
    %8163 = vmatpush.bf16.msra.mxu0 %v7851
    %8164 = vmatmul.bf16.gmra.mxu0 %v7270
    %v8165 = vpop.f32.mrf.mxu0
    %v8166 = vadd.f32 %v8153, %v8165
    %v8167 = vpop.f32.mrf.mxu0
    %8168 = vdwg.mxu0
    %8169 = vmatpush.bf16.msra.mxu0 %v7844
    %8170 = vmatpush.bf16.msra.mxu0 %v7836
    %8171 = vmatpush.bf16.msra.mxu0 %v7828
    %8172 = vmatpush.bf16.msra.mxu0 %v7820
    %8173 = vmatpush.bf16.msra.mxu0 %v7812
    %8174 = vmatpush.bf16.msra.mxu0 %v7804
    %8175 = vmatpush.bf16.msra.mxu0 %v7796
    %8176 = vmatpush.bf16.msra.mxu0 %v7788
    %8177 = vmatmul.bf16.gmra.mxu0 %v7269
    %v8178 = vpop.f32.mrf.mxu0
    %v8179 = vadd.f32 0.0, %v8178
    %v8180 = vpop.f32.mrf.mxu0
    %8181 = vdwg.mxu0
    %8182 = vmatpush.bf16.msra.mxu0 %v7908
    %8183 = vmatpush.bf16.msra.mxu0 %v7900
    %8184 = vmatpush.bf16.msra.mxu0 %v7892
    %8185 = vmatpush.bf16.msra.mxu0 %v7884
    %8186 = vmatpush.bf16.msra.mxu0 %v7876
    %8187 = vmatpush.bf16.msra.mxu0 %v7868
    %8188 = vmatpush.bf16.msra.mxu0 %v7860
    %8189 = vmatpush.bf16.msra.mxu0 %v7852
    %8190 = vmatmul.bf16.gmra.mxu0 %v7270
    %v8191 = vpop.f32.mrf.mxu0
    %v8192 = vadd.f32 %v8179, %v8191
    %v8193 = vpop.f32.mrf.mxu0
    %8194 = vdwg.mxu0
    %8195 = vmatpush.bf16.msra.mxu0 %v7845
    %8196 = vmatpush.bf16.msra.mxu0 %v7837
    %8197 = vmatpush.bf16.msra.mxu0 %v7829
    %8198 = vmatpush.bf16.msra.mxu0 %v7821
    %8199 = vmatpush.bf16.msra.mxu0 %v7813
    %8200 = vmatpush.bf16.msra.mxu0 %v7805
    %8201 = vmatpush.bf16.msra.mxu0 %v7797
    %8202 = vmatpush.bf16.msra.mxu0 %v7789
    %8203 = vmatmul.bf16.gmra.mxu0 %v7269
    %v8204 = vpop.f32.mrf.mxu0
    %v8205 = vadd.f32 0.0, %v8204
    %v8206 = vpop.f32.mrf.mxu0
    %8207 = vdwg.mxu0
    %8208 = vmatpush.bf16.msra.mxu0 %v7909
    %8209 = vmatpush.bf16.msra.mxu0 %v7901
    %8210 = vmatpush.bf16.msra.mxu0 %v7893
    %8211 = vmatpush.bf16.msra.mxu0 %v7885
    %8212 = vmatpush.bf16.msra.mxu0 %v7877
    %8213 = vmatpush.bf16.msra.mxu0 %v7869
    %8214 = vmatpush.bf16.msra.mxu0 %v7861
    %8215 = vmatpush.bf16.msra.mxu0 %v7853
    %8216 = vmatmul.bf16.gmra.mxu0 %v7270
    %v8217 = vpop.f32.mrf.mxu0
    %v8218 = vadd.f32 %v8205, %v8217
    %v8219 = vpop.f32.mrf.mxu0
    %8220 = vdwg.mxu0
    %8221 = vmatpush.bf16.msra.mxu0 %v7846
    %8222 = vmatpush.bf16.msra.mxu0 %v7838
    %8223 = vmatpush.bf16.msra.mxu0 %v7830
    %8224 = vmatpush.bf16.msra.mxu0 %v7822
    %8225 = vmatpush.bf16.msra.mxu0 %v7814
    %8226 = vmatpush.bf16.msra.mxu0 %v7806
    %8227 = vmatpush.bf16.msra.mxu0 %v7798
    %8228 = vmatpush.bf16.msra.mxu0 %v7790
    %8229 = vmatmul.bf16.gmra.mxu0 %v7269
    %v8230 = vpop.f32.mrf.mxu0
    %v8231 = vadd.f32 0.0, %v8230
    %v8232 = vpop.f32.mrf.mxu0
    %8233 = vdwg.mxu0
    %8234 = vmatpush.bf16.msra.mxu0 %v7910
    %8235 = vmatpush.bf16.msra.mxu0 %v7902
    %8236 = vmatpush.bf16.msra.mxu0 %v7894
    %8237 = vmatpush.bf16.msra.mxu0 %v7886
    %8238 = vmatpush.bf16.msra.mxu0 %v7878
    %8239 = vmatpush.bf16.msra.mxu0 %v7870
    %8240 = vmatpush.bf16.msra.mxu0 %v7862
    %8241 = vmatpush.bf16.msra.mxu0 %v7854
    %8242 = vmatmul.bf16.gmra.mxu0 %v7270
    %v8243 = vpop.f32.mrf.mxu0
    %v8244 = vadd.f32 %v8231, %v8243
    %v8245 = vpop.f32.mrf.mxu0
    %8246 = vdwg.mxu0
    %v8247 = vld [vmem:[#allocation2 + $0x140] sm:$0xff]
    %v8248 = vld [vmem:[#allocation2 + $0x148] sm:$0xff]
    %v8249 = vld [vmem:[#allocation2 + $0x150] sm:$0xff]
    %v8250 = vld [vmem:[#allocation2 + $0x158] sm:$0xff]
    %v8251 = vadd.f32 %v8247, %v8062
    %v8252 = vadd.f32 %v8248, %v8088
    %v8253 = vadd.f32 %v8249, %v8114
    %v8254 = vadd.f32 %v8250, %v8140
    %v8255 = vld [vmem:[#allocation2 + $0xa0] sm:$0xff]
    %v8256 = vld [vmem:[#allocation2 + $0xa8] sm:$0xff]
    %v8257 = vld [vmem:[#allocation2 + $0xb0] sm:$0xff]
    %v8258 = vld [vmem:[#allocation2 + $0xb8] sm:$0xff]
    %v8259 = vadd.f32 %v8255, %v8166
    %v8260 = vadd.f32 %v8256, %v8192
    %v8261 = vadd.f32 %v8257, %v8218
    %v8262 = vadd.f32 %v8258, %v8244
    %v8263 = vxor.u32 %v8251, 2147483648
    %v8264 = vxor.u32 %v8259, 2147483648
    %v8265 = vmul.f32 %v8263, 1.442695
    %v8266 = vpow.pop %v8265
    %v8267 = vmul.f32 %v8264, 1.442695
    %v8268 = vpow.pop %v8267
    %v8269 = vadd.f32 %v8266, 1.0
    %v8270 = vadd.f32 %v8268, 1.0
    %v8271 = vrcp.pop %v8269
    %v8272 = vmul.f32 %v8269, %v8271
    %v8273 = vsub.f32 1.0, %v8272
    %v8274 = vmul.f32 %v8271, %v8273
    %v8275 = vadd.f32 %v8271, %v8274
    %vm8276 = vweird.f32 %v8269
    %vm8277 = vweird.f32 %v8271
    %vm8278 = vmor %vm8276, %vm8277
    %v8279 = vsel %vm8278, %v8271, %v8275
    %v8280 = vand.u32 2147483647, %v8269
    %vm8281 = vcmp.eq.f32.partialorder %v8280, 8.507059e+37
    %v8282 = vand.u32 %v8269, 2147483648
    %v8283 = vor.u32 1.1754944e-38, %v8282
    %v8284 = vsel %vm8281, %v8283, %v8279
    %v8285 = vmul.f32 1.0, %v8284
    %v8286 = vrcp.pop %v8270
    %v8287 = vmul.f32 %v8270, %v8286
    %v8288 = vsub.f32 1.0, %v8287
    %v8289 = vmul.f32 %v8286, %v8288
    %v8290 = vadd.f32 %v8286, %v8289
    %vm8291 = vweird.f32 %v8270
    %vm8292 = vweird.f32 %v8286
    %vm8293 = vmor %vm8291, %vm8292
    %v8294 = vsel %vm8293, %v8286, %v8290
    %v8295 = vand.u32 2147483647, %v8270
    %vm8296 = vcmp.eq.f32.partialorder %v8295, 8.507059e+37
    %v8297 = vand.u32 %v8270, 2147483648
    %v8298 = vor.u32 1.1754944e-38, %v8297
    %v8299 = vsel %vm8296, %v8298, %v8294
    %v8300 = vmul.f32 1.0, %v8299
    %v8301 = vxor.u32 %v8252, 2147483648
    %v8302 = vxor.u32 %v8260, 2147483648
    %v8303 = vmul.f32 %v8301, 1.442695
    %v8304 = vpow.pop %v8303
    %v8305 = vmul.f32 %v8302, 1.442695
    %v8306 = vpow.pop %v8305
    %v8307 = vadd.f32 %v8304, 1.0
    %v8308 = vadd.f32 %v8306, 1.0
    %v8309 = vrcp.pop %v8307
    %v8310 = vmul.f32 %v8307, %v8309
    %v8311 = vsub.f32 1.0, %v8310
    %v8312 = vmul.f32 %v8309, %v8311
    %v8313 = vadd.f32 %v8309, %v8312
    %vm8314 = vweird.f32 %v8307
    %vm8315 = vweird.f32 %v8309
    %vm8316 = vmor %vm8314, %vm8315
    %v8317 = vsel %vm8316, %v8309, %v8313
    %v8318 = vand.u32 2147483647, %v8307
    %vm8319 = vcmp.eq.f32.partialorder %v8318, 8.507059e+37
    %v8320 = vand.u32 %v8307, 2147483648
    %v8321 = vor.u32 1.1754944e-38, %v8320
    %v8322 = vsel %vm8319, %v8321, %v8317
    %v8323 = vmul.f32 1.0, %v8322
    %v8324 = vrcp.pop %v8308
    %v8325 = vmul.f32 %v8308, %v8324
    %v8326 = vsub.f32 1.0, %v8325
    %v8327 = vmul.f32 %v8324, %v8326
    %v8328 = vadd.f32 %v8324, %v8327
    %vm8329 = vweird.f32 %v8308
    %vm8330 = vweird.f32 %v8324
    %vm8331 = vmor %vm8329, %vm8330
    %v8332 = vsel %vm8331, %v8324, %v8328
    %v8333 = vand.u32 2147483647, %v8308
    %vm8334 = vcmp.eq.f32.partialorder %v8333, 8.507059e+37
    %v8335 = vand.u32 %v8308, 2147483648
    %v8336 = vor.u32 1.1754944e-38, %v8335
    %v8337 = vsel %vm8334, %v8336, %v8332
    %v8338 = vmul.f32 1.0, %v8337
    %v8339 = vtanh.pop %v8253
    %v8340 = vtanh.pop %v8261
    %v8341 = vxor.u32 %v8254, 2147483648
    %v8342 = vxor.u32 %v8262, 2147483648
    %v8343 = vmul.f32 %v8341, 1.442695
    %v8344 = vpow.pop %v8343
    %v8345 = vmul.f32 %v8342, 1.442695
    %v8346 = vpow.pop %v8345
    %v8347 = vadd.f32 %v8344, 1.0
    %v8348 = vadd.f32 %v8346, 1.0
    %v8349 = vrcp.pop %v8347
    %v8350 = vmul.f32 %v8347, %v8349
    %v8351 = vsub.f32 1.0, %v8350
    %v8352 = vmul.f32 %v8349, %v8351
    %v8353 = vadd.f32 %v8349, %v8352
    %vm8354 = vweird.f32 %v8347
    %vm8355 = vweird.f32 %v8349
    %vm8356 = vmor %vm8354, %vm8355
    %v8357 = vsel %vm8356, %v8349, %v8353
    %v8358 = vand.u32 2147483647, %v8347
    %vm8359 = vcmp.eq.f32.partialorder %v8358, 8.507059e+37
    %v8360 = vand.u32 %v8347, 2147483648
    %v8361 = vor.u32 1.1754944e-38, %v8360
    %v8362 = vsel %vm8359, %v8361, %v8357
    %v8363 = vmul.f32 1.0, %v8362
    %v8364 = vrcp.pop %v8348
    %v8365 = vmul.f32 %v8348, %v8364
    %v8366 = vsub.f32 1.0, %v8365
    %v8367 = vmul.f32 %v8364, %v8366
    %v8368 = vadd.f32 %v8364, %v8367
    %vm8369 = vweird.f32 %v8348
    %vm8370 = vweird.f32 %v8364
    %vm8371 = vmor %vm8369, %vm8370
    %v8372 = vsel %vm8371, %v8364, %v8368
    %v8373 = vand.u32 2147483647, %v8348
    %vm8374 = vcmp.eq.f32.partialorder %v8373, 8.507059e+37
    %v8375 = vand.u32 %v8348, 2147483648
    %v8376 = vor.u32 1.1754944e-38, %v8375
    %v8377 = vsel %vm8374, %v8376, %v8372
    %v8378 = vmul.f32 1.0, %v8377
    %v8379 = vld [vmem:[#allocation4] sm:$0xff]
    %v8380 = vld [vmem:[#allocation4 + $0x8] sm:$0xff]
    %v8381 = vmul.f32 %v8323, %v8379
    %v8382 = vmul.f32 %v8338, %v8380
    %v8383 = vmul.f32 %v8285, %v8339
    %v8384 = vmul.f32 %v8300, %v8340
    %v8385 = vadd.f32 %v8381, %v8383
    %v8386 = vadd.f32 %v8382, %v8384
    %v8387 = vtanh.pop %v8385
    %v8388 = vtanh.pop %v8386
    %v8389 = vmul.f32 %v8363, %v8387
    %v8390 = vmul.f32 %v8378, %v8388
    %8391 = vst [vmem:[#allocation4] sm:$0xff] %v8385
    %8392 = vst [vmem:[#allocation4 + $0x8] sm:$0xff] %v8386
    %8393 = vst [vmem:[#allocation3] sm:$0xff] %v8389
    %8394 = vst [vmem:[#allocation3 + $0x8] sm:$0xff] %v8390
    %v8395 = vpack.c.bf16 %v8390, %v8389
    %v8396 = vld [vmem:[%s6 + $0x28] sm:$0xff]
    %v8397 = vld [vmem:[%s4] sm:$0xf]
    %v8398 = vld [vmem:[%s4 + $0x4] sm:$0xf]
    %v8399 = vld [vmem:[%s4 + $0x8] sm:$0xf]
    %v8400 = vld [vmem:[%s4 + $0xc] sm:$0xf]
    %v8401 = vld [vmem:[%s4 + $0x10] sm:$0xf]
    %v8402 = vld [vmem:[%s4 + $0x14] sm:$0xf]
    %v8403 = vld [vmem:[%s4 + $0x18] sm:$0xf]
    %v8404 = vld [vmem:[%s4 + $0x1c] sm:$0xf]
    %v8405 = vld [vmem:[%s4 + $0x20] sm:$0xf]
    %v8406 = vld [vmem:[%s4 + $0x24] sm:$0xf]
    %v8407 = vld [vmem:[%s4 + $0x28] sm:$0xf]
    %v8408 = vld [vmem:[%s4 + $0x2c] sm:$0xf]
    %v8409 = vld [vmem:[%s4 + $0x30] sm:$0xf]
    %v8410 = vld [vmem:[%s4 + $0x34] sm:$0xf]
    %v8411 = vld [vmem:[%s4 + $0x38] sm:$0xf]
    %v8412 = vld [vmem:[%s4 + $0x3c] sm:$0xf]
    %v8429 = vunpack.c.l.b16 %v8397
    %v8430 = vunpack.c.l.b16 %v8398
    %v8431 = vunpack.c.l.b16 %v8399
    %v8432 = vunpack.c.l.b16 %v8400
    %v8433 = vunpack.c.l.b16 %v8401
    %v8434 = vunpack.c.l.b16 %v8402
    %v8435 = vunpack.c.l.b16 %v8403
    %v8436 = vunpack.c.l.b16 %v8404
    %v8437 = vunpack.c.l.b16 %v8405
    %v8438 = vunpack.c.l.b16 %v8406
    %v8439 = vunpack.c.l.b16 %v8407
    %v8440 = vunpack.c.l.b16 %v8408
    %v8441 = vunpack.c.l.b16 %v8409
    %v8442 = vunpack.c.l.b16 %v8410
    %v8443 = vunpack.c.l.b16 %v8411
    %v8444 = vunpack.c.l.b16 %v8412
    %v8445 = vpack.c.b16 %v8430, %v8429
    %v8446 = vpack.c.b16 %v8432, %v8431
    %v8447 = vpack.c.b16 %v8434, %v8433
    %v8448 = vpack.c.b16 %v8436, %v8435
    %v8449 = vpack.c.b16 %v8438, %v8437
    %v8450 = vpack.c.b16 %v8440, %v8439
    %v8451 = vpack.c.b16 %v8442, %v8441
    %v8452 = vpack.c.b16 %v8444, %v8443
    %8461 = vmatpush.bf16.msra.mxu0 %v8452
    %8462 = vmatpush.bf16.msra.mxu0 %v8451
    %8463 = vmatpush.bf16.msra.mxu0 %v8450
    %8464 = vmatpush.bf16.msra.mxu0 %v8449
    %8465 = vmatpush.bf16.msra.mxu0 %v8448
    %8466 = vmatpush.bf16.msra.mxu0 %v8447
    %8467 = vmatpush.bf16.msra.mxu0 %v8446
    %8468 = vmatpush.bf16.msra.mxu0 %v8445
    %8469 = vmatmul.bf16.gmra.mxu0 %v8395
    %v8470 = vpop.f32.mrf.mxu0
    %v8471 = vadd.f32 0.0, %v8470
    %v8472 = vpop.f32.mrf.mxu0
    %8473 = vdwg.mxu0
    %v8474 = vadd.f32 %v8396, %v8471
    %8475 = vst [vmem:[%s6 + $0x28] sm:$0xff] %v8474
    %v8476 = vld [vmem:[%s6 + $0x10] sm:$0xff]
    %v8477 = vld [vmem:[%s4 + $0x40] sm:$0xf]
    %v8478 = vld [vmem:[%s4 + $0x44] sm:$0xf]
    %v8479 = vld [vmem:[%s4 + $0x48] sm:$0xf]
    %v8480 = vld [vmem:[%s4 + $0x4c] sm:$0xf]
    %v8481 = vld [vmem:[%s4 + $0x50] sm:$0xf]
    %v8482 = vld [vmem:[%s4 + $0x54] sm:$0xf]
    %v8483 = vld [vmem:[%s4 + $0x58] sm:$0xf]
    %v8484 = vld [vmem:[%s4 + $0x5c] sm:$0xf]
    %v8485 = vld [vmem:[%s4 + $0x60] sm:$0xf]
    %v8486 = vld [vmem:[%s4 + $0x64] sm:$0xf]
    %v8487 = vld [vmem:[%s4 + $0x68] sm:$0xf]
    %v8488 = vld [vmem:[%s4 + $0x6c] sm:$0xf]
    %v8489 = vld [vmem:[%s4 + $0x70] sm:$0xf]
    %v8490 = vld [vmem:[%s4 + $0x74] sm:$0xf]
    %v8491 = vld [vmem:[%s4 + $0x78] sm:$0xf]
    %v8492 = vld [vmem:[%s4 + $0x7c] sm:$0xf]
    %v8494 = vunpack.c.h.b16 %v8395
    %v8495 = vpack.c.b16 %v8494, %v8494
    %v8513 = vunpack.c.l.b16 %v8477
    %v8514 = vunpack.c.l.b16 %v8478
    %v8515 = vunpack.c.l.b16 %v8479
    %v8516 = vunpack.c.l.b16 %v8480
    %v8517 = vunpack.c.l.b16 %v8481
    %v8518 = vunpack.c.l.b16 %v8482
    %v8519 = vunpack.c.l.b16 %v8483
    %v8520 = vunpack.c.l.b16 %v8484
    %v8521 = vunpack.c.l.b16 %v8485
    %v8522 = vunpack.c.l.b16 %v8486
    %v8523 = vunpack.c.l.b16 %v8487
    %v8524 = vunpack.c.l.b16 %v8488
    %v8525 = vunpack.c.l.b16 %v8489
    %v8526 = vunpack.c.l.b16 %v8490
    %v8527 = vunpack.c.l.b16 %v8491
    %v8528 = vunpack.c.l.b16 %v8492
    %v8529 = vpack.c.b16 %v8514, %v8513
    %v8530 = vpack.c.b16 %v8516, %v8515
    %v8531 = vpack.c.b16 %v8518, %v8517
    %v8532 = vpack.c.b16 %v8520, %v8519
    %v8533 = vpack.c.b16 %v8522, %v8521
    %v8534 = vpack.c.b16 %v8524, %v8523
    %v8535 = vpack.c.b16 %v8526, %v8525
    %v8536 = vpack.c.b16 %v8528, %v8527
    %8545 = vmatpush.bf16.msra.mxu0 %v8536
    %8546 = vmatpush.bf16.msra.mxu0 %v8535
    %8547 = vmatpush.bf16.msra.mxu0 %v8534
    %8548 = vmatpush.bf16.msra.mxu0 %v8533
    %8549 = vmatpush.bf16.msra.mxu0 %v8532
    %8550 = vmatpush.bf16.msra.mxu0 %v8531
    %8551 = vmatpush.bf16.msra.mxu0 %v8530
    %8552 = vmatpush.bf16.msra.mxu0 %v8529
    %8553 = vmatmul.bf16.gmra.mxu0 %v8495
    %v8554 = vpop.f32.mrf.mxu0
    %v8555 = vadd.f32 0.0, %v8554
    %v8556 = vpop.f32.mrf.mxu0
    %8557 = vdwg.mxu0
    %v8558 = vadd.f32 %v8476, %v8555
    %8559 = vst [vmem:[%s6 + $0x10] sm:$0xff] %v8558
    %v8560 = vld [vmem:[#allocation3] sm:$0xff]
    %v8561 = vld [vmem:[#allocation3 + $0x8] sm:$0xff]
    %v8562 = vpack.c.bf16 %v8560, %v8560
    %v8563 = vpack.c.bf16 %v8561, %v8561
    %v8564 = vld [vmem:[#allocation7] sm:$0xff]
    %v8565 = vld [vmem:[#allocation7 + $0x8] sm:$0xff]
    %v8566 = vld [vmem:[#allocation7 + $0x10] sm:$0xff]
    %v8567 = vld [vmem:[#allocation7 + $0x18] sm:$0xff]
    %v8568 = vld [vmem:[#allocation7 + $0x20] sm:$0xff]
    %v8569 = vld [vmem:[#allocation7 + $0x28] sm:$0xff]
    %v8570 = vld [vmem:[#allocation7 + $0x30] sm:$0xff]
    %v8571 = vld [vmem:[#allocation7 + $0x38] sm:$0xff]
    %v8572 = vld [vmem:[#allocation7 + $0x40] sm:$0xff]
    %v8573 = vld [vmem:[#allocation7 + $0x48] sm:$0xff]
    %v8574 = vld [vmem:[#allocation7 + $0x50] sm:$0xff]
    %v8575 = vld [vmem:[#allocation7 + $0x58] sm:$0xff]
    %v8576 = vld [vmem:[#allocation7 + $0x60] sm:$0xff]
    %v8577 = vld [vmem:[#allocation7 + $0x68] sm:$0xff]
    %v8578 = vld [vmem:[#allocation7 + $0x70] sm:$0xff]
    %v8579 = vld [vmem:[#allocation7 + $0x78] sm:$0xff]
    %v8580 = vld [vmem:[#allocation7 + $0x80] sm:$0xff]
    %v8581 = vld [vmem:[#allocation7 + $0x88] sm:$0xff]
    %v8582 = vld [vmem:[#allocation7 + $0x90] sm:$0xff]
    %v8583 = vld [vmem:[#allocation7 + $0x98] sm:$0xff]
    %v8584 = vld [vmem:[#allocation7 + $0xa0] sm:$0xff]
    %v8585 = vld [vmem:[#allocation7 + $0xa8] sm:$0xff]
    %v8586 = vld [vmem:[#allocation7 + $0xb0] sm:$0xff]
    %v8587 = vld [vmem:[#allocation7 + $0xb8] sm:$0xff]
    %v8588 = vld [vmem:[#allocation7 + $0xc0] sm:$0xff]
    %v8589 = vld [vmem:[#allocation7 + $0xc8] sm:$0xff]
    %v8590 = vld [vmem:[#allocation7 + $0xd0] sm:$0xff]
    %v8591 = vld [vmem:[#allocation7 + $0xd8] sm:$0xff]
    %v8592 = vld [vmem:[#allocation7 + $0xe0] sm:$0xff]
    %v8593 = vld [vmem:[#allocation7 + $0xe8] sm:$0xff]
    %v8594 = vld [vmem:[#allocation7 + $0xf0] sm:$0xff]
    %v8595 = vld [vmem:[#allocation7 + $0xf8] sm:$0xff]
    %v8596 = vld [vmem:[#allocation7 + $0x100] sm:$0xff]
    %v8597 = vld [vmem:[#allocation7 + $0x108] sm:$0xff]
    %v8598 = vld [vmem:[#allocation7 + $0x110] sm:$0xff]
    %v8599 = vld [vmem:[#allocation7 + $0x118] sm:$0xff]
    %v8600 = vld [vmem:[#allocation7 + $0x120] sm:$0xff]
    %v8601 = vld [vmem:[#allocation7 + $0x128] sm:$0xff]
    %v8602 = vld [vmem:[#allocation7 + $0x130] sm:$0xff]
    %v8603 = vld [vmem:[#allocation7 + $0x138] sm:$0xff]
    %v8604 = vld [vmem:[#allocation7 + $0x140] sm:$0xff]
    %v8605 = vld [vmem:[#allocation7 + $0x148] sm:$0xff]
    %v8606 = vld [vmem:[#allocation7 + $0x150] sm:$0xff]
    %v8607 = vld [vmem:[#allocation7 + $0x158] sm:$0xff]
    %v8608 = vld [vmem:[#allocation7 + $0x160] sm:$0xff]
    %v8609 = vld [vmem:[#allocation7 + $0x168] sm:$0xff]
    %v8610 = vld [vmem:[#allocation7 + $0x170] sm:$0xff]
    %v8611 = vld [vmem:[#allocation7 + $0x178] sm:$0xff]
    %v8612 = vld [vmem:[#allocation7 + $0x180] sm:$0xff]
    %v8613 = vld [vmem:[#allocation7 + $0x188] sm:$0xff]
    %v8614 = vld [vmem:[#allocation7 + $0x190] sm:$0xff]
    %v8615 = vld [vmem:[#allocation7 + $0x198] sm:$0xff]
    %v8616 = vld [vmem:[#allocation7 + $0x1a0] sm:$0xff]
    %v8617 = vld [vmem:[#allocation7 + $0x1a8] sm:$0xff]
    %v8618 = vld [vmem:[#allocation7 + $0x1b0] sm:$0xff]
    %v8619 = vld [vmem:[#allocation7 + $0x1b8] sm:$0xff]
    %v8620 = vld [vmem:[#allocation7 + $0x1c0] sm:$0xff]
    %v8621 = vld [vmem:[#allocation7 + $0x1c8] sm:$0xff]
    %v8622 = vld [vmem:[#allocation7 + $0x1d0] sm:$0xff]
    %v8623 = vld [vmem:[#allocation7 + $0x1d8] sm:$0xff]
    %v8624 = vld [vmem:[#allocation7 + $0x1e0] sm:$0xff]
    %v8625 = vld [vmem:[#allocation7 + $0x1e8] sm:$0xff]
    %v8626 = vld [vmem:[#allocation7 + $0x1f0] sm:$0xff]
    %v8627 = vld [vmem:[#allocation7 + $0x1f8] sm:$0xff]
    %v8628 = vld [vmem:[#allocation7 + $0x200] sm:$0xff]
    %v8629 = vld [vmem:[#allocation7 + $0x208] sm:$0xff]
    %v8630 = vld [vmem:[#allocation7 + $0x210] sm:$0xff]
    %v8631 = vld [vmem:[#allocation7 + $0x218] sm:$0xff]
    %v8632 = vld [vmem:[#allocation7 + $0x220] sm:$0xff]
    %v8633 = vld [vmem:[#allocation7 + $0x228] sm:$0xff]
    %v8634 = vld [vmem:[#allocation7 + $0x230] sm:$0xff]
    %v8635 = vld [vmem:[#allocation7 + $0x238] sm:$0xff]
    %v8636 = vld [vmem:[#allocation7 + $0x240] sm:$0xff]
    %v8637 = vld [vmem:[#allocation7 + $0x248] sm:$0xff]
    %v8638 = vld [vmem:[#allocation7 + $0x250] sm:$0xff]
    %v8639 = vld [vmem:[#allocation7 + $0x258] sm:$0xff]
    %v8640 = vld [vmem:[#allocation7 + $0x260] sm:$0xff]
    %v8641 = vld [vmem:[#allocation7 + $0x268] sm:$0xff]
    %v8642 = vld [vmem:[#allocation7 + $0x270] sm:$0xff]
    %v8643 = vld [vmem:[#allocation7 + $0x278] sm:$0xff]
    %v8644 = vld [vmem:[#allocation7 + $0x280] sm:$0xff]
    %v8645 = vld [vmem:[#allocation7 + $0x288] sm:$0xff]
    %v8646 = vld [vmem:[#allocation7 + $0x290] sm:$0xff]
    %v8647 = vld [vmem:[#allocation7 + $0x298] sm:$0xff]
    %v8648 = vld [vmem:[#allocation7 + $0x2a0] sm:$0xff]
    %v8649 = vld [vmem:[#allocation7 + $0x2a8] sm:$0xff]
    %v8650 = vld [vmem:[#allocation7 + $0x2b0] sm:$0xff]
    %v8651 = vld [vmem:[#allocation7 + $0x2b8] sm:$0xff]
    %v8652 = vld [vmem:[#allocation7 + $0x2c0] sm:$0xff]
    %v8653 = vld [vmem:[#allocation7 + $0x2c8] sm:$0xff]
    %v8654 = vld [vmem:[#allocation7 + $0x2d0] sm:$0xff]
    %v8655 = vld [vmem:[#allocation7 + $0x2d8] sm:$0xff]
    %v8656 = vld [vmem:[#allocation7 + $0x2e0] sm:$0xff]
    %v8657 = vld [vmem:[#allocation7 + $0x2e8] sm:$0xff]
    %v8658 = vld [vmem:[#allocation7 + $0x2f0] sm:$0xff]
    %v8659 = vld [vmem:[#allocation7 + $0x2f8] sm:$0xff]
    %v8660 = vld [vmem:[#allocation7 + $0x300] sm:$0xff]
    %v8661 = vld [vmem:[#allocation7 + $0x308] sm:$0xff]
    %v8662 = vld [vmem:[#allocation7 + $0x310] sm:$0xff]
    %v8663 = vld [vmem:[#allocation7 + $0x318] sm:$0xff]
    %v8664 = vld [vmem:[#allocation7 + $0x320] sm:$0xff]
    %v8665 = vld [vmem:[#allocation7 + $0x328] sm:$0xff]
    %v8666 = vld [vmem:[#allocation7 + $0x330] sm:$0xff]
    %v8667 = vld [vmem:[#allocation7 + $0x338] sm:$0xff]
    %v8668 = vld [vmem:[#allocation7 + $0x340] sm:$0xff]
    %v8669 = vld [vmem:[#allocation7 + $0x348] sm:$0xff]
    %v8670 = vld [vmem:[#allocation7 + $0x350] sm:$0xff]
    %v8671 = vld [vmem:[#allocation7 + $0x358] sm:$0xff]
    %v8672 = vld [vmem:[#allocation7 + $0x360] sm:$0xff]
    %v8673 = vld [vmem:[#allocation7 + $0x368] sm:$0xff]
    %v8674 = vld [vmem:[#allocation7 + $0x370] sm:$0xff]
    %v8675 = vld [vmem:[#allocation7 + $0x378] sm:$0xff]
    %v8676 = vld [vmem:[#allocation7 + $0x380] sm:$0xff]
    %v8677 = vld [vmem:[#allocation7 + $0x388] sm:$0xff]
    %v8678 = vld [vmem:[#allocation7 + $0x390] sm:$0xff]
    %v8679 = vld [vmem:[#allocation7 + $0x398] sm:$0xff]
    %v8680 = vld [vmem:[#allocation7 + $0x3a0] sm:$0xff]
    %v8681 = vld [vmem:[#allocation7 + $0x3a8] sm:$0xff]
    %v8682 = vld [vmem:[#allocation7 + $0x3b0] sm:$0xff]
    %v8683 = vld [vmem:[#allocation7 + $0x3b8] sm:$0xff]
    %v8684 = vld [vmem:[#allocation7 + $0x3c0] sm:$0xff]
    %v8685 = vld [vmem:[#allocation7 + $0x3c8] sm:$0xff]
    %v8686 = vld [vmem:[#allocation7 + $0x3d0] sm:$0xff]
    %v8687 = vld [vmem:[#allocation7 + $0x3d8] sm:$0xff]
    %v8688 = vld [vmem:[#allocation7 + $0x3e0] sm:$0xff]
    %v8689 = vld [vmem:[#allocation7 + $0x3e8] sm:$0xff]
    %v8690 = vld [vmem:[#allocation7 + $0x3f0] sm:$0xff]
    %v8691 = vld [vmem:[#allocation7 + $0x3f8] sm:$0xff]
    %v8820 = vunpack.c.l.b16 %v8564
    %v8821 = vunpack.c.h.b16 %v8564
    %v8822 = vunpack.c.l.b16 %v8565
    %v8823 = vunpack.c.h.b16 %v8565
    %v8824 = vunpack.c.l.b16 %v8566
    %v8825 = vunpack.c.h.b16 %v8566
    %v8826 = vunpack.c.l.b16 %v8567
    %v8827 = vunpack.c.h.b16 %v8567
    %v8828 = vunpack.c.l.b16 %v8568
    %v8829 = vunpack.c.h.b16 %v8568
    %v8830 = vunpack.c.l.b16 %v8569
    %v8831 = vunpack.c.h.b16 %v8569
    %v8832 = vunpack.c.l.b16 %v8570
    %v8833 = vunpack.c.h.b16 %v8570
    %v8834 = vunpack.c.l.b16 %v8571
    %v8835 = vunpack.c.h.b16 %v8571
    %v8836 = vunpack.c.l.b16 %v8572
    %v8837 = vunpack.c.h.b16 %v8572
    %v8838 = vunpack.c.l.b16 %v8573
    %v8839 = vunpack.c.h.b16 %v8573
    %v8840 = vunpack.c.l.b16 %v8574
    %v8841 = vunpack.c.h.b16 %v8574
    %v8842 = vunpack.c.l.b16 %v8575
    %v8843 = vunpack.c.h.b16 %v8575
    %v8844 = vunpack.c.l.b16 %v8576
    %v8845 = vunpack.c.h.b16 %v8576
    %v8846 = vunpack.c.l.b16 %v8577
    %v8847 = vunpack.c.h.b16 %v8577
    %v8848 = vunpack.c.l.b16 %v8578
    %v8849 = vunpack.c.h.b16 %v8578
    %v8850 = vunpack.c.l.b16 %v8579
    %v8851 = vunpack.c.h.b16 %v8579
    %v8852 = vunpack.c.l.b16 %v8580
    %v8853 = vunpack.c.h.b16 %v8580
    %v8854 = vunpack.c.l.b16 %v8581
    %v8855 = vunpack.c.h.b16 %v8581
    %v8856 = vunpack.c.l.b16 %v8582
    %v8857 = vunpack.c.h.b16 %v8582
    %v8858 = vunpack.c.l.b16 %v8583
    %v8859 = vunpack.c.h.b16 %v8583
    %v8860 = vunpack.c.l.b16 %v8584
    %v8861 = vunpack.c.h.b16 %v8584
    %v8862 = vunpack.c.l.b16 %v8585
    %v8863 = vunpack.c.h.b16 %v8585
    %v8864 = vunpack.c.l.b16 %v8586
    %v8865 = vunpack.c.h.b16 %v8586
    %v8866 = vunpack.c.l.b16 %v8587
    %v8867 = vunpack.c.h.b16 %v8587
    %v8868 = vunpack.c.l.b16 %v8588
    %v8869 = vunpack.c.h.b16 %v8588
    %v8870 = vunpack.c.l.b16 %v8589
    %v8871 = vunpack.c.h.b16 %v8589
    %v8872 = vunpack.c.l.b16 %v8590
    %v8873 = vunpack.c.h.b16 %v8590
    %v8874 = vunpack.c.l.b16 %v8591
    %v8875 = vunpack.c.h.b16 %v8591
    %v8876 = vunpack.c.l.b16 %v8592
    %v8877 = vunpack.c.h.b16 %v8592
    %v8878 = vunpack.c.l.b16 %v8593
    %v8879 = vunpack.c.h.b16 %v8593
    %v8880 = vunpack.c.l.b16 %v8594
    %v8881 = vunpack.c.h.b16 %v8594
    %v8882 = vunpack.c.l.b16 %v8595
    %v8883 = vunpack.c.h.b16 %v8595
    %v8884 = vunpack.c.l.b16 %v8596
    %v8885 = vunpack.c.h.b16 %v8596
    %v8886 = vunpack.c.l.b16 %v8597
    %v8887 = vunpack.c.h.b16 %v8597
    %v8888 = vunpack.c.l.b16 %v8598
    %v8889 = vunpack.c.h.b16 %v8598
    %v8890 = vunpack.c.l.b16 %v8599
    %v8891 = vunpack.c.h.b16 %v8599
    %v8892 = vunpack.c.l.b16 %v8600
    %v8893 = vunpack.c.h.b16 %v8600
    %v8894 = vunpack.c.l.b16 %v8601
    %v8895 = vunpack.c.h.b16 %v8601
    %v8896 = vunpack.c.l.b16 %v8602
    %v8897 = vunpack.c.h.b16 %v8602
    %v8898 = vunpack.c.l.b16 %v8603
    %v8899 = vunpack.c.h.b16 %v8603
    %v8900 = vunpack.c.l.b16 %v8604
    %v8901 = vunpack.c.h.b16 %v8604
    %v8902 = vunpack.c.l.b16 %v8605
    %v8903 = vunpack.c.h.b16 %v8605
    %v8904 = vunpack.c.l.b16 %v8606
    %v8905 = vunpack.c.h.b16 %v8606
    %v8906 = vunpack.c.l.b16 %v8607
    %v8907 = vunpack.c.h.b16 %v8607
    %v8908 = vunpack.c.l.b16 %v8608
    %v8909 = vunpack.c.h.b16 %v8608
    %v8910 = vunpack.c.l.b16 %v8609
    %v8911 = vunpack.c.h.b16 %v8609
    %v8912 = vunpack.c.l.b16 %v8610
    %v8913 = vunpack.c.h.b16 %v8610
    %v8914 = vunpack.c.l.b16 %v8611
    %v8915 = vunpack.c.h.b16 %v8611
    %v8916 = vunpack.c.l.b16 %v8612
    %v8917 = vunpack.c.h.b16 %v8612
    %v8918 = vunpack.c.l.b16 %v8613
    %v8919 = vunpack.c.h.b16 %v8613
    %v8920 = vunpack.c.l.b16 %v8614
    %v8921 = vunpack.c.h.b16 %v8614
    %v8922 = vunpack.c.l.b16 %v8615
    %v8923 = vunpack.c.h.b16 %v8615
    %v8924 = vunpack.c.l.b16 %v8616
    %v8925 = vunpack.c.h.b16 %v8616
    %v8926 = vunpack.c.l.b16 %v8617
    %v8927 = vunpack.c.h.b16 %v8617
    %v8928 = vunpack.c.l.b16 %v8618
    %v8929 = vunpack.c.h.b16 %v8618
    %v8930 = vunpack.c.l.b16 %v8619
    %v8931 = vunpack.c.h.b16 %v8619
    %v8932 = vunpack.c.l.b16 %v8620
    %v8933 = vunpack.c.h.b16 %v8620
    %v8934 = vunpack.c.l.b16 %v8621
    %v8935 = vunpack.c.h.b16 %v8621
    %v8936 = vunpack.c.l.b16 %v8622
    %v8937 = vunpack.c.h.b16 %v8622
    %v8938 = vunpack.c.l.b16 %v8623
    %v8939 = vunpack.c.h.b16 %v8623
    %v8940 = vunpack.c.l.b16 %v8624
    %v8941 = vunpack.c.h.b16 %v8624
    %v8942 = vunpack.c.l.b16 %v8625
    %v8943 = vunpack.c.h.b16 %v8625
    %v8944 = vunpack.c.l.b16 %v8626
    %v8945 = vunpack.c.h.b16 %v8626
    %v8946 = vunpack.c.l.b16 %v8627
    %v8947 = vunpack.c.h.b16 %v8627
    %v8948 = vunpack.c.l.b16 %v8628
    %v8949 = vunpack.c.h.b16 %v8628
    %v8950 = vunpack.c.l.b16 %v8629
    %v8951 = vunpack.c.h.b16 %v8629
    %v8952 = vunpack.c.l.b16 %v8630
    %v8953 = vunpack.c.h.b16 %v8630
    %v8954 = vunpack.c.l.b16 %v8631
    %v8955 = vunpack.c.h.b16 %v8631
    %v8956 = vunpack.c.l.b16 %v8632
    %v8957 = vunpack.c.h.b16 %v8632
    %v8958 = vunpack.c.l.b16 %v8633
    %v8959 = vunpack.c.h.b16 %v8633
    %v8960 = vunpack.c.l.b16 %v8634
    %v8961 = vunpack.c.h.b16 %v8634
    %v8962 = vunpack.c.l.b16 %v8635
    %v8963 = vunpack.c.h.b16 %v8635
    %v8964 = vunpack.c.l.b16 %v8636
    %v8965 = vunpack.c.h.b16 %v8636
    %v8966 = vunpack.c.l.b16 %v8637
    %v8967 = vunpack.c.h.b16 %v8637
    %v8968 = vunpack.c.l.b16 %v8638
    %v8969 = vunpack.c.h.b16 %v8638
    %v8970 = vunpack.c.l.b16 %v8639
    %v8971 = vunpack.c.h.b16 %v8639
    %v8972 = vunpack.c.l.b16 %v8640
    %v8973 = vunpack.c.h.b16 %v8640
    %v8974 = vunpack.c.l.b16 %v8641
    %v8975 = vunpack.c.h.b16 %v8641
    %v8976 = vunpack.c.l.b16 %v8642
    %v8977 = vunpack.c.h.b16 %v8642
    %v8978 = vunpack.c.l.b16 %v8643
    %v8979 = vunpack.c.h.b16 %v8643
    %v8980 = vunpack.c.l.b16 %v8644
    %v8981 = vunpack.c.h.b16 %v8644
    %v8982 = vunpack.c.l.b16 %v8645
    %v8983 = vunpack.c.h.b16 %v8645
    %v8984 = vunpack.c.l.b16 %v8646
    %v8985 = vunpack.c.h.b16 %v8646
    %v8986 = vunpack.c.l.b16 %v8647
    %v8987 = vunpack.c.h.b16 %v8647
    %v8988 = vunpack.c.l.b16 %v8648
    %v8989 = vunpack.c.h.b16 %v8648
    %v8990 = vunpack.c.l.b16 %v8649
    %v8991 = vunpack.c.h.b16 %v8649
    %v8992 = vunpack.c.l.b16 %v8650
    %v8993 = vunpack.c.h.b16 %v8650
    %v8994 = vunpack.c.l.b16 %v8651
    %v8995 = vunpack.c.h.b16 %v8651
    %v8996 = vunpack.c.l.b16 %v8652
    %v8997 = vunpack.c.h.b16 %v8652
    %v8998 = vunpack.c.l.b16 %v8653
    %v8999 = vunpack.c.h.b16 %v8653
    %v9000 = vunpack.c.l.b16 %v8654
    %v9001 = vunpack.c.h.b16 %v8654
    %v9002 = vunpack.c.l.b16 %v8655
    %v9003 = vunpack.c.h.b16 %v8655
    %v9004 = vunpack.c.l.b16 %v8656
    %v9005 = vunpack.c.h.b16 %v8656
    %v9006 = vunpack.c.l.b16 %v8657
    %v9007 = vunpack.c.h.b16 %v8657
    %v9008 = vunpack.c.l.b16 %v8658
    %v9009 = vunpack.c.h.b16 %v8658
    %v9010 = vunpack.c.l.b16 %v8659
    %v9011 = vunpack.c.h.b16 %v8659
    %v9012 = vunpack.c.l.b16 %v8660
    %v9013 = vunpack.c.h.b16 %v8660
    %v9014 = vunpack.c.l.b16 %v8661
    %v9015 = vunpack.c.h.b16 %v8661
    %v9016 = vunpack.c.l.b16 %v8662
    %v9017 = vunpack.c.h.b16 %v8662
    %v9018 = vunpack.c.l.b16 %v8663
    %v9019 = vunpack.c.h.b16 %v8663
    %v9020 = vunpack.c.l.b16 %v8664
    %v9021 = vunpack.c.h.b16 %v8664
    %v9022 = vunpack.c.l.b16 %v8665
    %v9023 = vunpack.c.h.b16 %v8665
    %v9024 = vunpack.c.l.b16 %v8666
    %v9025 = vunpack.c.h.b16 %v8666
    %v9026 = vunpack.c.l.b16 %v8667
    %v9027 = vunpack.c.h.b16 %v8667
    %v9028 = vunpack.c.l.b16 %v8668
    %v9029 = vunpack.c.h.b16 %v8668
    %v9030 = vunpack.c.l.b16 %v8669
    %v9031 = vunpack.c.h.b16 %v8669
    %v9032 = vunpack.c.l.b16 %v8670
    %v9033 = vunpack.c.h.b16 %v8670
    %v9034 = vunpack.c.l.b16 %v8671
    %v9035 = vunpack.c.h.b16 %v8671
    %v9036 = vunpack.c.l.b16 %v8672
    %v9037 = vunpack.c.h.b16 %v8672
    %v9038 = vunpack.c.l.b16 %v8673
    %v9039 = vunpack.c.h.b16 %v8673
    %v9040 = vunpack.c.l.b16 %v8674
    %v9041 = vunpack.c.h.b16 %v8674
    %v9042 = vunpack.c.l.b16 %v8675
    %v9043 = vunpack.c.h.b16 %v8675
    %v9044 = vunpack.c.l.b16 %v8676
    %v9045 = vunpack.c.h.b16 %v8676
    %v9046 = vunpack.c.l.b16 %v8677
    %v9047 = vunpack.c.h.b16 %v8677
    %v9048 = vunpack.c.l.b16 %v8678
    %v9049 = vunpack.c.h.b16 %v8678
    %v9050 = vunpack.c.l.b16 %v8679
    %v9051 = vunpack.c.h.b16 %v8679
    %v9052 = vunpack.c.l.b16 %v8680
    %v9053 = vunpack.c.h.b16 %v8680
    %v9054 = vunpack.c.l.b16 %v8681
    %v9055 = vunpack.c.h.b16 %v8681
    %v9056 = vunpack.c.l.b16 %v8682
    %v9057 = vunpack.c.h.b16 %v8682
    %v9058 = vunpack.c.l.b16 %v8683
    %v9059 = vunpack.c.h.b16 %v8683
    %v9060 = vunpack.c.l.b16 %v8684
    %v9061 = vunpack.c.h.b16 %v8684
    %v9062 = vunpack.c.l.b16 %v8685
    %v9063 = vunpack.c.h.b16 %v8685
    %v9064 = vunpack.c.l.b16 %v8686
    %v9065 = vunpack.c.h.b16 %v8686
    %v9066 = vunpack.c.l.b16 %v8687
    %v9067 = vunpack.c.h.b16 %v8687
    %v9068 = vunpack.c.l.b16 %v8688
    %v9069 = vunpack.c.h.b16 %v8688
    %v9070 = vunpack.c.l.b16 %v8689
    %v9071 = vunpack.c.h.b16 %v8689
    %v9072 = vunpack.c.l.b16 %v8690
    %v9073 = vunpack.c.h.b16 %v8690
    %v9074 = vunpack.c.l.b16 %v8691
    %v9075 = vunpack.c.h.b16 %v8691
    %v9076 = vpack.c.b16 %v8828, %v8820
    %v9077 = vpack.c.b16 %v8829, %v8821
    %v9078 = vpack.c.b16 %v8830, %v8822
    %v9079 = vpack.c.b16 %v8831, %v8823
    %v9080 = vpack.c.b16 %v8832, %v8824
    %v9081 = vpack.c.b16 %v8833, %v8825
    %v9082 = vpack.c.b16 %v8834, %v8826
    %v9083 = vpack.c.b16 %v8835, %v8827
    %v9084 = vpack.c.b16 %v8844, %v8836
    %v9085 = vpack.c.b16 %v8845, %v8837
    %v9086 = vpack.c.b16 %v8846, %v8838
    %v9087 = vpack.c.b16 %v8847, %v8839
    %v9088 = vpack.c.b16 %v8848, %v8840
    %v9089 = vpack.c.b16 %v8849, %v8841
    %v9090 = vpack.c.b16 %v8850, %v8842
    %v9091 = vpack.c.b16 %v8851, %v8843
    %v9092 = vpack.c.b16 %v8860, %v8852
    %v9093 = vpack.c.b16 %v8861, %v8853
    %v9094 = vpack.c.b16 %v8862, %v8854
    %v9095 = vpack.c.b16 %v8863, %v8855
    %v9096 = vpack.c.b16 %v8864, %v8856
    %v9097 = vpack.c.b16 %v8865, %v8857
    %v9098 = vpack.c.b16 %v8866, %v8858
    %v9099 = vpack.c.b16 %v8867, %v8859
    %v9100 = vpack.c.b16 %v8876, %v8868
    %v9101 = vpack.c.b16 %v8877, %v8869
    %v9102 = vpack.c.b16 %v8878, %v8870
    %v9103 = vpack.c.b16 %v8879, %v8871
    %v9104 = vpack.c.b16 %v8880, %v8872
    %v9105 = vpack.c.b16 %v8881, %v8873
    %v9106 = vpack.c.b16 %v8882, %v8874
    %v9107 = vpack.c.b16 %v8883, %v8875
    %v9108 = vpack.c.b16 %v8892, %v8884
    %v9109 = vpack.c.b16 %v8893, %v8885
    %v9110 = vpack.c.b16 %v8894, %v8886
    %v9111 = vpack.c.b16 %v8895, %v8887
    %v9112 = vpack.c.b16 %v8896, %v8888
    %v9113 = vpack.c.b16 %v8897, %v8889
    %v9114 = vpack.c.b16 %v8898, %v8890
    %v9115 = vpack.c.b16 %v8899, %v8891
    %v9116 = vpack.c.b16 %v8908, %v8900
    %v9117 = vpack.c.b16 %v8909, %v8901
    %v9118 = vpack.c.b16 %v8910, %v8902
    %v9119 = vpack.c.b16 %v8911, %v8903
    %v9120 = vpack.c.b16 %v8912, %v8904
    %v9121 = vpack.c.b16 %v8913, %v8905
    %v9122 = vpack.c.b16 %v8914, %v8906
    %v9123 = vpack.c.b16 %v8915, %v8907
    %v9124 = vpack.c.b16 %v8924, %v8916
    %v9125 = vpack.c.b16 %v8925, %v8917
    %v9126 = vpack.c.b16 %v8926, %v8918
    %v9127 = vpack.c.b16 %v8927, %v8919
    %v9128 = vpack.c.b16 %v8928, %v8920
    %v9129 = vpack.c.b16 %v8929, %v8921
    %v9130 = vpack.c.b16 %v8930, %v8922
    %v9131 = vpack.c.b16 %v8931, %v8923
    %v9132 = vpack.c.b16 %v8940, %v8932
    %v9133 = vpack.c.b16 %v8941, %v8933
    %v9134 = vpack.c.b16 %v8942, %v8934
    %v9135 = vpack.c.b16 %v8943, %v8935
    %v9136 = vpack.c.b16 %v8944, %v8936
    %v9137 = vpack.c.b16 %v8945, %v8937
    %v9138 = vpack.c.b16 %v8946, %v8938
    %v9139 = vpack.c.b16 %v8947, %v8939
    %v9140 = vpack.c.b16 %v8956, %v8948
    %v9141 = vpack.c.b16 %v8957, %v8949
    %v9142 = vpack.c.b16 %v8958, %v8950
    %v9143 = vpack.c.b16 %v8959, %v8951
    %v9144 = vpack.c.b16 %v8960, %v8952
    %v9145 = vpack.c.b16 %v8961, %v8953
    %v9146 = vpack.c.b16 %v8962, %v8954
    %v9147 = vpack.c.b16 %v8963, %v8955
    %v9148 = vpack.c.b16 %v8972, %v8964
    %v9149 = vpack.c.b16 %v8973, %v8965
    %v9150 = vpack.c.b16 %v8974, %v8966
    %v9151 = vpack.c.b16 %v8975, %v8967
    %v9152 = vpack.c.b16 %v8976, %v8968
    %v9153 = vpack.c.b16 %v8977, %v8969
    %v9154 = vpack.c.b16 %v8978, %v8970
    %v9155 = vpack.c.b16 %v8979, %v8971
    %v9156 = vpack.c.b16 %v8988, %v8980
    %v9157 = vpack.c.b16 %v8989, %v8981
    %v9158 = vpack.c.b16 %v8990, %v8982
    %v9159 = vpack.c.b16 %v8991, %v8983
    %v9160 = vpack.c.b16 %v8992, %v8984
    %v9161 = vpack.c.b16 %v8993, %v8985
    %v9162 = vpack.c.b16 %v8994, %v8986
    %v9163 = vpack.c.b16 %v8995, %v8987
    %v9164 = vpack.c.b16 %v9004, %v8996
    %v9165 = vpack.c.b16 %v9005, %v8997
    %v9166 = vpack.c.b16 %v9006, %v8998
    %v9167 = vpack.c.b16 %v9007, %v8999
    %v9168 = vpack.c.b16 %v9008, %v9000
    %v9169 = vpack.c.b16 %v9009, %v9001
    %v9170 = vpack.c.b16 %v9010, %v9002
    %v9171 = vpack.c.b16 %v9011, %v9003
    %v9172 = vpack.c.b16 %v9020, %v9012
    %v9173 = vpack.c.b16 %v9021, %v9013
    %v9174 = vpack.c.b16 %v9022, %v9014
    %v9175 = vpack.c.b16 %v9023, %v9015
    %v9176 = vpack.c.b16 %v9024, %v9016
    %v9177 = vpack.c.b16 %v9025, %v9017
    %v9178 = vpack.c.b16 %v9026, %v9018
    %v9179 = vpack.c.b16 %v9027, %v9019
    %v9180 = vpack.c.b16 %v9036, %v9028
    %v9181 = vpack.c.b16 %v9037, %v9029
    %v9182 = vpack.c.b16 %v9038, %v9030
    %v9183 = vpack.c.b16 %v9039, %v9031
    %v9184 = vpack.c.b16 %v9040, %v9032
    %v9185 = vpack.c.b16 %v9041, %v9033
    %v9186 = vpack.c.b16 %v9042, %v9034
    %v9187 = vpack.c.b16 %v9043, %v9035
    %v9188 = vpack.c.b16 %v9052, %v9044
    %v9189 = vpack.c.b16 %v9053, %v9045
    %v9190 = vpack.c.b16 %v9054, %v9046
    %v9191 = vpack.c.b16 %v9055, %v9047
    %v9192 = vpack.c.b16 %v9056, %v9048
    %v9193 = vpack.c.b16 %v9057, %v9049
    %v9194 = vpack.c.b16 %v9058, %v9050
    %v9195 = vpack.c.b16 %v9059, %v9051
    %v9196 = vpack.c.b16 %v9068, %v9060
    %v9197 = vpack.c.b16 %v9069, %v9061
    %v9198 = vpack.c.b16 %v9070, %v9062
    %v9199 = vpack.c.b16 %v9071, %v9063
    %v9200 = vpack.c.b16 %v9072, %v9064
    %v9201 = vpack.c.b16 %v9073, %v9065
    %v9202 = vpack.c.b16 %v9074, %v9066
    %v9203 = vpack.c.b16 %v9075, %v9067
    %9332 = vmatpush.bf16.msra.mxu0 %v9132
    %9333 = vmatpush.bf16.msra.mxu0 %v9124
    %9334 = vmatpush.bf16.msra.mxu0 %v9116
    %9335 = vmatpush.bf16.msra.mxu0 %v9108
    %9336 = vmatpush.bf16.msra.mxu0 %v9100
    %9337 = vmatpush.bf16.msra.mxu0 %v9092
    %9338 = vmatpush.bf16.msra.mxu0 %v9084
    %9339 = vmatpush.bf16.msra.mxu0 %v9076
    %9340 = vmatmul.bf16.gmra.mxu0 %v8562
    %v9341 = vpop.f32.mrf.mxu0
    %v9342 = vadd.f32 0.0, %v9341
    %v9343 = vpop.f32.mrf.mxu0
    %9344 = vdwg.mxu0
    %9345 = vmatpush.bf16.msra.mxu0 %v9196
    %9346 = vmatpush.bf16.msra.mxu0 %v9188
    %9347 = vmatpush.bf16.msra.mxu0 %v9180
    %9348 = vmatpush.bf16.msra.mxu0 %v9172
    %9349 = vmatpush.bf16.msra.mxu0 %v9164
    %9350 = vmatpush.bf16.msra.mxu0 %v9156
    %9351 = vmatpush.bf16.msra.mxu0 %v9148
    %9352 = vmatpush.bf16.msra.mxu0 %v9140
    %9353 = vmatmul.bf16.gmra.mxu0 %v8563
    %v9354 = vpop.f32.mrf.mxu0
    %v9355 = vadd.f32 %v9342, %v9354
    %v9356 = vpop.f32.mrf.mxu0
    %9357 = vdwg.mxu0
    %9358 = vmatpush.bf16.msra.mxu0 %v9133
    %9359 = vmatpush.bf16.msra.mxu0 %v9125
    %9360 = vmatpush.bf16.msra.mxu0 %v9117
    %9361 = vmatpush.bf16.msra.mxu0 %v9109
    %9362 = vmatpush.bf16.msra.mxu0 %v9101
    %9363 = vmatpush.bf16.msra.mxu0 %v9093
    %9364 = vmatpush.bf16.msra.mxu0 %v9085
    %9365 = vmatpush.bf16.msra.mxu0 %v9077
    %9366 = vmatmul.bf16.gmra.mxu0 %v8562
    %v9367 = vpop.f32.mrf.mxu0
    %v9368 = vadd.f32 0.0, %v9367
    %v9369 = vpop.f32.mrf.mxu0
    %9370 = vdwg.mxu0
    %9371 = vmatpush.bf16.msra.mxu0 %v9197
    %9372 = vmatpush.bf16.msra.mxu0 %v9189
    %9373 = vmatpush.bf16.msra.mxu0 %v9181
    %9374 = vmatpush.bf16.msra.mxu0 %v9173
    %9375 = vmatpush.bf16.msra.mxu0 %v9165
    %9376 = vmatpush.bf16.msra.mxu0 %v9157
    %9377 = vmatpush.bf16.msra.mxu0 %v9149
    %9378 = vmatpush.bf16.msra.mxu0 %v9141
    %9379 = vmatmul.bf16.gmra.mxu0 %v8563
    %v9380 = vpop.f32.mrf.mxu0
    %v9381 = vadd.f32 %v9368, %v9380
    %v9382 = vpop.f32.mrf.mxu0
    %9383 = vdwg.mxu0
    %9384 = vmatpush.bf16.msra.mxu0 %v9134
    %9385 = vmatpush.bf16.msra.mxu0 %v9126
    %9386 = vmatpush.bf16.msra.mxu0 %v9118
    %9387 = vmatpush.bf16.msra.mxu0 %v9110
    %9388 = vmatpush.bf16.msra.mxu0 %v9102
    %9389 = vmatpush.bf16.msra.mxu0 %v9094
    %9390 = vmatpush.bf16.msra.mxu0 %v9086
    %9391 = vmatpush.bf16.msra.mxu0 %v9078
    %9392 = vmatmul.bf16.gmra.mxu0 %v8562
    %v9393 = vpop.f32.mrf.mxu0
    %v9394 = vadd.f32 0.0, %v9393
    %v9395 = vpop.f32.mrf.mxu0
    %9396 = vdwg.mxu0
    %9397 = vmatpush.bf16.msra.mxu0 %v9198
    %9398 = vmatpush.bf16.msra.mxu0 %v9190
    %9399 = vmatpush.bf16.msra.mxu0 %v9182
    %9400 = vmatpush.bf16.msra.mxu0 %v9174
    %9401 = vmatpush.bf16.msra.mxu0 %v9166
    %9402 = vmatpush.bf16.msra.mxu0 %v9158
    %9403 = vmatpush.bf16.msra.mxu0 %v9150
    %9404 = vmatpush.bf16.msra.mxu0 %v9142
    %9405 = vmatmul.bf16.gmra.mxu0 %v8563
    %v9406 = vpop.f32.mrf.mxu0
    %v9407 = vadd.f32 %v9394, %v9406
    %v9408 = vpop.f32.mrf.mxu0
    %9409 = vdwg.mxu0
    %9410 = vmatpush.bf16.msra.mxu0 %v9135
    %9411 = vmatpush.bf16.msra.mxu0 %v9127
    %9412 = vmatpush.bf16.msra.mxu0 %v9119
    %9413 = vmatpush.bf16.msra.mxu0 %v9111
    %9414 = vmatpush.bf16.msra.mxu0 %v9103
    %9415 = vmatpush.bf16.msra.mxu0 %v9095
    %9416 = vmatpush.bf16.msra.mxu0 %v9087
    %9417 = vmatpush.bf16.msra.mxu0 %v9079
    %9418 = vmatmul.bf16.gmra.mxu0 %v8562
    %v9419 = vpop.f32.mrf.mxu0
    %v9420 = vadd.f32 0.0, %v9419
    %v9421 = vpop.f32.mrf.mxu0
    %9422 = vdwg.mxu0
    %9423 = vmatpush.bf16.msra.mxu0 %v9199
    %9424 = vmatpush.bf16.msra.mxu0 %v9191
    %9425 = vmatpush.bf16.msra.mxu0 %v9183
    %9426 = vmatpush.bf16.msra.mxu0 %v9175
    %9427 = vmatpush.bf16.msra.mxu0 %v9167
    %9428 = vmatpush.bf16.msra.mxu0 %v9159
    %9429 = vmatpush.bf16.msra.mxu0 %v9151
    %9430 = vmatpush.bf16.msra.mxu0 %v9143
    %9431 = vmatmul.bf16.gmra.mxu0 %v8563
    %v9432 = vpop.f32.mrf.mxu0
    %v9433 = vadd.f32 %v9420, %v9432
    %v9434 = vpop.f32.mrf.mxu0
    %9435 = vdwg.mxu0
    %9436 = vmatpush.bf16.msra.mxu0 %v9136
    %9437 = vmatpush.bf16.msra.mxu0 %v9128
    %9438 = vmatpush.bf16.msra.mxu0 %v9120
    %9439 = vmatpush.bf16.msra.mxu0 %v9112
    %9440 = vmatpush.bf16.msra.mxu0 %v9104
    %9441 = vmatpush.bf16.msra.mxu0 %v9096
    %9442 = vmatpush.bf16.msra.mxu0 %v9088
    %9443 = vmatpush.bf16.msra.mxu0 %v9080
    %9444 = vmatmul.bf16.gmra.mxu0 %v8562
    %v9445 = vpop.f32.mrf.mxu0
    %v9446 = vadd.f32 0.0, %v9445
    %v9447 = vpop.f32.mrf.mxu0
    %9448 = vdwg.mxu0
    %9449 = vmatpush.bf16.msra.mxu0 %v9200
    %9450 = vmatpush.bf16.msra.mxu0 %v9192
    %9451 = vmatpush.bf16.msra.mxu0 %v9184
    %9452 = vmatpush.bf16.msra.mxu0 %v9176
    %9453 = vmatpush.bf16.msra.mxu0 %v9168
    %9454 = vmatpush.bf16.msra.mxu0 %v9160
    %9455 = vmatpush.bf16.msra.mxu0 %v9152
    %9456 = vmatpush.bf16.msra.mxu0 %v9144
    %9457 = vmatmul.bf16.gmra.mxu0 %v8563
    %v9458 = vpop.f32.mrf.mxu0
    %v9459 = vadd.f32 %v9446, %v9458
    %v9460 = vpop.f32.mrf.mxu0
    %9461 = vdwg.mxu0
    %9462 = vmatpush.bf16.msra.mxu0 %v9137
    %9463 = vmatpush.bf16.msra.mxu0 %v9129
    %9464 = vmatpush.bf16.msra.mxu0 %v9121
    %9465 = vmatpush.bf16.msra.mxu0 %v9113
    %9466 = vmatpush.bf16.msra.mxu0 %v9105
    %9467 = vmatpush.bf16.msra.mxu0 %v9097
    %9468 = vmatpush.bf16.msra.mxu0 %v9089
    %9469 = vmatpush.bf16.msra.mxu0 %v9081
    %9470 = vmatmul.bf16.gmra.mxu0 %v8562
    %v9471 = vpop.f32.mrf.mxu0
    %v9472 = vadd.f32 0.0, %v9471
    %v9473 = vpop.f32.mrf.mxu0
    %9474 = vdwg.mxu0
    %9475 = vmatpush.bf16.msra.mxu0 %v9201
    %9476 = vmatpush.bf16.msra.mxu0 %v9193
    %9477 = vmatpush.bf16.msra.mxu0 %v9185
    %9478 = vmatpush.bf16.msra.mxu0 %v9177
    %9479 = vmatpush.bf16.msra.mxu0 %v9169
    %9480 = vmatpush.bf16.msra.mxu0 %v9161
    %9481 = vmatpush.bf16.msra.mxu0 %v9153
    %9482 = vmatpush.bf16.msra.mxu0 %v9145
    %9483 = vmatmul.bf16.gmra.mxu0 %v8563
    %v9484 = vpop.f32.mrf.mxu0
    %v9485 = vadd.f32 %v9472, %v9484
    %v9486 = vpop.f32.mrf.mxu0
    %9487 = vdwg.mxu0
    %9488 = vmatpush.bf16.msra.mxu0 %v9138
    %9489 = vmatpush.bf16.msra.mxu0 %v9130
    %9490 = vmatpush.bf16.msra.mxu0 %v9122
    %9491 = vmatpush.bf16.msra.mxu0 %v9114
    %9492 = vmatpush.bf16.msra.mxu0 %v9106
    %9493 = vmatpush.bf16.msra.mxu0 %v9098
    %9494 = vmatpush.bf16.msra.mxu0 %v9090
    %9495 = vmatpush.bf16.msra.mxu0 %v9082
    %9496 = vmatmul.bf16.gmra.mxu0 %v8562
    %v9497 = vpop.f32.mrf.mxu0
    %v9498 = vadd.f32 0.0, %v9497
    %v9499 = vpop.f32.mrf.mxu0
    %9500 = vdwg.mxu0
    %9501 = vmatpush.bf16.msra.mxu0 %v9202
    %9502 = vmatpush.bf16.msra.mxu0 %v9194
    %9503 = vmatpush.bf16.msra.mxu0 %v9186
    %9504 = vmatpush.bf16.msra.mxu0 %v9178
    %9505 = vmatpush.bf16.msra.mxu0 %v9170
    %9506 = vmatpush.bf16.msra.mxu0 %v9162
    %9507 = vmatpush.bf16.msra.mxu0 %v9154
    %9508 = vmatpush.bf16.msra.mxu0 %v9146
    %9509 = vmatmul.bf16.gmra.mxu0 %v8563
    %v9510 = vpop.f32.mrf.mxu0
    %v9511 = vadd.f32 %v9498, %v9510
    %v9512 = vpop.f32.mrf.mxu0
    %9513 = vdwg.mxu0
    %9514 = vmatpush.bf16.msra.mxu0 %v9139
    %9515 = vmatpush.bf16.msra.mxu0 %v9131
    %9516 = vmatpush.bf16.msra.mxu0 %v9123
    %9517 = vmatpush.bf16.msra.mxu0 %v9115
    %9518 = vmatpush.bf16.msra.mxu0 %v9107
    %9519 = vmatpush.bf16.msra.mxu0 %v9099
    %9520 = vmatpush.bf16.msra.mxu0 %v9091
    %9521 = vmatpush.bf16.msra.mxu0 %v9083
    %9522 = vmatmul.bf16.gmra.mxu0 %v8562
    %v9523 = vpop.f32.mrf.mxu0
    %v9524 = vadd.f32 0.0, %v9523
    %v9525 = vpop.f32.mrf.mxu0
    %9526 = vdwg.mxu0
    %9527 = vmatpush.bf16.msra.mxu0 %v9203
    %9528 = vmatpush.bf16.msra.mxu0 %v9195
    %9529 = vmatpush.bf16.msra.mxu0 %v9187
    %9530 = vmatpush.bf16.msra.mxu0 %v9179
    %9531 = vmatpush.bf16.msra.mxu0 %v9171
    %9532 = vmatpush.bf16.msra.mxu0 %v9163
    %9533 = vmatpush.bf16.msra.mxu0 %v9155
    %9534 = vmatpush.bf16.msra.mxu0 %v9147
    %9535 = vmatmul.bf16.gmra.mxu0 %v8563
    %v9536 = vpop.f32.mrf.mxu0
    %v9537 = vadd.f32 %v9524, %v9536
    %v9538 = vpop.f32.mrf.mxu0
    %9539 = vdwg.mxu0
    %v9540 = vld [vmem:[#allocation2 + $0x180] sm:$0xff]
    %v9541 = vld [vmem:[#allocation2 + $0x188] sm:$0xff]
    %v9542 = vld [vmem:[#allocation2 + $0x190] sm:$0xff]
    %v9543 = vld [vmem:[#allocation2 + $0x198] sm:$0xff]
    %v9544 = vadd.f32 %v9540, %v9355
    %v9545 = vadd.f32 %v9541, %v9381
    %v9546 = vadd.f32 %v9542, %v9407
    %v9547 = vadd.f32 %v9543, %v9433
    %v9548 = vld [vmem:[#allocation2 + $0x60] sm:$0xff]
    %v9549 = vld [vmem:[#allocation2 + $0x68] sm:$0xff]
    %v9550 = vld [vmem:[#allocation2 + $0x70] sm:$0xff]
    %v9551 = vld [vmem:[#allocation2 + $0x78] sm:$0xff]
    %v9552 = vadd.f32 %v9548, %v9459
    %v9553 = vadd.f32 %v9549, %v9485
    %v9554 = vadd.f32 %v9550, %v9511
    %v9555 = vadd.f32 %v9551, %v9537
    %v9556 = vxor.u32 %v9544, 2147483648
    %v9557 = vxor.u32 %v9552, 2147483648
    %v9558 = vmul.f32 %v9556, 1.442695
    %v9559 = vpow.pop %v9558
    %v9560 = vmul.f32 %v9557, 1.442695
    %v9561 = vpow.pop %v9560
    %v9562 = vadd.f32 %v9559, 1.0
    %v9563 = vadd.f32 %v9561, 1.0
    %v9564 = vrcp.pop %v9562
    %v9565 = vmul.f32 %v9562, %v9564
    %v9566 = vsub.f32 1.0, %v9565
    %v9567 = vmul.f32 %v9564, %v9566
    %v9568 = vadd.f32 %v9564, %v9567
    %vm9569 = vweird.f32 %v9562
    %vm9570 = vweird.f32 %v9564
    %vm9571 = vmor %vm9569, %vm9570
    %v9572 = vsel %vm9571, %v9564, %v9568
    %v9573 = vand.u32 2147483647, %v9562
    %vm9574 = vcmp.eq.f32.partialorder %v9573, 8.507059e+37
    %v9575 = vand.u32 %v9562, 2147483648
    %v9576 = vor.u32 1.1754944e-38, %v9575
    %v9577 = vsel %vm9574, %v9576, %v9572
    %v9578 = vmul.f32 1.0, %v9577
    %v9579 = vrcp.pop %v9563
    %v9580 = vmul.f32 %v9563, %v9579
    %v9581 = vsub.f32 1.0, %v9580
    %v9582 = vmul.f32 %v9579, %v9581
    %v9583 = vadd.f32 %v9579, %v9582
    %vm9584 = vweird.f32 %v9563
    %vm9585 = vweird.f32 %v9579
    %vm9586 = vmor %vm9584, %vm9585
    %v9587 = vsel %vm9586, %v9579, %v9583
    %v9588 = vand.u32 2147483647, %v9563
    %vm9589 = vcmp.eq.f32.partialorder %v9588, 8.507059e+37
    %v9590 = vand.u32 %v9563, 2147483648
    %v9591 = vor.u32 1.1754944e-38, %v9590
    %v9592 = vsel %vm9589, %v9591, %v9587
    %v9593 = vmul.f32 1.0, %v9592
    %v9594 = vxor.u32 %v9545, 2147483648
    %v9595 = vxor.u32 %v9553, 2147483648
    %v9596 = vmul.f32 %v9594, 1.442695
    %v9597 = vpow.pop %v9596
    %v9598 = vmul.f32 %v9595, 1.442695
    %v9599 = vpow.pop %v9598
    %v9600 = vadd.f32 %v9597, 1.0
    %v9601 = vadd.f32 %v9599, 1.0
    %v9602 = vrcp.pop %v9600
    %v9603 = vmul.f32 %v9600, %v9602
    %v9604 = vsub.f32 1.0, %v9603
    %v9605 = vmul.f32 %v9602, %v9604
    %v9606 = vadd.f32 %v9602, %v9605
    %vm9607 = vweird.f32 %v9600
    %vm9608 = vweird.f32 %v9602
    %vm9609 = vmor %vm9607, %vm9608
    %v9610 = vsel %vm9609, %v9602, %v9606
    %v9611 = vand.u32 2147483647, %v9600
    %vm9612 = vcmp.eq.f32.partialorder %v9611, 8.507059e+37
    %v9613 = vand.u32 %v9600, 2147483648
    %v9614 = vor.u32 1.1754944e-38, %v9613
    %v9615 = vsel %vm9612, %v9614, %v9610
    %v9616 = vmul.f32 1.0, %v9615
    %v9617 = vrcp.pop %v9601
    %v9618 = vmul.f32 %v9601, %v9617
    %v9619 = vsub.f32 1.0, %v9618
    %v9620 = vmul.f32 %v9617, %v9619
    %v9621 = vadd.f32 %v9617, %v9620
    %vm9622 = vweird.f32 %v9601
    %vm9623 = vweird.f32 %v9617
    %vm9624 = vmor %vm9622, %vm9623
    %v9625 = vsel %vm9624, %v9617, %v9621
    %v9626 = vand.u32 2147483647, %v9601
    %vm9627 = vcmp.eq.f32.partialorder %v9626, 8.507059e+37
    %v9628 = vand.u32 %v9601, 2147483648
    %v9629 = vor.u32 1.1754944e-38, %v9628
    %v9630 = vsel %vm9627, %v9629, %v9625
    %v9631 = vmul.f32 1.0, %v9630
    %v9632 = vtanh.pop %v9546
    %v9633 = vtanh.pop %v9554
    %v9634 = vxor.u32 %v9547, 2147483648
    %v9635 = vxor.u32 %v9555, 2147483648
    %v9636 = vmul.f32 %v9634, 1.442695
    %v9637 = vpow.pop %v9636
    %v9638 = vmul.f32 %v9635, 1.442695
    %v9639 = vpow.pop %v9638
    %v9640 = vadd.f32 %v9637, 1.0
    %v9641 = vadd.f32 %v9639, 1.0
    %v9642 = vrcp.pop %v9640
    %v9643 = vmul.f32 %v9640, %v9642
    %v9644 = vsub.f32 1.0, %v9643
    %v9645 = vmul.f32 %v9642, %v9644
    %v9646 = vadd.f32 %v9642, %v9645
    %vm9647 = vweird.f32 %v9640
    %vm9648 = vweird.f32 %v9642
    %vm9649 = vmor %vm9647, %vm9648
    %v9650 = vsel %vm9649, %v9642, %v9646
    %v9651 = vand.u32 2147483647, %v9640
    %vm9652 = vcmp.eq.f32.partialorder %v9651, 8.507059e+37
    %v9653 = vand.u32 %v9640, 2147483648
    %v9654 = vor.u32 1.1754944e-38, %v9653
    %v9655 = vsel %vm9652, %v9654, %v9650
    %v9656 = vmul.f32 1.0, %v9655
    %v9657 = vrcp.pop %v9641
    %v9658 = vmul.f32 %v9641, %v9657
    %v9659 = vsub.f32 1.0, %v9658
    %v9660 = vmul.f32 %v9657, %v9659
    %v9661 = vadd.f32 %v9657, %v9660
    %vm9662 = vweird.f32 %v9641
    %vm9663 = vweird.f32 %v9657
    %vm9664 = vmor %vm9662, %vm9663
    %v9665 = vsel %vm9664, %v9657, %v9661
    %v9666 = vand.u32 2147483647, %v9641
    %vm9667 = vcmp.eq.f32.partialorder %v9666, 8.507059e+37
    %v9668 = vand.u32 %v9641, 2147483648
    %v9669 = vor.u32 1.1754944e-38, %v9668
    %v9670 = vsel %vm9667, %v9669, %v9665
    %v9671 = vmul.f32 1.0, %v9670
    %v9672 = vld [vmem:[#allocation4] sm:$0xff]
    %v9673 = vld [vmem:[#allocation4 + $0x8] sm:$0xff]
    %v9674 = vmul.f32 %v9616, %v9672
    %v9675 = vmul.f32 %v9631, %v9673
    %v9676 = vmul.f32 %v9578, %v9632
    %v9677 = vmul.f32 %v9593, %v9633
    %v9678 = vadd.f32 %v9674, %v9676
    %v9679 = vadd.f32 %v9675, %v9677
    %v9680 = vtanh.pop %v9678
    %v9681 = vtanh.pop %v9679
    %v9682 = vmul.f32 %v9656, %v9680
    %v9683 = vmul.f32 %v9671, %v9681
    %9684 = vst [vmem:[#allocation4] sm:$0xff] %v9678
    %9685 = vst [vmem:[#allocation4 + $0x8] sm:$0xff] %v9679
    %9686 = vst [vmem:[#allocation3] sm:$0xff] %v9682
    %9687 = vst [vmem:[#allocation3 + $0x8] sm:$0xff] %v9683
    %v9688 = vpack.c.bf16 %v9683, %v9682
    %v9689 = vld [vmem:[%s6 + $0x30] sm:$0xff]
    %v9690 = vld [vmem:[%s4] sm:$0xf]
    %v9691 = vld [vmem:[%s4 + $0x4] sm:$0xf]
    %v9692 = vld [vmem:[%s4 + $0x8] sm:$0xf]
    %v9693 = vld [vmem:[%s4 + $0xc] sm:$0xf]
    %v9694 = vld [vmem:[%s4 + $0x10] sm:$0xf]
    %v9695 = vld [vmem:[%s4 + $0x14] sm:$0xf]
    %v9696 = vld [vmem:[%s4 + $0x18] sm:$0xf]
    %v9697 = vld [vmem:[%s4 + $0x1c] sm:$0xf]
    %v9698 = vld [vmem:[%s4 + $0x20] sm:$0xf]
    %v9699 = vld [vmem:[%s4 + $0x24] sm:$0xf]
    %v9700 = vld [vmem:[%s4 + $0x28] sm:$0xf]
    %v9701 = vld [vmem:[%s4 + $0x2c] sm:$0xf]
    %v9702 = vld [vmem:[%s4 + $0x30] sm:$0xf]
    %v9703 = vld [vmem:[%s4 + $0x34] sm:$0xf]
    %v9704 = vld [vmem:[%s4 + $0x38] sm:$0xf]
    %v9705 = vld [vmem:[%s4 + $0x3c] sm:$0xf]
    %v9722 = vunpack.c.l.b16 %v9690
    %v9723 = vunpack.c.l.b16 %v9691
    %v9724 = vunpack.c.l.b16 %v9692
    %v9725 = vunpack.c.l.b16 %v9693
    %v9726 = vunpack.c.l.b16 %v9694
    %v9727 = vunpack.c.l.b16 %v9695
    %v9728 = vunpack.c.l.b16 %v9696
    %v9729 = vunpack.c.l.b16 %v9697
    %v9730 = vunpack.c.l.b16 %v9698
    %v9731 = vunpack.c.l.b16 %v9699
    %v9732 = vunpack.c.l.b16 %v9700
    %v9733 = vunpack.c.l.b16 %v9701
    %v9734 = vunpack.c.l.b16 %v9702
    %v9735 = vunpack.c.l.b16 %v9703
    %v9736 = vunpack.c.l.b16 %v9704
    %v9737 = vunpack.c.l.b16 %v9705
    %v9738 = vpack.c.b16 %v9723, %v9722
    %v9739 = vpack.c.b16 %v9725, %v9724
    %v9740 = vpack.c.b16 %v9727, %v9726
    %v9741 = vpack.c.b16 %v9729, %v9728
    %v9742 = vpack.c.b16 %v9731, %v9730
    %v9743 = vpack.c.b16 %v9733, %v9732
    %v9744 = vpack.c.b16 %v9735, %v9734
    %v9745 = vpack.c.b16 %v9737, %v9736
    %9754 = vmatpush.bf16.msra.mxu0 %v9745
    %9755 = vmatpush.bf16.msra.mxu0 %v9744
    %9756 = vmatpush.bf16.msra.mxu0 %v9743
    %9757 = vmatpush.bf16.msra.mxu0 %v9742
    %9758 = vmatpush.bf16.msra.mxu0 %v9741
    %9759 = vmatpush.bf16.msra.mxu0 %v9740
    %9760 = vmatpush.bf16.msra.mxu0 %v9739
    %9761 = vmatpush.bf16.msra.mxu0 %v9738
    %9762 = vmatmul.bf16.gmra.mxu0 %v9688
    %v9763 = vpop.f32.mrf.mxu0
    %v9764 = vadd.f32 0.0, %v9763
    %v9765 = vpop.f32.mrf.mxu0
    %9766 = vdwg.mxu0
    %v9767 = vadd.f32 %v9689, %v9764
    %9768 = vst [vmem:[%s6 + $0x30] sm:$0xff] %v9767
    %v9769 = vld [vmem:[%s6 + $0x8] sm:$0xff]
    %v9770 = vld [vmem:[%s4 + $0x40] sm:$0xf]
    %v9771 = vld [vmem:[%s4 + $0x44] sm:$0xf]
    %v9772 = vld [vmem:[%s4 + $0x48] sm:$0xf]
    %v9773 = vld [vmem:[%s4 + $0x4c] sm:$0xf]
    %v9774 = vld [vmem:[%s4 + $0x50] sm:$0xf]
    %v9775 = vld [vmem:[%s4 + $0x54] sm:$0xf]
    %v9776 = vld [vmem:[%s4 + $0x58] sm:$0xf]
    %v9777 = vld [vmem:[%s4 + $0x5c] sm:$0xf]
    %v9778 = vld [vmem:[%s4 + $0x60] sm:$0xf]
    %v9779 = vld [vmem:[%s4 + $0x64] sm:$0xf]
    %v9780 = vld [vmem:[%s4 + $0x68] sm:$0xf]
    %v9781 = vld [vmem:[%s4 + $0x6c] sm:$0xf]
    %v9782 = vld [vmem:[%s4 + $0x70] sm:$0xf]
    %v9783 = vld [vmem:[%s4 + $0x74] sm:$0xf]
    %v9784 = vld [vmem:[%s4 + $0x78] sm:$0xf]
    %v9785 = vld [vmem:[%s4 + $0x7c] sm:$0xf]
    %v9787 = vunpack.c.h.b16 %v9688
    %v9788 = vpack.c.b16 %v9787, %v9787
    %v9806 = vunpack.c.l.b16 %v9770
    %v9807 = vunpack.c.l.b16 %v9771
    %v9808 = vunpack.c.l.b16 %v9772
    %v9809 = vunpack.c.l.b16 %v9773
    %v9810 = vunpack.c.l.b16 %v9774
    %v9811 = vunpack.c.l.b16 %v9775
    %v9812 = vunpack.c.l.b16 %v9776
    %v9813 = vunpack.c.l.b16 %v9777
    %v9814 = vunpack.c.l.b16 %v9778
    %v9815 = vunpack.c.l.b16 %v9779
    %v9816 = vunpack.c.l.b16 %v9780
    %v9817 = vunpack.c.l.b16 %v9781
    %v9818 = vunpack.c.l.b16 %v9782
    %v9819 = vunpack.c.l.b16 %v9783
    %v9820 = vunpack.c.l.b16 %v9784
    %v9821 = vunpack.c.l.b16 %v9785
    %v9822 = vpack.c.b16 %v9807, %v9806
    %v9823 = vpack.c.b16 %v9809, %v9808
    %v9824 = vpack.c.b16 %v9811, %v9810
    %v9825 = vpack.c.b16 %v9813, %v9812
    %v9826 = vpack.c.b16 %v9815, %v9814
    %v9827 = vpack.c.b16 %v9817, %v9816
    %v9828 = vpack.c.b16 %v9819, %v9818
    %v9829 = vpack.c.b16 %v9821, %v9820
    %9838 = vmatpush.bf16.msra.mxu0 %v9829
    %9839 = vmatpush.bf16.msra.mxu0 %v9828
    %9840 = vmatpush.bf16.msra.mxu0 %v9827
    %9841 = vmatpush.bf16.msra.mxu0 %v9826
    %9842 = vmatpush.bf16.msra.mxu0 %v9825
    %9843 = vmatpush.bf16.msra.mxu0 %v9824
    %9844 = vmatpush.bf16.msra.mxu0 %v9823
    %9845 = vmatpush.bf16.msra.mxu0 %v9822
    %9846 = vmatmul.bf16.gmra.mxu0 %v9788
    %v9847 = vpop.f32.mrf.mxu0
    %v9848 = vadd.f32 0.0, %v9847
    %v9849 = vpop.f32.mrf.mxu0
    %9850 = vdwg.mxu0
    %v9851 = vadd.f32 %v9769, %v9848
    %9852 = vst [vmem:[%s6 + $0x8] sm:$0xff] %v9851
    %v9853 = vld [vmem:[#allocation3] sm:$0xff]
    %v9854 = vld [vmem:[#allocation3 + $0x8] sm:$0xff]
    %v9855 = vpack.c.bf16 %v9853, %v9853
    %v9856 = vpack.c.bf16 %v9854, %v9854
    %v9857 = vld [vmem:[#allocation7] sm:$0xff]
    %v9858 = vld [vmem:[#allocation7 + $0x8] sm:$0xff]
    %v9859 = vld [vmem:[#allocation7 + $0x10] sm:$0xff]
    %v9860 = vld [vmem:[#allocation7 + $0x18] sm:$0xff]
    %v9861 = vld [vmem:[#allocation7 + $0x20] sm:$0xff]
    %v9862 = vld [vmem:[#allocation7 + $0x28] sm:$0xff]
    %v9863 = vld [vmem:[#allocation7 + $0x30] sm:$0xff]
    %v9864 = vld [vmem:[#allocation7 + $0x38] sm:$0xff]
    %v9865 = vld [vmem:[#allocation7 + $0x40] sm:$0xff]
    %v9866 = vld [vmem:[#allocation7 + $0x48] sm:$0xff]
    %v9867 = vld [vmem:[#allocation7 + $0x50] sm:$0xff]
    %v9868 = vld [vmem:[#allocation7 + $0x58] sm:$0xff]
    %v9869 = vld [vmem:[#allocation7 + $0x60] sm:$0xff]
    %v9870 = vld [vmem:[#allocation7 + $0x68] sm:$0xff]
    %v9871 = vld [vmem:[#allocation7 + $0x70] sm:$0xff]
    %v9872 = vld [vmem:[#allocation7 + $0x78] sm:$0xff]
    %v9873 = vld [vmem:[#allocation7 + $0x80] sm:$0xff]
    %v9874 = vld [vmem:[#allocation7 + $0x88] sm:$0xff]
    %v9875 = vld [vmem:[#allocation7 + $0x90] sm:$0xff]
    %v9876 = vld [vmem:[#allocation7 + $0x98] sm:$0xff]
    %v9877 = vld [vmem:[#allocation7 + $0xa0] sm:$0xff]
    %v9878 = vld [vmem:[#allocation7 + $0xa8] sm:$0xff]
    %v9879 = vld [vmem:[#allocation7 + $0xb0] sm:$0xff]
    %v9880 = vld [vmem:[#allocation7 + $0xb8] sm:$0xff]
    %v9881 = vld [vmem:[#allocation7 + $0xc0] sm:$0xff]
    %v9882 = vld [vmem:[#allocation7 + $0xc8] sm:$0xff]
    %v9883 = vld [vmem:[#allocation7 + $0xd0] sm:$0xff]
    %v9884 = vld [vmem:[#allocation7 + $0xd8] sm:$0xff]
    %v9885 = vld [vmem:[#allocation7 + $0xe0] sm:$0xff]
    %v9886 = vld [vmem:[#allocation7 + $0xe8] sm:$0xff]
    %v9887 = vld [vmem:[#allocation7 + $0xf0] sm:$0xff]
    %v9888 = vld [vmem:[#allocation7 + $0xf8] sm:$0xff]
    %v9889 = vld [vmem:[#allocation7 + $0x100] sm:$0xff]
    %v9890 = vld [vmem:[#allocation7 + $0x108] sm:$0xff]
    %v9891 = vld [vmem:[#allocation7 + $0x110] sm:$0xff]
    %v9892 = vld [vmem:[#allocation7 + $0x118] sm:$0xff]
    %v9893 = vld [vmem:[#allocation7 + $0x120] sm:$0xff]
    %v9894 = vld [vmem:[#allocation7 + $0x128] sm:$0xff]
    %v9895 = vld [vmem:[#allocation7 + $0x130] sm:$0xff]
    %v9896 = vld [vmem:[#allocation7 + $0x138] sm:$0xff]
    %v9897 = vld [vmem:[#allocation7 + $0x140] sm:$0xff]
    %v9898 = vld [vmem:[#allocation7 + $0x148] sm:$0xff]
    %v9899 = vld [vmem:[#allocation7 + $0x150] sm:$0xff]
    %v9900 = vld [vmem:[#allocation7 + $0x158] sm:$0xff]
    %v9901 = vld [vmem:[#allocation7 + $0x160] sm:$0xff]
    %v9902 = vld [vmem:[#allocation7 + $0x168] sm:$0xff]
    %v9903 = vld [vmem:[#allocation7 + $0x170] sm:$0xff]
    %v9904 = vld [vmem:[#allocation7 + $0x178] sm:$0xff]
    %v9905 = vld [vmem:[#allocation7 + $0x180] sm:$0xff]
    %v9906 = vld [vmem:[#allocation7 + $0x188] sm:$0xff]
    %v9907 = vld [vmem:[#allocation7 + $0x190] sm:$0xff]
    %v9908 = vld [vmem:[#allocation7 + $0x198] sm:$0xff]
    %v9909 = vld [vmem:[#allocation7 + $0x1a0] sm:$0xff]
    %v9910 = vld [vmem:[#allocation7 + $0x1a8] sm:$0xff]
    %v9911 = vld [vmem:[#allocation7 + $0x1b0] sm:$0xff]
    %v9912 = vld [vmem:[#allocation7 + $0x1b8] sm:$0xff]
    %v9913 = vld [vmem:[#allocation7 + $0x1c0] sm:$0xff]
    %v9914 = vld [vmem:[#allocation7 + $0x1c8] sm:$0xff]
    %v9915 = vld [vmem:[#allocation7 + $0x1d0] sm:$0xff]
    %v9916 = vld [vmem:[#allocation7 + $0x1d8] sm:$0xff]
    %v9917 = vld [vmem:[#allocation7 + $0x1e0] sm:$0xff]
    %v9918 = vld [vmem:[#allocation7 + $0x1e8] sm:$0xff]
    %v9919 = vld [vmem:[#allocation7 + $0x1f0] sm:$0xff]
    %v9920 = vld [vmem:[#allocation7 + $0x1f8] sm:$0xff]
    %v9921 = vld [vmem:[#allocation7 + $0x200] sm:$0xff]
    %v9922 = vld [vmem:[#allocation7 + $0x208] sm:$0xff]
    %v9923 = vld [vmem:[#allocation7 + $0x210] sm:$0xff]
    %v9924 = vld [vmem:[#allocation7 + $0x218] sm:$0xff]
    %v9925 = vld [vmem:[#allocation7 + $0x220] sm:$0xff]
    %v9926 = vld [vmem:[#allocation7 + $0x228] sm:$0xff]
    %v9927 = vld [vmem:[#allocation7 + $0x230] sm:$0xff]
    %v9928 = vld [vmem:[#allocation7 + $0x238] sm:$0xff]
    %v9929 = vld [vmem:[#allocation7 + $0x240] sm:$0xff]
    %v9930 = vld [vmem:[#allocation7 + $0x248] sm:$0xff]
    %v9931 = vld [vmem:[#allocation7 + $0x250] sm:$0xff]
    %v9932 = vld [vmem:[#allocation7 + $0x258] sm:$0xff]
    %v9933 = vld [vmem:[#allocation7 + $0x260] sm:$0xff]
    %v9934 = vld [vmem:[#allocation7 + $0x268] sm:$0xff]
    %v9935 = vld [vmem:[#allocation7 + $0x270] sm:$0xff]
    %v9936 = vld [vmem:[#allocation7 + $0x278] sm:$0xff]
    %v9937 = vld [vmem:[#allocation7 + $0x280] sm:$0xff]
    %v9938 = vld [vmem:[#allocation7 + $0x288] sm:$0xff]
    %v9939 = vld [vmem:[#allocation7 + $0x290] sm:$0xff]
    %v9940 = vld [vmem:[#allocation7 + $0x298] sm:$0xff]
    %v9941 = vld [vmem:[#allocation7 + $0x2a0] sm:$0xff]
    %v9942 = vld [vmem:[#allocation7 + $0x2a8] sm:$0xff]
    %v9943 = vld [vmem:[#allocation7 + $0x2b0] sm:$0xff]
    %v9944 = vld [vmem:[#allocation7 + $0x2b8] sm:$0xff]
    %v9945 = vld [vmem:[#allocation7 + $0x2c0] sm:$0xff]
    %v9946 = vld [vmem:[#allocation7 + $0x2c8] sm:$0xff]
    %v9947 = vld [vmem:[#allocation7 + $0x2d0] sm:$0xff]
    %v9948 = vld [vmem:[#allocation7 + $0x2d8] sm:$0xff]
    %v9949 = vld [vmem:[#allocation7 + $0x2e0] sm:$0xff]
    %v9950 = vld [vmem:[#allocation7 + $0x2e8] sm:$0xff]
    %v9951 = vld [vmem:[#allocation7 + $0x2f0] sm:$0xff]
    %v9952 = vld [vmem:[#allocation7 + $0x2f8] sm:$0xff]
    %v9953 = vld [vmem:[#allocation7 + $0x300] sm:$0xff]
    %v9954 = vld [vmem:[#allocation7 + $0x308] sm:$0xff]
    %v9955 = vld [vmem:[#allocation7 + $0x310] sm:$0xff]
    %v9956 = vld [vmem:[#allocation7 + $0x318] sm:$0xff]
    %v9957 = vld [vmem:[#allocation7 + $0x320] sm:$0xff]
    %v9958 = vld [vmem:[#allocation7 + $0x328] sm:$0xff]
    %v9959 = vld [vmem:[#allocation7 + $0x330] sm:$0xff]
    %v9960 = vld [vmem:[#allocation7 + $0x338] sm:$0xff]
    %v9961 = vld [vmem:[#allocation7 + $0x340] sm:$0xff]
    %v9962 = vld [vmem:[#allocation7 + $0x348] sm:$0xff]
    %v9963 = vld [vmem:[#allocation7 + $0x350] sm:$0xff]
    %v9964 = vld [vmem:[#allocation7 + $0x358] sm:$0xff]
    %v9965 = vld [vmem:[#allocation7 + $0x360] sm:$0xff]
    %v9966 = vld [vmem:[#allocation7 + $0x368] sm:$0xff]
    %v9967 = vld [vmem:[#allocation7 + $0x370] sm:$0xff]
    %v9968 = vld [vmem:[#allocation7 + $0x378] sm:$0xff]
    %v9969 = vld [vmem:[#allocation7 + $0x380] sm:$0xff]
    %v9970 = vld [vmem:[#allocation7 + $0x388] sm:$0xff]
    %v9971 = vld [vmem:[#allocation7 + $0x390] sm:$0xff]
    %v9972 = vld [vmem:[#allocation7 + $0x398] sm:$0xff]
    %v9973 = vld [vmem:[#allocation7 + $0x3a0] sm:$0xff]
    %v9974 = vld [vmem:[#allocation7 + $0x3a8] sm:$0xff]
    %v9975 = vld [vmem:[#allocation7 + $0x3b0] sm:$0xff]
    %v9976 = vld [vmem:[#allocation7 + $0x3b8] sm:$0xff]
    %v9977 = vld [vmem:[#allocation7 + $0x3c0] sm:$0xff]
    %v9978 = vld [vmem:[#allocation7 + $0x3c8] sm:$0xff]
    %v9979 = vld [vmem:[#allocation7 + $0x3d0] sm:$0xff]
    %v9980 = vld [vmem:[#allocation7 + $0x3d8] sm:$0xff]
    %v9981 = vld [vmem:[#allocation7 + $0x3e0] sm:$0xff]
    %v9982 = vld [vmem:[#allocation7 + $0x3e8] sm:$0xff]
    %v9983 = vld [vmem:[#allocation7 + $0x3f0] sm:$0xff]
    %v9984 = vld [vmem:[#allocation7 + $0x3f8] sm:$0xff]
    %v10113 = vunpack.c.l.b16 %v9857
    %v10114 = vunpack.c.h.b16 %v9857
    %v10115 = vunpack.c.l.b16 %v9858
    %v10116 = vunpack.c.h.b16 %v9858
    %v10117 = vunpack.c.l.b16 %v9859
    %v10118 = vunpack.c.h.b16 %v9859
    %v10119 = vunpack.c.l.b16 %v9860
    %v10120 = vunpack.c.h.b16 %v9860
    %v10121 = vunpack.c.l.b16 %v9861
    %v10122 = vunpack.c.h.b16 %v9861
    %v10123 = vunpack.c.l.b16 %v9862
    %v10124 = vunpack.c.h.b16 %v9862
    %v10125 = vunpack.c.l.b16 %v9863
    %v10126 = vunpack.c.h.b16 %v9863
    %v10127 = vunpack.c.l.b16 %v9864
    %v10128 = vunpack.c.h.b16 %v9864
    %v10129 = vunpack.c.l.b16 %v9865
    %v10130 = vunpack.c.h.b16 %v9865
    %v10131 = vunpack.c.l.b16 %v9866
    %v10132 = vunpack.c.h.b16 %v9866
    %v10133 = vunpack.c.l.b16 %v9867
    %v10134 = vunpack.c.h.b16 %v9867
    %v10135 = vunpack.c.l.b16 %v9868
    %v10136 = vunpack.c.h.b16 %v9868
    %v10137 = vunpack.c.l.b16 %v9869
    %v10138 = vunpack.c.h.b16 %v9869
    %v10139 = vunpack.c.l.b16 %v9870
    %v10140 = vunpack.c.h.b16 %v9870
    %v10141 = vunpack.c.l.b16 %v9871
    %v10142 = vunpack.c.h.b16 %v9871
    %v10143 = vunpack.c.l.b16 %v9872
    %v10144 = vunpack.c.h.b16 %v9872
    %v10145 = vunpack.c.l.b16 %v9873
    %v10146 = vunpack.c.h.b16 %v9873
    %v10147 = vunpack.c.l.b16 %v9874
    %v10148 = vunpack.c.h.b16 %v9874
    %v10149 = vunpack.c.l.b16 %v9875
    %v10150 = vunpack.c.h.b16 %v9875
    %v10151 = vunpack.c.l.b16 %v9876
    %v10152 = vunpack.c.h.b16 %v9876
    %v10153 = vunpack.c.l.b16 %v9877
    %v10154 = vunpack.c.h.b16 %v9877
    %v10155 = vunpack.c.l.b16 %v9878
    %v10156 = vunpack.c.h.b16 %v9878
    %v10157 = vunpack.c.l.b16 %v9879
    %v10158 = vunpack.c.h.b16 %v9879
    %v10159 = vunpack.c.l.b16 %v9880
    %v10160 = vunpack.c.h.b16 %v9880
    %v10161 = vunpack.c.l.b16 %v9881
    %v10162 = vunpack.c.h.b16 %v9881
    %v10163 = vunpack.c.l.b16 %v9882
    %v10164 = vunpack.c.h.b16 %v9882
    %v10165 = vunpack.c.l.b16 %v9883
    %v10166 = vunpack.c.h.b16 %v9883
    %v10167 = vunpack.c.l.b16 %v9884
    %v10168 = vunpack.c.h.b16 %v9884
    %v10169 = vunpack.c.l.b16 %v9885
    %v10170 = vunpack.c.h.b16 %v9885
    %v10171 = vunpack.c.l.b16 %v9886
    %v10172 = vunpack.c.h.b16 %v9886
    %v10173 = vunpack.c.l.b16 %v9887
    %v10174 = vunpack.c.h.b16 %v9887
    %v10175 = vunpack.c.l.b16 %v9888
    %v10176 = vunpack.c.h.b16 %v9888
    %v10177 = vunpack.c.l.b16 %v9889
    %v10178 = vunpack.c.h.b16 %v9889
    %v10179 = vunpack.c.l.b16 %v9890
    %v10180 = vunpack.c.h.b16 %v9890
    %v10181 = vunpack.c.l.b16 %v9891
    %v10182 = vunpack.c.h.b16 %v9891
    %v10183 = vunpack.c.l.b16 %v9892
    %v10184 = vunpack.c.h.b16 %v9892
    %v10185 = vunpack.c.l.b16 %v9893
    %v10186 = vunpack.c.h.b16 %v9893
    %v10187 = vunpack.c.l.b16 %v9894
    %v10188 = vunpack.c.h.b16 %v9894
    %v10189 = vunpack.c.l.b16 %v9895
    %v10190 = vunpack.c.h.b16 %v9895
    %v10191 = vunpack.c.l.b16 %v9896
    %v10192 = vunpack.c.h.b16 %v9896
    %v10193 = vunpack.c.l.b16 %v9897
    %v10194 = vunpack.c.h.b16 %v9897
    %v10195 = vunpack.c.l.b16 %v9898
    %v10196 = vunpack.c.h.b16 %v9898
    %v10197 = vunpack.c.l.b16 %v9899
    %v10198 = vunpack.c.h.b16 %v9899
    %v10199 = vunpack.c.l.b16 %v9900
    %v10200 = vunpack.c.h.b16 %v9900
    %v10201 = vunpack.c.l.b16 %v9901
    %v10202 = vunpack.c.h.b16 %v9901
    %v10203 = vunpack.c.l.b16 %v9902
    %v10204 = vunpack.c.h.b16 %v9902
    %v10205 = vunpack.c.l.b16 %v9903
    %v10206 = vunpack.c.h.b16 %v9903
    %v10207 = vunpack.c.l.b16 %v9904
    %v10208 = vunpack.c.h.b16 %v9904
    %v10209 = vunpack.c.l.b16 %v9905
    %v10210 = vunpack.c.h.b16 %v9905
    %v10211 = vunpack.c.l.b16 %v9906
    %v10212 = vunpack.c.h.b16 %v9906
    %v10213 = vunpack.c.l.b16 %v9907
    %v10214 = vunpack.c.h.b16 %v9907
    %v10215 = vunpack.c.l.b16 %v9908
    %v10216 = vunpack.c.h.b16 %v9908
    %v10217 = vunpack.c.l.b16 %v9909
    %v10218 = vunpack.c.h.b16 %v9909
    %v10219 = vunpack.c.l.b16 %v9910
    %v10220 = vunpack.c.h.b16 %v9910
    %v10221 = vunpack.c.l.b16 %v9911
    %v10222 = vunpack.c.h.b16 %v9911
    %v10223 = vunpack.c.l.b16 %v9912
    %v10224 = vunpack.c.h.b16 %v9912
    %v10225 = vunpack.c.l.b16 %v9913
    %v10226 = vunpack.c.h.b16 %v9913
    %v10227 = vunpack.c.l.b16 %v9914
    %v10228 = vunpack.c.h.b16 %v9914
    %v10229 = vunpack.c.l.b16 %v9915
    %v10230 = vunpack.c.h.b16 %v9915
    %v10231 = vunpack.c.l.b16 %v9916
    %v10232 = vunpack.c.h.b16 %v9916
    %v10233 = vunpack.c.l.b16 %v9917
    %v10234 = vunpack.c.h.b16 %v9917
    %v10235 = vunpack.c.l.b16 %v9918
    %v10236 = vunpack.c.h.b16 %v9918
    %v10237 = vunpack.c.l.b16 %v9919
    %v10238 = vunpack.c.h.b16 %v9919
    %v10239 = vunpack.c.l.b16 %v9920
    %v10240 = vunpack.c.h.b16 %v9920
    %v10241 = vunpack.c.l.b16 %v9921
    %v10242 = vunpack.c.h.b16 %v9921
    %v10243 = vunpack.c.l.b16 %v9922
    %v10244 = vunpack.c.h.b16 %v9922
    %v10245 = vunpack.c.l.b16 %v9923
    %v10246 = vunpack.c.h.b16 %v9923
    %v10247 = vunpack.c.l.b16 %v9924
    %v10248 = vunpack.c.h.b16 %v9924
    %v10249 = vunpack.c.l.b16 %v9925
    %v10250 = vunpack.c.h.b16 %v9925
    %v10251 = vunpack.c.l.b16 %v9926
    %v10252 = vunpack.c.h.b16 %v9926
    %v10253 = vunpack.c.l.b16 %v9927
    %v10254 = vunpack.c.h.b16 %v9927
    %v10255 = vunpack.c.l.b16 %v9928
    %v10256 = vunpack.c.h.b16 %v9928
    %v10257 = vunpack.c.l.b16 %v9929
    %v10258 = vunpack.c.h.b16 %v9929
    %v10259 = vunpack.c.l.b16 %v9930
    %v10260 = vunpack.c.h.b16 %v9930
    %v10261 = vunpack.c.l.b16 %v9931
    %v10262 = vunpack.c.h.b16 %v9931
    %v10263 = vunpack.c.l.b16 %v9932
    %v10264 = vunpack.c.h.b16 %v9932
    %v10265 = vunpack.c.l.b16 %v9933
    %v10266 = vunpack.c.h.b16 %v9933
    %v10267 = vunpack.c.l.b16 %v9934
    %v10268 = vunpack.c.h.b16 %v9934
    %v10269 = vunpack.c.l.b16 %v9935
    %v10270 = vunpack.c.h.b16 %v9935
    %v10271 = vunpack.c.l.b16 %v9936
    %v10272 = vunpack.c.h.b16 %v9936
    %v10273 = vunpack.c.l.b16 %v9937
    %v10274 = vunpack.c.h.b16 %v9937
    %v10275 = vunpack.c.l.b16 %v9938
    %v10276 = vunpack.c.h.b16 %v9938
    %v10277 = vunpack.c.l.b16 %v9939
    %v10278 = vunpack.c.h.b16 %v9939
    %v10279 = vunpack.c.l.b16 %v9940
    %v10280 = vunpack.c.h.b16 %v9940
    %v10281 = vunpack.c.l.b16 %v9941
    %v10282 = vunpack.c.h.b16 %v9941
    %v10283 = vunpack.c.l.b16 %v9942
    %v10284 = vunpack.c.h.b16 %v9942
    %v10285 = vunpack.c.l.b16 %v9943
    %v10286 = vunpack.c.h.b16 %v9943
    %v10287 = vunpack.c.l.b16 %v9944
    %v10288 = vunpack.c.h.b16 %v9944
    %v10289 = vunpack.c.l.b16 %v9945
    %v10290 = vunpack.c.h.b16 %v9945
    %v10291 = vunpack.c.l.b16 %v9946
    %v10292 = vunpack.c.h.b16 %v9946
    %v10293 = vunpack.c.l.b16 %v9947
    %v10294 = vunpack.c.h.b16 %v9947
    %v10295 = vunpack.c.l.b16 %v9948
    %v10296 = vunpack.c.h.b16 %v9948
    %v10297 = vunpack.c.l.b16 %v9949
    %v10298 = vunpack.c.h.b16 %v9949
    %v10299 = vunpack.c.l.b16 %v9950
    %v10300 = vunpack.c.h.b16 %v9950
    %v10301 = vunpack.c.l.b16 %v9951
    %v10302 = vunpack.c.h.b16 %v9951
    %v10303 = vunpack.c.l.b16 %v9952
    %v10304 = vunpack.c.h.b16 %v9952
    %v10305 = vunpack.c.l.b16 %v9953
    %v10306 = vunpack.c.h.b16 %v9953
    %v10307 = vunpack.c.l.b16 %v9954
    %v10308 = vunpack.c.h.b16 %v9954
    %v10309 = vunpack.c.l.b16 %v9955
    %v10310 = vunpack.c.h.b16 %v9955
    %v10311 = vunpack.c.l.b16 %v9956
    %v10312 = vunpack.c.h.b16 %v9956
    %v10313 = vunpack.c.l.b16 %v9957
    %v10314 = vunpack.c.h.b16 %v9957
    %v10315 = vunpack.c.l.b16 %v9958
    %v10316 = vunpack.c.h.b16 %v9958
    %v10317 = vunpack.c.l.b16 %v9959
    %v10318 = vunpack.c.h.b16 %v9959
    %v10319 = vunpack.c.l.b16 %v9960
    %v10320 = vunpack.c.h.b16 %v9960
    %v10321 = vunpack.c.l.b16 %v9961
    %v10322 = vunpack.c.h.b16 %v9961
    %v10323 = vunpack.c.l.b16 %v9962
    %v10324 = vunpack.c.h.b16 %v9962
    %v10325 = vunpack.c.l.b16 %v9963
    %v10326 = vunpack.c.h.b16 %v9963
    %v10327 = vunpack.c.l.b16 %v9964
    %v10328 = vunpack.c.h.b16 %v9964
    %v10329 = vunpack.c.l.b16 %v9965
    %v10330 = vunpack.c.h.b16 %v9965
    %v10331 = vunpack.c.l.b16 %v9966
    %v10332 = vunpack.c.h.b16 %v9966
    %v10333 = vunpack.c.l.b16 %v9967
    %v10334 = vunpack.c.h.b16 %v9967
    %v10335 = vunpack.c.l.b16 %v9968
    %v10336 = vunpack.c.h.b16 %v9968
    %v10337 = vunpack.c.l.b16 %v9969
    %v10338 = vunpack.c.h.b16 %v9969
    %v10339 = vunpack.c.l.b16 %v9970
    %v10340 = vunpack.c.h.b16 %v9970
    %v10341 = vunpack.c.l.b16 %v9971
    %v10342 = vunpack.c.h.b16 %v9971
    %v10343 = vunpack.c.l.b16 %v9972
    %v10344 = vunpack.c.h.b16 %v9972
    %v10345 = vunpack.c.l.b16 %v9973
    %v10346 = vunpack.c.h.b16 %v9973
    %v10347 = vunpack.c.l.b16 %v9974
    %v10348 = vunpack.c.h.b16 %v9974
    %v10349 = vunpack.c.l.b16 %v9975
    %v10350 = vunpack.c.h.b16 %v9975
    %v10351 = vunpack.c.l.b16 %v9976
    %v10352 = vunpack.c.h.b16 %v9976
    %v10353 = vunpack.c.l.b16 %v9977
    %v10354 = vunpack.c.h.b16 %v9977
    %v10355 = vunpack.c.l.b16 %v9978
    %v10356 = vunpack.c.h.b16 %v9978
    %v10357 = vunpack.c.l.b16 %v9979
    %v10358 = vunpack.c.h.b16 %v9979
    %v10359 = vunpack.c.l.b16 %v9980
    %v10360 = vunpack.c.h.b16 %v9980
    %v10361 = vunpack.c.l.b16 %v9981
    %v10362 = vunpack.c.h.b16 %v9981
    %v10363 = vunpack.c.l.b16 %v9982
    %v10364 = vunpack.c.h.b16 %v9982
    %v10365 = vunpack.c.l.b16 %v9983
    %v10366 = vunpack.c.h.b16 %v9983
    %v10367 = vunpack.c.l.b16 %v9984
    %v10368 = vunpack.c.h.b16 %v9984
    %v10369 = vpack.c.b16 %v10121, %v10113
    %v10370 = vpack.c.b16 %v10122, %v10114
    %v10371 = vpack.c.b16 %v10123, %v10115
    %v10372 = vpack.c.b16 %v10124, %v10116
    %v10373 = vpack.c.b16 %v10125, %v10117
    %v10374 = vpack.c.b16 %v10126, %v10118
    %v10375 = vpack.c.b16 %v10127, %v10119
    %v10376 = vpack.c.b16 %v10128, %v10120
    %v10377 = vpack.c.b16 %v10137, %v10129
    %v10378 = vpack.c.b16 %v10138, %v10130
    %v10379 = vpack.c.b16 %v10139, %v10131
    %v10380 = vpack.c.b16 %v10140, %v10132
    %v10381 = vpack.c.b16 %v10141, %v10133
    %v10382 = vpack.c.b16 %v10142, %v10134
    %v10383 = vpack.c.b16 %v10143, %v10135
    %v10384 = vpack.c.b16 %v10144, %v10136
    %v10385 = vpack.c.b16 %v10153, %v10145
    %v10386 = vpack.c.b16 %v10154, %v10146
    %v10387 = vpack.c.b16 %v10155, %v10147
    %v10388 = vpack.c.b16 %v10156, %v10148
    %v10389 = vpack.c.b16 %v10157, %v10149
    %v10390 = vpack.c.b16 %v10158, %v10150
    %v10391 = vpack.c.b16 %v10159, %v10151
    %v10392 = vpack.c.b16 %v10160, %v10152
    %v10393 = vpack.c.b16 %v10169, %v10161
    %v10394 = vpack.c.b16 %v10170, %v10162
    %v10395 = vpack.c.b16 %v10171, %v10163
    %v10396 = vpack.c.b16 %v10172, %v10164
    %v10397 = vpack.c.b16 %v10173, %v10165
    %v10398 = vpack.c.b16 %v10174, %v10166
    %v10399 = vpack.c.b16 %v10175, %v10167
    %v10400 = vpack.c.b16 %v10176, %v10168
    %v10401 = vpack.c.b16 %v10185, %v10177
    %v10402 = vpack.c.b16 %v10186, %v10178
    %v10403 = vpack.c.b16 %v10187, %v10179
    %v10404 = vpack.c.b16 %v10188, %v10180
    %v10405 = vpack.c.b16 %v10189, %v10181
    %v10406 = vpack.c.b16 %v10190, %v10182
    %v10407 = vpack.c.b16 %v10191, %v10183
    %v10408 = vpack.c.b16 %v10192, %v10184
    %v10409 = vpack.c.b16 %v10201, %v10193
    %v10410 = vpack.c.b16 %v10202, %v10194
    %v10411 = vpack.c.b16 %v10203, %v10195
    %v10412 = vpack.c.b16 %v10204, %v10196
    %v10413 = vpack.c.b16 %v10205, %v10197
    %v10414 = vpack.c.b16 %v10206, %v10198
    %v10415 = vpack.c.b16 %v10207, %v10199
    %v10416 = vpack.c.b16 %v10208, %v10200
    %v10417 = vpack.c.b16 %v10217, %v10209
    %v10418 = vpack.c.b16 %v10218, %v10210
    %v10419 = vpack.c.b16 %v10219, %v10211
    %v10420 = vpack.c.b16 %v10220, %v10212
    %v10421 = vpack.c.b16 %v10221, %v10213
    %v10422 = vpack.c.b16 %v10222, %v10214
    %v10423 = vpack.c.b16 %v10223, %v10215
    %v10424 = vpack.c.b16 %v10224, %v10216
    %v10425 = vpack.c.b16 %v10233, %v10225
    %v10426 = vpack.c.b16 %v10234, %v10226
    %v10427 = vpack.c.b16 %v10235, %v10227
    %v10428 = vpack.c.b16 %v10236, %v10228
    %v10429 = vpack.c.b16 %v10237, %v10229
    %v10430 = vpack.c.b16 %v10238, %v10230
    %v10431 = vpack.c.b16 %v10239, %v10231
    %v10432 = vpack.c.b16 %v10240, %v10232
    %v10433 = vpack.c.b16 %v10249, %v10241
    %v10434 = vpack.c.b16 %v10250, %v10242
    %v10435 = vpack.c.b16 %v10251, %v10243
    %v10436 = vpack.c.b16 %v10252, %v10244
    %v10437 = vpack.c.b16 %v10253, %v10245
    %v10438 = vpack.c.b16 %v10254, %v10246
    %v10439 = vpack.c.b16 %v10255, %v10247
    %v10440 = vpack.c.b16 %v10256, %v10248
    %v10441 = vpack.c.b16 %v10265, %v10257
    %v10442 = vpack.c.b16 %v10266, %v10258
    %v10443 = vpack.c.b16 %v10267, %v10259
    %v10444 = vpack.c.b16 %v10268, %v10260
    %v10445 = vpack.c.b16 %v10269, %v10261
    %v10446 = vpack.c.b16 %v10270, %v10262
    %v10447 = vpack.c.b16 %v10271, %v10263
    %v10448 = vpack.c.b16 %v10272, %v10264
    %v10449 = vpack.c.b16 %v10281, %v10273
    %v10450 = vpack.c.b16 %v10282, %v10274
    %v10451 = vpack.c.b16 %v10283, %v10275
    %v10452 = vpack.c.b16 %v10284, %v10276
    %v10453 = vpack.c.b16 %v10285, %v10277
    %v10454 = vpack.c.b16 %v10286, %v10278
    %v10455 = vpack.c.b16 %v10287, %v10279
    %v10456 = vpack.c.b16 %v10288, %v10280
    %v10457 = vpack.c.b16 %v10297, %v10289
    %v10458 = vpack.c.b16 %v10298, %v10290
    %v10459 = vpack.c.b16 %v10299, %v10291
    %v10460 = vpack.c.b16 %v10300, %v10292
    %v10461 = vpack.c.b16 %v10301, %v10293
    %v10462 = vpack.c.b16 %v10302, %v10294
    %v10463 = vpack.c.b16 %v10303, %v10295
    %v10464 = vpack.c.b16 %v10304, %v10296
    %v10465 = vpack.c.b16 %v10313, %v10305
    %v10466 = vpack.c.b16 %v10314, %v10306
    %v10467 = vpack.c.b16 %v10315, %v10307
    %v10468 = vpack.c.b16 %v10316, %v10308
    %v10469 = vpack.c.b16 %v10317, %v10309
    %v10470 = vpack.c.b16 %v10318, %v10310
    %v10471 = vpack.c.b16 %v10319, %v10311
    %v10472 = vpack.c.b16 %v10320, %v10312
    %v10473 = vpack.c.b16 %v10329, %v10321
    %v10474 = vpack.c.b16 %v10330, %v10322
    %v10475 = vpack.c.b16 %v10331, %v10323
    %v10476 = vpack.c.b16 %v10332, %v10324
    %v10477 = vpack.c.b16 %v10333, %v10325
    %v10478 = vpack.c.b16 %v10334, %v10326
    %v10479 = vpack.c.b16 %v10335, %v10327
    %v10480 = vpack.c.b16 %v10336, %v10328
    %v10481 = vpack.c.b16 %v10345, %v10337
    %v10482 = vpack.c.b16 %v10346, %v10338
    %v10483 = vpack.c.b16 %v10347, %v10339
    %v10484 = vpack.c.b16 %v10348, %v10340
    %v10485 = vpack.c.b16 %v10349, %v10341
    %v10486 = vpack.c.b16 %v10350, %v10342
    %v10487 = vpack.c.b16 %v10351, %v10343
    %v10488 = vpack.c.b16 %v10352, %v10344
    %v10489 = vpack.c.b16 %v10361, %v10353
    %v10490 = vpack.c.b16 %v10362, %v10354
    %v10491 = vpack.c.b16 %v10363, %v10355
    %v10492 = vpack.c.b16 %v10364, %v10356
    %v10493 = vpack.c.b16 %v10365, %v10357
    %v10494 = vpack.c.b16 %v10366, %v10358
    %v10495 = vpack.c.b16 %v10367, %v10359
    %v10496 = vpack.c.b16 %v10368, %v10360
    %10625 = vmatpush.bf16.msra.mxu0 %v10425
    %10626 = vmatpush.bf16.msra.mxu0 %v10417
    %10627 = vmatpush.bf16.msra.mxu0 %v10409
    %10628 = vmatpush.bf16.msra.mxu0 %v10401
    %10629 = vmatpush.bf16.msra.mxu0 %v10393
    %10630 = vmatpush.bf16.msra.mxu0 %v10385
    %10631 = vmatpush.bf16.msra.mxu0 %v10377
    %10632 = vmatpush.bf16.msra.mxu0 %v10369
    %10633 = vmatmul.bf16.gmra.mxu0 %v9855
    %v10634 = vpop.f32.mrf.mxu0
    %v10635 = vadd.f32 0.0, %v10634
    %v10636 = vpop.f32.mrf.mxu0
    %10637 = vdwg.mxu0
    %10638 = vmatpush.bf16.msra.mxu0 %v10489
    %10639 = vmatpush.bf16.msra.mxu0 %v10481
    %10640 = vmatpush.bf16.msra.mxu0 %v10473
    %10641 = vmatpush.bf16.msra.mxu0 %v10465
    %10642 = vmatpush.bf16.msra.mxu0 %v10457
    %10643 = vmatpush.bf16.msra.mxu0 %v10449
    %10644 = vmatpush.bf16.msra.mxu0 %v10441
    %10645 = vmatpush.bf16.msra.mxu0 %v10433
    %10646 = vmatmul.bf16.gmra.mxu0 %v9856
    %v10647 = vpop.f32.mrf.mxu0
    %v10648 = vadd.f32 %v10635, %v10647
    %v10649 = vpop.f32.mrf.mxu0
    %10650 = vdwg.mxu0
    %10651 = vmatpush.bf16.msra.mxu0 %v10426
    %10652 = vmatpush.bf16.msra.mxu0 %v10418
    %10653 = vmatpush.bf16.msra.mxu0 %v10410
    %10654 = vmatpush.bf16.msra.mxu0 %v10402
    %10655 = vmatpush.bf16.msra.mxu0 %v10394
    %10656 = vmatpush.bf16.msra.mxu0 %v10386
    %10657 = vmatpush.bf16.msra.mxu0 %v10378
    %10658 = vmatpush.bf16.msra.mxu0 %v10370
    %10659 = vmatmul.bf16.gmra.mxu0 %v9855
    %v10660 = vpop.f32.mrf.mxu0
    %v10661 = vadd.f32 0.0, %v10660
    %v10662 = vpop.f32.mrf.mxu0
    %10663 = vdwg.mxu0
    %10664 = vmatpush.bf16.msra.mxu0 %v10490
    %10665 = vmatpush.bf16.msra.mxu0 %v10482
    %10666 = vmatpush.bf16.msra.mxu0 %v10474
    %10667 = vmatpush.bf16.msra.mxu0 %v10466
    %10668 = vmatpush.bf16.msra.mxu0 %v10458
    %10669 = vmatpush.bf16.msra.mxu0 %v10450
    %10670 = vmatpush.bf16.msra.mxu0 %v10442
    %10671 = vmatpush.bf16.msra.mxu0 %v10434
    %10672 = vmatmul.bf16.gmra.mxu0 %v9856
    %v10673 = vpop.f32.mrf.mxu0
    %v10674 = vadd.f32 %v10661, %v10673
    %v10675 = vpop.f32.mrf.mxu0
    %10676 = vdwg.mxu0
    %10677 = vmatpush.bf16.msra.mxu0 %v10427
    %10678 = vmatpush.bf16.msra.mxu0 %v10419
    %10679 = vmatpush.bf16.msra.mxu0 %v10411
    %10680 = vmatpush.bf16.msra.mxu0 %v10403
    %10681 = vmatpush.bf16.msra.mxu0 %v10395
    %10682 = vmatpush.bf16.msra.mxu0 %v10387
    %10683 = vmatpush.bf16.msra.mxu0 %v10379
    %10684 = vmatpush.bf16.msra.mxu0 %v10371
    %10685 = vmatmul.bf16.gmra.mxu0 %v9855
    %v10686 = vpop.f32.mrf.mxu0
    %v10687 = vadd.f32 0.0, %v10686
    %v10688 = vpop.f32.mrf.mxu0
    %10689 = vdwg.mxu0
    %10690 = vmatpush.bf16.msra.mxu0 %v10491
    %10691 = vmatpush.bf16.msra.mxu0 %v10483
    %10692 = vmatpush.bf16.msra.mxu0 %v10475
    %10693 = vmatpush.bf16.msra.mxu0 %v10467
    %10694 = vmatpush.bf16.msra.mxu0 %v10459
    %10695 = vmatpush.bf16.msra.mxu0 %v10451
    %10696 = vmatpush.bf16.msra.mxu0 %v10443
    %10697 = vmatpush.bf16.msra.mxu0 %v10435
    %10698 = vmatmul.bf16.gmra.mxu0 %v9856
    %v10699 = vpop.f32.mrf.mxu0
    %v10700 = vadd.f32 %v10687, %v10699
    %v10701 = vpop.f32.mrf.mxu0
    %10702 = vdwg.mxu0
    %10703 = vmatpush.bf16.msra.mxu0 %v10428
    %10704 = vmatpush.bf16.msra.mxu0 %v10420
    %10705 = vmatpush.bf16.msra.mxu0 %v10412
    %10706 = vmatpush.bf16.msra.mxu0 %v10404
    %10707 = vmatpush.bf16.msra.mxu0 %v10396
    %10708 = vmatpush.bf16.msra.mxu0 %v10388
    %10709 = vmatpush.bf16.msra.mxu0 %v10380
    %10710 = vmatpush.bf16.msra.mxu0 %v10372
    %10711 = vmatmul.bf16.gmra.mxu0 %v9855
    %v10712 = vpop.f32.mrf.mxu0
    %v10713 = vadd.f32 0.0, %v10712
    %v10714 = vpop.f32.mrf.mxu0
    %10715 = vdwg.mxu0
    %10716 = vmatpush.bf16.msra.mxu0 %v10492
    %10717 = vmatpush.bf16.msra.mxu0 %v10484
    %10718 = vmatpush.bf16.msra.mxu0 %v10476
    %10719 = vmatpush.bf16.msra.mxu0 %v10468
    %10720 = vmatpush.bf16.msra.mxu0 %v10460
    %10721 = vmatpush.bf16.msra.mxu0 %v10452
    %10722 = vmatpush.bf16.msra.mxu0 %v10444
    %10723 = vmatpush.bf16.msra.mxu0 %v10436
    %10724 = vmatmul.bf16.gmra.mxu0 %v9856
    %v10725 = vpop.f32.mrf.mxu0
    %v10726 = vadd.f32 %v10713, %v10725
    %v10727 = vpop.f32.mrf.mxu0
    %10728 = vdwg.mxu0
    %10729 = vmatpush.bf16.msra.mxu0 %v10429
    %10730 = vmatpush.bf16.msra.mxu0 %v10421
    %10731 = vmatpush.bf16.msra.mxu0 %v10413
    %10732 = vmatpush.bf16.msra.mxu0 %v10405
    %10733 = vmatpush.bf16.msra.mxu0 %v10397
    %10734 = vmatpush.bf16.msra.mxu0 %v10389
    %10735 = vmatpush.bf16.msra.mxu0 %v10381
    %10736 = vmatpush.bf16.msra.mxu0 %v10373
    %10737 = vmatmul.bf16.gmra.mxu0 %v9855
    %v10738 = vpop.f32.mrf.mxu0
    %v10739 = vadd.f32 0.0, %v10738
    %v10740 = vpop.f32.mrf.mxu0
    %10741 = vdwg.mxu0
    %10742 = vmatpush.bf16.msra.mxu0 %v10493
    %10743 = vmatpush.bf16.msra.mxu0 %v10485
    %10744 = vmatpush.bf16.msra.mxu0 %v10477
    %10745 = vmatpush.bf16.msra.mxu0 %v10469
    %10746 = vmatpush.bf16.msra.mxu0 %v10461
    %10747 = vmatpush.bf16.msra.mxu0 %v10453
    %10748 = vmatpush.bf16.msra.mxu0 %v10445
    %10749 = vmatpush.bf16.msra.mxu0 %v10437
    %10750 = vmatmul.bf16.gmra.mxu0 %v9856
    %v10751 = vpop.f32.mrf.mxu0
    %v10752 = vadd.f32 %v10739, %v10751
    %v10753 = vpop.f32.mrf.mxu0
    %10754 = vdwg.mxu0
    %10755 = vmatpush.bf16.msra.mxu0 %v10430
    %10756 = vmatpush.bf16.msra.mxu0 %v10422
    %10757 = vmatpush.bf16.msra.mxu0 %v10414
    %10758 = vmatpush.bf16.msra.mxu0 %v10406
    %10759 = vmatpush.bf16.msra.mxu0 %v10398
    %10760 = vmatpush.bf16.msra.mxu0 %v10390
    %10761 = vmatpush.bf16.msra.mxu0 %v10382
    %10762 = vmatpush.bf16.msra.mxu0 %v10374
    %10763 = vmatmul.bf16.gmra.mxu0 %v9855
    %v10764 = vpop.f32.mrf.mxu0
    %v10765 = vadd.f32 0.0, %v10764
    %v10766 = vpop.f32.mrf.mxu0
    %10767 = vdwg.mxu0
    %10768 = vmatpush.bf16.msra.mxu0 %v10494
    %10769 = vmatpush.bf16.msra.mxu0 %v10486
    %10770 = vmatpush.bf16.msra.mxu0 %v10478
    %10771 = vmatpush.bf16.msra.mxu0 %v10470
    %10772 = vmatpush.bf16.msra.mxu0 %v10462
    %10773 = vmatpush.bf16.msra.mxu0 %v10454
    %10774 = vmatpush.bf16.msra.mxu0 %v10446
    %10775 = vmatpush.bf16.msra.mxu0 %v10438
    %10776 = vmatmul.bf16.gmra.mxu0 %v9856
    %v10777 = vpop.f32.mrf.mxu0
    %v10778 = vadd.f32 %v10765, %v10777
    %v10779 = vpop.f32.mrf.mxu0
    %10780 = vdwg.mxu0
    %10781 = vmatpush.bf16.msra.mxu0 %v10431
    %10782 = vmatpush.bf16.msra.mxu0 %v10423
    %10783 = vmatpush.bf16.msra.mxu0 %v10415
    %10784 = vmatpush.bf16.msra.mxu0 %v10407
    %10785 = vmatpush.bf16.msra.mxu0 %v10399
    %10786 = vmatpush.bf16.msra.mxu0 %v10391
    %10787 = vmatpush.bf16.msra.mxu0 %v10383
    %10788 = vmatpush.bf16.msra.mxu0 %v10375
    %10789 = vmatmul.bf16.gmra.mxu0 %v9855
    %v10790 = vpop.f32.mrf.mxu0
    %v10791 = vadd.f32 0.0, %v10790
    %v10792 = vpop.f32.mrf.mxu0
    %10793 = vdwg.mxu0
    %10794 = vmatpush.bf16.msra.mxu0 %v10495
    %10795 = vmatpush.bf16.msra.mxu0 %v10487
    %10796 = vmatpush.bf16.msra.mxu0 %v10479
    %10797 = vmatpush.bf16.msra.mxu0 %v10471
    %10798 = vmatpush.bf16.msra.mxu0 %v10463
    %10799 = vmatpush.bf16.msra.mxu0 %v10455
    %10800 = vmatpush.bf16.msra.mxu0 %v10447
    %10801 = vmatpush.bf16.msra.mxu0 %v10439
    %10802 = vmatmul.bf16.gmra.mxu0 %v9856
    %v10803 = vpop.f32.mrf.mxu0
    %v10804 = vadd.f32 %v10791, %v10803
    %v10805 = vpop.f32.mrf.mxu0
    %10806 = vdwg.mxu0
    %10807 = vmatpush.bf16.msra.mxu0 %v10432
    %10808 = vmatpush.bf16.msra.mxu0 %v10424
    %10809 = vmatpush.bf16.msra.mxu0 %v10416
    %10810 = vmatpush.bf16.msra.mxu0 %v10408
    %10811 = vmatpush.bf16.msra.mxu0 %v10400
    %10812 = vmatpush.bf16.msra.mxu0 %v10392
    %10813 = vmatpush.bf16.msra.mxu0 %v10384
    %10814 = vmatpush.bf16.msra.mxu0 %v10376
    %10815 = vmatmul.bf16.gmra.mxu0 %v9855
    %v10816 = vpop.f32.mrf.mxu0
    %v10817 = vadd.f32 0.0, %v10816
    %v10818 = vpop.f32.mrf.mxu0
    %10819 = vdwg.mxu0
    %10820 = vmatpush.bf16.msra.mxu0 %v10496
    %10821 = vmatpush.bf16.msra.mxu0 %v10488
    %10822 = vmatpush.bf16.msra.mxu0 %v10480
    %10823 = vmatpush.bf16.msra.mxu0 %v10472
    %10824 = vmatpush.bf16.msra.mxu0 %v10464
    %10825 = vmatpush.bf16.msra.mxu0 %v10456
    %10826 = vmatpush.bf16.msra.mxu0 %v10448
    %10827 = vmatpush.bf16.msra.mxu0 %v10440
    %10828 = vmatmul.bf16.gmra.mxu0 %v9856
    %v10829 = vpop.f32.mrf.mxu0
    %v10830 = vadd.f32 %v10817, %v10829
    %v10831 = vpop.f32.mrf.mxu0
    %10832 = vdwg.mxu0
    %v10833 = vld [vmem:[#allocation2 + $0x1c0] sm:$0xff]
    %v10834 = vld [vmem:[#allocation2 + $0x1c8] sm:$0xff]
    %v10835 = vld [vmem:[#allocation2 + $0x1d0] sm:$0xff]
    %v10836 = vld [vmem:[#allocation2 + $0x1d8] sm:$0xff]
    %v10837 = vadd.f32 %v10833, %v10648
    %v10838 = vadd.f32 %v10834, %v10674
    %v10839 = vadd.f32 %v10835, %v10700
    %v10840 = vadd.f32 %v10836, %v10726
    %v10841 = vld [vmem:[#allocation2 + $0x20] sm:$0xff]
    %v10842 = vld [vmem:[#allocation2 + $0x28] sm:$0xff]
    %v10843 = vld [vmem:[#allocation2 + $0x30] sm:$0xff]
    %v10844 = vld [vmem:[#allocation2 + $0x38] sm:$0xff]
    %v10845 = vadd.f32 %v10841, %v10752
    %v10846 = vadd.f32 %v10842, %v10778
    %v10847 = vadd.f32 %v10843, %v10804
    %v10848 = vadd.f32 %v10844, %v10830
    %v10849 = vxor.u32 %v10837, 2147483648
    %v10850 = vxor.u32 %v10845, 2147483648
    %v10851 = vmul.f32 %v10849, 1.442695
    %v10852 = vpow.pop %v10851
    %v10853 = vmul.f32 %v10850, 1.442695
    %v10854 = vpow.pop %v10853
    %v10855 = vadd.f32 %v10852, 1.0
    %v10856 = vadd.f32 %v10854, 1.0
    %v10857 = vrcp.pop %v10855
    %v10858 = vmul.f32 %v10855, %v10857
    %v10859 = vsub.f32 1.0, %v10858
    %v10860 = vmul.f32 %v10857, %v10859
    %v10861 = vadd.f32 %v10857, %v10860
    %vm10862 = vweird.f32 %v10855
    %vm10863 = vweird.f32 %v10857
    %vm10864 = vmor %vm10862, %vm10863
    %v10865 = vsel %vm10864, %v10857, %v10861
    %v10866 = vand.u32 2147483647, %v10855
    %vm10867 = vcmp.eq.f32.partialorder %v10866, 8.507059e+37
    %v10868 = vand.u32 %v10855, 2147483648
    %v10869 = vor.u32 1.1754944e-38, %v10868
    %v10870 = vsel %vm10867, %v10869, %v10865
    %v10871 = vmul.f32 1.0, %v10870
    %v10872 = vrcp.pop %v10856
    %v10873 = vmul.f32 %v10856, %v10872
    %v10874 = vsub.f32 1.0, %v10873
    %v10875 = vmul.f32 %v10872, %v10874
    %v10876 = vadd.f32 %v10872, %v10875
    %vm10877 = vweird.f32 %v10856
    %vm10878 = vweird.f32 %v10872
    %vm10879 = vmor %vm10877, %vm10878
    %v10880 = vsel %vm10879, %v10872, %v10876
    %v10881 = vand.u32 2147483647, %v10856
    %vm10882 = vcmp.eq.f32.partialorder %v10881, 8.507059e+37
    %v10883 = vand.u32 %v10856, 2147483648
    %v10884 = vor.u32 1.1754944e-38, %v10883
    %v10885 = vsel %vm10882, %v10884, %v10880
    %v10886 = vmul.f32 1.0, %v10885
    %v10887 = vxor.u32 %v10838, 2147483648
    %v10888 = vxor.u32 %v10846, 2147483648
    %v10889 = vmul.f32 %v10887, 1.442695
    %v10890 = vpow.pop %v10889
    %v10891 = vmul.f32 %v10888, 1.442695
    %v10892 = vpow.pop %v10891
    %v10893 = vadd.f32 %v10890, 1.0
    %v10894 = vadd.f32 %v10892, 1.0
    %v10895 = vrcp.pop %v10893
    %v10896 = vmul.f32 %v10893, %v10895
    %v10897 = vsub.f32 1.0, %v10896
    %v10898 = vmul.f32 %v10895, %v10897
    %v10899 = vadd.f32 %v10895, %v10898
    %vm10900 = vweird.f32 %v10893
    %vm10901 = vweird.f32 %v10895
    %vm10902 = vmor %vm10900, %vm10901
    %v10903 = vsel %vm10902, %v10895, %v10899
    %v10904 = vand.u32 2147483647, %v10893
    %vm10905 = vcmp.eq.f32.partialorder %v10904, 8.507059e+37
    %v10906 = vand.u32 %v10893, 2147483648
    %v10907 = vor.u32 1.1754944e-38, %v10906
    %v10908 = vsel %vm10905, %v10907, %v10903
    %v10909 = vmul.f32 1.0, %v10908
    %v10910 = vrcp.pop %v10894
    %v10911 = vmul.f32 %v10894, %v10910
    %v10912 = vsub.f32 1.0, %v10911
    %v10913 = vmul.f32 %v10910, %v10912
    %v10914 = vadd.f32 %v10910, %v10913
    %vm10915 = vweird.f32 %v10894
    %vm10916 = vweird.f32 %v10910
    %vm10917 = vmor %vm10915, %vm10916
    %v10918 = vsel %vm10917, %v10910, %v10914
    %v10919 = vand.u32 2147483647, %v10894
    %vm10920 = vcmp.eq.f32.partialorder %v10919, 8.507059e+37
    %v10921 = vand.u32 %v10894, 2147483648
    %v10922 = vor.u32 1.1754944e-38, %v10921
    %v10923 = vsel %vm10920, %v10922, %v10918
    %v10924 = vmul.f32 1.0, %v10923
    %v10925 = vtanh.pop %v10839
    %v10926 = vtanh.pop %v10847
    %v10927 = vxor.u32 %v10840, 2147483648
    %v10928 = vxor.u32 %v10848, 2147483648
    %v10929 = vmul.f32 %v10927, 1.442695
    %v10930 = vpow.pop %v10929
    %v10931 = vmul.f32 %v10928, 1.442695
    %v10932 = vpow.pop %v10931
    %v10933 = vadd.f32 %v10930, 1.0
    %v10934 = vadd.f32 %v10932, 1.0
    %v10935 = vrcp.pop %v10933
    %v10936 = vmul.f32 %v10933, %v10935
    %v10937 = vsub.f32 1.0, %v10936
    %v10938 = vmul.f32 %v10935, %v10937
    %v10939 = vadd.f32 %v10935, %v10938
    %vm10940 = vweird.f32 %v10933
    %vm10941 = vweird.f32 %v10935
    %vm10942 = vmor %vm10940, %vm10941
    %v10943 = vsel %vm10942, %v10935, %v10939
    %v10944 = vand.u32 2147483647, %v10933
    %vm10945 = vcmp.eq.f32.partialorder %v10944, 8.507059e+37
    %v10946 = vand.u32 %v10933, 2147483648
    %v10947 = vor.u32 1.1754944e-38, %v10946
    %v10948 = vsel %vm10945, %v10947, %v10943
    %v10949 = vmul.f32 1.0, %v10948
    %v10950 = vrcp.pop %v10934
    %v10951 = vmul.f32 %v10934, %v10950
    %v10952 = vsub.f32 1.0, %v10951
    %v10953 = vmul.f32 %v10950, %v10952
    %v10954 = vadd.f32 %v10950, %v10953
    %vm10955 = vweird.f32 %v10934
    %vm10956 = vweird.f32 %v10950
    %vm10957 = vmor %vm10955, %vm10956
    %v10958 = vsel %vm10957, %v10950, %v10954
    %v10959 = vand.u32 2147483647, %v10934
    %vm10960 = vcmp.eq.f32.partialorder %v10959, 8.507059e+37
    %v10961 = vand.u32 %v10934, 2147483648
    %v10962 = vor.u32 1.1754944e-38, %v10961
    %v10963 = vsel %vm10960, %v10962, %v10958
    %v10964 = vmul.f32 1.0, %v10963
    %v10965 = vld [vmem:[#allocation4] sm:$0xff]
    %v10966 = vld [vmem:[#allocation4 + $0x8] sm:$0xff]
    %v10967 = vmul.f32 %v10909, %v10965
    %v10968 = vmul.f32 %v10924, %v10966
    %v10969 = vmul.f32 %v10871, %v10925
    %v10970 = vmul.f32 %v10886, %v10926
    %v10971 = vadd.f32 %v10967, %v10969
    %v10972 = vadd.f32 %v10968, %v10970
    %v10973 = vtanh.pop %v10971
    %v10974 = vtanh.pop %v10972
    %v10975 = vmul.f32 %v10949, %v10973
    %v10976 = vmul.f32 %v10964, %v10974
    %10977 = vst [vmem:[#allocation4] sm:$0xff] %v10971
    %10978 = vst [vmem:[#allocation4 + $0x8] sm:$0xff] %v10972
    %10979 = vst [vmem:[#allocation3] sm:$0xff] %v10975
    %10980 = vst [vmem:[#allocation3 + $0x8] sm:$0xff] %v10976
    %v10981 = vpack.c.bf16 %v10976, %v10975
    %v10982 = vld [vmem:[%s6 + $0x38] sm:$0xff]
    %v10983 = vld [vmem:[%s4] sm:$0xf]
    %v10984 = vld [vmem:[%s4 + $0x4] sm:$0xf]
    %v10985 = vld [vmem:[%s4 + $0x8] sm:$0xf]
    %v10986 = vld [vmem:[%s4 + $0xc] sm:$0xf]
    %v10987 = vld [vmem:[%s4 + $0x10] sm:$0xf]
    %v10988 = vld [vmem:[%s4 + $0x14] sm:$0xf]
    %v10989 = vld [vmem:[%s4 + $0x18] sm:$0xf]
    %v10990 = vld [vmem:[%s4 + $0x1c] sm:$0xf]
    %v10991 = vld [vmem:[%s4 + $0x20] sm:$0xf]
    %v10992 = vld [vmem:[%s4 + $0x24] sm:$0xf]
    %v10993 = vld [vmem:[%s4 + $0x28] sm:$0xf]
    %v10994 = vld [vmem:[%s4 + $0x2c] sm:$0xf]
    %v10995 = vld [vmem:[%s4 + $0x30] sm:$0xf]
    %v10996 = vld [vmem:[%s4 + $0x34] sm:$0xf]
    %v10997 = vld [vmem:[%s4 + $0x38] sm:$0xf]
    %v10998 = vld [vmem:[%s4 + $0x3c] sm:$0xf]
    %v11015 = vunpack.c.l.b16 %v10983
    %v11016 = vunpack.c.l.b16 %v10984
    %v11017 = vunpack.c.l.b16 %v10985
    %v11018 = vunpack.c.l.b16 %v10986
    %v11019 = vunpack.c.l.b16 %v10987
    %v11020 = vunpack.c.l.b16 %v10988
    %v11021 = vunpack.c.l.b16 %v10989
    %v11022 = vunpack.c.l.b16 %v10990
    %v11023 = vunpack.c.l.b16 %v10991
    %v11024 = vunpack.c.l.b16 %v10992
    %v11025 = vunpack.c.l.b16 %v10993
    %v11026 = vunpack.c.l.b16 %v10994
    %v11027 = vunpack.c.l.b16 %v10995
    %v11028 = vunpack.c.l.b16 %v10996
    %v11029 = vunpack.c.l.b16 %v10997
    %v11030 = vunpack.c.l.b16 %v10998
    %v11031 = vpack.c.b16 %v11016, %v11015
    %v11032 = vpack.c.b16 %v11018, %v11017
    %v11033 = vpack.c.b16 %v11020, %v11019
    %v11034 = vpack.c.b16 %v11022, %v11021
    %v11035 = vpack.c.b16 %v11024, %v11023
    %v11036 = vpack.c.b16 %v11026, %v11025
    %v11037 = vpack.c.b16 %v11028, %v11027
    %v11038 = vpack.c.b16 %v11030, %v11029
    %11047 = vmatpush.bf16.msra.mxu0 %v11038
    %11048 = vmatpush.bf16.msra.mxu0 %v11037
    %11049 = vmatpush.bf16.msra.mxu0 %v11036
    %11050 = vmatpush.bf16.msra.mxu0 %v11035
    %11051 = vmatpush.bf16.msra.mxu0 %v11034
    %11052 = vmatpush.bf16.msra.mxu0 %v11033
    %11053 = vmatpush.bf16.msra.mxu0 %v11032
    %11054 = vmatpush.bf16.msra.mxu0 %v11031
    %11055 = vmatmul.bf16.gmra.mxu0 %v10981
    %v11056 = vpop.f32.mrf.mxu0
    %v11057 = vadd.f32 0.0, %v11056
    %v11058 = vpop.f32.mrf.mxu0
    %11059 = vdwg.mxu0
    %v11060 = vadd.f32 %v10982, %v11057
    %11061 = vst [vmem:[%s6 + $0x38] sm:$0xff] %v11060
    %v11062 = vld [vmem:[%s6] sm:$0xff]
    %v11063 = vld [vmem:[%s4 + $0x40] sm:$0xf]
    %v11064 = vld [vmem:[%s4 + $0x44] sm:$0xf]
    %v11065 = vld [vmem:[%s4 + $0x48] sm:$0xf]
    %v11066 = vld [vmem:[%s4 + $0x4c] sm:$0xf]
    %v11067 = vld [vmem:[%s4 + $0x50] sm:$0xf]
    %v11068 = vld [vmem:[%s4 + $0x54] sm:$0xf]
    %v11069 = vld [vmem:[%s4 + $0x58] sm:$0xf]
    %v11070 = vld [vmem:[%s4 + $0x5c] sm:$0xf]
    %v11071 = vld [vmem:[%s4 + $0x60] sm:$0xf]
    %v11072 = vld [vmem:[%s4 + $0x64] sm:$0xf]
    %v11073 = vld [vmem:[%s4 + $0x68] sm:$0xf]
    %v11074 = vld [vmem:[%s4 + $0x6c] sm:$0xf]
    %v11075 = vld [vmem:[%s4 + $0x70] sm:$0xf]
    %v11076 = vld [vmem:[%s4 + $0x74] sm:$0xf]
    %v11077 = vld [vmem:[%s4 + $0x78] sm:$0xf]
    %v11078 = vld [vmem:[%s4 + $0x7c] sm:$0xf]
    %v11080 = vunpack.c.h.b16 %v10981
    %v11081 = vpack.c.b16 %v11080, %v11080
    %v11099 = vunpack.c.l.b16 %v11063
    %v11100 = vunpack.c.l.b16 %v11064
    %v11101 = vunpack.c.l.b16 %v11065
    %v11102 = vunpack.c.l.b16 %v11066
    %v11103 = vunpack.c.l.b16 %v11067
    %v11104 = vunpack.c.l.b16 %v11068
    %v11105 = vunpack.c.l.b16 %v11069
    %v11106 = vunpack.c.l.b16 %v11070
    %v11107 = vunpack.c.l.b16 %v11071
    %v11108 = vunpack.c.l.b16 %v11072
    %v11109 = vunpack.c.l.b16 %v11073
    %v11110 = vunpack.c.l.b16 %v11074
    %v11111 = vunpack.c.l.b16 %v11075
    %v11112 = vunpack.c.l.b16 %v11076
    %v11113 = vunpack.c.l.b16 %v11077
    %v11114 = vunpack.c.l.b16 %v11078
    %v11115 = vpack.c.b16 %v11100, %v11099
    %v11116 = vpack.c.b16 %v11102, %v11101
    %v11117 = vpack.c.b16 %v11104, %v11103
    %v11118 = vpack.c.b16 %v11106, %v11105
    %v11119 = vpack.c.b16 %v11108, %v11107
    %v11120 = vpack.c.b16 %v11110, %v11109
    %v11121 = vpack.c.b16 %v11112, %v11111
    %v11122 = vpack.c.b16 %v11114, %v11113
    %11131 = vmatpush.bf16.msra.mxu0 %v11122
    %11132 = vmatpush.bf16.msra.mxu0 %v11121
    %11133 = vmatpush.bf16.msra.mxu0 %v11120
    %11134 = vmatpush.bf16.msra.mxu0 %v11119
    %11135 = vmatpush.bf16.msra.mxu0 %v11118
    %11136 = vmatpush.bf16.msra.mxu0 %v11117
    %11137 = vmatpush.bf16.msra.mxu0 %v11116
    %11138 = vmatpush.bf16.msra.mxu0 %v11115
    %11139 = vmatmul.bf16.gmra.mxu0 %v11081
    %v11140 = vpop.f32.mrf.mxu0
    %v11141 = vadd.f32 0.0, %v11140
    %v11142 = vpop.f32.mrf.mxu0
    %11143 = vdwg.mxu0
    %v11144 = vadd.f32 %v11062, %v11141
    %11145 = vst [vmem:[%s6] sm:$0xff] %v11144
    // Predicated region
    $region34: #{birnn_forward.1} parent=1 // pred_check
      _
    $region35: #{birnn_forward.1} parent=1 // pred_check_branch
      %11147 = sbr.rel (0) target = $region37
    $region36: #{birnn_forward.1} parent=1 // pred_region
      _
    $region37: #{birnn_forward.1} parent=1 // pred_fallthru
      _
    // Predicated region
    $region38: #{birnn_forward.1} parent=1 // pred_check
      _
    $region39: #{birnn_forward.1} parent=1 // pred_check_branch
      %11149 = sbr.rel (0) target = $region41
    $region40: #{birnn_forward.1} parent=1 // pred_region
      _
    $region41: #{birnn_forward.1} parent=1 // pred_fallthru
      _
    %11150 = vsyncpa [#allocation6], 1
    %11151 = vsyncpa [#allocation8], 1

</llo_original>
